<compile_context>
chip_gen: v6e
topology: v6e:2x2x1
jax: 0.10.0
libtpu: 0.0.40
codegen_flags: <defaults>
</compile_context>

<pallas_src>
import functools

import jax
import jax.numpy as jnp
from jax.experimental import pallas as pl
from jax.experimental.pallas import tpu as pltpu


CPAD = 128  # lane-dense channel padding


def _round_up(n, m):
    return ((n + m - 1) // m) * m


def _pick_tile(dim, target, mult):
    """Largest multiple of `mult` that divides `dim` and is <= target; else the full extent."""
    best = None
    t = mult
    while t <= min(dim, target):
        if dim % t == 0:
            best = t
        t += mult
    return best if best is not None else dim


# ----------------------------------------------------------------------------
# Fused VGG block kernel: conv(+ReLU) x L  ->  2x2/stride-2 maxpool, one image per grid step.
# ----------------------------------------------------------------------------

def _vgg_block_kernel(*refs, layer_kernels, H, W, halo, pool):
    """refs = (x_ref, w0, b0, w1, b1, ..., o_ref, [act_scratch], [pool_scratch]).

    x_ref : (1, H+2*p0h, W+2*p0w, CPAD) bf16   (spatially padded for the FIRST conv only)
    w_l   : (n_groups_l, 2*CPAD, CPAD)  bf16   (taps paired along K; odd tap's 2nd half zero)
    b_l   : (1, CPAD) f32
    o_ref : (1, H', W', CPAD)                  (H'=H/2 if pool else H)
    act_scratch : (H+2*hh, W+2*hw, CPAD) bf16  (intermediate activation, 'same' halo kept zero)
    pool_scratch: (H/2, W, CPAD) f32
    """
    n_layers = len(layer_kernels)
    x_ref = refs[0]
    w_refs = [refs[1 + 2 * l] for l in range(n_layers)]
    b_refs = [refs[2 + 2 * l] for l in range(n_layers)]
    o_ref = refs[1 + 2 * n_layers]
    scratch = list(refs[2 + 2 * n_layers:])
    act_ref = scratch.pop(0) if n_layers > 1 else None
    tmp_ref = scratch.pop(0) if pool else None

    hh, hw = halo
    cp = CPAD

    # Zero the intermediate-activation halo once (interior is overwritten every image/layer).
    if act_ref is not None:
        @pl.when(pl.program_id(0) == 0)
        def _():
            act_ref[...] = jnp.zeros_like(act_ref)

    def conv_layer(load_tap, kh, kw, w_ref, b_ref):
        """Tap-paired conv: pairs of taps give K=256 matmuls (fills v6e/v7x MXU depth)."""
        n_taps = kh * kw
        acc = jnp.zeros((H * W, cp), jnp.float32)
        t = 0
        while t < n_taps:
            a = load_tap(t // kw, t % kw).reshape(H * W, cp)
            if t + 1 < n_taps:
                b = load_tap((t + 1) // kw, (t + 1) % kw).reshape(H * W, cp)
                lhs = jnp.concatenate([a, b], axis=-1)                  # (H*W, 2*CPAD)
                acc = acc + jnp.dot(lhs, w_ref[t // 2],
                                    preferred_element_type=jnp.float32)
            else:
                # Odd leftover tap: single K=128 matmul against the pair's first half.
                acc = acc + jnp.dot(a, w_ref[t // 2, 0:cp, :],
                                    preferred_element_type=jnp.float32)
            t += 2
        return jnp.maximum(acc + b_ref[...], 0.0)                       # (H*W, CPAD) f32

    for l, (kh, kw) in enumerate(layer_kernels):
        ph, pw = kh // 3, kw // 3        # 'same' padding; torch module only allows k in {1,3}
        if l == 0:
            def load_tap(i, j):
                return x_ref[0, i:i + H, j:j + W, :]
        else:
            def load_tap(i, j, ph=ph, pw=pw):
                return act_ref[hh - ph + i: hh - ph + i + H,
                               hw - pw + j: hw - pw + j + W, :]

        out = conv_layer(load_tap, kh, kw, w_refs[l], b_refs[l])

        if l < n_layers - 1:
            # Stay in VMEM: write the interior of the padded intermediate activation.
            act_ref[hh:hh + H, hw:hw + W, :] = out.reshape(H, W, cp).astype(act_ref.dtype)
        else:
            if not pool:
                o_ref[...] = out.reshape(1, H, W, cp).astype(o_ref.dtype)
            else:
                ho, wo = H // 2, W // 2
                # H-pool: tile-aligned regroup of rows, max over the parity dim.
                v = out.reshape(ho, 2, W, cp)
                tmp_ref[...] = jnp.maximum(v[:, 0], v[:, 1])            # (ho, W, CPAD) f32
                # W-pool: sublane-strided reads (stride 2) of the scratch.
                ev = tmp_ref[:, pl.ds(0, wo, 2), :]
                od = tmp_ref[:, pl.ds(1, wo, 2), :]
                o_ref[...] = jnp.maximum(ev, od).reshape(1, ho, wo, cp).astype(o_ref.dtype)


def vgg_block_pool(x_nhwc, layers, *, pool=True):
    """x: (N, H, W, CPAD) bf16; layers: list of (w_pairs, bias, (kh, kw)). Returns pooled block."""
    N, H, W, Cp = x_nhwc.shape
    kh0, kw0 = layers[0][2]
    p0h, p0w = kh0 // 3, kw0 // 3
    xp = jnp.pad(x_nhwc, ((0, 0), (p0h, p0h), (p0w, p0w), (0, 0)))
    Hp, Wp = H + 2 * p0h, W + 2 * p0w
    hh = max((l[2][0] // 3 for l in layers[1:]), default=0)
    hw = max((l[2][1] // 3 for l in layers[1:]), default=0)
    Ho, Wo = (H // 2, W // 2) if pool else (H, W)

    in_specs = [pl.BlockSpec((1, Hp, Wp, Cp), lambda n: (n, 0, 0, 0))]
    args = [xp]
    for (wg, b, _ks) in layers:
        ng = wg.shape[0]
        in_specs.append(pl.BlockSpec((ng, 2 * CPAD, CPAD), lambda n: (0, 0, 0)))
        in_specs.append(pl.BlockSpec((1, CPAD), lambda n: (0, 0)))
        args.append(wg)
        args.append(b.reshape(1, CPAD).astype(jnp.float32))

    scratch = []
    if len(layers) > 1:
        scratch.append(pltpu.VMEM((H + 2 * hh, W + 2 * hw, CPAD), jnp.bfloat16))
    if pool:
        scratch.append(pltpu.VMEM((H // 2, W, CPAD), jnp.float32))

    kernel = functools.partial(_vgg_block_kernel,
                               layer_kernels=tuple(l[2] for l in layers),
                               H=H, W=W, halo=(hh, hw), pool=pool)

    return pl.pallas_call(
        kernel,
        out_shape=jax.ShapeDtypeStruct((N, Ho, Wo, CPAD), x_nhwc.dtype),
        grid_spec=pltpu.PrefetchScalarGridSpec(
            num_scalar_prefetch=0,
            grid=(N,),
            in_specs=in_specs,
            out_specs=pl.BlockSpec((1, Ho, Wo, CPAD), lambda n: (n, 0, 0, 0)),
            scratch_shapes=scratch,
        ),
        compiler_params=pltpu.CompilerParams(dimension_semantics=("parallel",)),
    )(*args)


# ----------------------------------------------------------------------------
# Classifier GEMM (bf16 x bf16 -> f32 acc) + bias + optional ReLU / fused masked softmax.
# ----------------------------------------------------------------------------

def _matmul_bias_act_kernel(x_ref, w_ref, b_ref, o_ref, acc_ref, *, apply_relu, softmax_valid):
    k = pl.program_id(2)

    @pl.when(k == 0)
    def _():
        acc_ref[...] = jnp.zeros_like(acc_ref)

    acc_ref[...] += jnp.dot(x_ref[...], w_ref[...], preferred_element_type=jnp.float32)

    @pl.when(k == pl.num_programs(2) - 1)
    def _():
        out = acc_ref[...] + b_ref[...]
        if apply_relu:
            out = jnp.maximum(out, 0.0)
        if softmax_valid is not None:
            # Fused masked softmax over the real classes (padded logit columns -> ~0 prob).
            col = jax.lax.broadcasted_iota(jnp.int32, out.shape, dimension=1)
            out = jnp.where(col < softmax_valid, out, -1e30)
            m = jnp.max(out, axis=-1, keepdims=True)
            e = jnp.exp(out - m)
            out = e / jnp.sum(e, axis=-1, keepdims=True)
        o_ref[...] = out.astype(o_ref.dtype)


def linear_bias_act(x, w, b, *, apply_relu, out_dtype, softmax_valid=None):
    """x: (M, K), w: (K, N) bf16, b: (N,) f32 -> (M, N).

    Tiny-M (batch-sized) GEMMs are pure weight streaming, so pick the FEWEST, BIGGEST weight
    blocks: tn up to 1024, tk up to full K with the weight block capped at 8 MB bf16 (fits
    double-buffered within v7x's 64 MiB VMEM and under the raised scoped limit on v5e/v6e).
    """
    M, K = x.shape
    _, N = w.shape
    tm = _pick_tile(M, 256, 8)
    tn = _pick_tile(N, 1024, 128)
    max_tk = max(128, (8 * 1024 * 1024) // (tn * 2))
    tk = _pick_tile(K, max_tk, 128)
    if softmax_valid is not None:
        assert tn == N, "fused softmax needs the full output row in one tile"

    b2 = b.reshape(1, N).astype(jnp.float32)

    # Raise scoped VMEM above v5e's ~16 MiB default; stays well under v7x's 64 MiB physical.
    w_blk = tk * tn * 2
    x_blk = tm * tk * 2
    need = 2 * (w_blk + x_blk + tn * 4 + tm * tn * 2) + tm * tn * 4 + (4 << 20)
    vmem_limit = int(min(48 << 20, max(32 << 20, need)))

    kernel = functools.partial(_matmul_bias_act_kernel,
                               apply_relu=apply_relu, softmax_valid=softmax_valid)
    return pl.pallas_call(
        kernel,
        out_shape=jax.ShapeDtypeStruct((M, N), out_dtype),
        grid_spec=pltpu.PrefetchScalarGridSpec(
            num_scalar_prefetch=0,
            grid=(M // tm, N // tn, K // tk),
            in_specs=[
                pl.BlockSpec((tm, tk), lambda i, j, k: (i, k)),
                pl.BlockSpec((tk, tn), lambda i, j, k: (k, j)),
                pl.BlockSpec((1, tn), lambda i, j, k: (0, j)),
            ],
            out_specs=pl.BlockSpec((tm, tn), lambda i, j, k: (i, j)),
            scratch_shapes=[pltpu.VMEM((tm, tn), jnp.float32)],
        ),
        compiler_params=pltpu.CompilerParams(
            dimension_semantics=("parallel", "parallel", "arbitrary"),
            vmem_limit_bytes=vmem_limit),
    )(x.astype(jnp.bfloat16), w, b2)


# ----------------------------------------------------------------------------
# Parameter initialization (mirrors vgg_initialize_weights; channel-padded to CPAD)
# ----------------------------------------------------------------------------

def init_vgg_params(key, *, input_size, block_configs, in_channels, num_classes):
    params = {"blocks": [], "classifier": [], "num_classes": num_classes}

    c_in = in_channels
    for block in block_configs:
        layers = []
        for (ks, c_out) in block:
            kh, kw = ks
            assert kh in (1, 3) and kw in (1, 3), "VGGDownBlock only supports kernel sizes 1 and 3"
            key, sub = jax.random.split(key)
            # kaiming_normal_, mode='fan_out', relu: std = sqrt(2 / (Cout*KH*KW))
            std = (2.0 / (c_out * kh * kw)) ** 0.5
            w = jax.random.normal(sub, (kh * kw, c_in, c_out), jnp.float32) * std
            n_taps = kh * kw
            n_groups = (n_taps + 1) // 2
            # Pair taps along K: group g holds taps 2g (rows 0:CPAD) and 2g+1 (rows CPAD:2*CPAD).
            wp = jnp.zeros((n_groups, 2 * CPAD, CPAD), jnp.float32)
            for t in range(n_taps):
                g, half = t // 2, t % 2
                wp = wp.at[g, half * CPAD: half * CPAD + c_in, :c_out].set(w[t])
            b_pad = jnp.zeros((CPAD,), jnp.float32)
            layers.append((wp.astype(jnp.bfloat16), b_pad, ks))
            c_in = c_out
        params["blocks"].append(layers)

    n_last = c_in
    params["n_last"] = n_last
    sf = input_size // (2 ** len(block_configs))
    num_hidden = n_last * sf * sf                      # real torch num_hidden_features
    k_pad = _round_up(num_hidden, 128)
    params["flat_k_pad"] = k_pad
    ncls_pad = _round_up(num_classes, 128)

    # fc1: rows permuted from torch's (c, h, w) flatten order to our (h, w, c) order; only REAL
    # channel rows are kept (no 8x zero-row padding), then padded up to a multiple of 128.
    key, sub = jax.random.split(key)
    w1 = jax.random.normal(sub, (num_hidden, 4096), jnp.float32) * 0.01   # normal(0, 0.01)
    w1 = w1.reshape(n_last, sf, sf, 4096).transpose(1, 2, 0, 3).reshape(num_hidden, 4096)
    if k_pad != num_hidden:
        w1 = jnp.concatenate([w1, jnp.zeros((k_pad - num_hidden, 4096), jnp.float32)], axis=0)
    b1 = jnp.zeros((4096,), jnp.float32)

    key, sub = jax.random.split(key)
    w2 = jax.random.normal(sub, (4096, 4096), jnp.float32) * 0.01
    b2 = jnp.zeros((4096,), jnp.float32)

    key, sub = jax.random.split(key)
    w3 = jax.random.normal(sub, (4096, num_classes), jnp.float32) * 0.01
    w3p = jnp.zeros((4096, ncls_pad), jnp.float32).at[:, :num_classes].set(w3)
    b3 = jnp.zeros((ncls_pad,), jnp.float32)

    params["classifier"] = [(w1.astype(jnp.bfloat16), b1),
                            (w2.astype(jnp.bfloat16), b2),
                            (w3p.astype(jnp.bfloat16), b3)]
    return params


# ----------------------------------------------------------------------------
# Forward pass (VGGbase.forward, activation='relu')
# ----------------------------------------------------------------------------

def vgg_forward(params, x_nchw):
    num_classes = params["num_classes"]

    # NCHW (PyTorch) -> NHWC bf16, channels zero-padded to the 128-lane width.
    x = jnp.transpose(x_nchw, (0, 2, 3, 1)).astype(jnp.bfloat16)
    x = jnp.pad(x, ((0, 0), (0, 0), (0, 0), (0, CPAD - x.shape[-1])))

    # Each VGG down-block (convs + ReLU + 2x2/stride-2 MaxPool) is ONE fused pallas_call.
    for layers in params["blocks"]:
        x = vgg_block_pool(x, layers, pool=True)

    # torch.flatten(x, 1): compact to the real channels (drop the lane padding) so fc1's K is
    # the real hidden size; flatten in (h, w, c) order matching the permuted fc1 weight rows.
    N = x.shape[0]
    x = x[..., :params["n_last"]].reshape(N, -1)
    k_pad = params["flat_k_pad"]
    if x.shape[1] != k_pad:
        x = jnp.pad(x, ((0, 0), (0, k_pad - x.shape[1])))

    (w1, b1), (w2, b2), (w3, b3) = params["classifier"]
    # Linear->ReLU->(Dropout)->Linear->ReLU->(Dropout)->Linear->softmax (softmax fused in fc3).
    x = linear_bias_act(x, w1, b1, apply_relu=True, out_dtype=jnp.bfloat16)
    # TODO(synk): Dropout(p=0.5) treated as identity (eval-mode forward).
    x = linear_bias_act(x, w2, b2, apply_relu=True, out_dtype=jnp.bfloat16)
    probs = linear_bias_act(x, w3, b3, apply_relu=False, out_dtype=jnp.float32,
                            softmax_valid=num_classes)
    return probs[:, :num_classes]


# ----------------------------------------------------------------------------
# Demo
# ----------------------------------------------------------------------------

if __name__ == "__main__":
    # Small VGG config: 2 blocks -> spatial 16 reduces to 4; last channels 16
    # => num_hidden_features = 16 * 4 * 4 = 256.
    input_size = 16
    in_channels = 4
    num_classes = 10
    block_configs = (
        (((3, 3), 8), ((3, 3), 8)),
        (((3, 3), 16), ((1, 1), 16)),
    )

    root = jax.random.PRNGKey(0)
    k_in, k_par = jax.random.split(root)

    x = jax.random.normal(k_in, (2, in_channels, input_size, input_size), jnp.float32)
    params = init_vgg_params(k_par, input_size=input_size, block_configs=block_configs,
                             in_channels=in_channels, num_classes=num_classes)

    out = vgg_forward(params, x)
    out = jax.block_until_ready(out)

    assert out.shape == (2, num_classes), out.shape
    row_sums = jnp.sum(out, axis=-1)
    assert bool(jnp.all(jnp.abs(row_sums - 1.0) < 1e-4)), row_sums
    print("KERNEL_OK")
</pallas_src>

<mosaic_0001>
module attributes {stable_mosaic.version = 11 : i64} {
  func.func @_vgg_block_kernel(%arg0: i32, %arg1: memref<1x18x18x128xbf16, #tpu.memory_space<vmem>>, %arg2: memref<5x256x128xbf16, #tpu.memory_space<vmem>>, %arg3: memref<1x128xf32, #tpu.memory_space<vmem>>, %arg4: memref<5x256x128xbf16, #tpu.memory_space<vmem>>, %arg5: memref<1x128xf32, #tpu.memory_space<vmem>>, %arg6: memref<1x8x8x128xbf16, #tpu.memory_space<vmem>>, %arg7: memref<18x18x128xbf16, #tpu.memory_space<vmem>>, %arg8: memref<8x16x128xf32, #tpu.memory_space<vmem>>) attributes {dimension_semantics = [#tpu.dimension_semantics<parallel>], iteration_bounds = array<i64: 2>, scalar_prefetch = 0 : i64, scratch_operands = 2 : i64, tpu.core_type = #tpu.core_type<tc>, window_params = [{transform_indices = @transform_0, window_bounds = array<i64: 1, 18, 18, 128>}, {pipeline_mode = #tpu.pipeline_mode<synchronous>, transform_indices = @transform_1, window_bounds = array<i64: 5, 256, 128>}, {pipeline_mode = #tpu.pipeline_mode<synchronous>, transform_indices = @transform_2, window_bounds = array<i64: 1, 128>}, {pipeline_mode = #tpu.pipeline_mode<synchronous>, transform_indices = @transform_3, window_bounds = array<i64: 5, 256, 128>}, {pipeline_mode = #tpu.pipeline_mode<synchronous>, transform_indices = @transform_4, window_bounds = array<i64: 1, 128>}, {transform_indices = @transform_5, window_bounds = array<i64: 1, 8, 8, 128>}]} {
    %c0_i32 = arith.constant 0 : i32
    %0 = arith.cmpi eq, %arg0, %c0_i32 : i32
    %1 = arith.extui %0 : i1 to i32
    %c0_i32_0 = arith.constant 0 : i32
    %2 = arith.cmpi ne, %1, %c0_i32_0 : i32
    scf.if %2 {
      %cst_122 = arith.constant 0.000000e+00 : bf16
      %124 = vector.broadcast %cst_122 : bf16 to vector<18x18x128xbf16>
      %c0_123 = arith.constant 0 : index
      %c0_124 = arith.constant 0 : index
      %c0_125 = arith.constant 0 : index
      %125 = vector.load %arg7[%c0_123, %c0_124, %c0_125] : memref<18x18x128xbf16, #tpu.memory_space<vmem>>, vector<18x18x128xbf16>
      tpu.vector_store %arg7[%c0_123, %c0_124, %c0_125], %124 {strides = array<i32>} : memref<18x18x128xbf16, #tpu.memory_space<vmem>>, vector<18x18x128xbf16>,
    } else {
    }
    %cst = arith.constant 0.000000e+00 : f32
    %3 = vector.broadcast %cst : f32 to vector<256x128xf32>
    %c0 = arith.constant 0 : index
    %c0_1 = arith.constant 0 : index
    %c0_2 = arith.constant 0 : index
    %c0_3 = arith.constant 0 : index
    %4 = vector.load %arg1[%c0, %c0_1, %c0_2, %c0_3] : memref<1x18x18x128xbf16, #tpu.memory_space<vmem>>, vector<1x16x16x128xbf16>
    %5 = vector.shape_cast %4 : vector<1x16x16x128xbf16> to vector<16x16x128xbf16>
    %6 = vector.shape_cast %5 : vector<16x16x128xbf16> to vector<256x128xbf16>
    %c0_4 = arith.constant 0 : index
    %c0_5 = arith.constant 0 : index
    %c1 = arith.constant 1 : index
    %c0_6 = arith.constant 0 : index
    %7 = vector.load %arg1[%c0_4, %c0_5, %c1, %c0_6] : memref<1x18x18x128xbf16, #tpu.memory_space<vmem>>, vector<1x16x16x128xbf16>
    %8 = vector.shape_cast %7 : vector<1x16x16x128xbf16> to vector<16x16x128xbf16>
    %9 = vector.shape_cast %8 : vector<16x16x128xbf16> to vector<256x128xbf16>
    %10 = tpu.concatenate %6, %9 in 1 : vector<256x128xbf16>, vector<256x128xbf16> -> vector<256x256xbf16>
    %c0_7 = arith.constant 0 : index
    %c0_8 = arith.constant 0 : index
    %c0_9 = arith.constant 0 : index
    %11 = vector.load %arg2[%c0_7, %c0_8, %c0_9] : memref<5x256x128xbf16, #tpu.memory_space<vmem>>, vector<1x256x128xbf16>
    %12 = vector.shape_cast %11 : vector<1x256x128xbf16> to vector<256x128xbf16>
    %cst_10 = arith.constant dense<0.000000e+00> : vector<256x128xf32>
    %13 = tpu.matmul %10, %12, %cst_10 {dimension_numbers = #tpu.dot_dimension_numbers<[1], [0], [0], [1], [0, 0, 1, 1], [], []>} : vector<256x256xbf16>, vector<256x128xbf16>, vector<256x128xf32> -> vector<256x128xf32>
    %14 = arith.addf %3, %13 : vector<256x128xf32>
    %c0_11 = arith.constant 0 : index
    %c0_12 = arith.constant 0 : index
    %c2 = arith.constant 2 : index
    %c0_13 = arith.constant 0 : index
    %15 = vector.load %arg1[%c0_11, %c0_12, %c2, %c0_13] : memref<1x18x18x128xbf16, #tpu.memory_space<vmem>>, vector<1x16x16x128xbf16>
    %16 = vector.shape_cast %15 : vector<1x16x16x128xbf16> to vector<16x16x128xbf16>
    %17 = vector.shape_cast %16 : vector<16x16x128xbf16> to vector<256x128xbf16>
    %c0_14 = arith.constant 0 : index
    %c1_15 = arith.constant 1 : index
    %c0_16 = arith.constant 0 : index
    %c0_17 = arith.constant 0 : index
    %18 = vector.load %arg1[%c0_14, %c1_15, %c0_16, %c0_17] : memref<1x18x18x128xbf16, #tpu.memory_space<vmem>>, vector<1x16x16x128xbf16>
    %19 = vector.shape_cast %18 : vector<1x16x16x128xbf16> to vector<16x16x128xbf16>
    %20 = vector.shape_cast %19 : vector<16x16x128xbf16> to vector<256x128xbf16>
    %21 = tpu.concatenate %17, %20 in 1 : vector<256x128xbf16>, vector<256x128xbf16> -> vector<256x256xbf16>
    %c1_18 = arith.constant 1 : index
    %c0_19 = arith.constant 0 : index
    %c0_20 = arith.constant 0 : index
    %22 = vector.load %arg2[%c1_18, %c0_19, %c0_20] : memref<5x256x128xbf16, #tpu.memory_space<vmem>>, vector<1x256x128xbf16>
    %23 = vector.shape_cast %22 : vector<1x256x128xbf16> to vector<256x128xbf16>
    %cst_21 = arith.constant dense<0.000000e+00> : vector<256x128xf32>
    %24 = tpu.matmul %21, %23, %cst_21 {dimension_numbers = #tpu.dot_dimension_numbers<[1], [0], [0], [1], [0, 0, 1, 1], [], []>} : vector<256x256xbf16>, vector<256x128xbf16>, vector<256x128xf32> -> vector<256x128xf32>
    %25 = arith.addf %14, %24 : vector<256x128xf32>
    %c0_22 = arith.constant 0 : index
    %c1_23 = arith.constant 1 : index
    %c1_24 = arith.constant 1 : index
    %c0_25 = arith.constant 0 : index
    %26 = vector.load %arg1[%c0_22, %c1_23, %c1_24, %c0_25] : memref<1x18x18x128xbf16, #tpu.memory_space<vmem>>, vector<1x16x16x128xbf16>
    %27 = vector.shape_cast %26 : vector<1x16x16x128xbf16> to vector<16x16x128xbf16>
    %28 = vector.shape_cast %27 : vector<16x16x128xbf16> to vector<256x128xbf16>
    %c0_26 = arith.constant 0 : index
    %c1_27 = arith.constant 1 : index
    %c2_28 = arith.constant 2 : index
    %c0_29 = arith.constant 0 : index
    %29 = vector.load %arg1[%c0_26, %c1_27, %c2_28, %c0_29] : memref<1x18x18x128xbf16, #tpu.memory_space<vmem>>, vector<1x16x16x128xbf16>
    %30 = vector.shape_cast %29 : vector<1x16x16x128xbf16> to vector<16x16x128xbf16>
    %31 = vector.shape_cast %30 : vector<16x16x128xbf16> to vector<256x128xbf16>
    %32 = tpu.concatenate %28, %31 in 1 : vector<256x128xbf16>, vector<256x128xbf16> -> vector<256x256xbf16>
    %c2_30 = arith.constant 2 : index
    %c0_31 = arith.constant 0 : index
    %c0_32 = arith.constant 0 : index
    %33 = vector.load %arg2[%c2_30, %c0_31, %c0_32] : memref<5x256x128xbf16, #tpu.memory_space<vmem>>, vector<1x256x128xbf16>
    %34 = vector.shape_cast %33 : vector<1x256x128xbf16> to vector<256x128xbf16>
    %cst_33 = arith.constant dense<0.000000e+00> : vector<256x128xf32>
    %35 = tpu.matmul %32, %34, %cst_33 {dimension_numbers = #tpu.dot_dimension_numbers<[1], [0], [0], [1], [0, 0, 1, 1], [], []>} : vector<256x256xbf16>, vector<256x128xbf16>, vector<256x128xf32> -> vector<256x128xf32>
    %36 = arith.addf %25, %35 : vector<256x128xf32>
    %c0_34 = arith.constant 0 : index
    %c2_35 = arith.constant 2 : index
    %c0_36 = arith.constant 0 : index
    %c0_37 = arith.constant 0 : index
    %37 = vector.load %arg1[%c0_34, %c2_35, %c0_36, %c0_37] : memref<1x18x18x128xbf16, #tpu.memory_space<vmem>>, vector<1x16x16x128xbf16>
    %38 = vector.shape_cast %37 : vector<1x16x16x128xbf16> to vector<16x16x128xbf16>
    %39 = vector.shape_cast %38 : vector<16x16x128xbf16> to vector<256x128xbf16>
    %c0_38 = arith.constant 0 : index
    %c2_39 = arith.constant 2 : index
    %c1_40 = arith.constant 1 : index
    %c0_41 = arith.constant 0 : index
    %40 = vector.load %arg1[%c0_38, %c2_39, %c1_40, %c0_41] : memref<1x18x18x128xbf16, #tpu.memory_space<vmem>>, vector<1x16x16x128xbf16>
    %41 = vector.shape_cast %40 : vector<1x16x16x128xbf16> to vector<16x16x128xbf16>
    %42 = vector.shape_cast %41 : vector<16x16x128xbf16> to vector<256x128xbf16>
    %43 = tpu.concatenate %39, %42 in 1 : vector<256x128xbf16>, vector<256x128xbf16> -> vector<256x256xbf16>
    %c3 = arith.constant 3 : index
    %c0_42 = arith.constant 0 : index
    %c0_43 = arith.constant 0 : index
    %44 = vector.load %arg2[%c3, %c0_42, %c0_43] : memref<5x256x128xbf16, #tpu.memory_space<vmem>>, vector<1x256x128xbf16>
    %45 = vector.shape_cast %44 : vector<1x256x128xbf16> to vector<256x128xbf16>
    %cst_44 = arith.constant dense<0.000000e+00> : vector<256x128xf32>
    %46 = tpu.matmul %43, %45, %cst_44 {dimension_numbers = #tpu.dot_dimension_numbers<[1], [0], [0], [1], [0, 0, 1, 1], [], []>} : vector<256x256xbf16>, vector<256x128xbf16>, vector<256x128xf32> -> vector<256x128xf32>
    %47 = arith.addf %36, %46 : vector<256x128xf32>
    %c0_45 = arith.constant 0 : index
    %c2_46 = arith.constant 2 : index
    %c2_47 = arith.constant 2 : index
    %c0_48 = arith.constant 0 : index
    %48 = vector.load %arg1[%c0_45, %c2_46, %c2_47, %c0_48] : memref<1x18x18x128xbf16, #tpu.memory_space<vmem>>, vector<1x16x16x128xbf16>
    %49 = vector.shape_cast %48 : vector<1x16x16x128xbf16> to vector<16x16x128xbf16>
    %50 = vector.shape_cast %49 : vector<16x16x128xbf16> to vector<256x128xbf16>
    %c4 = arith.constant 4 : index
    %c0_49 = arith.constant 0 : index
    %c0_50 = arith.constant 0 : index
    %51 = vector.load %arg2[%c4, %c0_49, %c0_50] : memref<5x256x128xbf16, #tpu.memory_space<vmem>>, vector<1x128x128xbf16>
    %52 = vector.shape_cast %51 : vector<1x128x128xbf16> to vector<128x128xbf16>
    %cst_51 = arith.constant dense<0.000000e+00> : vector<256x128xf32>
    %53 = tpu.matmul %50, %52, %cst_51 {dimension_numbers = #tpu.dot_dimension_numbers<[1], [0], [0], [1], [0, 0, 1, 1], [], []>} : vector<256x128xbf16>, vector<128x128xbf16>, vector<256x128xf32> -> vector<256x128xf32>
    %54 = arith.addf %47, %53 : vector<256x128xf32>
    %c0_52 = arith.constant 0 : index
    %c0_53 = arith.constant 0 : index
    %55 = vector.load %arg3[%c0_52, %c0_53] : memref<1x128xf32, #tpu.memory_space<vmem>>, vector<1x128xf32>
    %56 = vector.broadcast %55 : vector<1x128xf32> to vector<256x128xf32>
    %57 = arith.addf %54, %56 : vector<256x128xf32>
    %cst_54 = arith.constant 0.000000e+00 : f32
    %58 = vector.broadcast %cst_54 : f32 to vector<256x128xf32>
    %59 = arith.maximumf %57, %58 : vector<256x128xf32>
    %60 = vector.shape_cast %59 : vector<256x128xf32> to vector<16x16x128xf32>
    %61 = arith.truncf %60 : vector<16x16x128xf32> to vector<16x16x128xbf16>
    %c1_55 = arith.constant 1 : index
    %c1_56 = arith.constant 1 : index
    %c0_57 = arith.constant 0 : index
    %62 = vector.load %arg7[%c1_55, %c1_56, %c0_57] : memref<18x18x128xbf16, #tpu.memory_space<vmem>>, vector<16x16x128xbf16>
    tpu.vector_store %arg7[%c1_55, %c1_56, %c0_57], %61 {strides = array<i32>} : memref<18x18x128xbf16, #tpu.memory_space<vmem>>, vector<16x16x128xbf16>,
    %cst_58 = arith.constant 0.000000e+00 : f32
    %63 = vector.broadcast %cst_58 : f32 to vector<256x128xf32>
    %c0_59 = arith.constant 0 : index
    %c0_60 = arith.constant 0 : index
    %c0_61 = arith.constant 0 : index
    %64 = vector.load %arg7[%c0_59, %c0_60, %c0_61] : memref<18x18x128xbf16, #tpu.memory_space<vmem>>, vector<16x16x128xbf16>
    %65 = vector.shape_cast %64 : vector<16x16x128xbf16> to vector<256x128xbf16>
    %c0_62 = arith.constant 0 : index
    %c1_63 = arith.constant 1 : index
    %c0_64 = arith.constant 0 : index
    %66 = vector.load %arg7[%c0_62, %c1_63, %c0_64] : memref<18x18x128xbf16, #tpu.memory_space<vmem>>, vector<16x16x128xbf16>
    %67 = vector.shape_cast %66 : vector<16x16x128xbf16> to vector<256x128xbf16>
    %68 = tpu.concatenate %65, %67 in 1 : vector<256x128xbf16>, vector<256x128xbf16> -> vector<256x256xbf16>
    %c0_65 = arith.constant 0 : index
    %c0_66 = arith.constant 0 : index
    %c0_67 = arith.constant 0 : index
    %69 = vector.load %arg4[%c0_65, %c0_66, %c0_67] : memref<5x256x128xbf16, #tpu.memory_space<vmem>>, vector<1x256x128xbf16>
    %70 = vector.shape_cast %69 : vector<1x256x128xbf16> to vector<256x128xbf16>
    %cst_68 = arith.constant dense<0.000000e+00> : vector<256x128xf32>
    %71 = tpu.matmul %68, %70, %cst_68 {dimension_numbers = #tpu.dot_dimension_numbers<[1], [0], [0], [1], [0, 0, 1, 1], [], []>} : vector<256x256xbf16>, vector<256x128xbf16>, vector<256x128xf32> -> vector<256x128xf32>
    %72 = arith.addf %63, %71 : vector<256x128xf32>
    %c0_69 = arith.constant 0 : index
    %c2_70 = arith.constant 2 : index
    %c0_71 = arith.constant 0 : index
    %73 = vector.load %arg7[%c0_69, %c2_70, %c0_71] : memref<18x18x128xbf16, #tpu.memory_space<vmem>>, vector<16x16x128xbf16>
    %74 = vector.shape_cast %73 : vector<16x16x128xbf16> to vector<256x128xbf16>
    %c1_72 = arith.constant 1 : index
    %c0_73 = arith.constant 0 : index
    %c0_74 = arith.constant 0 : index
    %75 = vector.load %arg7[%c1_72, %c0_73, %c0_74] : memref<18x18x128xbf16, #tpu.memory_space<vmem>>, vector<16x16x128xbf16>
    %76 = vector.shape_cast %75 : vector<16x16x128xbf16> to vector<256x128xbf16>
    %77 = tpu.concatenate %74, %76 in 1 : vector<256x128xbf16>, vector<256x128xbf16> -> vector<256x256xbf16>
    %c1_75 = arith.constant 1 : index
    %c0_76 = arith.constant 0 : index
    %c0_77 = arith.constant 0 : index
    %78 = vector.load %arg4[%c1_75, %c0_76, %c0_77] : memref<5x256x128xbf16, #tpu.memory_space<vmem>>, vector<1x256x128xbf16>
    %79 = vector.shape_cast %78 : vector<1x256x128xbf16> to vector<256x128xbf16>
    %cst_78 = arith.constant dense<0.000000e+00> : vector<256x128xf32>
    %80 = tpu.matmul %77, %79, %cst_78 {dimension_numbers = #tpu.dot_dimension_numbers<[1], [0], [0], [1], [0, 0, 1, 1], [], []>} : vector<256x256xbf16>, vector<256x128xbf16>, vector<256x128xf32> -> vector<256x128xf32>
    %81 = arith.addf %72, %80 : vector<256x128xf32>
    %c1_79 = arith.constant 1 : index
    %c1_80 = arith.constant 1 : index
    %c0_81 = arith.constant 0 : index
    %82 = vector.load %arg7[%c1_79, %c1_80, %c0_81] : memref<18x18x128xbf16, #tpu.memory_space<vmem>>, vector<16x16x128xbf16>
    %83 = vector.shape_cast %82 : vector<16x16x128xbf16> to vector<256x128xbf16>
    %c1_82 = arith.constant 1 : index
    %c2_83 = arith.constant 2 : index
    %c0_84 = arith.constant 0 : index
    %84 = vector.load %arg7[%c1_82, %c2_83, %c0_84] : memref<18x18x128xbf16, #tpu.memory_space<vmem>>, vector<16x16x128xbf16>
    %85 = vector.shape_cast %84 : vector<16x16x128xbf16> to vector<256x128xbf16>
    %86 = tpu.concatenate %83, %85 in 1 : vector<256x128xbf16>, vector<256x128xbf16> -> vector<256x256xbf16>
    %c2_85 = arith.constant 2 : index
    %c0_86 = arith.constant 0 : index
    %c0_87 = arith.constant 0 : index
    %87 = vector.load %arg4[%c2_85, %c0_86, %c0_87] : memref<5x256x128xbf16, #tpu.memory_space<vmem>>, vector<1x256x128xbf16>
    %88 = vector.shape_cast %87 : vector<1x256x128xbf16> to vector<256x128xbf16>
    %cst_88 = arith.constant dense<0.000000e+00> : vector<256x128xf32>
    %89 = tpu.matmul %86, %88, %cst_88 {dimension_numbers = #tpu.dot_dimension_numbers<[1], [0], [0], [1], [0, 0, 1, 1], [], []>} : vector<256x256xbf16>, vector<256x128xbf16>, vector<256x128xf32> -> vector<256x128xf32>
    %90 = arith.addf %81, %89 : vector<256x128xf32>
    %c2_89 = arith.constant 2 : index
    %c0_90 = arith.constant 0 : index
    %c0_91 = arith.constant 0 : index
    %91 = vector.load %arg7[%c2_89, %c0_90, %c0_91] : memref<18x18x128xbf16, #tpu.memory_space<vmem>>, vector<16x16x128xbf16>
    %92 = vector.shape_cast %91 : vector<16x16x128xbf16> to vector<256x128xbf16>
    %c2_92 = arith.constant 2 : index
    %c1_93 = arith.constant 1 : index
    %c0_94 = arith.constant 0 : index
    %93 = vector.load %arg7[%c2_92, %c1_93, %c0_94] : memref<18x18x128xbf16, #tpu.memory_space<vmem>>, vector<16x16x128xbf16>
    %94 = vector.shape_cast %93 : vector<16x16x128xbf16> to vector<256x128xbf16>
    %95 = tpu.concatenate %92, %94 in 1 : vector<256x128xbf16>, vector<256x128xbf16> -> vector<256x256xbf16>
    %c3_95 = arith.constant 3 : index
    %c0_96 = arith.constant 0 : index
    %c0_97 = arith.constant 0 : index
    %96 = vector.load %arg4[%c3_95, %c0_96, %c0_97] : memref<5x256x128xbf16, #tpu.memory_space<vmem>>, vector<1x256x128xbf16>
    %97 = vector.shape_cast %96 : vector<1x256x128xbf16> to vector<256x128xbf16>
    %cst_98 = arith.constant dense<0.000000e+00> : vector<256x128xf32>
    %98 = tpu.matmul %95, %97, %cst_98 {dimension_numbers = #tpu.dot_dimension_numbers<[1], [0], [0], [1], [0, 0, 1, 1], [], []>} : vector<256x256xbf16>, vector<256x128xbf16>, vector<256x128xf32> -> vector<256x128xf32>
    %99 = arith.addf %90, %98 : vector<256x128xf32>
    %c2_99 = arith.constant 2 : index
    %c2_100 = arith.constant 2 : index
    %c0_101 = arith.constant 0 : index
    %100 = vector.load %arg7[%c2_99, %c2_100, %c0_101] : memref<18x18x128xbf16, #tpu.memory_space<vmem>>, vector<16x16x128xbf16>
    %101 = vector.shape_cast %100 : vector<16x16x128xbf16> to vector<256x128xbf16>
    %c4_102 = arith.constant 4 : index
    %c0_103 = arith.constant 0 : index
    %c0_104 = arith.constant 0 : index
    %102 = vector.load %arg4[%c4_102, %c0_103, %c0_104] : memref<5x256x128xbf16, #tpu.memory_space<vmem>>, vector<1x128x128xbf16>
    %103 = vector.shape_cast %102 : vector<1x128x128xbf16> to vector<128x128xbf16>
    %cst_105 = arith.constant dense<0.000000e+00> : vector<256x128xf32>
    %104 = tpu.matmul %101, %103, %cst_105 {dimension_numbers = #tpu.dot_dimension_numbers<[1], [0], [0], [1], [0, 0, 1, 1], [], []>} : vector<256x128xbf16>, vector<128x128xbf16>, vector<256x128xf32> -> vector<256x128xf32>
    %105 = arith.addf %99, %104 : vector<256x128xf32>
    %c0_106 = arith.constant 0 : index
    %c0_107 = arith.constant 0 : index
    %106 = vector.load %arg5[%c0_106, %c0_107] : memref<1x128xf32, #tpu.memory_space<vmem>>, vector<1x128xf32>
    %107 = vector.broadcast %106 : vector<1x128xf32> to vector<256x128xf32>
    %108 = arith.addf %105, %107 : vector<256x128xf32>
    %cst_108 = arith.constant 0.000000e+00 : f32
    %109 = vector.broadcast %cst_108 : f32 to vector<256x128xf32>
    %110 = arith.maximumf %108, %109 : vector<256x128xf32>
    %111 = vector.shape_cast %110 : vector<256x128xf32> to vector<8x2x16x128xf32>
    %112 = vector.extract_strided_slice %111 {offsets = [0, 0, 0, 0], sizes = [8, 1, 16, 128], strides = [1, 1, 1, 1]} : vector<8x2x16x128xf32> to vector<8x1x16x128xf32>
    %113 = vector.shape_cast %112 : vector<8x1x16x128xf32> to vector<8x16x128xf32>
    %114 = vector.extract_strided_slice %111 {offsets = [0, 1, 0, 0], sizes = [8, 1, 16, 128], strides = [1, 1, 1, 1]} : vector<8x2x16x128xf32> to vector<8x1x16x128xf32>
    %115 = vector.shape_cast %114 : vector<8x1x16x128xf32> to vector<8x16x128xf32>
    %116 = arith.maximumf %113, %115 : vector<8x16x128xf32>
    %c0_109 = arith.constant 0 : index
    %c0_110 = arith.constant 0 : index
    %c0_111 = arith.constant 0 : index
    %117 = vector.load %arg8[%c0_109, %c0_110, %c0_111] : memref<8x16x128xf32, #tpu.memory_space<vmem>>, vector<8x16x128xf32>
    tpu.vector_store %arg8[%c0_109, %c0_110, %c0_111], %116 {strides = array<i32>} : memref<8x16x128xf32, #tpu.memory_space<vmem>>, vector<8x16x128xf32>,
    %c0_112 = arith.constant 0 : index
    %c0_113 = arith.constant 0 : index
    %c0_114 = arith.constant 0 : index
    %118 = tpu.strided_load %arg8[%c0_112, %c0_113, %c0_114] {strides = array<i32: 1, 2, 1>} : memref<8x16x128xf32, #tpu.memory_space<vmem>>, vector<8x8x128xf32>
    %c0_115 = arith.constant 0 : index
    %c1_116 = arith.constant 1 : index
    %c0_117 = arith.constant 0 : index
    %119 = tpu.strided_load %arg8[%c0_115, %c1_116, %c0_117] {strides = array<i32: 1, 2, 1>} : memref<8x16x128xf32, #tpu.memory_space<vmem>>, vector<8x8x128xf32>
    %120 = arith.maximumf %118, %119 : vector<8x8x128xf32>
    %121 = vector.shape_cast %120 : vector<8x8x128xf32> to vector<1x8x8x128xf32>
    %122 = arith.truncf %121 : vector<1x8x8x128xf32> to vector<1x8x8x128xbf16>
    %c0_118 = arith.constant 0 : index
    %c0_119 = arith.constant 0 : index
    %c0_120 = arith.constant 0 : index
    %c0_121 = arith.constant 0 : index
    %123 = vector.load %arg6[%c0_118, %c0_119, %c0_120, %c0_121] : memref<1x8x8x128xbf16, #tpu.memory_space<vmem>>, vector<1x8x8x128xbf16>
    tpu.vector_store %arg6[%c0_118, %c0_119, %c0_120, %c0_121], %122 {strides = array<i32>} : memref<1x8x8x128xbf16, #tpu.memory_space<vmem>>, vector<1x8x8x128xbf16>,
    return
  }
  func.func @transform_0(%arg0: i32) -> (i32, i32, i32, i32) {
    %c0_i32 = arith.constant 0 : i32
    %c0_i32_0 = arith.constant 0 : i32
    %c0_i32_1 = arith.constant 0 : i32
    %c0_i32_2 = arith.constant 0 : i32
    return %arg0, %c0_i32, %c0_i32_0, %c0_i32_1 : i32, i32, i32, i32
  }
  func.func @transform_1(%arg0: i32) -> (i32, i32, i32) {
    %c0_i32 = arith.constant 0 : i32
    %c0_i32_0 = arith.constant 0 : i32
    %c0_i32_1 = arith.constant 0 : i32
    %c0_i32_2 = arith.constant 0 : i32
    return %c0_i32, %c0_i32_0, %c0_i32_1 : i32, i32, i32
  }
  func.func @transform_2(%arg0: i32) -> (i32, i32) {
    %c0_i32 = arith.constant 0 : i32
    %c0_i32_0 = arith.constant 0 : i32
    %c0_i32_1 = arith.constant 0 : i32
    return %c0_i32, %c0_i32_0 : i32, i32
  }
  func.func @transform_3(%arg0: i32) -> (i32, i32, i32) {
    %c0_i32 = arith.constant 0 : i32
    %c0_i32_0 = arith.constant 0 : i32
    %c0_i32_1 = arith.constant 0 : i32
    %c0_i32_2 = arith.constant 0 : i32
    return %c0_i32, %c0_i32_0, %c0_i32_1 : i32, i32, i32
  }
  func.func @transform_4(%arg0: i32) -> (i32, i32) {
    %c0_i32 = arith.constant 0 : i32
    %c0_i32_0 = arith.constant 0 : i32
    %c0_i32_1 = arith.constant 0 : i32
    return %c0_i32, %c0_i32_0 : i32, i32
  }
  func.func @transform_5(%arg0: i32) -> (i32, i32, i32, i32) {
    %c0_i32 = arith.constant 0 : i32
    %c0_i32_0 = arith.constant 0 : i32
    %c0_i32_1 = arith.constant 0 : i32
    %c0_i32_2 = arith.constant 0 : i32
    return %arg0, %c0_i32, %c0_i32_0, %c0_i32_1 : i32, i32, i32, i32
  }
}

</mosaic_0001>

<llo_original>
// kernel: tpu_custom_call.1
$region0: #{tpu_custom_call.1}
  #allocation0 [shape = 'u32[]', space=smem, size = 0x4, offset = 0x4, fixed_abs, tag = 'smem constant byte address 0x4 - core index']
  #allocation1 [shape = 'u32[144,128]{1,0:T(1,128)}', space=vmem, size = 0x12000, scoped, tag = 'internal scratch']
  #allocation2 [shape = 'bf16[18,18,128]{2,1,0:T(8,128)(2,1)}', space=vmem, size = 0x1b000, scoped, tag = 'scratch operand']
  #allocation3 [shape = 'f32[8,16,128]{2,1,0:T(8,128)}', space=vmem, size = 0x10000, scoped, tag = 'scratch operand']
  %s0 = inlined_call_operand.vmem [shape: bf16[2,18,18,128], index: 0, kind: input, shape index: {}]
  %s1 = inlined_call_operand.vmem [shape: bf16[5,256,128], index: 1, kind: input, shape index: {}]
  %s2 = inlined_call_operand.vmem [shape: f32[1,128], index: 2, kind: input, shape index: {}]
  %s3 = inlined_call_operand.hbm [shape: bf16[5,256,128], index: 3, kind: input, shape index: {}]
  %s4 = inlined_call_operand.vmem [shape: f32[1,128], index: 4, kind: input, shape index: {}]
  %s5 = inlined_call_operand.hbm [shape: bf16[2,8,8,128], index: 5, kind: output, shape index: {}]
  %s6 = sld [smem:[#allocation0]]
  $region61: #{tpu_custom_call.1} parent=0
    _
  %s8 = ssub.s32 1, %s6
  %s9 = scalar_select 0, %s8, %s6
  $region1: #{tpu_custom_call.1} parent=0
    #allocation4 [shape = 'u8[327680]{0}', space=vmem, size = 0x50000, scoped, tag = 'input window, operand 3, single buffered']
    #allocation5 [shape = 's32[2]{0}', space=sflag, size = 0x8, scoped, tag = 'scoped memory for tpu_custom_call.1']
    #allocation6 [shape = 's32[2]{0}', space=sflag, size = 0x8, scoped, tag = 'scoped memory for tpu_custom_call.1']
    #allocation7 [shape = 'u8[32768]{0}', space=vmem, size = 0x8000, scoped, tag = 'output window, operand 0']
    %10 = vsyncpa [#allocation5], 0
    %11 = vsyncpa [#allocation6], 0
    %s12 = scalar_lea.sflag [#allocation6], 1
    %13 = vsyncpa %s12, 0
    loop: start=0, step=1, limit=4
    $region2: #{tpu_custom_call.1} parent=1 // loop_pre_header
      _
    $region3: #{tpu_custom_call.1} parent=1 // loop_header
      %s15 = sphi 0, %s19
      %p16 = scmp.ge.s32.totalorder %s15, 4
      %s25 = sphi 0, %s27
      %s28 = sphi 0, %s25
      %s29 = sphi 0, %s28
      %s45 = sphi 0, %s29
      %s49 = sphi 0, %s49
      %s51 = sphi 0, %s49
      %s52 = sphi 0, %s51
      %s66 = sphi 0, %s52
      %s70 = sphi 0, %s70
      %s72 = sphi 0, %s70
      %s73 = sphi 0, %s72
      %s87 = sphi 0, %s73
      %s91 = sphi 0, %s91
      %s93 = sphi 0, %s91
      %s94 = sphi 0, %s93
      %s108 = sphi 0, %s94
      %s112 = sphi 0, %s112
      %s114 = sphi 0, %s112
      %s115 = sphi 0, %s114
      %s129 = sphi 0, %s115
      %s135 = sphi 0, %s137
      %s138 = sphi 0, %s135
      %s139 = sphi 0, %s138
      %s155 = sphi 0, %s139
    $region4: #{tpu_custom_call.1} parent=1 // loop_header_branch
      %18 = sbr.rel (%p16) target = $region8
    $region5: #{tpu_custom_call.1} parent=1 // loop_body
      %s20 = ssub.s32 %s15, 1
      %s21 = ssub.s32 %s15, 2
      %s22 = sadd.s32 %s15, 1
      %s23 = ssub.s32 %s15, %s22
      %p24 = scmp.eq.s32.totalorder %s23, 0
      %s26 = sadd.s32 %s25, 1
      %s27 = scalar_select %p24, %s25, %s26
      %p30 = pneg %p24
      %p31 = scmp.eq.s32.totalorder %s15, 1
      %p32 = por %p30, %p31
      %p33 = scmp.ne.s32.totalorder %s25, %s28
      %p34 = scmp.eq.s32.totalorder %s15, 0
      %p35 = por %p33, %p34
      %p36 = scmp.ne.s32.totalorder %s25, %s28
      %p37 = scmp.eq.s32.totalorder %s20, 1
      %p38 = por %p36, %p37
      %p39 = scmp.ne.s32.totalorder %s28, %s29
      %p40 = scmp.eq.s32.totalorder %s20, 0
      %p41 = por %p39, %p40
      %p42 = scmp.ne.s32.totalorder %s28, %s29
      %p43 = scmp.eq.s32.totalorder %s21, 1
      %p44 = por %p42, %p43
      %p46 = scmp.ne.s32.totalorder %s29, %s45
      %p47 = scmp.eq.s32.totalorder %s21, 0
      %p48 = por %p46, %p47
      %s50 = sadd.s32 %s49, 1
      %p53 = scmp.eq.s32.totalorder %s15, 1
      %p54 = scmp.ne.s32.totalorder %s49, %s51
      %p55 = scmp.eq.s32.totalorder %s15, 0
      %p56 = por %p54, %p55
      %p57 = scmp.ne.s32.totalorder %s49, %s51
      %p58 = scmp.eq.s32.totalorder %s20, 1
      %p59 = por %p57, %p58
      %p60 = scmp.ne.s32.totalorder %s51, %s52
      %p61 = scmp.eq.s32.totalorder %s20, 0
      %p62 = por %p60, %p61
      %p63 = scmp.ne.s32.totalorder %s51, %s52
      %p64 = scmp.eq.s32.totalorder %s21, 1
      %p65 = por %p63, %p64
      %p67 = scmp.ne.s32.totalorder %s52, %s66
      %p68 = scmp.eq.s32.totalorder %s21, 0
      %p69 = por %p67, %p68
      %s71 = sadd.s32 %s70, 1
      %p74 = scmp.eq.s32.totalorder %s15, 1
      %p75 = scmp.ne.s32.totalorder %s70, %s72
      %p76 = scmp.eq.s32.totalorder %s15, 0
      %p77 = por %p75, %p76
      %p78 = scmp.ne.s32.totalorder %s70, %s72
      %p79 = scmp.eq.s32.totalorder %s20, 1
      %p80 = por %p78, %p79
      %p81 = scmp.ne.s32.totalorder %s72, %s73
      %p82 = scmp.eq.s32.totalorder %s20, 0
      %p83 = por %p81, %p82
      %p84 = scmp.ne.s32.totalorder %s72, %s73
      %p85 = scmp.eq.s32.totalorder %s21, 1
      %p86 = por %p84, %p85
      %p88 = scmp.ne.s32.totalorder %s73, %s87
      %p89 = scmp.eq.s32.totalorder %s21, 0
      %p90 = por %p88, %p89
      %s92 = sadd.s32 %s91, 1
      %p95 = scmp.eq.s32.totalorder %s15, 1
      %p96 = scmp.ne.s32.totalorder %s91, %s93
      %p97 = scmp.eq.s32.totalorder %s15, 0
      %p98 = por %p96, %p97
      %p99 = scmp.ne.s32.totalorder %s91, %s93
      %p100 = scmp.eq.s32.totalorder %s20, 1
      %p101 = por %p99, %p100
      %p102 = scmp.ne.s32.totalorder %s93, %s94
      %p103 = scmp.eq.s32.totalorder %s20, 0
      %p104 = por %p102, %p103
      %p105 = scmp.ne.s32.totalorder %s93, %s94
      %p106 = scmp.eq.s32.totalorder %s21, 1
      %p107 = por %p105, %p106
      %p109 = scmp.ne.s32.totalorder %s94, %s108
      %p110 = scmp.eq.s32.totalorder %s21, 0
      %p111 = por %p109, %p110
      %s113 = sadd.s32 %s112, 1
      %p116 = scmp.eq.s32.totalorder %s15, 1
      %p117 = scmp.ne.s32.totalorder %s112, %s114
      %p118 = scmp.eq.s32.totalorder %s15, 0
      %p119 = por %p117, %p118
      %p120 = scmp.ne.s32.totalorder %s112, %s114
      %p121 = scmp.eq.s32.totalorder %s20, 1
      %p122 = por %p120, %p121
      %p123 = scmp.ne.s32.totalorder %s114, %s115
      %p124 = scmp.eq.s32.totalorder %s20, 0
      %p125 = por %p123, %p124
      %p126 = scmp.ne.s32.totalorder %s114, %s115
      %p127 = scmp.eq.s32.totalorder %s21, 1
      %p128 = por %p126, %p127
      %p130 = scmp.ne.s32.totalorder %s115, %s129
      %p131 = scmp.eq.s32.totalorder %s21, 0
      %p132 = por %p130, %p131
      %s133 = ssub.s32 %s15, %s22
      %p134 = scmp.eq.s32.totalorder %s133, 0
      %s136 = sadd.s32 %s135, 1
      %s137 = scalar_select %p134, %s135, %s136
      %p140 = pneg %p134
      %p141 = scmp.eq.s32.totalorder %s15, 1
      %p142 = por %p140, %p141
      %p143 = scmp.ne.s32.totalorder %s135, %s138
      %p144 = scmp.eq.s32.totalorder %s15, 0
      %p145 = por %p143, %p144
      %p146 = scmp.ne.s32.totalorder %s135, %s138
      %p147 = scmp.eq.s32.totalorder %s20, 1
      %p148 = por %p146, %p147
      %p149 = scmp.ne.s32.totalorder %s138, %s139
      %p150 = scmp.eq.s32.totalorder %s20, 0
      %p151 = por %p149, %p150
      %p152 = scmp.ne.s32.totalorder %s138, %s139
      %p153 = scmp.eq.s32.totalorder %s21, 1
      %p154 = por %p152, %p153
      %p156 = scmp.ne.s32.totalorder %s139, %s155
      %p157 = scmp.eq.s32.totalorder %s21, 0
      %p158 = por %p156, %p157
      %p159 = scmp.le.s32.totalorder 1, %s15
      %p160 = scmp.lt.s32.totalorder %s15, 3
      %p161 = pnand %p159, %p160
      %p162 = pneg %p161
      // Predicated region
      $region9: #{tpu_custom_call.1} parent=5 // pred_check
        _
      $region10: #{tpu_custom_call.1} parent=5 // pred_check_branch
        %164 = sbr.rel (%p161) target = $region12
      $region11: #{tpu_custom_call.1} parent=5 // pred_region
        %s165 = ssub.s32 %s15, 1
        // Predicated region
        $region13: #{tpu_custom_call.1} parent=11 // pred_check
          %p166 = pneg %p62
        $region14: #{tpu_custom_call.1} parent=11 // pred_check_branch
          %168 = sbr.rel (%p166) target = $region16
        $region15: #{tpu_custom_call.1} parent=11 // pred_region
          _
        $region16: #{tpu_custom_call.1} parent=11 // pred_fallthru
          _
        // Predicated region
        $region17: #{tpu_custom_call.1} parent=11 // pred_check
          %p169 = pneg %p83
        $region18: #{tpu_custom_call.1} parent=11 // pred_check_branch
          %171 = sbr.rel (%p169) target = $region20
        $region19: #{tpu_custom_call.1} parent=11 // pred_region
          _
        $region20: #{tpu_custom_call.1} parent=11 // pred_fallthru
          _
        // Predicated region
        $region21: #{tpu_custom_call.1} parent=11 // pred_check
          %p172 = pneg %p104
        $region22: #{tpu_custom_call.1} parent=11 // pred_check_branch
          %174 = sbr.rel (%p172) target = $region24
        $region23: #{tpu_custom_call.1} parent=11 // pred_region
          %s176 = ssub.s32 10240, 10240
          %177 = vsyncadd [#allocation5], %s176
          %s178 = sshll.u32 [#allocation4], 4
          %s179 = int_to_ptr.vmem [resolvable:$true] %s178
          %184 = dma.hbm_to_vmem [thread:$0]  %s3, 10240, %s179, [#allocation5], 64, 64, 4
        $region24: #{tpu_custom_call.1} parent=11 // pred_fallthru
          _
        // Predicated region
        $region25: #{tpu_custom_call.1} parent=11 // pred_check
          %p185 = pneg %p125
        $region26: #{tpu_custom_call.1} parent=11 // pred_check_branch
          %187 = sbr.rel (%p185) target = $region28
        $region27: #{tpu_custom_call.1} parent=11 // pred_region
          _
        $region28: #{tpu_custom_call.1} parent=11 // pred_fallthru
          _
      $region12: #{tpu_custom_call.1} parent=5 // pred_fallthru
        _
      %p188 = scmp.lt.s32.totalorder %s15, 2
      // Predicated region
      $region29: #{tpu_custom_call.1} parent=5 // pred_check
        %p189 = pneg %p188
      $region30: #{tpu_custom_call.1} parent=5 // pred_check_branch
        %191 = sbr.rel (%p189) target = $region32
      $region31: #{tpu_custom_call.1} parent=5 // pred_region
        // Predicated region
        $region33: #{tpu_custom_call.1} parent=31 // pred_check
          %p192 = pneg %p35
        $region34: #{tpu_custom_call.1} parent=31 // pred_check_branch
          %194 = sbr.rel (%p192) target = $region36
        $region35: #{tpu_custom_call.1} parent=31 // pred_region
          %p195 = scmp.lt.s32.totalorder %s15, 1
          %s196 = scalar_select %p195, %s15, 1
          %s197 = smul.addr %s196, 54
          %s198 = smul.addr %s197, 4
          %s199 = scalar_lea.vmem %s0, %s198
        $region36: #{tpu_custom_call.1} parent=31 // pred_fallthru
          _
      $region32: #{tpu_custom_call.1} parent=5 // pred_fallthru
        _
      %p200 = scmp.le.s32.totalorder 1, %s15
      %p201 = scmp.lt.s32.totalorder %s15, 3
      %p202 = pnand %p200, %p201
      %p203 = pneg %p202
      // Predicated region
      $region37: #{tpu_custom_call.1} parent=5 // pred_check
        _
      $region38: #{tpu_custom_call.1} parent=5 // pred_check_branch
        %205 = sbr.rel (%p202) target = $region40
      $region39: #{tpu_custom_call.1} parent=5 // pred_region
        %s206 = ssub.s32 %s15, 1
        // Predicated region
        $region41: #{tpu_custom_call.1} parent=39 // pred_check
          %p207 = pneg %p104
        $region42: #{tpu_custom_call.1} parent=39 // pred_check_branch
          %209 = sbr.rel (%p207) target = $region44
        $region43: #{tpu_custom_call.1} parent=39 // pred_region
          %210 = dma.done [#allocation5], 10240
        $region44: #{tpu_custom_call.1} parent=39 // pred_fallthru
          _
        %p211 = scmp.lt.s32.totalorder %s20, 1
        %s212 = scalar_select %p211, %s20, 1
        %s213 = smul.addr %s212, 54
        %s214 = smul.addr %s213, 4
        %s215 = scalar_lea.vmem %s0, %s214
        %p216 = pneg %p41
        %p217 = pneg %p38
        %p218 = pneg %p62
        %p219 = pneg %p59
        %p220 = pneg %p83
        %p221 = pneg %p80
        %p222 = pneg %p104
        %p223 = pneg %p101
        %p224 = pneg %p125
        %p225 = pneg %p122
        %p226 = pneg %p151
        %p227 = pneg %p148
        %s228 = sand.u32 %s138, 1
        %s229 = scalar_lea.sflag [#allocation6], %s228
        %s230 = sand.u32 %s138, 1
        %s231 = smul.addr %s230, 32
        %s232 = scalar_lea.vmem [#allocation7], %s231
        %p233 = scmp.lt.s32.totalorder %s20, 1
        %s234 = scalar_select %p233, %s20, 1
        %s235 = smul.addr %s234, 54
        %s236 = smul.addr %s235, 4
        %s237 = scalar_lea.vmem %s0, %s236
        %p239 = scmp.eq.s32.totalorder %s20, 0
        // Predicated region
        $region45: #{tpu_custom_call.1} parent=39 // pred_check
          %p240 = pneg %p239
        $region46: #{tpu_custom_call.1} parent=39 // pred_check_branch
          %242 = sbr.rel (%p240) target = $region48
        $region47: #{tpu_custom_call.1} parent=39 // pred_region
          %243 = vst [vmem:[#allocation2] sm:$0xf] 0
          %244 = vst [vmem:[#allocation2 + $0x4] sm:$0xf] 0
          %245 = vst [vmem:[#allocation2 + $0x8] sm:$0x1] 0
          %246 = vst [vmem:[#allocation2 + $0xc] sm:$0xf] 0
          %247 = vst [vmem:[#allocation2 + $0x10] sm:$0xf] 0
          %248 = vst [vmem:[#allocation2 + $0x14] sm:$0x1] 0
          %249 = vst [vmem:[#allocation2 + $0x18] sm:$0xf] 0
          %250 = vst [vmem:[#allocation2 + $0x1c] sm:$0xf] 0
          %251 = vst [vmem:[#allocation2 + $0x20] sm:$0x1] 0
          %252 = vst [vmem:[#allocation2 + $0x24] sm:$0xf] 0
          %253 = vst [vmem:[#allocation2 + $0x28] sm:$0xf] 0
          %254 = vst [vmem:[#allocation2 + $0x2c] sm:$0x1] 0
          %255 = vst [vmem:[#allocation2 + $0x30] sm:$0xf] 0
          %256 = vst [vmem:[#allocation2 + $0x34] sm:$0xf] 0
          %257 = vst [vmem:[#allocation2 + $0x38] sm:$0x1] 0
          %258 = vst [vmem:[#allocation2 + $0x3c] sm:$0xf] 0
          %259 = vst [vmem:[#allocation2 + $0x40] sm:$0xf] 0
          %260 = vst [vmem:[#allocation2 + $0x44] sm:$0x1] 0
          %261 = vst [vmem:[#allocation2 + $0x48] sm:$0xf] 0
          %262 = vst [vmem:[#allocation2 + $0x4c] sm:$0xf] 0
          %263 = vst [vmem:[#allocation2 + $0x50] sm:$0x1] 0
          %264 = vst [vmem:[#allocation2 + $0x54] sm:$0xf] 0
          %265 = vst [vmem:[#allocation2 + $0x58] sm:$0xf] 0
          %266 = vst [vmem:[#allocation2 + $0x5c] sm:$0x1] 0
          %267 = vst [vmem:[#allocation2 + $0x60] sm:$0xf] 0
          %268 = vst [vmem:[#allocation2 + $0x64] sm:$0xf] 0
          %269 = vst [vmem:[#allocation2 + $0x68] sm:$0x1] 0
          %270 = vst [vmem:[#allocation2 + $0x6c] sm:$0xf] 0
          %271 = vst [vmem:[#allocation2 + $0x70] sm:$0xf] 0
          %272 = vst [vmem:[#allocation2 + $0x74] sm:$0x1] 0
          %273 = vst [vmem:[#allocation2 + $0x78] sm:$0xf] 0
          %274 = vst [vmem:[#allocation2 + $0x7c] sm:$0xf] 0
          %275 = vst [vmem:[#allocation2 + $0x80] sm:$0x1] 0
          %276 = vst [vmem:[#allocation2 + $0x84] sm:$0xf] 0
          %277 = vst [vmem:[#allocation2 + $0x88] sm:$0xf] 0
          %278 = vst [vmem:[#allocation2 + $0x8c] sm:$0x1] 0
          %279 = vst [vmem:[#allocation2 + $0x90] sm:$0xf] 0
          %280 = vst [vmem:[#allocation2 + $0x94] sm:$0xf] 0
          %281 = vst [vmem:[#allocation2 + $0x98] sm:$0x1] 0
          %282 = vst [vmem:[#allocation2 + $0x9c] sm:$0xf] 0
          %283 = vst [vmem:[#allocation2 + $0xa0] sm:$0xf] 0
          %284 = vst [vmem:[#allocation2 + $0xa4] sm:$0x1] 0
          %285 = vst [vmem:[#allocation2 + $0xa8] sm:$0xf] 0
          %286 = vst [vmem:[#allocation2 + $0xac] sm:$0xf] 0
          %287 = vst [vmem:[#allocation2 + $0xb0] sm:$0x1] 0
          %288 = vst [vmem:[#allocation2 + $0xb4] sm:$0xf] 0
          %289 = vst [vmem:[#allocation2 + $0xb8] sm:$0xf] 0
          %290 = vst [vmem:[#allocation2 + $0xbc] sm:$0x1] 0
          %291 = vst [vmem:[#allocation2 + $0xc0] sm:$0xf] 0
          %292 = vst [vmem:[#allocation2 + $0xc4] sm:$0xf] 0
          %293 = vst [vmem:[#allocation2 + $0xc8] sm:$0x1] 0
          %294 = vst [vmem:[#allocation2 + $0xcc] sm:$0xf] 0
          %295 = vst [vmem:[#allocation2 + $0xd0] sm:$0xf] 0
          %296 = vst [vmem:[#allocation2 + $0xd4] sm:$0x1] 0
        $region48: #{tpu_custom_call.1} parent=39 // pred_fallthru
          _
        %v297 = vld [vmem:[%s237] sm:$0xf]
        %v298 = vld [vmem:[%s237 + $0x4] sm:$0xf]
        %v299 = vld [vmem:[%s237 + $0xc] sm:$0xf]
        %v300 = vld [vmem:[%s237 + $0x10] sm:$0xf]
        %v301 = vld [vmem:[%s237 + $0x18] sm:$0xf]
        %v302 = vld [vmem:[%s237 + $0x1c] sm:$0xf]
        %v303 = vld [vmem:[%s237 + $0x24] sm:$0xf]
        %v304 = vld [vmem:[%s237 + $0x28] sm:$0xf]
        %v305 = vld [vmem:[%s237 + $0x30] sm:$0xf]
        %v306 = vld [vmem:[%s237 + $0x34] sm:$0xf]
        %v307 = vld [vmem:[%s237 + $0x3c] sm:$0xf]
        %v308 = vld [vmem:[%s237 + $0x40] sm:$0xf]
        %v309 = vld [vmem:[%s237 + $0x48] sm:$0xf]
        %v310 = vld [vmem:[%s237 + $0x4c] sm:$0xf]
        %v311 = vld [vmem:[%s237 + $0x54] sm:$0xf]
        %v312 = vld [vmem:[%s237 + $0x58] sm:$0xf]
        %v313 = vld [vmem:[%s237 + $0x60] sm:$0xf]
        %v314 = vld [vmem:[%s237 + $0x64] sm:$0xf]
        %v315 = vld [vmem:[%s237 + $0x6c] sm:$0xf]
        %v316 = vld [vmem:[%s237 + $0x70] sm:$0xf]
        %v317 = vld [vmem:[%s237 + $0x78] sm:$0xf]
        %v318 = vld [vmem:[%s237 + $0x7c] sm:$0xf]
        %v319 = vld [vmem:[%s237 + $0x84] sm:$0xf]
        %v320 = vld [vmem:[%s237 + $0x88] sm:$0xf]
        %v321 = vld [vmem:[%s237 + $0x90] sm:$0xf]
        %v322 = vld [vmem:[%s237 + $0x94] sm:$0xf]
        %v323 = vld [vmem:[%s237 + $0x9c] sm:$0xf]
        %v324 = vld [vmem:[%s237 + $0xa0] sm:$0xf]
        %v325 = vld [vmem:[%s237 + $0xa8] sm:$0xf]
        %v326 = vld [vmem:[%s237 + $0xac] sm:$0xf]
        %v327 = vld [vmem:[%s237 + $0xb4] sm:$0xf]
        %v328 = vld [vmem:[%s237 + $0xb8] sm:$0xf]
        %v329 = vld [vmem:[%s237 + $0x8] sm:$0x1]
        %v330 = vld [vmem:[%s237 + $0x14] sm:$0x1]
        %v331 = vld [vmem:[%s237 + $0x20] sm:$0x1]
        %v332 = vld [vmem:[%s237 + $0x2c] sm:$0x1]
        %v333 = vld [vmem:[%s237 + $0x38] sm:$0x1]
        %v334 = vld [vmem:[%s237 + $0x44] sm:$0x1]
        %v335 = vld [vmem:[%s237 + $0x50] sm:$0x1]
        %v336 = vld [vmem:[%s237 + $0x5c] sm:$0x1]
        %v337 = vld [vmem:[%s237 + $0x68] sm:$0x1]
        %v338 = vld [vmem:[%s237 + $0x74] sm:$0x1]
        %v339 = vld [vmem:[%s237 + $0x80] sm:$0x1]
        %v340 = vld [vmem:[%s237 + $0x8c] sm:$0x1]
        %v341 = vld [vmem:[%s237 + $0x98] sm:$0x1]
        %v342 = vld [vmem:[%s237 + $0xa4] sm:$0x1]
        %v343 = vld [vmem:[%s237 + $0xb0] sm:$0x1]
        %v344 = vld [vmem:[%s237 + $0xbc] sm:$0x1]
        %vm345 = vsmask.f32 3328
        %vm346 = vsmask.f32 7440
        %vm347 = vmor %vm345, %vm346
        %v349 = vshrl.u32 %v297, 16
        %v351 = vrot.slane %v349, 4
        %v352 = vshll.u32 %v297, 16
        %v354 = vrot.slane %v352, 5
        %v355 = vor.u32 %v351, %v354
        %v356 = vrot.slane %v355, 4
        %v358 = vshll.u32 %v298, 16
        %v360 = vrot.slane %v358, 5
        %v361 = vsel %vm347, %v356, %v360
        %v362 = vshrl.u32 %v298, 16
        %v364 = vrot.slane %v362, 4
        %v365 = vor.u32 %v364, %v360
        %v366 = vrot.slane %v365, 4
        %v368 = vshll.u32 %v329, 16
        %v370 = vrot.slane %v368, 5
        %v371 = vsel %vm347, %v366, %v370
        %v373 = vshrl.u32 %v299, 16
        %v375 = vrot.slane %v373, 4
        %v376 = vshll.u32 %v299, 16
        %v378 = vrot.slane %v376, 5
        %v379 = vor.u32 %v375, %v378
        %v380 = vrot.slane %v379, 4
        %v382 = vshll.u32 %v300, 16
        %v384 = vrot.slane %v382, 5
        %v385 = vsel %vm347, %v380, %v384
        %v386 = vshrl.u32 %v300, 16
        %v388 = vrot.slane %v386, 4
        %v389 = vor.u32 %v388, %v384
        %v390 = vrot.slane %v389, 4
        %v392 = vshll.u32 %v330, 16
        %v394 = vrot.slane %v392, 5
        %v395 = vsel %vm347, %v390, %v394
        %v397 = vshrl.u32 %v301, 16
        %v399 = vrot.slane %v397, 4
        %v400 = vshll.u32 %v301, 16
        %v402 = vrot.slane %v400, 5
        %v403 = vor.u32 %v399, %v402
        %v404 = vrot.slane %v403, 4
        %v406 = vshll.u32 %v302, 16
        %v408 = vrot.slane %v406, 5
        %v409 = vsel %vm347, %v404, %v408
        %v410 = vshrl.u32 %v302, 16
        %v412 = vrot.slane %v410, 4
        %v413 = vor.u32 %v412, %v408
        %v414 = vrot.slane %v413, 4
        %v416 = vshll.u32 %v331, 16
        %v418 = vrot.slane %v416, 5
        %v419 = vsel %vm347, %v414, %v418
        %v421 = vshrl.u32 %v303, 16
        %v423 = vrot.slane %v421, 4
        %v424 = vshll.u32 %v303, 16
        %v426 = vrot.slane %v424, 5
        %v427 = vor.u32 %v423, %v426
        %v428 = vrot.slane %v427, 4
        %v430 = vshll.u32 %v304, 16
        %v432 = vrot.slane %v430, 5
        %v433 = vsel %vm347, %v428, %v432
        %v434 = vshrl.u32 %v304, 16
        %v436 = vrot.slane %v434, 4
        %v437 = vor.u32 %v436, %v432
        %v438 = vrot.slane %v437, 4
        %v440 = vshll.u32 %v332, 16
        %v442 = vrot.slane %v440, 5
        %v443 = vsel %vm347, %v438, %v442
        %v445 = vshrl.u32 %v305, 16
        %v447 = vrot.slane %v445, 4
        %v448 = vshll.u32 %v305, 16
        %v450 = vrot.slane %v448, 5
        %v451 = vor.u32 %v447, %v450
        %v452 = vrot.slane %v451, 4
        %v454 = vshll.u32 %v306, 16
        %v456 = vrot.slane %v454, 5
        %v457 = vsel %vm347, %v452, %v456
        %v458 = vshrl.u32 %v306, 16
        %v460 = vrot.slane %v458, 4
        %v461 = vor.u32 %v460, %v456
        %v462 = vrot.slane %v461, 4
        %v464 = vshll.u32 %v333, 16
        %v466 = vrot.slane %v464, 5
        %v467 = vsel %vm347, %v462, %v466
        %v469 = vshrl.u32 %v307, 16
        %v471 = vrot.slane %v469, 4
        %v472 = vshll.u32 %v307, 16
        %v474 = vrot.slane %v472, 5
        %v475 = vor.u32 %v471, %v474
        %v476 = vrot.slane %v475, 4
        %v478 = vshll.u32 %v308, 16
        %v480 = vrot.slane %v478, 5
        %v481 = vsel %vm347, %v476, %v480
        %v482 = vshrl.u32 %v308, 16
        %v484 = vrot.slane %v482, 4
        %v485 = vor.u32 %v484, %v480
        %v486 = vrot.slane %v485, 4
        %v488 = vshll.u32 %v334, 16
        %v490 = vrot.slane %v488, 5
        %v491 = vsel %vm347, %v486, %v490
        %v493 = vshrl.u32 %v309, 16
        %v495 = vrot.slane %v493, 4
        %v496 = vshll.u32 %v309, 16
        %v498 = vrot.slane %v496, 5
        %v499 = vor.u32 %v495, %v498
        %v500 = vrot.slane %v499, 4
        %v502 = vshll.u32 %v310, 16
        %v504 = vrot.slane %v502, 5
        %v505 = vsel %vm347, %v500, %v504
        %v506 = vshrl.u32 %v310, 16
        %v508 = vrot.slane %v506, 4
        %v509 = vor.u32 %v508, %v504
        %v510 = vrot.slane %v509, 4
        %v512 = vshll.u32 %v335, 16
        %v514 = vrot.slane %v512, 5
        %v515 = vsel %vm347, %v510, %v514
        %v517 = vshrl.u32 %v311, 16
        %v519 = vrot.slane %v517, 4
        %v520 = vshll.u32 %v311, 16
        %v522 = vrot.slane %v520, 5
        %v523 = vor.u32 %v519, %v522
        %v524 = vrot.slane %v523, 4
        %v526 = vshll.u32 %v312, 16
        %v528 = vrot.slane %v526, 5
        %v529 = vsel %vm347, %v524, %v528
        %v530 = vshrl.u32 %v312, 16
        %v532 = vrot.slane %v530, 4
        %v533 = vor.u32 %v532, %v528
        %v534 = vrot.slane %v533, 4
        %v536 = vshll.u32 %v336, 16
        %v538 = vrot.slane %v536, 5
        %v539 = vsel %vm347, %v534, %v538
        %v541 = vshrl.u32 %v313, 16
        %v543 = vrot.slane %v541, 4
        %v544 = vshll.u32 %v313, 16
        %v546 = vrot.slane %v544, 5
        %v547 = vor.u32 %v543, %v546
        %v548 = vrot.slane %v547, 4
        %v550 = vshll.u32 %v314, 16
        %v552 = vrot.slane %v550, 5
        %v553 = vsel %vm347, %v548, %v552
        %v554 = vshrl.u32 %v314, 16
        %v556 = vrot.slane %v554, 4
        %v557 = vor.u32 %v556, %v552
        %v558 = vrot.slane %v557, 4
        %v560 = vshll.u32 %v337, 16
        %v562 = vrot.slane %v560, 5
        %v563 = vsel %vm347, %v558, %v562
        %v565 = vshrl.u32 %v315, 16
        %v567 = vrot.slane %v565, 4
        %v568 = vshll.u32 %v315, 16
        %v570 = vrot.slane %v568, 5
        %v571 = vor.u32 %v567, %v570
        %v572 = vrot.slane %v571, 4
        %v574 = vshll.u32 %v316, 16
        %v576 = vrot.slane %v574, 5
        %v577 = vsel %vm347, %v572, %v576
        %v578 = vshrl.u32 %v316, 16
        %v580 = vrot.slane %v578, 4
        %v581 = vor.u32 %v580, %v576
        %v582 = vrot.slane %v581, 4
        %v584 = vshll.u32 %v338, 16
        %v586 = vrot.slane %v584, 5
        %v587 = vsel %vm347, %v582, %v586
        %v589 = vshrl.u32 %v317, 16
        %v591 = vrot.slane %v589, 4
        %v592 = vshll.u32 %v317, 16
        %v594 = vrot.slane %v592, 5
        %v595 = vor.u32 %v591, %v594
        %v596 = vrot.slane %v595, 4
        %v598 = vshll.u32 %v318, 16
        %v600 = vrot.slane %v598, 5
        %v601 = vsel %vm347, %v596, %v600
        %v602 = vshrl.u32 %v318, 16
        %v604 = vrot.slane %v602, 4
        %v605 = vor.u32 %v604, %v600
        %v606 = vrot.slane %v605, 4
        %v608 = vshll.u32 %v339, 16
        %v610 = vrot.slane %v608, 5
        %v611 = vsel %vm347, %v606, %v610
        %v613 = vshrl.u32 %v319, 16
        %v615 = vrot.slane %v613, 4
        %v616 = vshll.u32 %v319, 16
        %v618 = vrot.slane %v616, 5
        %v619 = vor.u32 %v615, %v618
        %v620 = vrot.slane %v619, 4
        %v622 = vshll.u32 %v320, 16
        %v624 = vrot.slane %v622, 5
        %v625 = vsel %vm347, %v620, %v624
        %v626 = vshrl.u32 %v320, 16
        %v628 = vrot.slane %v626, 4
        %v629 = vor.u32 %v628, %v624
        %v630 = vrot.slane %v629, 4
        %v632 = vshll.u32 %v340, 16
        %v634 = vrot.slane %v632, 5
        %v635 = vsel %vm347, %v630, %v634
        %v637 = vshrl.u32 %v321, 16
        %v639 = vrot.slane %v637, 4
        %v640 = vshll.u32 %v321, 16
        %v642 = vrot.slane %v640, 5
        %v643 = vor.u32 %v639, %v642
        %v644 = vrot.slane %v643, 4
        %v646 = vshll.u32 %v322, 16
        %v648 = vrot.slane %v646, 5
        %v649 = vsel %vm347, %v644, %v648
        %v650 = vshrl.u32 %v322, 16
        %v652 = vrot.slane %v650, 4
        %v653 = vor.u32 %v652, %v648
        %v654 = vrot.slane %v653, 4
        %v656 = vshll.u32 %v341, 16
        %v658 = vrot.slane %v656, 5
        %v659 = vsel %vm347, %v654, %v658
        %v661 = vshrl.u32 %v323, 16
        %v663 = vrot.slane %v661, 4
        %v664 = vshll.u32 %v323, 16
        %v666 = vrot.slane %v664, 5
        %v667 = vor.u32 %v663, %v666
        %v668 = vrot.slane %v667, 4
        %v670 = vshll.u32 %v324, 16
        %v672 = vrot.slane %v670, 5
        %v673 = vsel %vm347, %v668, %v672
        %v674 = vshrl.u32 %v324, 16
        %v676 = vrot.slane %v674, 4
        %v677 = vor.u32 %v676, %v672
        %v678 = vrot.slane %v677, 4
        %v680 = vshll.u32 %v342, 16
        %v682 = vrot.slane %v680, 5
        %v683 = vsel %vm347, %v678, %v682
        %v685 = vshrl.u32 %v325, 16
        %v687 = vrot.slane %v685, 4
        %v688 = vshll.u32 %v325, 16
        %v690 = vrot.slane %v688, 5
        %v691 = vor.u32 %v687, %v690
        %v692 = vrot.slane %v691, 4
        %v694 = vshll.u32 %v326, 16
        %v696 = vrot.slane %v694, 5
        %v697 = vsel %vm347, %v692, %v696
        %v698 = vshrl.u32 %v326, 16
        %v700 = vrot.slane %v698, 4
        %v701 = vor.u32 %v700, %v696
        %v702 = vrot.slane %v701, 4
        %v704 = vshll.u32 %v343, 16
        %v706 = vrot.slane %v704, 5
        %v707 = vsel %vm347, %v702, %v706
        %v709 = vshrl.u32 %v327, 16
        %v711 = vrot.slane %v709, 4
        %v712 = vshll.u32 %v327, 16
        %v714 = vrot.slane %v712, 5
        %v715 = vor.u32 %v711, %v714
        %v716 = vrot.slane %v715, 4
        %v718 = vshll.u32 %v328, 16
        %v720 = vrot.slane %v718, 5
        %v721 = vsel %vm347, %v716, %v720
        %v722 = vshrl.u32 %v328, 16
        %v724 = vrot.slane %v722, 4
        %v725 = vor.u32 %v724, %v720
        %v726 = vrot.slane %v725, 4
        %v728 = vshll.u32 %v344, 16
        %v730 = vrot.slane %v728, 5
        %v731 = vsel %vm347, %v726, %v730
        %v764 = vunpack.c.l.b16 %v297
        %v765 = vunpack.c.l.b16 %v298
        %v766 = vunpack.c.l.b16 %v299
        %v767 = vunpack.c.l.b16 %v300
        %v768 = vunpack.c.l.b16 %v301
        %v769 = vunpack.c.l.b16 %v302
        %v770 = vunpack.c.l.b16 %v303
        %v771 = vunpack.c.l.b16 %v304
        %v772 = vunpack.c.l.b16 %v305
        %v773 = vunpack.c.l.b16 %v306
        %v774 = vunpack.c.l.b16 %v307
        %v775 = vunpack.c.l.b16 %v308
        %v776 = vunpack.c.l.b16 %v309
        %v777 = vunpack.c.l.b16 %v310
        %v778 = vunpack.c.l.b16 %v311
        %v779 = vunpack.c.l.b16 %v312
        %v780 = vunpack.c.l.b16 %v313
        %v781 = vunpack.c.l.b16 %v314
        %v782 = vunpack.c.l.b16 %v315
        %v783 = vunpack.c.l.b16 %v316
        %v784 = vunpack.c.l.b16 %v317
        %v785 = vunpack.c.l.b16 %v318
        %v786 = vunpack.c.l.b16 %v319
        %v787 = vunpack.c.l.b16 %v320
        %v788 = vunpack.c.l.b16 %v321
        %v789 = vunpack.c.l.b16 %v322
        %v790 = vunpack.c.l.b16 %v323
        %v791 = vunpack.c.l.b16 %v324
        %v792 = vunpack.c.l.b16 %v325
        %v793 = vunpack.c.l.b16 %v326
        %v794 = vunpack.c.l.b16 %v327
        %v795 = vunpack.c.l.b16 %v328
        %v796 = vpack.c.b16 %v765, %v764
        %v797 = vpack.c.b16 %v767, %v766
        %v798 = vpack.c.b16 %v769, %v768
        %v799 = vpack.c.b16 %v771, %v770
        %v800 = vpack.c.b16 %v773, %v772
        %v801 = vpack.c.b16 %v775, %v774
        %v802 = vpack.c.b16 %v777, %v776
        %v803 = vpack.c.b16 %v779, %v778
        %v804 = vpack.c.b16 %v781, %v780
        %v805 = vpack.c.b16 %v783, %v782
        %v806 = vpack.c.b16 %v785, %v784
        %v807 = vpack.c.b16 %v787, %v786
        %v808 = vpack.c.b16 %v789, %v788
        %v809 = vpack.c.b16 %v791, %v790
        %v810 = vpack.c.b16 %v793, %v792
        %v811 = vpack.c.b16 %v795, %v794
        %v828 = vunpack.c.l.b16 %v361
        %v829 = vunpack.c.l.b16 %v371
        %v830 = vunpack.c.l.b16 %v385
        %v831 = vunpack.c.l.b16 %v395
        %v832 = vunpack.c.l.b16 %v409
        %v833 = vunpack.c.l.b16 %v419
        %v834 = vunpack.c.l.b16 %v433
        %v835 = vunpack.c.l.b16 %v443
        %v836 = vunpack.c.l.b16 %v457
        %v837 = vunpack.c.l.b16 %v467
        %v838 = vunpack.c.l.b16 %v481
        %v839 = vunpack.c.l.b16 %v491
        %v840 = vunpack.c.l.b16 %v505
        %v841 = vunpack.c.l.b16 %v515
        %v842 = vunpack.c.l.b16 %v529
        %v843 = vunpack.c.l.b16 %v539
        %v844 = vunpack.c.l.b16 %v553
        %v845 = vunpack.c.l.b16 %v563
        %v846 = vunpack.c.l.b16 %v577
        %v847 = vunpack.c.l.b16 %v587
        %v848 = vunpack.c.l.b16 %v601
        %v849 = vunpack.c.l.b16 %v611
        %v850 = vunpack.c.l.b16 %v625
        %v851 = vunpack.c.l.b16 %v635
        %v852 = vunpack.c.l.b16 %v649
        %v853 = vunpack.c.l.b16 %v659
        %v854 = vunpack.c.l.b16 %v673
        %v855 = vunpack.c.l.b16 %v683
        %v856 = vunpack.c.l.b16 %v697
        %v857 = vunpack.c.l.b16 %v707
        %v858 = vunpack.c.l.b16 %v721
        %v859 = vunpack.c.l.b16 %v731
        %v860 = vpack.c.b16 %v829, %v828
        %v861 = vpack.c.b16 %v831, %v830
        %v862 = vpack.c.b16 %v833, %v832
        %v863 = vpack.c.b16 %v835, %v834
        %v864 = vpack.c.b16 %v837, %v836
        %v865 = vpack.c.b16 %v839, %v838
        %v866 = vpack.c.b16 %v841, %v840
        %v867 = vpack.c.b16 %v843, %v842
        %v868 = vpack.c.b16 %v845, %v844
        %v869 = vpack.c.b16 %v847, %v846
        %v870 = vpack.c.b16 %v849, %v848
        %v871 = vpack.c.b16 %v851, %v850
        %v872 = vpack.c.b16 %v853, %v852
        %v873 = vpack.c.b16 %v855, %v854
        %v874 = vpack.c.b16 %v857, %v856
        %v875 = vpack.c.b16 %v859, %v858
        %v892 = vld [vmem:[%s1] sm:$0xf]
        %v893 = vld [vmem:[%s1 + $0x4] sm:$0xf]
        %v894 = vld [vmem:[%s1 + $0x8] sm:$0xf]
        %v895 = vld [vmem:[%s1 + $0xc] sm:$0xf]
        %v896 = vld [vmem:[%s1 + $0x10] sm:$0xf]
        %v897 = vld [vmem:[%s1 + $0x14] sm:$0xf]
        %v898 = vld [vmem:[%s1 + $0x18] sm:$0xf]
        %v899 = vld [vmem:[%s1 + $0x1c] sm:$0xf]
        %v900 = vld [vmem:[%s1 + $0x20] sm:$0xf]
        %v901 = vld [vmem:[%s1 + $0x24] sm:$0xf]
        %v902 = vld [vmem:[%s1 + $0x28] sm:$0xf]
        %v903 = vld [vmem:[%s1 + $0x2c] sm:$0xf]
        %v904 = vld [vmem:[%s1 + $0x30] sm:$0xf]
        %v905 = vld [vmem:[%s1 + $0x34] sm:$0xf]
        %v906 = vld [vmem:[%s1 + $0x38] sm:$0xf]
        %v907 = vld [vmem:[%s1 + $0x3c] sm:$0xf]
        %v908 = vld [vmem:[%s1 + $0x40] sm:$0xf]
        %v909 = vld [vmem:[%s1 + $0x44] sm:$0xf]
        %v910 = vld [vmem:[%s1 + $0x48] sm:$0xf]
        %v911 = vld [vmem:[%s1 + $0x4c] sm:$0xf]
        %v912 = vld [vmem:[%s1 + $0x50] sm:$0xf]
        %v913 = vld [vmem:[%s1 + $0x54] sm:$0xf]
        %v914 = vld [vmem:[%s1 + $0x58] sm:$0xf]
        %v915 = vld [vmem:[%s1 + $0x5c] sm:$0xf]
        %v916 = vld [vmem:[%s1 + $0x60] sm:$0xf]
        %v917 = vld [vmem:[%s1 + $0x64] sm:$0xf]
        %v918 = vld [vmem:[%s1 + $0x68] sm:$0xf]
        %v919 = vld [vmem:[%s1 + $0x6c] sm:$0xf]
        %v920 = vld [vmem:[%s1 + $0x70] sm:$0xf]
        %v921 = vld [vmem:[%s1 + $0x74] sm:$0xf]
        %v922 = vld [vmem:[%s1 + $0x78] sm:$0xf]
        %v923 = vld [vmem:[%s1 + $0x7c] sm:$0xf]
        %v924 = vld [vmem:[%s237] sm:$0xe]
        %v925 = vld [vmem:[%s237 + $0xc] sm:$0xe]
        %v926 = vld [vmem:[%s237 + $0x18] sm:$0xe]
        %v927 = vld [vmem:[%s237 + $0x24] sm:$0xe]
        %v928 = vld [vmem:[%s237 + $0x30] sm:$0xe]
        %v929 = vld [vmem:[%s237 + $0x3c] sm:$0xe]
        %v930 = vld [vmem:[%s237 + $0x48] sm:$0xe]
        %v931 = vld [vmem:[%s237 + $0x54] sm:$0xe]
        %v932 = vld [vmem:[%s237 + $0x60] sm:$0xe]
        %v933 = vld [vmem:[%s237 + $0x6c] sm:$0xe]
        %v934 = vld [vmem:[%s237 + $0x78] sm:$0xe]
        %v935 = vld [vmem:[%s237 + $0x84] sm:$0xe]
        %v936 = vld [vmem:[%s237 + $0x90] sm:$0xe]
        %v937 = vld [vmem:[%s237 + $0x9c] sm:$0xe]
        %v938 = vld [vmem:[%s237 + $0xa8] sm:$0xe]
        %v939 = vld [vmem:[%s237 + $0xb4] sm:$0xe]
        %vm972 = vcmask 1042432
        %vm973 = vcmask 1046532
        %vm974 = vmor %vm972, %vm973
        %v975 = vrot.slane %v924, 5
        %v976 = vrot.slane %v975, 4
        %v977 = vrot.slane %v298, 5
        %v978 = vsel %vm974, %v976, %v977
        %v979 = vrot.slane %v977, 4
        %v980 = vrot.slane %v329, 5
        %v981 = vsel %vm974, %v979, %v980
        %v982 = vrot.slane %v925, 5
        %v983 = vrot.slane %v982, 4
        %v984 = vrot.slane %v300, 5
        %v985 = vsel %vm974, %v983, %v984
        %v986 = vrot.slane %v984, 4
        %v987 = vrot.slane %v330, 5
        %v988 = vsel %vm974, %v986, %v987
        %v989 = vrot.slane %v926, 5
        %v990 = vrot.slane %v989, 4
        %v991 = vrot.slane %v302, 5
        %v992 = vsel %vm974, %v990, %v991
        %v993 = vrot.slane %v991, 4
        %v994 = vrot.slane %v331, 5
        %v995 = vsel %vm974, %v993, %v994
        %v996 = vrot.slane %v927, 5
        %v997 = vrot.slane %v996, 4
        %v998 = vrot.slane %v304, 5
        %v999 = vsel %vm974, %v997, %v998
        %v1000 = vrot.slane %v998, 4
        %v1001 = vrot.slane %v332, 5
        %v1002 = vsel %vm974, %v1000, %v1001
        %v1003 = vrot.slane %v928, 5
        %v1004 = vrot.slane %v1003, 4
        %v1005 = vrot.slane %v306, 5
        %v1006 = vsel %vm974, %v1004, %v1005
        %v1007 = vrot.slane %v1005, 4
        %v1008 = vrot.slane %v333, 5
        %v1009 = vsel %vm974, %v1007, %v1008
        %v1010 = vrot.slane %v929, 5
        %v1011 = vrot.slane %v1010, 4
        %v1012 = vrot.slane %v308, 5
        %v1013 = vsel %vm974, %v1011, %v1012
        %v1014 = vrot.slane %v1012, 4
        %v1015 = vrot.slane %v334, 5
        %v1016 = vsel %vm974, %v1014, %v1015
        %v1017 = vrot.slane %v930, 5
        %v1018 = vrot.slane %v1017, 4
        %v1019 = vrot.slane %v310, 5
        %v1020 = vsel %vm974, %v1018, %v1019
        %v1021 = vrot.slane %v1019, 4
        %v1022 = vrot.slane %v335, 5
        %v1023 = vsel %vm974, %v1021, %v1022
        %v1024 = vrot.slane %v931, 5
        %v1025 = vrot.slane %v1024, 4
        %v1026 = vrot.slane %v312, 5
        %v1027 = vsel %vm974, %v1025, %v1026
        %v1028 = vrot.slane %v1026, 4
        %v1029 = vrot.slane %v336, 5
        %v1030 = vsel %vm974, %v1028, %v1029
        %v1031 = vrot.slane %v932, 5
        %v1032 = vrot.slane %v1031, 4
        %v1033 = vrot.slane %v314, 5
        %v1034 = vsel %vm974, %v1032, %v1033
        %v1035 = vrot.slane %v1033, 4
        %v1036 = vrot.slane %v337, 5
        %v1037 = vsel %vm974, %v1035, %v1036
        %v1038 = vrot.slane %v933, 5
        %v1039 = vrot.slane %v1038, 4
        %v1040 = vrot.slane %v316, 5
        %v1041 = vsel %vm974, %v1039, %v1040
        %v1042 = vrot.slane %v1040, 4
        %v1043 = vrot.slane %v338, 5
        %v1044 = vsel %vm974, %v1042, %v1043
        %v1045 = vrot.slane %v934, 5
        %v1046 = vrot.slane %v1045, 4
        %v1047 = vrot.slane %v318, 5
        %v1048 = vsel %vm974, %v1046, %v1047
        %v1049 = vrot.slane %v1047, 4
        %v1050 = vrot.slane %v339, 5
        %v1051 = vsel %vm974, %v1049, %v1050
        %v1052 = vrot.slane %v935, 5
        %v1053 = vrot.slane %v1052, 4
        %v1054 = vrot.slane %v320, 5
        %v1055 = vsel %vm974, %v1053, %v1054
        %v1056 = vrot.slane %v1054, 4
        %v1057 = vrot.slane %v340, 5
        %v1058 = vsel %vm974, %v1056, %v1057
        %v1059 = vrot.slane %v936, 5
        %v1060 = vrot.slane %v1059, 4
        %v1061 = vrot.slane %v322, 5
        %v1062 = vsel %vm974, %v1060, %v1061
        %v1063 = vrot.slane %v1061, 4
        %v1064 = vrot.slane %v341, 5
        %v1065 = vsel %vm974, %v1063, %v1064
        %v1066 = vrot.slane %v937, 5
        %v1067 = vrot.slane %v1066, 4
        %v1068 = vrot.slane %v324, 5
        %v1069 = vsel %vm974, %v1067, %v1068
        %v1070 = vrot.slane %v1068, 4
        %v1071 = vrot.slane %v342, 5
        %v1072 = vsel %vm974, %v1070, %v1071
        %v1073 = vrot.slane %v938, 5
        %v1074 = vrot.slane %v1073, 4
        %v1075 = vrot.slane %v326, 5
        %v1076 = vsel %vm974, %v1074, %v1075
        %v1077 = vrot.slane %v1075, 4
        %v1078 = vrot.slane %v343, 5
        %v1079 = vsel %vm974, %v1077, %v1078
        %v1080 = vrot.slane %v939, 5
        %v1081 = vrot.slane %v1080, 4
        %v1082 = vrot.slane %v328, 5
        %v1083 = vsel %vm974, %v1081, %v1082
        %v1084 = vrot.slane %v1082, 4
        %v1085 = vrot.slane %v344, 5
        %v1086 = vsel %vm974, %v1084, %v1085
        %s1087 = scalar_lea.vmem %s237, 12
        %v1088 = vld [vmem:[%s1087] sm:$0xf]
        %v1089 = vld [vmem:[%s1087 + $0x4] sm:$0xf]
        %v1090 = vld [vmem:[%s1087 + $0xc] sm:$0xf]
        %v1091 = vld [vmem:[%s1087 + $0x10] sm:$0xf]
        %v1092 = vld [vmem:[%s1087 + $0x18] sm:$0xf]
        %v1093 = vld [vmem:[%s1087 + $0x1c] sm:$0xf]
        %v1094 = vld [vmem:[%s1087 + $0x24] sm:$0xf]
        %v1095 = vld [vmem:[%s1087 + $0x28] sm:$0xf]
        %v1096 = vld [vmem:[%s1087 + $0x30] sm:$0xf]
        %v1097 = vld [vmem:[%s1087 + $0x34] sm:$0xf]
        %v1098 = vld [vmem:[%s1087 + $0x3c] sm:$0xf]
        %v1099 = vld [vmem:[%s1087 + $0x40] sm:$0xf]
        %v1100 = vld [vmem:[%s1087 + $0x48] sm:$0xf]
        %v1101 = vld [vmem:[%s1087 + $0x4c] sm:$0xf]
        %v1102 = vld [vmem:[%s1087 + $0x54] sm:$0xf]
        %v1103 = vld [vmem:[%s1087 + $0x58] sm:$0xf]
        %v1104 = vld [vmem:[%s1087 + $0x60] sm:$0xf]
        %v1105 = vld [vmem:[%s1087 + $0x64] sm:$0xf]
        %v1106 = vld [vmem:[%s1087 + $0x6c] sm:$0xf]
        %v1107 = vld [vmem:[%s1087 + $0x70] sm:$0xf]
        %v1108 = vld [vmem:[%s1087 + $0x78] sm:$0xf]
        %v1109 = vld [vmem:[%s1087 + $0x7c] sm:$0xf]
        %v1110 = vld [vmem:[%s1087 + $0x84] sm:$0xf]
        %v1111 = vld [vmem:[%s1087 + $0x88] sm:$0xf]
        %v1112 = vld [vmem:[%s1087 + $0x90] sm:$0xf]
        %v1113 = vld [vmem:[%s1087 + $0x94] sm:$0xf]
        %v1114 = vld [vmem:[%s1087 + $0x9c] sm:$0xf]
        %v1115 = vld [vmem:[%s1087 + $0xa0] sm:$0xf]
        %v1116 = vld [vmem:[%s1087 + $0xa8] sm:$0xf]
        %v1117 = vld [vmem:[%s1087 + $0xac] sm:$0xf]
        %v1118 = vld [vmem:[%s1087 + $0xb4] sm:$0xf]
        %v1119 = vld [vmem:[%s1087 + $0xb8] sm:$0xf]
        %v1120 = vunpack.c.l.b16 %v978
        %v1121 = vunpack.c.l.b16 %v981
        %v1122 = vunpack.c.l.b16 %v985
        %v1123 = vunpack.c.l.b16 %v988
        %v1124 = vunpack.c.l.b16 %v992
        %v1125 = vunpack.c.l.b16 %v995
        %v1126 = vunpack.c.l.b16 %v999
        %v1127 = vunpack.c.l.b16 %v1002
        %v1128 = vunpack.c.l.b16 %v1006
        %v1129 = vunpack.c.l.b16 %v1009
        %v1130 = vunpack.c.l.b16 %v1013
        %v1131 = vunpack.c.l.b16 %v1016
        %v1132 = vunpack.c.l.b16 %v1020
        %v1133 = vunpack.c.l.b16 %v1023
        %v1134 = vunpack.c.l.b16 %v1027
        %v1135 = vunpack.c.l.b16 %v1030
        %v1136 = vunpack.c.l.b16 %v1034
        %v1137 = vunpack.c.l.b16 %v1037
        %v1138 = vunpack.c.l.b16 %v1041
        %v1139 = vunpack.c.l.b16 %v1044
        %v1140 = vunpack.c.l.b16 %v1048
        %v1141 = vunpack.c.l.b16 %v1051
        %v1142 = vunpack.c.l.b16 %v1055
        %v1143 = vunpack.c.l.b16 %v1058
        %v1144 = vunpack.c.l.b16 %v1062
        %v1145 = vunpack.c.l.b16 %v1065
        %v1146 = vunpack.c.l.b16 %v1069
        %v1147 = vunpack.c.l.b16 %v1072
        %v1148 = vunpack.c.l.b16 %v1076
        %v1149 = vunpack.c.l.b16 %v1079
        %v1150 = vunpack.c.l.b16 %v1083
        %v1151 = vunpack.c.l.b16 %v1086
        %v1152 = vpack.c.b16 %v1121, %v1120
        %v1153 = vpack.c.b16 %v1123, %v1122
        %v1154 = vpack.c.b16 %v1125, %v1124
        %v1155 = vpack.c.b16 %v1127, %v1126
        %v1156 = vpack.c.b16 %v1129, %v1128
        %v1157 = vpack.c.b16 %v1131, %v1130
        %v1158 = vpack.c.b16 %v1133, %v1132
        %v1159 = vpack.c.b16 %v1135, %v1134
        %v1160 = vpack.c.b16 %v1137, %v1136
        %v1161 = vpack.c.b16 %v1139, %v1138
        %v1162 = vpack.c.b16 %v1141, %v1140
        %v1163 = vpack.c.b16 %v1143, %v1142
        %v1164 = vpack.c.b16 %v1145, %v1144
        %v1165 = vpack.c.b16 %v1147, %v1146
        %v1166 = vpack.c.b16 %v1149, %v1148
        %v1167 = vpack.c.b16 %v1151, %v1150
        %v1216 = vunpack.c.l.b16 %v1088
        %v1217 = vunpack.c.l.b16 %v1089
        %v1218 = vunpack.c.l.b16 %v1090
        %v1219 = vunpack.c.l.b16 %v1091
        %v1220 = vunpack.c.l.b16 %v1092
        %v1221 = vunpack.c.l.b16 %v1093
        %v1222 = vunpack.c.l.b16 %v1094
        %v1223 = vunpack.c.l.b16 %v1095
        %v1224 = vunpack.c.l.b16 %v1096
        %v1225 = vunpack.c.l.b16 %v1097
        %v1226 = vunpack.c.l.b16 %v1098
        %v1227 = vunpack.c.l.b16 %v1099
        %v1228 = vunpack.c.l.b16 %v1100
        %v1229 = vunpack.c.l.b16 %v1101
        %v1230 = vunpack.c.l.b16 %v1102
        %v1231 = vunpack.c.l.b16 %v1103
        %v1232 = vunpack.c.l.b16 %v1104
        %v1233 = vunpack.c.l.b16 %v1105
        %v1234 = vunpack.c.l.b16 %v1106
        %v1235 = vunpack.c.l.b16 %v1107
        %v1236 = vunpack.c.l.b16 %v1108
        %v1237 = vunpack.c.l.b16 %v1109
        %v1238 = vunpack.c.l.b16 %v1110
        %v1239 = vunpack.c.l.b16 %v1111
        %v1240 = vunpack.c.l.b16 %v1112
        %v1241 = vunpack.c.l.b16 %v1113
        %v1242 = vunpack.c.l.b16 %v1114
        %v1243 = vunpack.c.l.b16 %v1115
        %v1244 = vunpack.c.l.b16 %v1116
        %v1245 = vunpack.c.l.b16 %v1117
        %v1246 = vunpack.c.l.b16 %v1118
        %v1247 = vunpack.c.l.b16 %v1119
        %v1248 = vpack.c.b16 %v1217, %v1216
        %v1249 = vpack.c.b16 %v1219, %v1218
        %v1250 = vpack.c.b16 %v1221, %v1220
        %v1251 = vpack.c.b16 %v1223, %v1222
        %v1252 = vpack.c.b16 %v1225, %v1224
        %v1253 = vpack.c.b16 %v1227, %v1226
        %v1254 = vpack.c.b16 %v1229, %v1228
        %v1255 = vpack.c.b16 %v1231, %v1230
        %v1256 = vpack.c.b16 %v1233, %v1232
        %v1257 = vpack.c.b16 %v1235, %v1234
        %v1258 = vpack.c.b16 %v1237, %v1236
        %v1259 = vpack.c.b16 %v1239, %v1238
        %v1260 = vpack.c.b16 %v1241, %v1240
        %v1261 = vpack.c.b16 %v1243, %v1242
        %v1262 = vpack.c.b16 %v1245, %v1244
        %v1263 = vpack.c.b16 %v1247, %v1246
        %s1280 = scalar_lea.vmem %s1, 128
        %v1281 = vld [vmem:[%s1280] sm:$0xf]
        %v1282 = vld [vmem:[%s1280 + $0x4] sm:$0xf]
        %v1283 = vld [vmem:[%s1280 + $0x8] sm:$0xf]
        %v1284 = vld [vmem:[%s1280 + $0xc] sm:$0xf]
        %v1285 = vld [vmem:[%s1280 + $0x10] sm:$0xf]
        %v1286 = vld [vmem:[%s1280 + $0x14] sm:$0xf]
        %v1287 = vld [vmem:[%s1280 + $0x18] sm:$0xf]
        %v1288 = vld [vmem:[%s1280 + $0x1c] sm:$0xf]
        %v1289 = vld [vmem:[%s1280 + $0x20] sm:$0xf]
        %v1290 = vld [vmem:[%s1280 + $0x24] sm:$0xf]
        %v1291 = vld [vmem:[%s1280 + $0x28] sm:$0xf]
        %v1292 = vld [vmem:[%s1280 + $0x2c] sm:$0xf]
        %v1293 = vld [vmem:[%s1280 + $0x30] sm:$0xf]
        %v1294 = vld [vmem:[%s1280 + $0x34] sm:$0xf]
        %v1295 = vld [vmem:[%s1280 + $0x38] sm:$0xf]
        %v1296 = vld [vmem:[%s1280 + $0x3c] sm:$0xf]
        %v1297 = vld [vmem:[%s1280 + $0x40] sm:$0xf]
        %v1298 = vld [vmem:[%s1280 + $0x44] sm:$0xf]
        %v1299 = vld [vmem:[%s1280 + $0x48] sm:$0xf]
        %v1300 = vld [vmem:[%s1280 + $0x4c] sm:$0xf]
        %v1301 = vld [vmem:[%s1280 + $0x50] sm:$0xf]
        %v1302 = vld [vmem:[%s1280 + $0x54] sm:$0xf]
        %v1303 = vld [vmem:[%s1280 + $0x58] sm:$0xf]
        %v1304 = vld [vmem:[%s1280 + $0x5c] sm:$0xf]
        %v1305 = vld [vmem:[%s1280 + $0x60] sm:$0xf]
        %v1306 = vld [vmem:[%s1280 + $0x64] sm:$0xf]
        %v1307 = vld [vmem:[%s1280 + $0x68] sm:$0xf]
        %v1308 = vld [vmem:[%s1280 + $0x6c] sm:$0xf]
        %v1309 = vld [vmem:[%s1280 + $0x70] sm:$0xf]
        %v1310 = vld [vmem:[%s1280 + $0x74] sm:$0xf]
        %v1311 = vld [vmem:[%s1280 + $0x78] sm:$0xf]
        %v1312 = vld [vmem:[%s1280 + $0x7c] sm:$0xf]
        %v1345 = vunpack.c.l.b16 %v1281
        %v1346 = vunpack.c.l.b16 %v1282
        %v1347 = vunpack.c.l.b16 %v1283
        %v1348 = vunpack.c.l.b16 %v1284
        %v1349 = vunpack.c.l.b16 %v1285
        %v1350 = vunpack.c.l.b16 %v1286
        %v1351 = vunpack.c.l.b16 %v1287
        %v1352 = vunpack.c.l.b16 %v1288
        %v1353 = vunpack.c.l.b16 %v1289
        %v1354 = vunpack.c.l.b16 %v1290
        %v1355 = vunpack.c.l.b16 %v1291
        %v1356 = vunpack.c.l.b16 %v1292
        %v1357 = vunpack.c.l.b16 %v1293
        %v1358 = vunpack.c.l.b16 %v1294
        %v1359 = vunpack.c.l.b16 %v1295
        %v1360 = vunpack.c.l.b16 %v1296
        %v1361 = vunpack.c.l.b16 %v1297
        %v1362 = vunpack.c.l.b16 %v1298
        %v1363 = vunpack.c.l.b16 %v1299
        %v1364 = vunpack.c.l.b16 %v1300
        %v1365 = vunpack.c.l.b16 %v1301
        %v1366 = vunpack.c.l.b16 %v1302
        %v1367 = vunpack.c.l.b16 %v1303
        %v1368 = vunpack.c.l.b16 %v1304
        %v1369 = vunpack.c.l.b16 %v1305
        %v1370 = vunpack.c.l.b16 %v1306
        %v1371 = vunpack.c.l.b16 %v1307
        %v1372 = vunpack.c.l.b16 %v1308
        %v1373 = vunpack.c.l.b16 %v1309
        %v1374 = vunpack.c.l.b16 %v1310
        %v1375 = vunpack.c.l.b16 %v1311
        %v1376 = vunpack.c.l.b16 %v1312
        %v1377 = vpack.c.b16 %v1346, %v1345
        %v1378 = vpack.c.b16 %v1348, %v1347
        %v1379 = vpack.c.b16 %v1350, %v1349
        %v1380 = vpack.c.b16 %v1352, %v1351
        %v1381 = vpack.c.b16 %v1354, %v1353
        %v1382 = vpack.c.b16 %v1356, %v1355
        %v1383 = vpack.c.b16 %v1358, %v1357
        %v1384 = vpack.c.b16 %v1360, %v1359
        %v1385 = vpack.c.b16 %v1362, %v1361
        %v1386 = vpack.c.b16 %v1364, %v1363
        %v1387 = vpack.c.b16 %v1366, %v1365
        %v1388 = vpack.c.b16 %v1368, %v1367
        %v1389 = vpack.c.b16 %v1370, %v1369
        %v1390 = vpack.c.b16 %v1372, %v1371
        %v1391 = vpack.c.b16 %v1374, %v1373
        %v1392 = vpack.c.b16 %v1376, %v1375
        %1409 = vmatprep.subr.bf16.mxu0 0
        %1410 = vmatpush1.bf16.msra.mxu0 %v1384
        %1411 = vmatprep.subr.bf16.mxu0 0
        %1412 = vmatpush1.bf16.msra.mxu0 %v1383
        %1413 = vmatprep.subr.bf16.mxu0 0
        %1414 = vmatpush1.bf16.msra.mxu0 %v1382
        %1415 = vmatprep.subr.bf16.mxu0 0
        %1416 = vmatpush1.bf16.msra.mxu0 %v1381
        %1417 = vmatprep.subr.bf16.mxu0 0
        %1418 = vmatpush1.bf16.msra.mxu0 %v1380
        %1419 = vmatprep.subr.bf16.mxu0 0
        %1420 = vmatpush1.bf16.msra.mxu0 %v1379
        %1421 = vmatprep.subr.bf16.mxu0 0
        %1422 = vmatpush1.bf16.msra.mxu0 %v1378
        %1423 = vmatprep.subr.bf16.mxu0 0
        %1424 = vmatpush1.bf16.msra.mxu0 %v1377
        %1425 = vmatprep.subr.bf16.mxu0 0
        %1426 = vmatpush2.bf16.msra.mxu0 %v1392
        %1427 = vmatprep.subr.bf16.mxu0 0
        %1428 = vmatpush2.bf16.msra.mxu0 %v1391
        %1429 = vmatprep.subr.bf16.mxu0 0
        %1430 = vmatpush2.bf16.msra.mxu0 %v1390
        %1431 = vmatprep.subr.bf16.mxu0 0
        %1432 = vmatpush2.bf16.msra.mxu0 %v1389
        %1433 = vmatprep.subr.bf16.mxu0 0
        %1434 = vmatpush2.bf16.msra.mxu0 %v1388
        %1435 = vmatprep.subr.bf16.mxu0 0
        %1436 = vmatpush2.bf16.msra.mxu0 %v1387
        %1437 = vmatprep.subr.bf16.mxu0 0
        %1438 = vmatpush2.bf16.msra.mxu0 %v1386
        %1439 = vmatprep.subr.bf16.mxu0 0
        %1440 = vmatpush2.bf16.msra.mxu0 %v1385
        %1441 = vmatprep.mubr.bf16.mxu0 %v1248
        %1442 = vmatmul.mubr.bf16.gmra.mxu0 %v1152
        %v1443 = vpop.f32.mrf.mxu0
        %v1444 = vadd.f32 0.0, %v1443
        %v1445 = vpop.f32.mrf.mxu0
        %v1446 = vpop.f32.mrf.mxu0
        %v1447 = vadd.f32 0.0, %v1446
        %v1448 = vpop.f32.mrf.mxu0
        %1449 = vmatprep.mubr.bf16.mxu0 %v1249
        %1450 = vmatmul.mubr.bf16.gmra.mxu0 %v1153
        %v1451 = vpop.f32.mrf.mxu0
        %v1452 = vadd.f32 0.0, %v1451
        %v1453 = vpop.f32.mrf.mxu0
        %v1454 = vpop.f32.mrf.mxu0
        %v1455 = vadd.f32 0.0, %v1454
        %v1456 = vpop.f32.mrf.mxu0
        %1457 = vmatprep.mubr.bf16.mxu0 %v1250
        %1458 = vmatmul.mubr.bf16.gmra.mxu0 %v1154
        %v1459 = vpop.f32.mrf.mxu0
        %v1460 = vadd.f32 0.0, %v1459
        %v1461 = vpop.f32.mrf.mxu0
        %v1462 = vpop.f32.mrf.mxu0
        %v1463 = vadd.f32 0.0, %v1462
        %v1464 = vpop.f32.mrf.mxu0
        %1465 = vmatprep.mubr.bf16.mxu0 %v1251
        %1466 = vmatmul.mubr.bf16.gmra.mxu0 %v1155
        %v1467 = vpop.f32.mrf.mxu0
        %v1468 = vadd.f32 0.0, %v1467
        %v1469 = vpop.f32.mrf.mxu0
        %v1470 = vpop.f32.mrf.mxu0
        %v1471 = vadd.f32 0.0, %v1470
        %v1472 = vpop.f32.mrf.mxu0
        %1473 = vmatprep.mubr.bf16.mxu0 %v1252
        %1474 = vmatmul.mubr.bf16.gmra.mxu0 %v1156
        %v1475 = vpop.f32.mrf.mxu0
        %v1476 = vadd.f32 0.0, %v1475
        %v1477 = vpop.f32.mrf.mxu0
        %v1478 = vpop.f32.mrf.mxu0
        %v1479 = vadd.f32 0.0, %v1478
        %v1480 = vpop.f32.mrf.mxu0
        %1481 = vmatprep.mubr.bf16.mxu0 %v1253
        %1482 = vmatmul.mubr.bf16.gmra.mxu0 %v1157
        %v1483 = vpop.f32.mrf.mxu0
        %v1484 = vadd.f32 0.0, %v1483
        %v1485 = vpop.f32.mrf.mxu0
        %v1486 = vpop.f32.mrf.mxu0
        %v1487 = vadd.f32 0.0, %v1486
        %v1488 = vpop.f32.mrf.mxu0
        %1489 = vmatprep.mubr.bf16.mxu0 %v1254
        %1490 = vmatmul.mubr.bf16.gmra.mxu0 %v1158
        %v1491 = vpop.f32.mrf.mxu0
        %v1492 = vadd.f32 0.0, %v1491
        %v1493 = vpop.f32.mrf.mxu0
        %v1494 = vpop.f32.mrf.mxu0
        %v1495 = vadd.f32 0.0, %v1494
        %v1496 = vpop.f32.mrf.mxu0
        %1497 = vmatprep.mubr.bf16.mxu0 %v1255
        %1498 = vmatmul.mubr.bf16.gmra.mxu0 %v1159
        %v1499 = vpop.f32.mrf.mxu0
        %v1500 = vadd.f32 0.0, %v1499
        %v1501 = vpop.f32.mrf.mxu0
        %v1502 = vpop.f32.mrf.mxu0
        %v1503 = vadd.f32 0.0, %v1502
        %v1504 = vpop.f32.mrf.mxu0
        %1505 = vmatprep.mubr.bf16.mxu0 %v1256
        %1506 = vmatmul.mubr.bf16.gmra.mxu0 %v1160
        %v1507 = vpop.f32.mrf.mxu0
        %v1508 = vadd.f32 0.0, %v1507
        %v1509 = vpop.f32.mrf.mxu0
        %v1510 = vpop.f32.mrf.mxu0
        %v1511 = vadd.f32 0.0, %v1510
        %v1512 = vpop.f32.mrf.mxu0
        %1513 = vmatprep.mubr.bf16.mxu0 %v1257
        %1514 = vmatmul.mubr.bf16.gmra.mxu0 %v1161
        %v1515 = vpop.f32.mrf.mxu0
        %v1516 = vadd.f32 0.0, %v1515
        %v1517 = vpop.f32.mrf.mxu0
        %v1518 = vpop.f32.mrf.mxu0
        %v1519 = vadd.f32 0.0, %v1518
        %v1520 = vpop.f32.mrf.mxu0
        %1521 = vmatprep.mubr.bf16.mxu0 %v1258
        %1522 = vmatmul.mubr.bf16.gmra.mxu0 %v1162
        %v1523 = vpop.f32.mrf.mxu0
        %v1524 = vadd.f32 0.0, %v1523
        %v1525 = vpop.f32.mrf.mxu0
        %v1526 = vpop.f32.mrf.mxu0
        %v1527 = vadd.f32 0.0, %v1526
        %v1528 = vpop.f32.mrf.mxu0
        %1529 = vmatprep.mubr.bf16.mxu0 %v1259
        %1530 = vmatmul.mubr.bf16.gmra.mxu0 %v1163
        %v1531 = vpop.f32.mrf.mxu0
        %v1532 = vadd.f32 0.0, %v1531
        %v1533 = vpop.f32.mrf.mxu0
        %v1534 = vpop.f32.mrf.mxu0
        %v1535 = vadd.f32 0.0, %v1534
        %v1536 = vpop.f32.mrf.mxu0
        %1537 = vmatprep.mubr.bf16.mxu0 %v1260
        %1538 = vmatmul.mubr.bf16.gmra.mxu0 %v1164
        %v1539 = vpop.f32.mrf.mxu0
        %v1540 = vadd.f32 0.0, %v1539
        %v1541 = vpop.f32.mrf.mxu0
        %v1542 = vpop.f32.mrf.mxu0
        %v1543 = vadd.f32 0.0, %v1542
        %v1544 = vpop.f32.mrf.mxu0
        %1545 = vmatprep.mubr.bf16.mxu0 %v1261
        %1546 = vmatmul.mubr.bf16.gmra.mxu0 %v1165
        %v1547 = vpop.f32.mrf.mxu0
        %v1548 = vadd.f32 0.0, %v1547
        %v1549 = vpop.f32.mrf.mxu0
        %v1550 = vpop.f32.mrf.mxu0
        %v1551 = vadd.f32 0.0, %v1550
        %v1552 = vpop.f32.mrf.mxu0
        %1553 = vmatprep.mubr.bf16.mxu0 %v1262
        %1554 = vmatmul.mubr.bf16.gmra.mxu0 %v1166
        %v1555 = vpop.f32.mrf.mxu0
        %v1556 = vadd.f32 0.0, %v1555
        %v1557 = vpop.f32.mrf.mxu0
        %v1558 = vpop.f32.mrf.mxu0
        %v1559 = vadd.f32 0.0, %v1558
        %v1560 = vpop.f32.mrf.mxu0
        %1561 = vmatprep.mubr.bf16.mxu0 %v1263
        %1562 = vmatmul.mubr.bf16.gmra.mxu0 %v1167
        %v1563 = vpop.f32.mrf.mxu0
        %v1564 = vadd.f32 0.0, %v1563
        %v1565 = vpop.f32.mrf.mxu0
        %v1566 = vpop.f32.mrf.mxu0
        %v1567 = vadd.f32 0.0, %v1566
        %v1568 = vpop.f32.mrf.mxu0
        %1569 = vdwg.mxu0
        %v1602 = vunpack.c.l.b16 %v892
        %v1603 = vunpack.c.l.b16 %v893
        %v1604 = vunpack.c.l.b16 %v894
        %v1605 = vunpack.c.l.b16 %v895
        %v1606 = vunpack.c.l.b16 %v896
        %v1607 = vunpack.c.l.b16 %v897
        %v1608 = vunpack.c.l.b16 %v898
        %v1609 = vunpack.c.l.b16 %v899
        %v1610 = vunpack.c.l.b16 %v900
        %v1611 = vunpack.c.l.b16 %v901
        %v1612 = vunpack.c.l.b16 %v902
        %v1613 = vunpack.c.l.b16 %v903
        %v1614 = vunpack.c.l.b16 %v904
        %v1615 = vunpack.c.l.b16 %v905
        %v1616 = vunpack.c.l.b16 %v906
        %v1617 = vunpack.c.l.b16 %v907
        %v1618 = vunpack.c.l.b16 %v908
        %v1619 = vunpack.c.l.b16 %v909
        %v1620 = vunpack.c.l.b16 %v910
        %v1621 = vunpack.c.l.b16 %v911
        %v1622 = vunpack.c.l.b16 %v912
        %v1623 = vunpack.c.l.b16 %v913
        %v1624 = vunpack.c.l.b16 %v914
        %v1625 = vunpack.c.l.b16 %v915
        %v1626 = vunpack.c.l.b16 %v916
        %v1627 = vunpack.c.l.b16 %v917
        %v1628 = vunpack.c.l.b16 %v918
        %v1629 = vunpack.c.l.b16 %v919
        %v1630 = vunpack.c.l.b16 %v920
        %v1631 = vunpack.c.l.b16 %v921
        %v1632 = vunpack.c.l.b16 %v922
        %v1633 = vunpack.c.l.b16 %v923
        %v1634 = vpack.c.b16 %v1603, %v1602
        %v1635 = vpack.c.b16 %v1605, %v1604
        %v1636 = vpack.c.b16 %v1607, %v1606
        %v1637 = vpack.c.b16 %v1609, %v1608
        %v1638 = vpack.c.b16 %v1611, %v1610
        %v1639 = vpack.c.b16 %v1613, %v1612
        %v1640 = vpack.c.b16 %v1615, %v1614
        %v1641 = vpack.c.b16 %v1617, %v1616
        %v1642 = vpack.c.b16 %v1619, %v1618
        %v1643 = vpack.c.b16 %v1621, %v1620
        %v1644 = vpack.c.b16 %v1623, %v1622
        %v1645 = vpack.c.b16 %v1625, %v1624
        %v1646 = vpack.c.b16 %v1627, %v1626
        %v1647 = vpack.c.b16 %v1629, %v1628
        %v1648 = vpack.c.b16 %v1631, %v1630
        %v1649 = vpack.c.b16 %v1633, %v1632
        %1666 = vmatprep.subr.bf16.mxu0 0
        %1667 = vmatpush1.bf16.msra.mxu0 %v1641
        %1668 = vmatprep.subr.bf16.mxu0 0
        %1669 = vmatpush1.bf16.msra.mxu0 %v1640
        %1670 = vmatprep.subr.bf16.mxu0 0
        %1671 = vmatpush1.bf16.msra.mxu0 %v1639
        %1672 = vmatprep.subr.bf16.mxu0 0
        %1673 = vmatpush1.bf16.msra.mxu0 %v1638
        %1674 = vmatprep.subr.bf16.mxu0 0
        %1675 = vmatpush1.bf16.msra.mxu0 %v1637
        %1676 = vmatprep.subr.bf16.mxu0 0
        %1677 = vmatpush1.bf16.msra.mxu0 %v1636
        %1678 = vmatprep.subr.bf16.mxu0 0
        %1679 = vmatpush1.bf16.msra.mxu0 %v1635
        %1680 = vmatprep.subr.bf16.mxu0 0
        %1681 = vmatpush1.bf16.msra.mxu0 %v1634
        %1682 = vmatprep.subr.bf16.mxu0 0
        %1683 = vmatpush2.bf16.msra.mxu0 %v1649
        %1684 = vmatprep.subr.bf16.mxu0 0
        %1685 = vmatpush2.bf16.msra.mxu0 %v1648
        %1686 = vmatprep.subr.bf16.mxu0 0
        %1687 = vmatpush2.bf16.msra.mxu0 %v1647
        %1688 = vmatprep.subr.bf16.mxu0 0
        %1689 = vmatpush2.bf16.msra.mxu0 %v1646
        %1690 = vmatprep.subr.bf16.mxu0 0
        %1691 = vmatpush2.bf16.msra.mxu0 %v1645
        %1692 = vmatprep.subr.bf16.mxu0 0
        %1693 = vmatpush2.bf16.msra.mxu0 %v1644
        %1694 = vmatprep.subr.bf16.mxu0 0
        %1695 = vmatpush2.bf16.msra.mxu0 %v1643
        %1696 = vmatprep.subr.bf16.mxu0 0
        %1697 = vmatpush2.bf16.msra.mxu0 %v1642
        %1698 = vmatprep.mubr.bf16.mxu0 %v860
        %1699 = vmatmul.mubr.bf16.gmra.mxu0 %v796
        %v1700 = vpop.f32.mrf.mxu0
        %v1701 = vadd.f32 %v1444, %v1700
        %v1702 = vpop.f32.mrf.mxu0
        %v1703 = vpop.f32.mrf.mxu0
        %v1704 = vadd.f32 %v1447, %v1703
        %v1705 = vpop.f32.mrf.mxu0
        %1706 = vmatprep.mubr.bf16.mxu0 %v861
        %1707 = vmatmul.mubr.bf16.gmra.mxu0 %v797
        %v1708 = vpop.f32.mrf.mxu0
        %v1709 = vadd.f32 %v1452, %v1708
        %v1710 = vpop.f32.mrf.mxu0
        %v1711 = vpop.f32.mrf.mxu0
        %v1712 = vadd.f32 %v1455, %v1711
        %v1713 = vpop.f32.mrf.mxu0
        %1714 = vmatprep.mubr.bf16.mxu0 %v862
        %1715 = vmatmul.mubr.bf16.gmra.mxu0 %v798
        %v1716 = vpop.f32.mrf.mxu0
        %v1717 = vadd.f32 %v1460, %v1716
        %v1718 = vpop.f32.mrf.mxu0
        %v1719 = vpop.f32.mrf.mxu0
        %v1720 = vadd.f32 %v1463, %v1719
        %v1721 = vpop.f32.mrf.mxu0
        %1722 = vmatprep.mubr.bf16.mxu0 %v863
        %1723 = vmatmul.mubr.bf16.gmra.mxu0 %v799
        %v1724 = vpop.f32.mrf.mxu0
        %v1725 = vadd.f32 %v1468, %v1724
        %v1726 = vpop.f32.mrf.mxu0
        %v1727 = vpop.f32.mrf.mxu0
        %v1728 = vadd.f32 %v1471, %v1727
        %v1729 = vpop.f32.mrf.mxu0
        %1730 = vmatprep.mubr.bf16.mxu0 %v864
        %1731 = vmatmul.mubr.bf16.gmra.mxu0 %v800
        %v1732 = vpop.f32.mrf.mxu0
        %v1733 = vadd.f32 %v1476, %v1732
        %v1734 = vpop.f32.mrf.mxu0
        %v1735 = vpop.f32.mrf.mxu0
        %v1736 = vadd.f32 %v1479, %v1735
        %v1737 = vpop.f32.mrf.mxu0
        %1738 = vmatprep.mubr.bf16.mxu0 %v865
        %1739 = vmatmul.mubr.bf16.gmra.mxu0 %v801
        %v1740 = vpop.f32.mrf.mxu0
        %v1741 = vadd.f32 %v1484, %v1740
        %v1742 = vpop.f32.mrf.mxu0
        %v1743 = vpop.f32.mrf.mxu0
        %v1744 = vadd.f32 %v1487, %v1743
        %v1745 = vpop.f32.mrf.mxu0
        %1746 = vmatprep.mubr.bf16.mxu0 %v866
        %1747 = vmatmul.mubr.bf16.gmra.mxu0 %v802
        %v1748 = vpop.f32.mrf.mxu0
        %v1749 = vadd.f32 %v1492, %v1748
        %v1750 = vpop.f32.mrf.mxu0
        %v1751 = vpop.f32.mrf.mxu0
        %v1752 = vadd.f32 %v1495, %v1751
        %v1753 = vpop.f32.mrf.mxu0
        %1754 = vmatprep.mubr.bf16.mxu0 %v867
        %1755 = vmatmul.mubr.bf16.gmra.mxu0 %v803
        %v1756 = vpop.f32.mrf.mxu0
        %v1757 = vadd.f32 %v1500, %v1756
        %v1758 = vpop.f32.mrf.mxu0
        %v1759 = vpop.f32.mrf.mxu0
        %v1760 = vadd.f32 %v1503, %v1759
        %v1761 = vpop.f32.mrf.mxu0
        %1762 = vmatprep.mubr.bf16.mxu0 %v868
        %1763 = vmatmul.mubr.bf16.gmra.mxu0 %v804
        %v1764 = vpop.f32.mrf.mxu0
        %v1765 = vadd.f32 %v1508, %v1764
        %v1766 = vpop.f32.mrf.mxu0
        %v1767 = vpop.f32.mrf.mxu0
        %v1768 = vadd.f32 %v1511, %v1767
        %v1769 = vpop.f32.mrf.mxu0
        %1770 = vmatprep.mubr.bf16.mxu0 %v869
        %1771 = vmatmul.mubr.bf16.gmra.mxu0 %v805
        %v1772 = vpop.f32.mrf.mxu0
        %v1773 = vadd.f32 %v1516, %v1772
        %v1774 = vpop.f32.mrf.mxu0
        %v1775 = vpop.f32.mrf.mxu0
        %v1776 = vadd.f32 %v1519, %v1775
        %v1777 = vpop.f32.mrf.mxu0
        %1778 = vmatprep.mubr.bf16.mxu0 %v870
        %1779 = vmatmul.mubr.bf16.gmra.mxu0 %v806
        %v1780 = vpop.f32.mrf.mxu0
        %v1781 = vadd.f32 %v1524, %v1780
        %v1782 = vpop.f32.mrf.mxu0
        %v1783 = vpop.f32.mrf.mxu0
        %v1784 = vadd.f32 %v1527, %v1783
        %v1785 = vpop.f32.mrf.mxu0
        %1786 = vmatprep.mubr.bf16.mxu0 %v871
        %1787 = vmatmul.mubr.bf16.gmra.mxu0 %v807
        %v1788 = vpop.f32.mrf.mxu0
        %v1789 = vadd.f32 %v1532, %v1788
        %v1790 = vpop.f32.mrf.mxu0
        %v1791 = vpop.f32.mrf.mxu0
        %v1792 = vadd.f32 %v1535, %v1791
        %v1793 = vpop.f32.mrf.mxu0
        %1794 = vmatprep.mubr.bf16.mxu0 %v872
        %1795 = vmatmul.mubr.bf16.gmra.mxu0 %v808
        %v1796 = vpop.f32.mrf.mxu0
        %v1797 = vadd.f32 %v1540, %v1796
        %v1798 = vpop.f32.mrf.mxu0
        %v1799 = vpop.f32.mrf.mxu0
        %v1800 = vadd.f32 %v1543, %v1799
        %v1801 = vpop.f32.mrf.mxu0
        %1802 = vmatprep.mubr.bf16.mxu0 %v873
        %1803 = vmatmul.mubr.bf16.gmra.mxu0 %v809
        %v1804 = vpop.f32.mrf.mxu0
        %v1805 = vadd.f32 %v1548, %v1804
        %v1806 = vpop.f32.mrf.mxu0
        %v1807 = vpop.f32.mrf.mxu0
        %v1808 = vadd.f32 %v1551, %v1807
        %v1809 = vpop.f32.mrf.mxu0
        %1810 = vmatprep.mubr.bf16.mxu0 %v874
        %1811 = vmatmul.mubr.bf16.gmra.mxu0 %v810
        %v1812 = vpop.f32.mrf.mxu0
        %v1813 = vadd.f32 %v1556, %v1812
        %v1814 = vpop.f32.mrf.mxu0
        %v1815 = vpop.f32.mrf.mxu0
        %v1816 = vadd.f32 %v1559, %v1815
        %v1817 = vpop.f32.mrf.mxu0
        %1818 = vmatprep.mubr.bf16.mxu0 %v875
        %1819 = vmatmul.mubr.bf16.gmra.mxu0 %v811
        %v1820 = vpop.f32.mrf.mxu0
        %v1821 = vadd.f32 %v1564, %v1820
        %v1822 = vpop.f32.mrf.mxu0
        %v1823 = vpop.f32.mrf.mxu0
        %v1824 = vadd.f32 %v1567, %v1823
        %v1825 = vpop.f32.mrf.mxu0
        %1826 = vdwg.mxu0
        %v1827 = vld [vmem:[%s1087] sm:$0xf]
        %v1828 = vld [vmem:[%s1087 + $0x4] sm:$0xf]
        %v1829 = vld [vmem:[%s1087 + $0x8] sm:$0x1]
        %v1830 = vld [vmem:[%s1087 + $0xc] sm:$0xf]
        %v1831 = vld [vmem:[%s1087 + $0x10] sm:$0xf]
        %v1832 = vld [vmem:[%s1087 + $0x14] sm:$0x1]
        %v1833 = vld [vmem:[%s1087 + $0x18] sm:$0xf]
        %v1834 = vld [vmem:[%s1087 + $0x1c] sm:$0xf]
        %v1835 = vld [vmem:[%s1087 + $0x20] sm:$0x1]
        %v1836 = vld [vmem:[%s1087 + $0x24] sm:$0xf]
        %v1837 = vld [vmem:[%s1087 + $0x28] sm:$0xf]
        %v1838 = vld [vmem:[%s1087 + $0x2c] sm:$0x1]
        %v1839 = vld [vmem:[%s1087 + $0x30] sm:$0xf]
        %v1840 = vld [vmem:[%s1087 + $0x34] sm:$0xf]
        %v1841 = vld [vmem:[%s1087 + $0x38] sm:$0x1]
        %v1842 = vld [vmem:[%s1087 + $0x3c] sm:$0xf]
        %v1843 = vld [vmem:[%s1087 + $0x40] sm:$0xf]
        %v1844 = vld [vmem:[%s1087 + $0x44] sm:$0x1]
        %v1845 = vld [vmem:[%s1087 + $0x48] sm:$0xf]
        %v1846 = vld [vmem:[%s1087 + $0x4c] sm:$0xf]
        %v1847 = vld [vmem:[%s1087 + $0x50] sm:$0x1]
        %v1848 = vld [vmem:[%s1087 + $0x54] sm:$0xf]
        %v1849 = vld [vmem:[%s1087 + $0x58] sm:$0xf]
        %v1850 = vld [vmem:[%s1087 + $0x5c] sm:$0x1]
        %v1851 = vld [vmem:[%s1087 + $0x60] sm:$0xf]
        %v1852 = vld [vmem:[%s1087 + $0x64] sm:$0xf]
        %v1853 = vld [vmem:[%s1087 + $0x68] sm:$0x1]
        %v1854 = vld [vmem:[%s1087 + $0x6c] sm:$0xf]
        %v1855 = vld [vmem:[%s1087 + $0x70] sm:$0xf]
        %v1856 = vld [vmem:[%s1087 + $0x74] sm:$0x1]
        %v1857 = vld [vmem:[%s1087 + $0x78] sm:$0xf]
        %v1858 = vld [vmem:[%s1087 + $0x7c] sm:$0xf]
        %v1859 = vld [vmem:[%s1087 + $0x80] sm:$0x1]
        %v1860 = vld [vmem:[%s1087 + $0x84] sm:$0xf]
        %v1861 = vld [vmem:[%s1087 + $0x88] sm:$0xf]
        %v1862 = vld [vmem:[%s1087 + $0x8c] sm:$0x1]
        %v1863 = vld [vmem:[%s1087 + $0x90] sm:$0xf]
        %v1864 = vld [vmem:[%s1087 + $0x94] sm:$0xf]
        %v1865 = vld [vmem:[%s1087 + $0x98] sm:$0x1]
        %v1866 = vld [vmem:[%s1087 + $0x9c] sm:$0xf]
        %v1867 = vld [vmem:[%s1087 + $0xa0] sm:$0xf]
        %v1868 = vld [vmem:[%s1087 + $0xa4] sm:$0x1]
        %v1869 = vld [vmem:[%s1087 + $0xa8] sm:$0xf]
        %v1870 = vld [vmem:[%s1087 + $0xac] sm:$0xf]
        %v1871 = vld [vmem:[%s1087 + $0xb0] sm:$0x1]
        %v1872 = vld [vmem:[%s1087 + $0xb4] sm:$0xf]
        %v1873 = vld [vmem:[%s1087 + $0xb8] sm:$0xf]
        %v1874 = vld [vmem:[%s1087 + $0xbc] sm:$0x1]
        %v1876 = vshrl.u32 %v1827, 16
        %v1878 = vrot.slane %v1876, 4
        %v1879 = vshll.u32 %v1827, 16
        %v1881 = vrot.slane %v1879, 5
        %v1882 = vor.u32 %v1878, %v1881
        %v1883 = vrot.slane %v1882, 4
        %v1885 = vshll.u32 %v1828, 16
        %v1887 = vrot.slane %v1885, 5
        %v1888 = vsel %vm347, %v1883, %v1887
        %v1889 = vshrl.u32 %v1828, 16
        %v1891 = vrot.slane %v1889, 4
        %v1892 = vor.u32 %v1891, %v1887
        %v1893 = vrot.slane %v1892, 4
        %v1895 = vshll.u32 %v1829, 16
        %v1897 = vrot.slane %v1895, 5
        %v1898 = vsel %vm347, %v1893, %v1897
        %v1900 = vshrl.u32 %v1830, 16
        %v1902 = vrot.slane %v1900, 4
        %v1903 = vshll.u32 %v1830, 16
        %v1905 = vrot.slane %v1903, 5
        %v1906 = vor.u32 %v1902, %v1905
        %v1907 = vrot.slane %v1906, 4
        %v1909 = vshll.u32 %v1831, 16
        %v1911 = vrot.slane %v1909, 5
        %v1912 = vsel %vm347, %v1907, %v1911
        %v1913 = vshrl.u32 %v1831, 16
        %v1915 = vrot.slane %v1913, 4
        %v1916 = vor.u32 %v1915, %v1911
        %v1917 = vrot.slane %v1916, 4
        %v1919 = vshll.u32 %v1832, 16
        %v1921 = vrot.slane %v1919, 5
        %v1922 = vsel %vm347, %v1917, %v1921
        %v1924 = vshrl.u32 %v1833, 16
        %v1926 = vrot.slane %v1924, 4
        %v1927 = vshll.u32 %v1833, 16
        %v1929 = vrot.slane %v1927, 5
        %v1930 = vor.u32 %v1926, %v1929
        %v1931 = vrot.slane %v1930, 4
        %v1933 = vshll.u32 %v1834, 16
        %v1935 = vrot.slane %v1933, 5
        %v1936 = vsel %vm347, %v1931, %v1935
        %v1937 = vshrl.u32 %v1834, 16
        %v1939 = vrot.slane %v1937, 4
        %v1940 = vor.u32 %v1939, %v1935
        %v1941 = vrot.slane %v1940, 4
        %v1943 = vshll.u32 %v1835, 16
        %v1945 = vrot.slane %v1943, 5
        %v1946 = vsel %vm347, %v1941, %v1945
        %v1948 = vshrl.u32 %v1836, 16
        %v1950 = vrot.slane %v1948, 4
        %v1951 = vshll.u32 %v1836, 16
        %v1953 = vrot.slane %v1951, 5
        %v1954 = vor.u32 %v1950, %v1953
        %v1955 = vrot.slane %v1954, 4
        %v1957 = vshll.u32 %v1837, 16
        %v1959 = vrot.slane %v1957, 5
        %v1960 = vsel %vm347, %v1955, %v1959
        %v1961 = vshrl.u32 %v1837, 16
        %v1963 = vrot.slane %v1961, 4
        %v1964 = vor.u32 %v1963, %v1959
        %v1965 = vrot.slane %v1964, 4
        %v1967 = vshll.u32 %v1838, 16
        %v1969 = vrot.slane %v1967, 5
        %v1970 = vsel %vm347, %v1965, %v1969
        %v1972 = vshrl.u32 %v1839, 16
        %v1974 = vrot.slane %v1972, 4
        %v1975 = vshll.u32 %v1839, 16
        %v1977 = vrot.slane %v1975, 5
        %v1978 = vor.u32 %v1974, %v1977
        %v1979 = vrot.slane %v1978, 4
        %v1981 = vshll.u32 %v1840, 16
        %v1983 = vrot.slane %v1981, 5
        %v1984 = vsel %vm347, %v1979, %v1983
        %v1985 = vshrl.u32 %v1840, 16
        %v1987 = vrot.slane %v1985, 4
        %v1988 = vor.u32 %v1987, %v1983
        %v1989 = vrot.slane %v1988, 4
        %v1991 = vshll.u32 %v1841, 16
        %v1993 = vrot.slane %v1991, 5
        %v1994 = vsel %vm347, %v1989, %v1993
        %v1996 = vshrl.u32 %v1842, 16
        %v1998 = vrot.slane %v1996, 4
        %v1999 = vshll.u32 %v1842, 16
        %v2001 = vrot.slane %v1999, 5
        %v2002 = vor.u32 %v1998, %v2001
        %v2003 = vrot.slane %v2002, 4
        %v2005 = vshll.u32 %v1843, 16
        %v2007 = vrot.slane %v2005, 5
        %v2008 = vsel %vm347, %v2003, %v2007
        %v2009 = vshrl.u32 %v1843, 16
        %v2011 = vrot.slane %v2009, 4
        %v2012 = vor.u32 %v2011, %v2007
        %v2013 = vrot.slane %v2012, 4
        %v2015 = vshll.u32 %v1844, 16
        %v2017 = vrot.slane %v2015, 5
        %v2018 = vsel %vm347, %v2013, %v2017
        %v2020 = vshrl.u32 %v1845, 16
        %v2022 = vrot.slane %v2020, 4
        %v2023 = vshll.u32 %v1845, 16
        %v2025 = vrot.slane %v2023, 5
        %v2026 = vor.u32 %v2022, %v2025
        %v2027 = vrot.slane %v2026, 4
        %v2029 = vshll.u32 %v1846, 16
        %v2031 = vrot.slane %v2029, 5
        %v2032 = vsel %vm347, %v2027, %v2031
        %v2033 = vshrl.u32 %v1846, 16
        %v2035 = vrot.slane %v2033, 4
        %v2036 = vor.u32 %v2035, %v2031
        %v2037 = vrot.slane %v2036, 4
        %v2039 = vshll.u32 %v1847, 16
        %v2041 = vrot.slane %v2039, 5
        %v2042 = vsel %vm347, %v2037, %v2041
        %v2044 = vshrl.u32 %v1848, 16
        %v2046 = vrot.slane %v2044, 4
        %v2047 = vshll.u32 %v1848, 16
        %v2049 = vrot.slane %v2047, 5
        %v2050 = vor.u32 %v2046, %v2049
        %v2051 = vrot.slane %v2050, 4
        %v2053 = vshll.u32 %v1849, 16
        %v2055 = vrot.slane %v2053, 5
        %v2056 = vsel %vm347, %v2051, %v2055
        %v2057 = vshrl.u32 %v1849, 16
        %v2059 = vrot.slane %v2057, 4
        %v2060 = vor.u32 %v2059, %v2055
        %v2061 = vrot.slane %v2060, 4
        %v2063 = vshll.u32 %v1850, 16
        %v2065 = vrot.slane %v2063, 5
        %v2066 = vsel %vm347, %v2061, %v2065
        %v2068 = vshrl.u32 %v1851, 16
        %v2070 = vrot.slane %v2068, 4
        %v2071 = vshll.u32 %v1851, 16
        %v2073 = vrot.slane %v2071, 5
        %v2074 = vor.u32 %v2070, %v2073
        %v2075 = vrot.slane %v2074, 4
        %v2077 = vshll.u32 %v1852, 16
        %v2079 = vrot.slane %v2077, 5
        %v2080 = vsel %vm347, %v2075, %v2079
        %v2081 = vshrl.u32 %v1852, 16
        %v2083 = vrot.slane %v2081, 4
        %v2084 = vor.u32 %v2083, %v2079
        %v2085 = vrot.slane %v2084, 4
        %v2087 = vshll.u32 %v1853, 16
        %v2089 = vrot.slane %v2087, 5
        %v2090 = vsel %vm347, %v2085, %v2089
        %v2092 = vshrl.u32 %v1854, 16
        %v2094 = vrot.slane %v2092, 4
        %v2095 = vshll.u32 %v1854, 16
        %v2097 = vrot.slane %v2095, 5
        %v2098 = vor.u32 %v2094, %v2097
        %v2099 = vrot.slane %v2098, 4
        %v2101 = vshll.u32 %v1855, 16
        %v2103 = vrot.slane %v2101, 5
        %v2104 = vsel %vm347, %v2099, %v2103
        %v2105 = vshrl.u32 %v1855, 16
        %v2107 = vrot.slane %v2105, 4
        %v2108 = vor.u32 %v2107, %v2103
        %v2109 = vrot.slane %v2108, 4
        %v2111 = vshll.u32 %v1856, 16
        %v2113 = vrot.slane %v2111, 5
        %v2114 = vsel %vm347, %v2109, %v2113
        %v2116 = vshrl.u32 %v1857, 16
        %v2118 = vrot.slane %v2116, 4
        %v2119 = vshll.u32 %v1857, 16
        %v2121 = vrot.slane %v2119, 5
        %v2122 = vor.u32 %v2118, %v2121
        %v2123 = vrot.slane %v2122, 4
        %v2125 = vshll.u32 %v1858, 16
        %v2127 = vrot.slane %v2125, 5
        %v2128 = vsel %vm347, %v2123, %v2127
        %v2129 = vshrl.u32 %v1858, 16
        %v2131 = vrot.slane %v2129, 4
        %v2132 = vor.u32 %v2131, %v2127
        %v2133 = vrot.slane %v2132, 4
        %v2135 = vshll.u32 %v1859, 16
        %v2137 = vrot.slane %v2135, 5
        %v2138 = vsel %vm347, %v2133, %v2137
        %v2140 = vshrl.u32 %v1860, 16
        %v2142 = vrot.slane %v2140, 4
        %v2143 = vshll.u32 %v1860, 16
        %v2145 = vrot.slane %v2143, 5
        %v2146 = vor.u32 %v2142, %v2145
        %v2147 = vrot.slane %v2146, 4
        %v2149 = vshll.u32 %v1861, 16
        %v2151 = vrot.slane %v2149, 5
        %v2152 = vsel %vm347, %v2147, %v2151
        %v2153 = vshrl.u32 %v1861, 16
        %v2155 = vrot.slane %v2153, 4
        %v2156 = vor.u32 %v2155, %v2151
        %v2157 = vrot.slane %v2156, 4
        %v2159 = vshll.u32 %v1862, 16
        %v2161 = vrot.slane %v2159, 5
        %v2162 = vsel %vm347, %v2157, %v2161
        %v2164 = vshrl.u32 %v1863, 16
        %v2166 = vrot.slane %v2164, 4
        %v2167 = vshll.u32 %v1863, 16
        %v2169 = vrot.slane %v2167, 5
        %v2170 = vor.u32 %v2166, %v2169
        %v2171 = vrot.slane %v2170, 4
        %v2173 = vshll.u32 %v1864, 16
        %v2175 = vrot.slane %v2173, 5
        %v2176 = vsel %vm347, %v2171, %v2175
        %v2177 = vshrl.u32 %v1864, 16
        %v2179 = vrot.slane %v2177, 4
        %v2180 = vor.u32 %v2179, %v2175
        %v2181 = vrot.slane %v2180, 4
        %v2183 = vshll.u32 %v1865, 16
        %v2185 = vrot.slane %v2183, 5
        %v2186 = vsel %vm347, %v2181, %v2185
        %v2188 = vshrl.u32 %v1866, 16
        %v2190 = vrot.slane %v2188, 4
        %v2191 = vshll.u32 %v1866, 16
        %v2193 = vrot.slane %v2191, 5
        %v2194 = vor.u32 %v2190, %v2193
        %v2195 = vrot.slane %v2194, 4
        %v2197 = vshll.u32 %v1867, 16
        %v2199 = vrot.slane %v2197, 5
        %v2200 = vsel %vm347, %v2195, %v2199
        %v2201 = vshrl.u32 %v1867, 16
        %v2203 = vrot.slane %v2201, 4
        %v2204 = vor.u32 %v2203, %v2199
        %v2205 = vrot.slane %v2204, 4
        %v2207 = vshll.u32 %v1868, 16
        %v2209 = vrot.slane %v2207, 5
        %v2210 = vsel %vm347, %v2205, %v2209
        %v2212 = vshrl.u32 %v1869, 16
        %v2214 = vrot.slane %v2212, 4
        %v2215 = vshll.u32 %v1869, 16
        %v2217 = vrot.slane %v2215, 5
        %v2218 = vor.u32 %v2214, %v2217
        %v2219 = vrot.slane %v2218, 4
        %v2221 = vshll.u32 %v1870, 16
        %v2223 = vrot.slane %v2221, 5
        %v2224 = vsel %vm347, %v2219, %v2223
        %v2225 = vshrl.u32 %v1870, 16
        %v2227 = vrot.slane %v2225, 4
        %v2228 = vor.u32 %v2227, %v2223
        %v2229 = vrot.slane %v2228, 4
        %v2231 = vshll.u32 %v1871, 16
        %v2233 = vrot.slane %v2231, 5
        %v2234 = vsel %vm347, %v2229, %v2233
        %v2236 = vshrl.u32 %v1872, 16
        %v2238 = vrot.slane %v2236, 4
        %v2239 = vshll.u32 %v1872, 16
        %v2241 = vrot.slane %v2239, 5
        %v2242 = vor.u32 %v2238, %v2241
        %v2243 = vrot.slane %v2242, 4
        %v2245 = vshll.u32 %v1873, 16
        %v2247 = vrot.slane %v2245, 5
        %v2248 = vsel %vm347, %v2243, %v2247
        %v2249 = vshrl.u32 %v1873, 16
        %v2251 = vrot.slane %v2249, 4
        %v2252 = vor.u32 %v2251, %v2247
        %v2253 = vrot.slane %v2252, 4
        %v2255 = vshll.u32 %v1874, 16
        %v2257 = vrot.slane %v2255, 5
        %v2258 = vsel %vm347, %v2253, %v2257
        %v2259 = vld [vmem:[%s1087] sm:$0xe]
        %v2260 = vld [vmem:[%s1087 + $0xc] sm:$0xe]
        %v2261 = vld [vmem:[%s1087 + $0x18] sm:$0xe]
        %v2262 = vld [vmem:[%s1087 + $0x24] sm:$0xe]
        %v2263 = vld [vmem:[%s1087 + $0x30] sm:$0xe]
        %v2264 = vld [vmem:[%s1087 + $0x3c] sm:$0xe]
        %v2265 = vld [vmem:[%s1087 + $0x48] sm:$0xe]
        %v2266 = vld [vmem:[%s1087 + $0x54] sm:$0xe]
        %v2267 = vld [vmem:[%s1087 + $0x60] sm:$0xe]
        %v2268 = vld [vmem:[%s1087 + $0x6c] sm:$0xe]
        %v2269 = vld [vmem:[%s1087 + $0x78] sm:$0xe]
        %v2270 = vld [vmem:[%s1087 + $0x84] sm:$0xe]
        %v2271 = vld [vmem:[%s1087 + $0x90] sm:$0xe]
        %v2272 = vld [vmem:[%s1087 + $0x9c] sm:$0xe]
        %v2273 = vld [vmem:[%s1087 + $0xa8] sm:$0xe]
        %v2274 = vld [vmem:[%s1087 + $0xb4] sm:$0xe]
        %v2323 = vrot.slane %v2259, 5
        %v2324 = vrot.slane %v2323, 4
        %v2325 = vrot.slane %v1828, 5
        %v2326 = vsel %vm974, %v2324, %v2325
        %v2327 = vrot.slane %v2325, 4
        %v2328 = vrot.slane %v1829, 5
        %v2329 = vsel %vm974, %v2327, %v2328
        %v2330 = vrot.slane %v2260, 5
        %v2331 = vrot.slane %v2330, 4
        %v2332 = vrot.slane %v1831, 5
        %v2333 = vsel %vm974, %v2331, %v2332
        %v2334 = vrot.slane %v2332, 4
        %v2335 = vrot.slane %v1832, 5
        %v2336 = vsel %vm974, %v2334, %v2335
        %v2337 = vrot.slane %v2261, 5
        %v2338 = vrot.slane %v2337, 4
        %v2339 = vrot.slane %v1834, 5
        %v2340 = vsel %vm974, %v2338, %v2339
        %v2341 = vrot.slane %v2339, 4
        %v2342 = vrot.slane %v1835, 5
        %v2343 = vsel %vm974, %v2341, %v2342
        %v2344 = vrot.slane %v2262, 5
        %v2345 = vrot.slane %v2344, 4
        %v2346 = vrot.slane %v1837, 5
        %v2347 = vsel %vm974, %v2345, %v2346
        %v2348 = vrot.slane %v2346, 4
        %v2349 = vrot.slane %v1838, 5
        %v2350 = vsel %vm974, %v2348, %v2349
        %v2351 = vrot.slane %v2263, 5
        %v2352 = vrot.slane %v2351, 4
        %v2353 = vrot.slane %v1840, 5
        %v2354 = vsel %vm974, %v2352, %v2353
        %v2355 = vrot.slane %v2353, 4
        %v2356 = vrot.slane %v1841, 5
        %v2357 = vsel %vm974, %v2355, %v2356
        %v2358 = vrot.slane %v2264, 5
        %v2359 = vrot.slane %v2358, 4
        %v2360 = vrot.slane %v1843, 5
        %v2361 = vsel %vm974, %v2359, %v2360
        %v2362 = vrot.slane %v2360, 4
        %v2363 = vrot.slane %v1844, 5
        %v2364 = vsel %vm974, %v2362, %v2363
        %v2365 = vrot.slane %v2265, 5
        %v2366 = vrot.slane %v2365, 4
        %v2367 = vrot.slane %v1846, 5
        %v2368 = vsel %vm974, %v2366, %v2367
        %v2369 = vrot.slane %v2367, 4
        %v2370 = vrot.slane %v1847, 5
        %v2371 = vsel %vm974, %v2369, %v2370
        %v2372 = vrot.slane %v2266, 5
        %v2373 = vrot.slane %v2372, 4
        %v2374 = vrot.slane %v1849, 5
        %v2375 = vsel %vm974, %v2373, %v2374
        %v2376 = vrot.slane %v2374, 4
        %v2377 = vrot.slane %v1850, 5
        %v2378 = vsel %vm974, %v2376, %v2377
        %v2379 = vrot.slane %v2267, 5
        %v2380 = vrot.slane %v2379, 4
        %v2381 = vrot.slane %v1852, 5
        %v2382 = vsel %vm974, %v2380, %v2381
        %v2383 = vrot.slane %v2381, 4
        %v2384 = vrot.slane %v1853, 5
        %v2385 = vsel %vm974, %v2383, %v2384
        %v2386 = vrot.slane %v2268, 5
        %v2387 = vrot.slane %v2386, 4
        %v2388 = vrot.slane %v1855, 5
        %v2389 = vsel %vm974, %v2387, %v2388
        %v2390 = vrot.slane %v2388, 4
        %v2391 = vrot.slane %v1856, 5
        %v2392 = vsel %vm974, %v2390, %v2391
        %v2393 = vrot.slane %v2269, 5
        %v2394 = vrot.slane %v2393, 4
        %v2395 = vrot.slane %v1858, 5
        %v2396 = vsel %vm974, %v2394, %v2395
        %v2397 = vrot.slane %v2395, 4
        %v2398 = vrot.slane %v1859, 5
        %v2399 = vsel %vm974, %v2397, %v2398
        %v2400 = vrot.slane %v2270, 5
        %v2401 = vrot.slane %v2400, 4
        %v2402 = vrot.slane %v1861, 5
        %v2403 = vsel %vm974, %v2401, %v2402
        %v2404 = vrot.slane %v2402, 4
        %v2405 = vrot.slane %v1862, 5
        %v2406 = vsel %vm974, %v2404, %v2405
        %v2407 = vrot.slane %v2271, 5
        %v2408 = vrot.slane %v2407, 4
        %v2409 = vrot.slane %v1864, 5
        %v2410 = vsel %vm974, %v2408, %v2409
        %v2411 = vrot.slane %v2409, 4
        %v2412 = vrot.slane %v1865, 5
        %v2413 = vsel %vm974, %v2411, %v2412
        %v2414 = vrot.slane %v2272, 5
        %v2415 = vrot.slane %v2414, 4
        %v2416 = vrot.slane %v1867, 5
        %v2417 = vsel %vm974, %v2415, %v2416
        %v2418 = vrot.slane %v2416, 4
        %v2419 = vrot.slane %v1868, 5
        %v2420 = vsel %vm974, %v2418, %v2419
        %v2421 = vrot.slane %v2273, 5
        %v2422 = vrot.slane %v2421, 4
        %v2423 = vrot.slane %v1870, 5
        %v2424 = vsel %vm974, %v2422, %v2423
        %v2425 = vrot.slane %v2423, 4
        %v2426 = vrot.slane %v1871, 5
        %v2427 = vsel %vm974, %v2425, %v2426
        %v2428 = vrot.slane %v2274, 5
        %v2429 = vrot.slane %v2428, 4
        %v2430 = vrot.slane %v1873, 5
        %v2431 = vsel %vm974, %v2429, %v2430
        %v2432 = vrot.slane %v2430, 4
        %v2433 = vrot.slane %v1874, 5
        %v2434 = vsel %vm974, %v2432, %v2433
        %v2435 = vunpack.c.l.b16 %v1888
        %v2436 = vunpack.c.l.b16 %v1898
        %v2437 = vunpack.c.l.b16 %v1912
        %v2438 = vunpack.c.l.b16 %v1922
        %v2439 = vunpack.c.l.b16 %v1936
        %v2440 = vunpack.c.l.b16 %v1946
        %v2441 = vunpack.c.l.b16 %v1960
        %v2442 = vunpack.c.l.b16 %v1970
        %v2443 = vunpack.c.l.b16 %v1984
        %v2444 = vunpack.c.l.b16 %v1994
        %v2445 = vunpack.c.l.b16 %v2008
        %v2446 = vunpack.c.l.b16 %v2018
        %v2447 = vunpack.c.l.b16 %v2032
        %v2448 = vunpack.c.l.b16 %v2042
        %v2449 = vunpack.c.l.b16 %v2056
        %v2450 = vunpack.c.l.b16 %v2066
        %v2451 = vunpack.c.l.b16 %v2080
        %v2452 = vunpack.c.l.b16 %v2090
        %v2453 = vunpack.c.l.b16 %v2104
        %v2454 = vunpack.c.l.b16 %v2114
        %v2455 = vunpack.c.l.b16 %v2128
        %v2456 = vunpack.c.l.b16 %v2138
        %v2457 = vunpack.c.l.b16 %v2152
        %v2458 = vunpack.c.l.b16 %v2162
        %v2459 = vunpack.c.l.b16 %v2176
        %v2460 = vunpack.c.l.b16 %v2186
        %v2461 = vunpack.c.l.b16 %v2200
        %v2462 = vunpack.c.l.b16 %v2210
        %v2463 = vunpack.c.l.b16 %v2224
        %v2464 = vunpack.c.l.b16 %v2234
        %v2465 = vunpack.c.l.b16 %v2248
        %v2466 = vunpack.c.l.b16 %v2258
        %v2467 = vpack.c.b16 %v2436, %v2435
        %v2468 = vpack.c.b16 %v2438, %v2437
        %v2469 = vpack.c.b16 %v2440, %v2439
        %v2470 = vpack.c.b16 %v2442, %v2441
        %v2471 = vpack.c.b16 %v2444, %v2443
        %v2472 = vpack.c.b16 %v2446, %v2445
        %v2473 = vpack.c.b16 %v2448, %v2447
        %v2474 = vpack.c.b16 %v2450, %v2449
        %v2475 = vpack.c.b16 %v2452, %v2451
        %v2476 = vpack.c.b16 %v2454, %v2453
        %v2477 = vpack.c.b16 %v2456, %v2455
        %v2478 = vpack.c.b16 %v2458, %v2457
        %v2479 = vpack.c.b16 %v2460, %v2459
        %v2480 = vpack.c.b16 %v2462, %v2461
        %v2481 = vpack.c.b16 %v2464, %v2463
        %v2482 = vpack.c.b16 %v2466, %v2465
        %v2499 = vunpack.c.l.b16 %v2326
        %v2500 = vunpack.c.l.b16 %v2329
        %v2501 = vunpack.c.l.b16 %v2333
        %v2502 = vunpack.c.l.b16 %v2336
        %v2503 = vunpack.c.l.b16 %v2340
        %v2504 = vunpack.c.l.b16 %v2343
        %v2505 = vunpack.c.l.b16 %v2347
        %v2506 = vunpack.c.l.b16 %v2350
        %v2507 = vunpack.c.l.b16 %v2354
        %v2508 = vunpack.c.l.b16 %v2357
        %v2509 = vunpack.c.l.b16 %v2361
        %v2510 = vunpack.c.l.b16 %v2364
        %v2511 = vunpack.c.l.b16 %v2368
        %v2512 = vunpack.c.l.b16 %v2371
        %v2513 = vunpack.c.l.b16 %v2375
        %v2514 = vunpack.c.l.b16 %v2378
        %v2515 = vunpack.c.l.b16 %v2382
        %v2516 = vunpack.c.l.b16 %v2385
        %v2517 = vunpack.c.l.b16 %v2389
        %v2518 = vunpack.c.l.b16 %v2392
        %v2519 = vunpack.c.l.b16 %v2396
        %v2520 = vunpack.c.l.b16 %v2399
        %v2521 = vunpack.c.l.b16 %v2403
        %v2522 = vunpack.c.l.b16 %v2406
        %v2523 = vunpack.c.l.b16 %v2410
        %v2524 = vunpack.c.l.b16 %v2413
        %v2525 = vunpack.c.l.b16 %v2417
        %v2526 = vunpack.c.l.b16 %v2420
        %v2527 = vunpack.c.l.b16 %v2424
        %v2528 = vunpack.c.l.b16 %v2427
        %v2529 = vunpack.c.l.b16 %v2431
        %v2530 = vunpack.c.l.b16 %v2434
        %v2531 = vpack.c.b16 %v2500, %v2499
        %v2532 = vpack.c.b16 %v2502, %v2501
        %v2533 = vpack.c.b16 %v2504, %v2503
        %v2534 = vpack.c.b16 %v2506, %v2505
        %v2535 = vpack.c.b16 %v2508, %v2507
        %v2536 = vpack.c.b16 %v2510, %v2509
        %v2537 = vpack.c.b16 %v2512, %v2511
        %v2538 = vpack.c.b16 %v2514, %v2513
        %v2539 = vpack.c.b16 %v2516, %v2515
        %v2540 = vpack.c.b16 %v2518, %v2517
        %v2541 = vpack.c.b16 %v2520, %v2519
        %v2542 = vpack.c.b16 %v2522, %v2521
        %v2543 = vpack.c.b16 %v2524, %v2523
        %v2544 = vpack.c.b16 %v2526, %v2525
        %v2545 = vpack.c.b16 %v2528, %v2527
        %v2546 = vpack.c.b16 %v2530, %v2529
        %s2563 = scalar_lea.vmem %s1, 256
        %v2564 = vld [vmem:[%s2563] sm:$0xf]
        %v2565 = vld [vmem:[%s2563 + $0x4] sm:$0xf]
        %v2566 = vld [vmem:[%s2563 + $0x8] sm:$0xf]
        %v2567 = vld [vmem:[%s2563 + $0xc] sm:$0xf]
        %v2568 = vld [vmem:[%s2563 + $0x10] sm:$0xf]
        %v2569 = vld [vmem:[%s2563 + $0x14] sm:$0xf]
        %v2570 = vld [vmem:[%s2563 + $0x18] sm:$0xf]
        %v2571 = vld [vmem:[%s2563 + $0x1c] sm:$0xf]
        %v2572 = vld [vmem:[%s2563 + $0x20] sm:$0xf]
        %v2573 = vld [vmem:[%s2563 + $0x24] sm:$0xf]
        %v2574 = vld [vmem:[%s2563 + $0x28] sm:$0xf]
        %v2575 = vld [vmem:[%s2563 + $0x2c] sm:$0xf]
        %v2576 = vld [vmem:[%s2563 + $0x30] sm:$0xf]
        %v2577 = vld [vmem:[%s2563 + $0x34] sm:$0xf]
        %v2578 = vld [vmem:[%s2563 + $0x38] sm:$0xf]
        %v2579 = vld [vmem:[%s2563 + $0x3c] sm:$0xf]
        %v2580 = vld [vmem:[%s2563 + $0x40] sm:$0xf]
        %v2581 = vld [vmem:[%s2563 + $0x44] sm:$0xf]
        %v2582 = vld [vmem:[%s2563 + $0x48] sm:$0xf]
        %v2583 = vld [vmem:[%s2563 + $0x4c] sm:$0xf]
        %v2584 = vld [vmem:[%s2563 + $0x50] sm:$0xf]
        %v2585 = vld [vmem:[%s2563 + $0x54] sm:$0xf]
        %v2586 = vld [vmem:[%s2563 + $0x58] sm:$0xf]
        %v2587 = vld [vmem:[%s2563 + $0x5c] sm:$0xf]
        %v2588 = vld [vmem:[%s2563 + $0x60] sm:$0xf]
        %v2589 = vld [vmem:[%s2563 + $0x64] sm:$0xf]
        %v2590 = vld [vmem:[%s2563 + $0x68] sm:$0xf]
        %v2591 = vld [vmem:[%s2563 + $0x6c] sm:$0xf]
        %v2592 = vld [vmem:[%s2563 + $0x70] sm:$0xf]
        %v2593 = vld [vmem:[%s2563 + $0x74] sm:$0xf]
        %v2594 = vld [vmem:[%s2563 + $0x78] sm:$0xf]
        %v2595 = vld [vmem:[%s2563 + $0x7c] sm:$0xf]
        %v2628 = vunpack.c.l.b16 %v2564
        %v2629 = vunpack.c.l.b16 %v2565
        %v2630 = vunpack.c.l.b16 %v2566
        %v2631 = vunpack.c.l.b16 %v2567
        %v2632 = vunpack.c.l.b16 %v2568
        %v2633 = vunpack.c.l.b16 %v2569
        %v2634 = vunpack.c.l.b16 %v2570
        %v2635 = vunpack.c.l.b16 %v2571
        %v2636 = vunpack.c.l.b16 %v2572
        %v2637 = vunpack.c.l.b16 %v2573
        %v2638 = vunpack.c.l.b16 %v2574
        %v2639 = vunpack.c.l.b16 %v2575
        %v2640 = vunpack.c.l.b16 %v2576
        %v2641 = vunpack.c.l.b16 %v2577
        %v2642 = vunpack.c.l.b16 %v2578
        %v2643 = vunpack.c.l.b16 %v2579
        %v2644 = vunpack.c.l.b16 %v2580
        %v2645 = vunpack.c.l.b16 %v2581
        %v2646 = vunpack.c.l.b16 %v2582
        %v2647 = vunpack.c.l.b16 %v2583
        %v2648 = vunpack.c.l.b16 %v2584
        %v2649 = vunpack.c.l.b16 %v2585
        %v2650 = vunpack.c.l.b16 %v2586
        %v2651 = vunpack.c.l.b16 %v2587
        %v2652 = vunpack.c.l.b16 %v2588
        %v2653 = vunpack.c.l.b16 %v2589
        %v2654 = vunpack.c.l.b16 %v2590
        %v2655 = vunpack.c.l.b16 %v2591
        %v2656 = vunpack.c.l.b16 %v2592
        %v2657 = vunpack.c.l.b16 %v2593
        %v2658 = vunpack.c.l.b16 %v2594
        %v2659 = vunpack.c.l.b16 %v2595
        %v2660 = vpack.c.b16 %v2629, %v2628
        %v2661 = vpack.c.b16 %v2631, %v2630
        %v2662 = vpack.c.b16 %v2633, %v2632
        %v2663 = vpack.c.b16 %v2635, %v2634
        %v2664 = vpack.c.b16 %v2637, %v2636
        %v2665 = vpack.c.b16 %v2639, %v2638
        %v2666 = vpack.c.b16 %v2641, %v2640
        %v2667 = vpack.c.b16 %v2643, %v2642
        %v2668 = vpack.c.b16 %v2645, %v2644
        %v2669 = vpack.c.b16 %v2647, %v2646
        %v2670 = vpack.c.b16 %v2649, %v2648
        %v2671 = vpack.c.b16 %v2651, %v2650
        %v2672 = vpack.c.b16 %v2653, %v2652
        %v2673 = vpack.c.b16 %v2655, %v2654
        %v2674 = vpack.c.b16 %v2657, %v2656
        %v2675 = vpack.c.b16 %v2659, %v2658
        %2692 = vmatprep.subr.bf16.mxu0 0
        %2693 = vmatpush1.bf16.msra.mxu0 %v2667
        %2694 = vmatprep.subr.bf16.mxu0 0
        %2695 = vmatpush1.bf16.msra.mxu0 %v2666
        %2696 = vmatprep.subr.bf16.mxu0 0
        %2697 = vmatpush1.bf16.msra.mxu0 %v2665
        %2698 = vmatprep.subr.bf16.mxu0 0
        %2699 = vmatpush1.bf16.msra.mxu0 %v2664
        %2700 = vmatprep.subr.bf16.mxu0 0
        %2701 = vmatpush1.bf16.msra.mxu0 %v2663
        %2702 = vmatprep.subr.bf16.mxu0 0
        %2703 = vmatpush1.bf16.msra.mxu0 %v2662
        %2704 = vmatprep.subr.bf16.mxu0 0
        %2705 = vmatpush1.bf16.msra.mxu0 %v2661
        %2706 = vmatprep.subr.bf16.mxu0 0
        %2707 = vmatpush1.bf16.msra.mxu0 %v2660
        %2708 = vmatprep.subr.bf16.mxu0 0
        %2709 = vmatpush2.bf16.msra.mxu0 %v2675
        %2710 = vmatprep.subr.bf16.mxu0 0
        %2711 = vmatpush2.bf16.msra.mxu0 %v2674
        %2712 = vmatprep.subr.bf16.mxu0 0
        %2713 = vmatpush2.bf16.msra.mxu0 %v2673
        %2714 = vmatprep.subr.bf16.mxu0 0
        %2715 = vmatpush2.bf16.msra.mxu0 %v2672
        %2716 = vmatprep.subr.bf16.mxu0 0
        %2717 = vmatpush2.bf16.msra.mxu0 %v2671
        %2718 = vmatprep.subr.bf16.mxu0 0
        %2719 = vmatpush2.bf16.msra.mxu0 %v2670
        %2720 = vmatprep.subr.bf16.mxu0 0
        %2721 = vmatpush2.bf16.msra.mxu0 %v2669
        %2722 = vmatprep.subr.bf16.mxu0 0
        %2723 = vmatpush2.bf16.msra.mxu0 %v2668
        %2724 = vmatprep.mubr.bf16.mxu0 %v2531
        %2725 = vmatmul.mubr.bf16.gmra.mxu0 %v2467
        %v2726 = vpop.f32.mrf.mxu0
        %v2727 = vadd.f32 0.0, %v2726
        %v2728 = vpop.f32.mrf.mxu0
        %v2729 = vpop.f32.mrf.mxu0
        %v2730 = vadd.f32 0.0, %v2729
        %v2731 = vpop.f32.mrf.mxu0
        %2732 = vmatprep.mubr.bf16.mxu0 %v2532
        %2733 = vmatmul.mubr.bf16.gmra.mxu0 %v2468
        %v2734 = vpop.f32.mrf.mxu0
        %v2735 = vadd.f32 0.0, %v2734
        %v2736 = vpop.f32.mrf.mxu0
        %v2737 = vpop.f32.mrf.mxu0
        %v2738 = vadd.f32 0.0, %v2737
        %v2739 = vpop.f32.mrf.mxu0
        %2740 = vmatprep.mubr.bf16.mxu0 %v2533
        %2741 = vmatmul.mubr.bf16.gmra.mxu0 %v2469
        %v2742 = vpop.f32.mrf.mxu0
        %v2743 = vadd.f32 0.0, %v2742
        %v2744 = vpop.f32.mrf.mxu0
        %v2745 = vpop.f32.mrf.mxu0
        %v2746 = vadd.f32 0.0, %v2745
        %v2747 = vpop.f32.mrf.mxu0
        %2748 = vmatprep.mubr.bf16.mxu0 %v2534
        %2749 = vmatmul.mubr.bf16.gmra.mxu0 %v2470
        %v2750 = vpop.f32.mrf.mxu0
        %v2751 = vadd.f32 0.0, %v2750
        %v2752 = vpop.f32.mrf.mxu0
        %v2753 = vpop.f32.mrf.mxu0
        %v2754 = vadd.f32 0.0, %v2753
        %v2755 = vpop.f32.mrf.mxu0
        %2756 = vmatprep.mubr.bf16.mxu0 %v2535
        %2757 = vmatmul.mubr.bf16.gmra.mxu0 %v2471
        %v2758 = vpop.f32.mrf.mxu0
        %v2759 = vadd.f32 0.0, %v2758
        %v2760 = vpop.f32.mrf.mxu0
        %v2761 = vpop.f32.mrf.mxu0
        %v2762 = vadd.f32 0.0, %v2761
        %v2763 = vpop.f32.mrf.mxu0
        %2764 = vmatprep.mubr.bf16.mxu0 %v2536
        %2765 = vmatmul.mubr.bf16.gmra.mxu0 %v2472
        %v2766 = vpop.f32.mrf.mxu0
        %v2767 = vadd.f32 0.0, %v2766
        %v2768 = vpop.f32.mrf.mxu0
        %v2769 = vpop.f32.mrf.mxu0
        %v2770 = vadd.f32 0.0, %v2769
        %v2771 = vpop.f32.mrf.mxu0
        %2772 = vmatprep.mubr.bf16.mxu0 %v2537
        %2773 = vmatmul.mubr.bf16.gmra.mxu0 %v2473
        %v2774 = vpop.f32.mrf.mxu0
        %v2775 = vadd.f32 0.0, %v2774
        %v2776 = vpop.f32.mrf.mxu0
        %v2777 = vpop.f32.mrf.mxu0
        %v2778 = vadd.f32 0.0, %v2777
        %v2779 = vpop.f32.mrf.mxu0
        %2780 = vmatprep.mubr.bf16.mxu0 %v2538
        %2781 = vmatmul.mubr.bf16.gmra.mxu0 %v2474
        %v2782 = vpop.f32.mrf.mxu0
        %v2783 = vadd.f32 0.0, %v2782
        %v2784 = vpop.f32.mrf.mxu0
        %v2785 = vpop.f32.mrf.mxu0
        %v2786 = vadd.f32 0.0, %v2785
        %v2787 = vpop.f32.mrf.mxu0
        %2788 = vmatprep.mubr.bf16.mxu0 %v2539
        %2789 = vmatmul.mubr.bf16.gmra.mxu0 %v2475
        %v2790 = vpop.f32.mrf.mxu0
        %v2791 = vadd.f32 0.0, %v2790
        %v2792 = vpop.f32.mrf.mxu0
        %v2793 = vpop.f32.mrf.mxu0
        %v2794 = vadd.f32 0.0, %v2793
        %v2795 = vpop.f32.mrf.mxu0
        %2796 = vmatprep.mubr.bf16.mxu0 %v2540
        %2797 = vmatmul.mubr.bf16.gmra.mxu0 %v2476
        %v2798 = vpop.f32.mrf.mxu0
        %v2799 = vadd.f32 0.0, %v2798
        %v2800 = vpop.f32.mrf.mxu0
        %v2801 = vpop.f32.mrf.mxu0
        %v2802 = vadd.f32 0.0, %v2801
        %v2803 = vpop.f32.mrf.mxu0
        %2804 = vmatprep.mubr.bf16.mxu0 %v2541
        %2805 = vmatmul.mubr.bf16.gmra.mxu0 %v2477
        %v2806 = vpop.f32.mrf.mxu0
        %v2807 = vadd.f32 0.0, %v2806
        %v2808 = vpop.f32.mrf.mxu0
        %v2809 = vpop.f32.mrf.mxu0
        %v2810 = vadd.f32 0.0, %v2809
        %v2811 = vpop.f32.mrf.mxu0
        %2812 = vmatprep.mubr.bf16.mxu0 %v2542
        %2813 = vmatmul.mubr.bf16.gmra.mxu0 %v2478
        %v2814 = vpop.f32.mrf.mxu0
        %v2815 = vadd.f32 0.0, %v2814
        %v2816 = vpop.f32.mrf.mxu0
        %v2817 = vpop.f32.mrf.mxu0
        %v2818 = vadd.f32 0.0, %v2817
        %v2819 = vpop.f32.mrf.mxu0
        %2820 = vmatprep.mubr.bf16.mxu0 %v2543
        %2821 = vmatmul.mubr.bf16.gmra.mxu0 %v2479
        %v2822 = vpop.f32.mrf.mxu0
        %v2823 = vadd.f32 0.0, %v2822
        %v2824 = vpop.f32.mrf.mxu0
        %v2825 = vpop.f32.mrf.mxu0
        %v2826 = vadd.f32 0.0, %v2825
        %v2827 = vpop.f32.mrf.mxu0
        %2828 = vmatprep.mubr.bf16.mxu0 %v2544
        %2829 = vmatmul.mubr.bf16.gmra.mxu0 %v2480
        %v2830 = vpop.f32.mrf.mxu0
        %v2831 = vadd.f32 0.0, %v2830
        %v2832 = vpop.f32.mrf.mxu0
        %v2833 = vpop.f32.mrf.mxu0
        %v2834 = vadd.f32 0.0, %v2833
        %v2835 = vpop.f32.mrf.mxu0
        %2836 = vmatprep.mubr.bf16.mxu0 %v2545
        %2837 = vmatmul.mubr.bf16.gmra.mxu0 %v2481
        %v2838 = vpop.f32.mrf.mxu0
        %v2839 = vadd.f32 0.0, %v2838
        %v2840 = vpop.f32.mrf.mxu0
        %v2841 = vpop.f32.mrf.mxu0
        %v2842 = vadd.f32 0.0, %v2841
        %v2843 = vpop.f32.mrf.mxu0
        %2844 = vmatprep.mubr.bf16.mxu0 %v2546
        %2845 = vmatmul.mubr.bf16.gmra.mxu0 %v2482
        %v2846 = vpop.f32.mrf.mxu0
        %v2847 = vadd.f32 0.0, %v2846
        %v2848 = vpop.f32.mrf.mxu0
        %v2849 = vpop.f32.mrf.mxu0
        %v2850 = vadd.f32 0.0, %v2849
        %v2851 = vpop.f32.mrf.mxu0
        %2852 = vdwg.mxu0
        %v2853 = vadd.f32 %v1701, %v2727
        %v2854 = vadd.f32 %v1704, %v2730
        %v2855 = vadd.f32 %v1709, %v2735
        %v2856 = vadd.f32 %v1712, %v2738
        %v2857 = vadd.f32 %v1717, %v2743
        %v2858 = vadd.f32 %v1720, %v2746
        %v2859 = vadd.f32 %v1725, %v2751
        %v2860 = vadd.f32 %v1728, %v2754
        %v2861 = vadd.f32 %v1733, %v2759
        %v2862 = vadd.f32 %v1736, %v2762
        %v2863 = vadd.f32 %v1741, %v2767
        %v2864 = vadd.f32 %v1744, %v2770
        %v2865 = vadd.f32 %v1749, %v2775
        %v2866 = vadd.f32 %v1752, %v2778
        %v2867 = vadd.f32 %v1757, %v2783
        %v2868 = vadd.f32 %v1760, %v2786
        %v2869 = vadd.f32 %v1765, %v2791
        %v2870 = vadd.f32 %v1768, %v2794
        %v2871 = vadd.f32 %v1773, %v2799
        %v2872 = vadd.f32 %v1776, %v2802
        %v2873 = vadd.f32 %v1781, %v2807
        %v2874 = vadd.f32 %v1784, %v2810
        %v2875 = vadd.f32 %v1789, %v2815
        %v2876 = vadd.f32 %v1792, %v2818
        %v2877 = vadd.f32 %v1797, %v2823
        %v2878 = vadd.f32 %v1800, %v2826
        %v2879 = vadd.f32 %v1805, %v2831
        %v2880 = vadd.f32 %v1808, %v2834
        %v2881 = vadd.f32 %v1813, %v2839
        %v2882 = vadd.f32 %v1816, %v2842
        %v2883 = vadd.f32 %v1821, %v2847
        %v2884 = vadd.f32 %v1824, %v2850
        %s2885 = scalar_lea.vmem %s237, 24
        %v2886 = vld [vmem:[%s2885] sm:$0xf]
        %v2887 = vld [vmem:[%s2885 + $0x4] sm:$0xf]
        %v2888 = vld [vmem:[%s2885 + $0xc] sm:$0xf]
        %v2889 = vld [vmem:[%s2885 + $0x10] sm:$0xf]
        %v2890 = vld [vmem:[%s2885 + $0x18] sm:$0xf]
        %v2891 = vld [vmem:[%s2885 + $0x1c] sm:$0xf]
        %v2892 = vld [vmem:[%s2885 + $0x24] sm:$0xf]
        %v2893 = vld [vmem:[%s2885 + $0x28] sm:$0xf]
        %v2894 = vld [vmem:[%s2885 + $0x30] sm:$0xf]
        %v2895 = vld [vmem:[%s2885 + $0x34] sm:$0xf]
        %v2896 = vld [vmem:[%s2885 + $0x3c] sm:$0xf]
        %v2897 = vld [vmem:[%s2885 + $0x40] sm:$0xf]
        %v2898 = vld [vmem:[%s2885 + $0x48] sm:$0xf]
        %v2899 = vld [vmem:[%s2885 + $0x4c] sm:$0xf]
        %v2900 = vld [vmem:[%s2885 + $0x54] sm:$0xf]
        %v2901 = vld [vmem:[%s2885 + $0x58] sm:$0xf]
        %v2902 = vld [vmem:[%s2885 + $0x60] sm:$0xf]
        %v2903 = vld [vmem:[%s2885 + $0x64] sm:$0xf]
        %v2904 = vld [vmem:[%s2885 + $0x6c] sm:$0xf]
        %v2905 = vld [vmem:[%s2885 + $0x70] sm:$0xf]
        %v2906 = vld [vmem:[%s2885 + $0x78] sm:$0xf]
        %v2907 = vld [vmem:[%s2885 + $0x7c] sm:$0xf]
        %v2908 = vld [vmem:[%s2885 + $0x84] sm:$0xf]
        %v2909 = vld [vmem:[%s2885 + $0x88] sm:$0xf]
        %v2910 = vld [vmem:[%s2885 + $0x90] sm:$0xf]
        %v2911 = vld [vmem:[%s2885 + $0x94] sm:$0xf]
        %v2912 = vld [vmem:[%s2885 + $0x9c] sm:$0xf]
        %v2913 = vld [vmem:[%s2885 + $0xa0] sm:$0xf]
        %v2914 = vld [vmem:[%s2885 + $0xa8] sm:$0xf]
        %v2915 = vld [vmem:[%s2885 + $0xac] sm:$0xf]
        %v2916 = vld [vmem:[%s2885 + $0xb4] sm:$0xf]
        %v2917 = vld [vmem:[%s2885 + $0xb8] sm:$0xf]
        %v2918 = vld [vmem:[%s2885 + $0x8] sm:$0x1]
        %v2919 = vld [vmem:[%s2885 + $0x14] sm:$0x1]
        %v2920 = vld [vmem:[%s2885 + $0x20] sm:$0x1]
        %v2921 = vld [vmem:[%s2885 + $0x2c] sm:$0x1]
        %v2922 = vld [vmem:[%s2885 + $0x38] sm:$0x1]
        %v2923 = vld [vmem:[%s2885 + $0x44] sm:$0x1]
        %v2924 = vld [vmem:[%s2885 + $0x50] sm:$0x1]
        %v2925 = vld [vmem:[%s2885 + $0x5c] sm:$0x1]
        %v2926 = vld [vmem:[%s2885 + $0x68] sm:$0x1]
        %v2927 = vld [vmem:[%s2885 + $0x74] sm:$0x1]
        %v2928 = vld [vmem:[%s2885 + $0x80] sm:$0x1]
        %v2929 = vld [vmem:[%s2885 + $0x8c] sm:$0x1]
        %v2930 = vld [vmem:[%s2885 + $0x98] sm:$0x1]
        %v2931 = vld [vmem:[%s2885 + $0xa4] sm:$0x1]
        %v2932 = vld [vmem:[%s2885 + $0xb0] sm:$0x1]
        %v2933 = vld [vmem:[%s2885 + $0xbc] sm:$0x1]
        %v2935 = vshrl.u32 %v2886, 16
        %v2937 = vrot.slane %v2935, 4
        %v2938 = vshll.u32 %v2886, 16
        %v2940 = vrot.slane %v2938, 5
        %v2941 = vor.u32 %v2937, %v2940
        %v2942 = vrot.slane %v2941, 4
        %v2944 = vshll.u32 %v2887, 16
        %v2946 = vrot.slane %v2944, 5
        %v2947 = vsel %vm347, %v2942, %v2946
        %v2948 = vshrl.u32 %v2887, 16
        %v2950 = vrot.slane %v2948, 4
        %v2951 = vor.u32 %v2950, %v2946
        %v2952 = vrot.slane %v2951, 4
        %v2954 = vshll.u32 %v2918, 16
        %v2956 = vrot.slane %v2954, 5
        %v2957 = vsel %vm347, %v2952, %v2956
        %v2959 = vshrl.u32 %v2888, 16
        %v2961 = vrot.slane %v2959, 4
        %v2962 = vshll.u32 %v2888, 16
        %v2964 = vrot.slane %v2962, 5
        %v2965 = vor.u32 %v2961, %v2964
        %v2966 = vrot.slane %v2965, 4
        %v2968 = vshll.u32 %v2889, 16
        %v2970 = vrot.slane %v2968, 5
        %v2971 = vsel %vm347, %v2966, %v2970
        %v2972 = vshrl.u32 %v2889, 16
        %v2974 = vrot.slane %v2972, 4
        %v2975 = vor.u32 %v2974, %v2970
        %v2976 = vrot.slane %v2975, 4
        %v2978 = vshll.u32 %v2919, 16
        %v2980 = vrot.slane %v2978, 5
        %v2981 = vsel %vm347, %v2976, %v2980
        %v2983 = vshrl.u32 %v2890, 16
        %v2985 = vrot.slane %v2983, 4
        %v2986 = vshll.u32 %v2890, 16
        %v2988 = vrot.slane %v2986, 5
        %v2989 = vor.u32 %v2985, %v2988
        %v2990 = vrot.slane %v2989, 4
        %v2992 = vshll.u32 %v2891, 16
        %v2994 = vrot.slane %v2992, 5
        %v2995 = vsel %vm347, %v2990, %v2994
        %v2996 = vshrl.u32 %v2891, 16
        %v2998 = vrot.slane %v2996, 4
        %v2999 = vor.u32 %v2998, %v2994
        %v3000 = vrot.slane %v2999, 4
        %v3002 = vshll.u32 %v2920, 16
        %v3004 = vrot.slane %v3002, 5
        %v3005 = vsel %vm347, %v3000, %v3004
        %v3007 = vshrl.u32 %v2892, 16
        %v3009 = vrot.slane %v3007, 4
        %v3010 = vshll.u32 %v2892, 16
        %v3012 = vrot.slane %v3010, 5
        %v3013 = vor.u32 %v3009, %v3012
        %v3014 = vrot.slane %v3013, 4
        %v3016 = vshll.u32 %v2893, 16
        %v3018 = vrot.slane %v3016, 5
        %v3019 = vsel %vm347, %v3014, %v3018
        %v3020 = vshrl.u32 %v2893, 16
        %v3022 = vrot.slane %v3020, 4
        %v3023 = vor.u32 %v3022, %v3018
        %v3024 = vrot.slane %v3023, 4
        %v3026 = vshll.u32 %v2921, 16
        %v3028 = vrot.slane %v3026, 5
        %v3029 = vsel %vm347, %v3024, %v3028
        %v3031 = vshrl.u32 %v2894, 16
        %v3033 = vrot.slane %v3031, 4
        %v3034 = vshll.u32 %v2894, 16
        %v3036 = vrot.slane %v3034, 5
        %v3037 = vor.u32 %v3033, %v3036
        %v3038 = vrot.slane %v3037, 4
        %v3040 = vshll.u32 %v2895, 16
        %v3042 = vrot.slane %v3040, 5
        %v3043 = vsel %vm347, %v3038, %v3042
        %v3044 = vshrl.u32 %v2895, 16
        %v3046 = vrot.slane %v3044, 4
        %v3047 = vor.u32 %v3046, %v3042
        %v3048 = vrot.slane %v3047, 4
        %v3050 = vshll.u32 %v2922, 16
        %v3052 = vrot.slane %v3050, 5
        %v3053 = vsel %vm347, %v3048, %v3052
        %v3055 = vshrl.u32 %v2896, 16
        %v3057 = vrot.slane %v3055, 4
        %v3058 = vshll.u32 %v2896, 16
        %v3060 = vrot.slane %v3058, 5
        %v3061 = vor.u32 %v3057, %v3060
        %v3062 = vrot.slane %v3061, 4
        %v3064 = vshll.u32 %v2897, 16
        %v3066 = vrot.slane %v3064, 5
        %v3067 = vsel %vm347, %v3062, %v3066
        %v3068 = vshrl.u32 %v2897, 16
        %v3070 = vrot.slane %v3068, 4
        %v3071 = vor.u32 %v3070, %v3066
        %v3072 = vrot.slane %v3071, 4
        %v3074 = vshll.u32 %v2923, 16
        %v3076 = vrot.slane %v3074, 5
        %v3077 = vsel %vm347, %v3072, %v3076
        %v3079 = vshrl.u32 %v2898, 16
        %v3081 = vrot.slane %v3079, 4
        %v3082 = vshll.u32 %v2898, 16
        %v3084 = vrot.slane %v3082, 5
        %v3085 = vor.u32 %v3081, %v3084
        %v3086 = vrot.slane %v3085, 4
        %v3088 = vshll.u32 %v2899, 16
        %v3090 = vrot.slane %v3088, 5
        %v3091 = vsel %vm347, %v3086, %v3090
        %v3092 = vshrl.u32 %v2899, 16
        %v3094 = vrot.slane %v3092, 4
        %v3095 = vor.u32 %v3094, %v3090
        %v3096 = vrot.slane %v3095, 4
        %v3098 = vshll.u32 %v2924, 16
        %v3100 = vrot.slane %v3098, 5
        %v3101 = vsel %vm347, %v3096, %v3100
        %v3103 = vshrl.u32 %v2900, 16
        %v3105 = vrot.slane %v3103, 4
        %v3106 = vshll.u32 %v2900, 16
        %v3108 = vrot.slane %v3106, 5
        %v3109 = vor.u32 %v3105, %v3108
        %v3110 = vrot.slane %v3109, 4
        %v3112 = vshll.u32 %v2901, 16
        %v3114 = vrot.slane %v3112, 5
        %v3115 = vsel %vm347, %v3110, %v3114
        %v3116 = vshrl.u32 %v2901, 16
        %v3118 = vrot.slane %v3116, 4
        %v3119 = vor.u32 %v3118, %v3114
        %v3120 = vrot.slane %v3119, 4
        %v3122 = vshll.u32 %v2925, 16
        %v3124 = vrot.slane %v3122, 5
        %v3125 = vsel %vm347, %v3120, %v3124
        %v3127 = vshrl.u32 %v2902, 16
        %v3129 = vrot.slane %v3127, 4
        %v3130 = vshll.u32 %v2902, 16
        %v3132 = vrot.slane %v3130, 5
        %v3133 = vor.u32 %v3129, %v3132
        %v3134 = vrot.slane %v3133, 4
        %v3136 = vshll.u32 %v2903, 16
        %v3138 = vrot.slane %v3136, 5
        %v3139 = vsel %vm347, %v3134, %v3138
        %v3140 = vshrl.u32 %v2903, 16
        %v3142 = vrot.slane %v3140, 4
        %v3143 = vor.u32 %v3142, %v3138
        %v3144 = vrot.slane %v3143, 4
        %v3146 = vshll.u32 %v2926, 16
        %v3148 = vrot.slane %v3146, 5
        %v3149 = vsel %vm347, %v3144, %v3148
        %v3151 = vshrl.u32 %v2904, 16
        %v3153 = vrot.slane %v3151, 4
        %v3154 = vshll.u32 %v2904, 16
        %v3156 = vrot.slane %v3154, 5
        %v3157 = vor.u32 %v3153, %v3156
        %v3158 = vrot.slane %v3157, 4
        %v3160 = vshll.u32 %v2905, 16
        %v3162 = vrot.slane %v3160, 5
        %v3163 = vsel %vm347, %v3158, %v3162
        %v3164 = vshrl.u32 %v2905, 16
        %v3166 = vrot.slane %v3164, 4
        %v3167 = vor.u32 %v3166, %v3162
        %v3168 = vrot.slane %v3167, 4
        %v3170 = vshll.u32 %v2927, 16
        %v3172 = vrot.slane %v3170, 5
        %v3173 = vsel %vm347, %v3168, %v3172
        %v3175 = vshrl.u32 %v2906, 16
        %v3177 = vrot.slane %v3175, 4
        %v3178 = vshll.u32 %v2906, 16
        %v3180 = vrot.slane %v3178, 5
        %v3181 = vor.u32 %v3177, %v3180
        %v3182 = vrot.slane %v3181, 4
        %v3184 = vshll.u32 %v2907, 16
        %v3186 = vrot.slane %v3184, 5
        %v3187 = vsel %vm347, %v3182, %v3186
        %v3188 = vshrl.u32 %v2907, 16
        %v3190 = vrot.slane %v3188, 4
        %v3191 = vor.u32 %v3190, %v3186
        %v3192 = vrot.slane %v3191, 4
        %v3194 = vshll.u32 %v2928, 16
        %v3196 = vrot.slane %v3194, 5
        %v3197 = vsel %vm347, %v3192, %v3196
        %v3199 = vshrl.u32 %v2908, 16
        %v3201 = vrot.slane %v3199, 4
        %v3202 = vshll.u32 %v2908, 16
        %v3204 = vrot.slane %v3202, 5
        %v3205 = vor.u32 %v3201, %v3204
        %v3206 = vrot.slane %v3205, 4
        %v3208 = vshll.u32 %v2909, 16
        %v3210 = vrot.slane %v3208, 5
        %v3211 = vsel %vm347, %v3206, %v3210
        %v3212 = vshrl.u32 %v2909, 16
        %v3214 = vrot.slane %v3212, 4
        %v3215 = vor.u32 %v3214, %v3210
        %v3216 = vrot.slane %v3215, 4
        %v3218 = vshll.u32 %v2929, 16
        %v3220 = vrot.slane %v3218, 5
        %v3221 = vsel %vm347, %v3216, %v3220
        %v3223 = vshrl.u32 %v2910, 16
        %v3225 = vrot.slane %v3223, 4
        %v3226 = vshll.u32 %v2910, 16
        %v3228 = vrot.slane %v3226, 5
        %v3229 = vor.u32 %v3225, %v3228
        %v3230 = vrot.slane %v3229, 4
        %v3232 = vshll.u32 %v2911, 16
        %v3234 = vrot.slane %v3232, 5
        %v3235 = vsel %vm347, %v3230, %v3234
        %v3236 = vshrl.u32 %v2911, 16
        %v3238 = vrot.slane %v3236, 4
        %v3239 = vor.u32 %v3238, %v3234
        %v3240 = vrot.slane %v3239, 4
        %v3242 = vshll.u32 %v2930, 16
        %v3244 = vrot.slane %v3242, 5
        %v3245 = vsel %vm347, %v3240, %v3244
        %v3247 = vshrl.u32 %v2912, 16
        %v3249 = vrot.slane %v3247, 4
        %v3250 = vshll.u32 %v2912, 16
        %v3252 = vrot.slane %v3250, 5
        %v3253 = vor.u32 %v3249, %v3252
        %v3254 = vrot.slane %v3253, 4
        %v3256 = vshll.u32 %v2913, 16
        %v3258 = vrot.slane %v3256, 5
        %v3259 = vsel %vm347, %v3254, %v3258
        %v3260 = vshrl.u32 %v2913, 16
        %v3262 = vrot.slane %v3260, 4
        %v3263 = vor.u32 %v3262, %v3258
        %v3264 = vrot.slane %v3263, 4
        %v3266 = vshll.u32 %v2931, 16
        %v3268 = vrot.slane %v3266, 5
        %v3269 = vsel %vm347, %v3264, %v3268
        %v3271 = vshrl.u32 %v2914, 16
        %v3273 = vrot.slane %v3271, 4
        %v3274 = vshll.u32 %v2914, 16
        %v3276 = vrot.slane %v3274, 5
        %v3277 = vor.u32 %v3273, %v3276
        %v3278 = vrot.slane %v3277, 4
        %v3280 = vshll.u32 %v2915, 16
        %v3282 = vrot.slane %v3280, 5
        %v3283 = vsel %vm347, %v3278, %v3282
        %v3284 = vshrl.u32 %v2915, 16
        %v3286 = vrot.slane %v3284, 4
        %v3287 = vor.u32 %v3286, %v3282
        %v3288 = vrot.slane %v3287, 4
        %v3290 = vshll.u32 %v2932, 16
        %v3292 = vrot.slane %v3290, 5
        %v3293 = vsel %vm347, %v3288, %v3292
        %v3295 = vshrl.u32 %v2916, 16
        %v3297 = vrot.slane %v3295, 4
        %v3298 = vshll.u32 %v2916, 16
        %v3300 = vrot.slane %v3298, 5
        %v3301 = vor.u32 %v3297, %v3300
        %v3302 = vrot.slane %v3301, 4
        %v3304 = vshll.u32 %v2917, 16
        %v3306 = vrot.slane %v3304, 5
        %v3307 = vsel %vm347, %v3302, %v3306
        %v3308 = vshrl.u32 %v2917, 16
        %v3310 = vrot.slane %v3308, 4
        %v3311 = vor.u32 %v3310, %v3306
        %v3312 = vrot.slane %v3311, 4
        %v3314 = vshll.u32 %v2933, 16
        %v3316 = vrot.slane %v3314, 5
        %v3317 = vsel %vm347, %v3312, %v3316
        %v3350 = vunpack.c.l.b16 %v2886
        %v3351 = vunpack.c.l.b16 %v2887
        %v3352 = vunpack.c.l.b16 %v2888
        %v3353 = vunpack.c.l.b16 %v2889
        %v3354 = vunpack.c.l.b16 %v2890
        %v3355 = vunpack.c.l.b16 %v2891
        %v3356 = vunpack.c.l.b16 %v2892
        %v3357 = vunpack.c.l.b16 %v2893
        %v3358 = vunpack.c.l.b16 %v2894
        %v3359 = vunpack.c.l.b16 %v2895
        %v3360 = vunpack.c.l.b16 %v2896
        %v3361 = vunpack.c.l.b16 %v2897
        %v3362 = vunpack.c.l.b16 %v2898
        %v3363 = vunpack.c.l.b16 %v2899
        %v3364 = vunpack.c.l.b16 %v2900
        %v3365 = vunpack.c.l.b16 %v2901
        %v3366 = vunpack.c.l.b16 %v2902
        %v3367 = vunpack.c.l.b16 %v2903
        %v3368 = vunpack.c.l.b16 %v2904
        %v3369 = vunpack.c.l.b16 %v2905
        %v3370 = vunpack.c.l.b16 %v2906
        %v3371 = vunpack.c.l.b16 %v2907
        %v3372 = vunpack.c.l.b16 %v2908
        %v3373 = vunpack.c.l.b16 %v2909
        %v3374 = vunpack.c.l.b16 %v2910
        %v3375 = vunpack.c.l.b16 %v2911
        %v3376 = vunpack.c.l.b16 %v2912
        %v3377 = vunpack.c.l.b16 %v2913
        %v3378 = vunpack.c.l.b16 %v2914
        %v3379 = vunpack.c.l.b16 %v2915
        %v3380 = vunpack.c.l.b16 %v2916
        %v3381 = vunpack.c.l.b16 %v2917
        %v3382 = vpack.c.b16 %v3351, %v3350
        %v3383 = vpack.c.b16 %v3353, %v3352
        %v3384 = vpack.c.b16 %v3355, %v3354
        %v3385 = vpack.c.b16 %v3357, %v3356
        %v3386 = vpack.c.b16 %v3359, %v3358
        %v3387 = vpack.c.b16 %v3361, %v3360
        %v3388 = vpack.c.b16 %v3363, %v3362
        %v3389 = vpack.c.b16 %v3365, %v3364
        %v3390 = vpack.c.b16 %v3367, %v3366
        %v3391 = vpack.c.b16 %v3369, %v3368
        %v3392 = vpack.c.b16 %v3371, %v3370
        %v3393 = vpack.c.b16 %v3373, %v3372
        %v3394 = vpack.c.b16 %v3375, %v3374
        %v3395 = vpack.c.b16 %v3377, %v3376
        %v3396 = vpack.c.b16 %v3379, %v3378
        %v3397 = vpack.c.b16 %v3381, %v3380
        %v3414 = vunpack.c.l.b16 %v2947
        %v3415 = vunpack.c.l.b16 %v2957
        %v3416 = vunpack.c.l.b16 %v2971
        %v3417 = vunpack.c.l.b16 %v2981
        %v3418 = vunpack.c.l.b16 %v2995
        %v3419 = vunpack.c.l.b16 %v3005
        %v3420 = vunpack.c.l.b16 %v3019
        %v3421 = vunpack.c.l.b16 %v3029
        %v3422 = vunpack.c.l.b16 %v3043
        %v3423 = vunpack.c.l.b16 %v3053
        %v3424 = vunpack.c.l.b16 %v3067
        %v3425 = vunpack.c.l.b16 %v3077
        %v3426 = vunpack.c.l.b16 %v3091
        %v3427 = vunpack.c.l.b16 %v3101
        %v3428 = vunpack.c.l.b16 %v3115
        %v3429 = vunpack.c.l.b16 %v3125
        %v3430 = vunpack.c.l.b16 %v3139
        %v3431 = vunpack.c.l.b16 %v3149
        %v3432 = vunpack.c.l.b16 %v3163
        %v3433 = vunpack.c.l.b16 %v3173
        %v3434 = vunpack.c.l.b16 %v3187
        %v3435 = vunpack.c.l.b16 %v3197
        %v3436 = vunpack.c.l.b16 %v3211
        %v3437 = vunpack.c.l.b16 %v3221
        %v3438 = vunpack.c.l.b16 %v3235
        %v3439 = vunpack.c.l.b16 %v3245
        %v3440 = vunpack.c.l.b16 %v3259
        %v3441 = vunpack.c.l.b16 %v3269
        %v3442 = vunpack.c.l.b16 %v3283
        %v3443 = vunpack.c.l.b16 %v3293
        %v3444 = vunpack.c.l.b16 %v3307
        %v3445 = vunpack.c.l.b16 %v3317
        %v3446 = vpack.c.b16 %v3415, %v3414
        %v3447 = vpack.c.b16 %v3417, %v3416
        %v3448 = vpack.c.b16 %v3419, %v3418
        %v3449 = vpack.c.b16 %v3421, %v3420
        %v3450 = vpack.c.b16 %v3423, %v3422
        %v3451 = vpack.c.b16 %v3425, %v3424
        %v3452 = vpack.c.b16 %v3427, %v3426
        %v3453 = vpack.c.b16 %v3429, %v3428
        %v3454 = vpack.c.b16 %v3431, %v3430
        %v3455 = vpack.c.b16 %v3433, %v3432
        %v3456 = vpack.c.b16 %v3435, %v3434
        %v3457 = vpack.c.b16 %v3437, %v3436
        %v3458 = vpack.c.b16 %v3439, %v3438
        %v3459 = vpack.c.b16 %v3441, %v3440
        %v3460 = vpack.c.b16 %v3443, %v3442
        %v3461 = vpack.c.b16 %v3445, %v3444
        %s3478 = scalar_lea.vmem %s1, 384
        %v3479 = vld [vmem:[%s3478] sm:$0xf]
        %v3480 = vld [vmem:[%s3478 + $0x4] sm:$0xf]
        %v3481 = vld [vmem:[%s3478 + $0x8] sm:$0xf]
        %v3482 = vld [vmem:[%s3478 + $0xc] sm:$0xf]
        %v3483 = vld [vmem:[%s3478 + $0x10] sm:$0xf]
        %v3484 = vld [vmem:[%s3478 + $0x14] sm:$0xf]
        %v3485 = vld [vmem:[%s3478 + $0x18] sm:$0xf]
        %v3486 = vld [vmem:[%s3478 + $0x1c] sm:$0xf]
        %v3487 = vld [vmem:[%s3478 + $0x20] sm:$0xf]
        %v3488 = vld [vmem:[%s3478 + $0x24] sm:$0xf]
        %v3489 = vld [vmem:[%s3478 + $0x28] sm:$0xf]
        %v3490 = vld [vmem:[%s3478 + $0x2c] sm:$0xf]
        %v3491 = vld [vmem:[%s3478 + $0x30] sm:$0xf]
        %v3492 = vld [vmem:[%s3478 + $0x34] sm:$0xf]
        %v3493 = vld [vmem:[%s3478 + $0x38] sm:$0xf]
        %v3494 = vld [vmem:[%s3478 + $0x3c] sm:$0xf]
        %v3495 = vld [vmem:[%s3478 + $0x40] sm:$0xf]
        %v3496 = vld [vmem:[%s3478 + $0x44] sm:$0xf]
        %v3497 = vld [vmem:[%s3478 + $0x48] sm:$0xf]
        %v3498 = vld [vmem:[%s3478 + $0x4c] sm:$0xf]
        %v3499 = vld [vmem:[%s3478 + $0x50] sm:$0xf]
        %v3500 = vld [vmem:[%s3478 + $0x54] sm:$0xf]
        %v3501 = vld [vmem:[%s3478 + $0x58] sm:$0xf]
        %v3502 = vld [vmem:[%s3478 + $0x5c] sm:$0xf]
        %v3503 = vld [vmem:[%s3478 + $0x60] sm:$0xf]
        %v3504 = vld [vmem:[%s3478 + $0x64] sm:$0xf]
        %v3505 = vld [vmem:[%s3478 + $0x68] sm:$0xf]
        %v3506 = vld [vmem:[%s3478 + $0x6c] sm:$0xf]
        %v3507 = vld [vmem:[%s3478 + $0x70] sm:$0xf]
        %v3508 = vld [vmem:[%s3478 + $0x74] sm:$0xf]
        %v3509 = vld [vmem:[%s3478 + $0x78] sm:$0xf]
        %v3510 = vld [vmem:[%s3478 + $0x7c] sm:$0xf]
        %v3543 = vunpack.c.l.b16 %v3479
        %v3544 = vunpack.c.l.b16 %v3480
        %v3545 = vunpack.c.l.b16 %v3481
        %v3546 = vunpack.c.l.b16 %v3482
        %v3547 = vunpack.c.l.b16 %v3483
        %v3548 = vunpack.c.l.b16 %v3484
        %v3549 = vunpack.c.l.b16 %v3485
        %v3550 = vunpack.c.l.b16 %v3486
        %v3551 = vunpack.c.l.b16 %v3487
        %v3552 = vunpack.c.l.b16 %v3488
        %v3553 = vunpack.c.l.b16 %v3489
        %v3554 = vunpack.c.l.b16 %v3490
        %v3555 = vunpack.c.l.b16 %v3491
        %v3556 = vunpack.c.l.b16 %v3492
        %v3557 = vunpack.c.l.b16 %v3493
        %v3558 = vunpack.c.l.b16 %v3494
        %v3559 = vunpack.c.l.b16 %v3495
        %v3560 = vunpack.c.l.b16 %v3496
        %v3561 = vunpack.c.l.b16 %v3497
        %v3562 = vunpack.c.l.b16 %v3498
        %v3563 = vunpack.c.l.b16 %v3499
        %v3564 = vunpack.c.l.b16 %v3500
        %v3565 = vunpack.c.l.b16 %v3501
        %v3566 = vunpack.c.l.b16 %v3502
        %v3567 = vunpack.c.l.b16 %v3503
        %v3568 = vunpack.c.l.b16 %v3504
        %v3569 = vunpack.c.l.b16 %v3505
        %v3570 = vunpack.c.l.b16 %v3506
        %v3571 = vunpack.c.l.b16 %v3507
        %v3572 = vunpack.c.l.b16 %v3508
        %v3573 = vunpack.c.l.b16 %v3509
        %v3574 = vunpack.c.l.b16 %v3510
        %v3575 = vpack.c.b16 %v3544, %v3543
        %v3576 = vpack.c.b16 %v3546, %v3545
        %v3577 = vpack.c.b16 %v3548, %v3547
        %v3578 = vpack.c.b16 %v3550, %v3549
        %v3579 = vpack.c.b16 %v3552, %v3551
        %v3580 = vpack.c.b16 %v3554, %v3553
        %v3581 = vpack.c.b16 %v3556, %v3555
        %v3582 = vpack.c.b16 %v3558, %v3557
        %v3583 = vpack.c.b16 %v3560, %v3559
        %v3584 = vpack.c.b16 %v3562, %v3561
        %v3585 = vpack.c.b16 %v3564, %v3563
        %v3586 = vpack.c.b16 %v3566, %v3565
        %v3587 = vpack.c.b16 %v3568, %v3567
        %v3588 = vpack.c.b16 %v3570, %v3569
        %v3589 = vpack.c.b16 %v3572, %v3571
        %v3590 = vpack.c.b16 %v3574, %v3573
        %3607 = vmatprep.subr.bf16.mxu0 0
        %3608 = vmatpush1.bf16.msra.mxu0 %v3582
        %3609 = vmatprep.subr.bf16.mxu0 0
        %3610 = vmatpush1.bf16.msra.mxu0 %v3581
        %3611 = vmatprep.subr.bf16.mxu0 0
        %3612 = vmatpush1.bf16.msra.mxu0 %v3580
        %3613 = vmatprep.subr.bf16.mxu0 0
        %3614 = vmatpush1.bf16.msra.mxu0 %v3579
        %3615 = vmatprep.subr.bf16.mxu0 0
        %3616 = vmatpush1.bf16.msra.mxu0 %v3578
        %3617 = vmatprep.subr.bf16.mxu0 0
        %3618 = vmatpush1.bf16.msra.mxu0 %v3577
        %3619 = vmatprep.subr.bf16.mxu0 0
        %3620 = vmatpush1.bf16.msra.mxu0 %v3576
        %3621 = vmatprep.subr.bf16.mxu0 0
        %3622 = vmatpush1.bf16.msra.mxu0 %v3575
        %3623 = vmatprep.subr.bf16.mxu0 0
        %3624 = vmatpush2.bf16.msra.mxu0 %v3590
        %3625 = vmatprep.subr.bf16.mxu0 0
        %3626 = vmatpush2.bf16.msra.mxu0 %v3589
        %3627 = vmatprep.subr.bf16.mxu0 0
        %3628 = vmatpush2.bf16.msra.mxu0 %v3588
        %3629 = vmatprep.subr.bf16.mxu0 0
        %3630 = vmatpush2.bf16.msra.mxu0 %v3587
        %3631 = vmatprep.subr.bf16.mxu0 0
        %3632 = vmatpush2.bf16.msra.mxu0 %v3586
        %3633 = vmatprep.subr.bf16.mxu0 0
        %3634 = vmatpush2.bf16.msra.mxu0 %v3585
        %3635 = vmatprep.subr.bf16.mxu0 0
        %3636 = vmatpush2.bf16.msra.mxu0 %v3584
        %3637 = vmatprep.subr.bf16.mxu0 0
        %3638 = vmatpush2.bf16.msra.mxu0 %v3583
        %3639 = vmatprep.mubr.bf16.mxu0 %v3446
        %3640 = vmatmul.mubr.bf16.gmra.mxu0 %v3382
        %v3641 = vpop.f32.mrf.mxu0
        %v3642 = vadd.f32 0.0, %v3641
        %v3643 = vpop.f32.mrf.mxu0
        %v3644 = vpop.f32.mrf.mxu0
        %v3645 = vadd.f32 0.0, %v3644
        %v3646 = vpop.f32.mrf.mxu0
        %3647 = vmatprep.mubr.bf16.mxu0 %v3447
        %3648 = vmatmul.mubr.bf16.gmra.mxu0 %v3383
        %v3649 = vpop.f32.mrf.mxu0
        %v3650 = vadd.f32 0.0, %v3649
        %v3651 = vpop.f32.mrf.mxu0
        %v3652 = vpop.f32.mrf.mxu0
        %v3653 = vadd.f32 0.0, %v3652
        %v3654 = vpop.f32.mrf.mxu0
        %3655 = vmatprep.mubr.bf16.mxu0 %v3448
        %3656 = vmatmul.mubr.bf16.gmra.mxu0 %v3384
        %v3657 = vpop.f32.mrf.mxu0
        %v3658 = vadd.f32 0.0, %v3657
        %v3659 = vpop.f32.mrf.mxu0
        %v3660 = vpop.f32.mrf.mxu0
        %v3661 = vadd.f32 0.0, %v3660
        %v3662 = vpop.f32.mrf.mxu0
        %3663 = vmatprep.mubr.bf16.mxu0 %v3449
        %3664 = vmatmul.mubr.bf16.gmra.mxu0 %v3385
        %v3665 = vpop.f32.mrf.mxu0
        %v3666 = vadd.f32 0.0, %v3665
        %v3667 = vpop.f32.mrf.mxu0
        %v3668 = vpop.f32.mrf.mxu0
        %v3669 = vadd.f32 0.0, %v3668
        %v3670 = vpop.f32.mrf.mxu0
        %3671 = vmatprep.mubr.bf16.mxu0 %v3450
        %3672 = vmatmul.mubr.bf16.gmra.mxu0 %v3386
        %v3673 = vpop.f32.mrf.mxu0
        %v3674 = vadd.f32 0.0, %v3673
        %v3675 = vpop.f32.mrf.mxu0
        %v3676 = vpop.f32.mrf.mxu0
        %v3677 = vadd.f32 0.0, %v3676
        %v3678 = vpop.f32.mrf.mxu0
        %3679 = vmatprep.mubr.bf16.mxu0 %v3451
        %3680 = vmatmul.mubr.bf16.gmra.mxu0 %v3387
        %v3681 = vpop.f32.mrf.mxu0
        %v3682 = vadd.f32 0.0, %v3681
        %v3683 = vpop.f32.mrf.mxu0
        %v3684 = vpop.f32.mrf.mxu0
        %v3685 = vadd.f32 0.0, %v3684
        %v3686 = vpop.f32.mrf.mxu0
        %3687 = vmatprep.mubr.bf16.mxu0 %v3452
        %3688 = vmatmul.mubr.bf16.gmra.mxu0 %v3388
        %v3689 = vpop.f32.mrf.mxu0
        %v3690 = vadd.f32 0.0, %v3689
        %v3691 = vpop.f32.mrf.mxu0
        %v3692 = vpop.f32.mrf.mxu0
        %v3693 = vadd.f32 0.0, %v3692
        %v3694 = vpop.f32.mrf.mxu0
        %3695 = vmatprep.mubr.bf16.mxu0 %v3453
        %3696 = vmatmul.mubr.bf16.gmra.mxu0 %v3389
        %v3697 = vpop.f32.mrf.mxu0
        %v3698 = vadd.f32 0.0, %v3697
        %v3699 = vpop.f32.mrf.mxu0
        %v3700 = vpop.f32.mrf.mxu0
        %v3701 = vadd.f32 0.0, %v3700
        %v3702 = vpop.f32.mrf.mxu0
        %3703 = vmatprep.mubr.bf16.mxu0 %v3454
        %3704 = vmatmul.mubr.bf16.gmra.mxu0 %v3390
        %v3705 = vpop.f32.mrf.mxu0
        %v3706 = vadd.f32 0.0, %v3705
        %v3707 = vpop.f32.mrf.mxu0
        %v3708 = vpop.f32.mrf.mxu0
        %v3709 = vadd.f32 0.0, %v3708
        %v3710 = vpop.f32.mrf.mxu0
        %3711 = vmatprep.mubr.bf16.mxu0 %v3455
        %3712 = vmatmul.mubr.bf16.gmra.mxu0 %v3391
        %v3713 = vpop.f32.mrf.mxu0
        %v3714 = vadd.f32 0.0, %v3713
        %v3715 = vpop.f32.mrf.mxu0
        %v3716 = vpop.f32.mrf.mxu0
        %v3717 = vadd.f32 0.0, %v3716
        %v3718 = vpop.f32.mrf.mxu0
        %3719 = vmatprep.mubr.bf16.mxu0 %v3456
        %3720 = vmatmul.mubr.bf16.gmra.mxu0 %v3392
        %v3721 = vpop.f32.mrf.mxu0
        %v3722 = vadd.f32 0.0, %v3721
        %v3723 = vpop.f32.mrf.mxu0
        %v3724 = vpop.f32.mrf.mxu0
        %v3725 = vadd.f32 0.0, %v3724
        %v3726 = vpop.f32.mrf.mxu0
        %3727 = vmatprep.mubr.bf16.mxu0 %v3457
        %3728 = vmatmul.mubr.bf16.gmra.mxu0 %v3393
        %v3729 = vpop.f32.mrf.mxu0
        %v3730 = vadd.f32 0.0, %v3729
        %v3731 = vpop.f32.mrf.mxu0
        %v3732 = vpop.f32.mrf.mxu0
        %v3733 = vadd.f32 0.0, %v3732
        %v3734 = vpop.f32.mrf.mxu0
        %3735 = vmatprep.mubr.bf16.mxu0 %v3458
        %3736 = vmatmul.mubr.bf16.gmra.mxu0 %v3394
        %v3737 = vpop.f32.mrf.mxu0
        %v3738 = vadd.f32 0.0, %v3737
        %v3739 = vpop.f32.mrf.mxu0
        %v3740 = vpop.f32.mrf.mxu0
        %v3741 = vadd.f32 0.0, %v3740
        %v3742 = vpop.f32.mrf.mxu0
        %3743 = vmatprep.mubr.bf16.mxu0 %v3459
        %3744 = vmatmul.mubr.bf16.gmra.mxu0 %v3395
        %v3745 = vpop.f32.mrf.mxu0
        %v3746 = vadd.f32 0.0, %v3745
        %v3747 = vpop.f32.mrf.mxu0
        %v3748 = vpop.f32.mrf.mxu0
        %v3749 = vadd.f32 0.0, %v3748
        %v3750 = vpop.f32.mrf.mxu0
        %3751 = vmatprep.mubr.bf16.mxu0 %v3460
        %3752 = vmatmul.mubr.bf16.gmra.mxu0 %v3396
        %v3753 = vpop.f32.mrf.mxu0
        %v3754 = vadd.f32 0.0, %v3753
        %v3755 = vpop.f32.mrf.mxu0
        %v3756 = vpop.f32.mrf.mxu0
        %v3757 = vadd.f32 0.0, %v3756
        %v3758 = vpop.f32.mrf.mxu0
        %3759 = vmatprep.mubr.bf16.mxu0 %v3461
        %3760 = vmatmul.mubr.bf16.gmra.mxu0 %v3397
        %v3761 = vpop.f32.mrf.mxu0
        %v3762 = vadd.f32 0.0, %v3761
        %v3763 = vpop.f32.mrf.mxu0
        %v3764 = vpop.f32.mrf.mxu0
        %v3765 = vadd.f32 0.0, %v3764
        %v3766 = vpop.f32.mrf.mxu0
        %3767 = vdwg.mxu0
        %v3768 = vadd.f32 %v2853, %v3642
        %v3769 = vadd.f32 %v2854, %v3645
        %v3770 = vadd.f32 %v2855, %v3650
        %v3771 = vadd.f32 %v2856, %v3653
        %v3772 = vadd.f32 %v2857, %v3658
        %v3773 = vadd.f32 %v2858, %v3661
        %v3774 = vadd.f32 %v2859, %v3666
        %v3775 = vadd.f32 %v2860, %v3669
        %v3776 = vadd.f32 %v2861, %v3674
        %v3777 = vadd.f32 %v2862, %v3677
        %v3778 = vadd.f32 %v2863, %v3682
        %v3779 = vadd.f32 %v2864, %v3685
        %v3780 = vadd.f32 %v2865, %v3690
        %v3781 = vadd.f32 %v2866, %v3693
        %v3782 = vadd.f32 %v2867, %v3698
        %v3783 = vadd.f32 %v2868, %v3701
        %v3784 = vadd.f32 %v2869, %v3706
        %v3785 = vadd.f32 %v2870, %v3709
        %v3786 = vadd.f32 %v2871, %v3714
        %v3787 = vadd.f32 %v2872, %v3717
        %v3788 = vadd.f32 %v2873, %v3722
        %v3789 = vadd.f32 %v2874, %v3725
        %v3790 = vadd.f32 %v2875, %v3730
        %v3791 = vadd.f32 %v2876, %v3733
        %v3792 = vadd.f32 %v2877, %v3738
        %v3793 = vadd.f32 %v2878, %v3741
        %v3794 = vadd.f32 %v2879, %v3746
        %v3795 = vadd.f32 %v2880, %v3749
        %v3796 = vadd.f32 %v2881, %v3754
        %v3797 = vadd.f32 %v2882, %v3757
        %v3798 = vadd.f32 %v2883, %v3762
        %v3799 = vadd.f32 %v2884, %v3765
        %v3800 = vld [vmem:[%s2885] sm:$0xe]
        %v3801 = vld [vmem:[%s2885 + $0xc] sm:$0xe]
        %v3802 = vld [vmem:[%s2885 + $0x18] sm:$0xe]
        %v3803 = vld [vmem:[%s2885 + $0x24] sm:$0xe]
        %v3804 = vld [vmem:[%s2885 + $0x30] sm:$0xe]
        %v3805 = vld [vmem:[%s2885 + $0x3c] sm:$0xe]
        %v3806 = vld [vmem:[%s2885 + $0x48] sm:$0xe]
        %v3807 = vld [vmem:[%s2885 + $0x54] sm:$0xe]
        %v3808 = vld [vmem:[%s2885 + $0x60] sm:$0xe]
        %v3809 = vld [vmem:[%s2885 + $0x6c] sm:$0xe]
        %v3810 = vld [vmem:[%s2885 + $0x78] sm:$0xe]
        %v3811 = vld [vmem:[%s2885 + $0x84] sm:$0xe]
        %v3812 = vld [vmem:[%s2885 + $0x90] sm:$0xe]
        %v3813 = vld [vmem:[%s2885 + $0x9c] sm:$0xe]
        %v3814 = vld [vmem:[%s2885 + $0xa8] sm:$0xe]
        %v3815 = vld [vmem:[%s2885 + $0xb4] sm:$0xe]
        %v3848 = vrot.slane %v3800, 5
        %v3849 = vrot.slane %v3848, 4
        %v3850 = vrot.slane %v2887, 5
        %v3851 = vsel %vm974, %v3849, %v3850
        %v3852 = vrot.slane %v3850, 4
        %v3853 = vrot.slane %v2918, 5
        %v3854 = vsel %vm974, %v3852, %v3853
        %v3855 = vrot.slane %v3801, 5
        %v3856 = vrot.slane %v3855, 4
        %v3857 = vrot.slane %v2889, 5
        %v3858 = vsel %vm974, %v3856, %v3857
        %v3859 = vrot.slane %v3857, 4
        %v3860 = vrot.slane %v2919, 5
        %v3861 = vsel %vm974, %v3859, %v3860
        %v3862 = vrot.slane %v3802, 5
        %v3863 = vrot.slane %v3862, 4
        %v3864 = vrot.slane %v2891, 5
        %v3865 = vsel %vm974, %v3863, %v3864
        %v3866 = vrot.slane %v3864, 4
        %v3867 = vrot.slane %v2920, 5
        %v3868 = vsel %vm974, %v3866, %v3867
        %v3869 = vrot.slane %v3803, 5
        %v3870 = vrot.slane %v3869, 4
        %v3871 = vrot.slane %v2893, 5
        %v3872 = vsel %vm974, %v3870, %v3871
        %v3873 = vrot.slane %v3871, 4
        %v3874 = vrot.slane %v2921, 5
        %v3875 = vsel %vm974, %v3873, %v3874
        %v3876 = vrot.slane %v3804, 5
        %v3877 = vrot.slane %v3876, 4
        %v3878 = vrot.slane %v2895, 5
        %v3879 = vsel %vm974, %v3877, %v3878
        %v3880 = vrot.slane %v3878, 4
        %v3881 = vrot.slane %v2922, 5
        %v3882 = vsel %vm974, %v3880, %v3881
        %v3883 = vrot.slane %v3805, 5
        %v3884 = vrot.slane %v3883, 4
        %v3885 = vrot.slane %v2897, 5
        %v3886 = vsel %vm974, %v3884, %v3885
        %v3887 = vrot.slane %v3885, 4
        %v3888 = vrot.slane %v2923, 5
        %v3889 = vsel %vm974, %v3887, %v3888
        %v3890 = vrot.slane %v3806, 5
        %v3891 = vrot.slane %v3890, 4
        %v3892 = vrot.slane %v2899, 5
        %v3893 = vsel %vm974, %v3891, %v3892
        %v3894 = vrot.slane %v3892, 4
        %v3895 = vrot.slane %v2924, 5
        %v3896 = vsel %vm974, %v3894, %v3895
        %v3897 = vrot.slane %v3807, 5
        %v3898 = vrot.slane %v3897, 4
        %v3899 = vrot.slane %v2901, 5
        %v3900 = vsel %vm974, %v3898, %v3899
        %v3901 = vrot.slane %v3899, 4
        %v3902 = vrot.slane %v2925, 5
        %v3903 = vsel %vm974, %v3901, %v3902
        %v3904 = vrot.slane %v3808, 5
        %v3905 = vrot.slane %v3904, 4
        %v3906 = vrot.slane %v2903, 5
        %v3907 = vsel %vm974, %v3905, %v3906
        %v3908 = vrot.slane %v3906, 4
        %v3909 = vrot.slane %v2926, 5
        %v3910 = vsel %vm974, %v3908, %v3909
        %v3911 = vrot.slane %v3809, 5
        %v3912 = vrot.slane %v3911, 4
        %v3913 = vrot.slane %v2905, 5
        %v3914 = vsel %vm974, %v3912, %v3913
        %v3915 = vrot.slane %v3913, 4
        %v3916 = vrot.slane %v2927, 5
        %v3917 = vsel %vm974, %v3915, %v3916
        %v3918 = vrot.slane %v3810, 5
        %v3919 = vrot.slane %v3918, 4
        %v3920 = vrot.slane %v2907, 5
        %v3921 = vsel %vm974, %v3919, %v3920
        %v3922 = vrot.slane %v3920, 4
        %v3923 = vrot.slane %v2928, 5
        %v3924 = vsel %vm974, %v3922, %v3923
        %v3925 = vrot.slane %v3811, 5
        %v3926 = vrot.slane %v3925, 4
        %v3927 = vrot.slane %v2909, 5
        %v3928 = vsel %vm974, %v3926, %v3927
        %v3929 = vrot.slane %v3927, 4
        %v3930 = vrot.slane %v2929, 5
        %v3931 = vsel %vm974, %v3929, %v3930
        %v3932 = vrot.slane %v3812, 5
        %v3933 = vrot.slane %v3932, 4
        %v3934 = vrot.slane %v2911, 5
        %v3935 = vsel %vm974, %v3933, %v3934
        %v3936 = vrot.slane %v3934, 4
        %v3937 = vrot.slane %v2930, 5
        %v3938 = vsel %vm974, %v3936, %v3937
        %v3939 = vrot.slane %v3813, 5
        %v3940 = vrot.slane %v3939, 4
        %v3941 = vrot.slane %v2913, 5
        %v3942 = vsel %vm974, %v3940, %v3941
        %v3943 = vrot.slane %v3941, 4
        %v3944 = vrot.slane %v2931, 5
        %v3945 = vsel %vm974, %v3943, %v3944
        %v3946 = vrot.slane %v3814, 5
        %v3947 = vrot.slane %v3946, 4
        %v3948 = vrot.slane %v2915, 5
        %v3949 = vsel %vm974, %v3947, %v3948
        %v3950 = vrot.slane %v3948, 4
        %v3951 = vrot.slane %v2932, 5
        %v3952 = vsel %vm974, %v3950, %v3951
        %v3953 = vrot.slane %v3815, 5
        %v3954 = vrot.slane %v3953, 4
        %v3955 = vrot.slane %v2917, 5
        %v3956 = vsel %vm974, %v3954, %v3955
        %v3957 = vrot.slane %v3955, 4
        %v3958 = vrot.slane %v2933, 5
        %v3959 = vsel %vm974, %v3957, %v3958
        %s3960 = scalar_lea.vmem %s1, 512
        %v3961 = vld [vmem:[%s3960] sm:$0xf]
        %v3962 = vld [vmem:[%s3960 + $0x4] sm:$0xf]
        %v3963 = vld [vmem:[%s3960 + $0x8] sm:$0xf]
        %v3964 = vld [vmem:[%s3960 + $0xc] sm:$0xf]
        %v3965 = vld [vmem:[%s3960 + $0x10] sm:$0xf]
        %v3966 = vld [vmem:[%s3960 + $0x14] sm:$0xf]
        %v3967 = vld [vmem:[%s3960 + $0x18] sm:$0xf]
        %v3968 = vld [vmem:[%s3960 + $0x1c] sm:$0xf]
        %v3969 = vld [vmem:[%s3960 + $0x20] sm:$0xf]
        %v3970 = vld [vmem:[%s3960 + $0x24] sm:$0xf]
        %v3971 = vld [vmem:[%s3960 + $0x28] sm:$0xf]
        %v3972 = vld [vmem:[%s3960 + $0x2c] sm:$0xf]
        %v3973 = vld [vmem:[%s3960 + $0x30] sm:$0xf]
        %v3974 = vld [vmem:[%s3960 + $0x34] sm:$0xf]
        %v3975 = vld [vmem:[%s3960 + $0x38] sm:$0xf]
        %v3976 = vld [vmem:[%s3960 + $0x3c] sm:$0xf]
        %v3977 = vunpack.c.l.b16 %v3851
        %v3978 = vunpack.c.l.b16 %v3854
        %v3979 = vunpack.c.l.b16 %v3858
        %v3980 = vunpack.c.l.b16 %v3861
        %v3981 = vunpack.c.l.b16 %v3865
        %v3982 = vunpack.c.l.b16 %v3868
        %v3983 = vunpack.c.l.b16 %v3872
        %v3984 = vunpack.c.l.b16 %v3875
        %v3985 = vunpack.c.l.b16 %v3879
        %v3986 = vunpack.c.l.b16 %v3882
        %v3987 = vunpack.c.l.b16 %v3886
        %v3988 = vunpack.c.l.b16 %v3889
        %v3989 = vunpack.c.l.b16 %v3893
        %v3990 = vunpack.c.l.b16 %v3896
        %v3991 = vunpack.c.l.b16 %v3900
        %v3992 = vunpack.c.l.b16 %v3903
        %v3993 = vunpack.c.l.b16 %v3907
        %v3994 = vunpack.c.l.b16 %v3910
        %v3995 = vunpack.c.l.b16 %v3914
        %v3996 = vunpack.c.l.b16 %v3917
        %v3997 = vunpack.c.l.b16 %v3921
        %v3998 = vunpack.c.l.b16 %v3924
        %v3999 = vunpack.c.l.b16 %v3928
        %v4000 = vunpack.c.l.b16 %v3931
        %v4001 = vunpack.c.l.b16 %v3935
        %v4002 = vunpack.c.l.b16 %v3938
        %v4003 = vunpack.c.l.b16 %v3942
        %v4004 = vunpack.c.l.b16 %v3945
        %v4005 = vunpack.c.l.b16 %v3949
        %v4006 = vunpack.c.l.b16 %v3952
        %v4007 = vunpack.c.l.b16 %v3956
        %v4008 = vunpack.c.l.b16 %v3959
        %v4009 = vpack.c.b16 %v3978, %v3977
        %v4010 = vpack.c.b16 %v3980, %v3979
        %v4011 = vpack.c.b16 %v3982, %v3981
        %v4012 = vpack.c.b16 %v3984, %v3983
        %v4013 = vpack.c.b16 %v3986, %v3985
        %v4014 = vpack.c.b16 %v3988, %v3987
        %v4015 = vpack.c.b16 %v3990, %v3989
        %v4016 = vpack.c.b16 %v3992, %v3991
        %v4017 = vpack.c.b16 %v3994, %v3993
        %v4018 = vpack.c.b16 %v3996, %v3995
        %v4019 = vpack.c.b16 %v3998, %v3997
        %v4020 = vpack.c.b16 %v4000, %v3999
        %v4021 = vpack.c.b16 %v4002, %v4001
        %v4022 = vpack.c.b16 %v4004, %v4003
        %v4023 = vpack.c.b16 %v4006, %v4005
        %v4024 = vpack.c.b16 %v4008, %v4007
        %v4057 = vunpack.c.l.b16 %v3961
        %v4058 = vunpack.c.l.b16 %v3962
        %v4059 = vunpack.c.l.b16 %v3963
        %v4060 = vunpack.c.l.b16 %v3964
        %v4061 = vunpack.c.l.b16 %v3965
        %v4062 = vunpack.c.l.b16 %v3966
        %v4063 = vunpack.c.l.b16 %v3967
        %v4064 = vunpack.c.l.b16 %v3968
        %v4065 = vunpack.c.l.b16 %v3969
        %v4066 = vunpack.c.l.b16 %v3970
        %v4067 = vunpack.c.l.b16 %v3971
        %v4068 = vunpack.c.l.b16 %v3972
        %v4069 = vunpack.c.l.b16 %v3973
        %v4070 = vunpack.c.l.b16 %v3974
        %v4071 = vunpack.c.l.b16 %v3975
        %v4072 = vunpack.c.l.b16 %v3976
        %v4073 = vpack.c.b16 %v4058, %v4057
        %v4074 = vpack.c.b16 %v4060, %v4059
        %v4075 = vpack.c.b16 %v4062, %v4061
        %v4076 = vpack.c.b16 %v4064, %v4063
        %v4077 = vpack.c.b16 %v4066, %v4065
        %v4078 = vpack.c.b16 %v4068, %v4067
        %v4079 = vpack.c.b16 %v4070, %v4069
        %v4080 = vpack.c.b16 %v4072, %v4071
        %4089 = vmatprep.subr.bf16.mxu0 0
        %4090 = vmatpush1.bf16.msra.mxu0 %v4080
        %4091 = vmatprep.subr.bf16.mxu0 0
        %4092 = vmatpush1.bf16.msra.mxu0 %v4079
        %4093 = vmatprep.subr.bf16.mxu0 0
        %4094 = vmatpush1.bf16.msra.mxu0 %v4078
        %4095 = vmatprep.subr.bf16.mxu0 0
        %4096 = vmatpush1.bf16.msra.mxu0 %v4077
        %4097 = vmatprep.subr.bf16.mxu0 0
        %4098 = vmatpush1.bf16.msra.mxu0 %v4076
        %4099 = vmatprep.subr.bf16.mxu0 0
        %4100 = vmatpush1.bf16.msra.mxu0 %v4075
        %4101 = vmatprep.subr.bf16.mxu0 0
        %4102 = vmatpush1.bf16.msra.mxu0 %v4074
        %4103 = vmatprep.subr.bf16.mxu0 0
        %4104 = vmatpush1.bf16.msra.mxu0 %v4073
        %4105 = vmatprep.subr.bf16.mxu0 0
        %4106 = vmatpush2.bf16.msra.mxu0 0
        %4107 = vmatprep.subr.bf16.mxu0 0
        %4108 = vmatpush2.bf16.msra.mxu0 0
        %4109 = vmatprep.subr.bf16.mxu0 0
        %4110 = vmatpush2.bf16.msra.mxu0 0
        %4111 = vmatprep.subr.bf16.mxu0 0
        %4112 = vmatpush2.bf16.msra.mxu0 0
        %4113 = vmatprep.subr.bf16.mxu0 0
        %4114 = vmatpush2.bf16.msra.mxu0 0
        %4115 = vmatprep.subr.bf16.mxu0 0
        %4116 = vmatpush2.bf16.msra.mxu0 0
        %4117 = vmatprep.subr.bf16.mxu0 0
        %4118 = vmatpush2.bf16.msra.mxu0 0
        %4119 = vmatprep.subr.bf16.mxu0 0
        %4120 = vmatpush2.bf16.msra.mxu0 0
        %4121 = vmatprep.mubr.bf16.mxu0 0
        %4122 = vmatmul.mubr.bf16.gmra.mxu0 %v4009
        %v4123 = vpop.f32.mrf.mxu0
        %v4124 = vadd.f32 0.0, %v4123
        %v4125 = vpop.f32.mrf.mxu0
        %v4126 = vpop.f32.mrf.mxu0
        %v4127 = vadd.f32 0.0, %v4126
        %v4128 = vpop.f32.mrf.mxu0
        %4129 = vmatprep.mubr.bf16.mxu0 0
        %4130 = vmatmul.mubr.bf16.gmra.mxu0 %v4010
        %v4131 = vpop.f32.mrf.mxu0
        %v4132 = vadd.f32 0.0, %v4131
        %v4133 = vpop.f32.mrf.mxu0
        %v4134 = vpop.f32.mrf.mxu0
        %v4135 = vadd.f32 0.0, %v4134
        %v4136 = vpop.f32.mrf.mxu0
        %4137 = vmatprep.mubr.bf16.mxu0 0
        %4138 = vmatmul.mubr.bf16.gmra.mxu0 %v4011
        %v4139 = vpop.f32.mrf.mxu0
        %v4140 = vadd.f32 0.0, %v4139
        %v4141 = vpop.f32.mrf.mxu0
        %v4142 = vpop.f32.mrf.mxu0
        %v4143 = vadd.f32 0.0, %v4142
        %v4144 = vpop.f32.mrf.mxu0
        %4145 = vmatprep.mubr.bf16.mxu0 0
        %4146 = vmatmul.mubr.bf16.gmra.mxu0 %v4012
        %v4147 = vpop.f32.mrf.mxu0
        %v4148 = vadd.f32 0.0, %v4147
        %v4149 = vpop.f32.mrf.mxu0
        %v4150 = vpop.f32.mrf.mxu0
        %v4151 = vadd.f32 0.0, %v4150
        %v4152 = vpop.f32.mrf.mxu0
        %4153 = vmatprep.mubr.bf16.mxu0 0
        %4154 = vmatmul.mubr.bf16.gmra.mxu0 %v4013
        %v4155 = vpop.f32.mrf.mxu0
        %v4156 = vadd.f32 0.0, %v4155
        %v4157 = vpop.f32.mrf.mxu0
        %v4158 = vpop.f32.mrf.mxu0
        %v4159 = vadd.f32 0.0, %v4158
        %v4160 = vpop.f32.mrf.mxu0
        %4161 = vmatprep.mubr.bf16.mxu0 0
        %4162 = vmatmul.mubr.bf16.gmra.mxu0 %v4014
        %v4163 = vpop.f32.mrf.mxu0
        %v4164 = vadd.f32 0.0, %v4163
        %v4165 = vpop.f32.mrf.mxu0
        %v4166 = vpop.f32.mrf.mxu0
        %v4167 = vadd.f32 0.0, %v4166
        %v4168 = vpop.f32.mrf.mxu0
        %4169 = vmatprep.mubr.bf16.mxu0 0
        %4170 = vmatmul.mubr.bf16.gmra.mxu0 %v4015
        %v4171 = vpop.f32.mrf.mxu0
        %v4172 = vadd.f32 0.0, %v4171
        %v4173 = vpop.f32.mrf.mxu0
        %v4174 = vpop.f32.mrf.mxu0
        %v4175 = vadd.f32 0.0, %v4174
        %v4176 = vpop.f32.mrf.mxu0
        %4177 = vmatprep.mubr.bf16.mxu0 0
        %4178 = vmatmul.mubr.bf16.gmra.mxu0 %v4016
        %v4179 = vpop.f32.mrf.mxu0
        %v4180 = vadd.f32 0.0, %v4179
        %v4181 = vpop.f32.mrf.mxu0
        %v4182 = vpop.f32.mrf.mxu0
        %v4183 = vadd.f32 0.0, %v4182
        %v4184 = vpop.f32.mrf.mxu0
        %4185 = vmatprep.mubr.bf16.mxu0 0
        %4186 = vmatmul.mubr.bf16.gmra.mxu0 %v4017
        %v4187 = vpop.f32.mrf.mxu0
        %v4188 = vadd.f32 0.0, %v4187
        %v4189 = vpop.f32.mrf.mxu0
        %v4190 = vpop.f32.mrf.mxu0
        %v4191 = vadd.f32 0.0, %v4190
        %v4192 = vpop.f32.mrf.mxu0
        %4193 = vmatprep.mubr.bf16.mxu0 0
        %4194 = vmatmul.mubr.bf16.gmra.mxu0 %v4018
        %v4195 = vpop.f32.mrf.mxu0
        %v4196 = vadd.f32 0.0, %v4195
        %v4197 = vpop.f32.mrf.mxu0
        %v4198 = vpop.f32.mrf.mxu0
        %v4199 = vadd.f32 0.0, %v4198
        %v4200 = vpop.f32.mrf.mxu0
        %4201 = vmatprep.mubr.bf16.mxu0 0
        %4202 = vmatmul.mubr.bf16.gmra.mxu0 %v4019
        %v4203 = vpop.f32.mrf.mxu0
        %v4204 = vadd.f32 0.0, %v4203
        %v4205 = vpop.f32.mrf.mxu0
        %v4206 = vpop.f32.mrf.mxu0
        %v4207 = vadd.f32 0.0, %v4206
        %v4208 = vpop.f32.mrf.mxu0
        %4209 = vmatprep.mubr.bf16.mxu0 0
        %4210 = vmatmul.mubr.bf16.gmra.mxu0 %v4020
        %v4211 = vpop.f32.mrf.mxu0
        %v4212 = vadd.f32 0.0, %v4211
        %v4213 = vpop.f32.mrf.mxu0
        %v4214 = vpop.f32.mrf.mxu0
        %v4215 = vadd.f32 0.0, %v4214
        %v4216 = vpop.f32.mrf.mxu0
        %4217 = vmatprep.mubr.bf16.mxu0 0
        %4218 = vmatmul.mubr.bf16.gmra.mxu0 %v4021
        %v4219 = vpop.f32.mrf.mxu0
        %v4220 = vadd.f32 0.0, %v4219
        %v4221 = vpop.f32.mrf.mxu0
        %v4222 = vpop.f32.mrf.mxu0
        %v4223 = vadd.f32 0.0, %v4222
        %v4224 = vpop.f32.mrf.mxu0
        %4225 = vmatprep.mubr.bf16.mxu0 0
        %4226 = vmatmul.mubr.bf16.gmra.mxu0 %v4022
        %v4227 = vpop.f32.mrf.mxu0
        %v4228 = vadd.f32 0.0, %v4227
        %v4229 = vpop.f32.mrf.mxu0
        %v4230 = vpop.f32.mrf.mxu0
        %v4231 = vadd.f32 0.0, %v4230
        %v4232 = vpop.f32.mrf.mxu0
        %4233 = vmatprep.mubr.bf16.mxu0 0
        %4234 = vmatmul.mubr.bf16.gmra.mxu0 %v4023
        %v4235 = vpop.f32.mrf.mxu0
        %v4236 = vadd.f32 0.0, %v4235
        %v4237 = vpop.f32.mrf.mxu0
        %v4238 = vpop.f32.mrf.mxu0
        %v4239 = vadd.f32 0.0, %v4238
        %v4240 = vpop.f32.mrf.mxu0
        %4241 = vmatprep.mubr.bf16.mxu0 0
        %4242 = vmatmul.mubr.bf16.gmra.mxu0 %v4024
        %v4243 = vpop.f32.mrf.mxu0
        %v4244 = vadd.f32 0.0, %v4243
        %v4245 = vpop.f32.mrf.mxu0
        %v4246 = vpop.f32.mrf.mxu0
        %v4247 = vadd.f32 0.0, %v4246
        %v4248 = vpop.f32.mrf.mxu0
        %4249 = vdwg.mxu0
        %v4250 = vadd.f32 %v3768, %v4124
        %v4251 = vadd.f32 %v3769, %v4127
        %v4252 = vadd.f32 %v3770, %v4132
        %v4253 = vadd.f32 %v3771, %v4135
        %v4254 = vadd.f32 %v3772, %v4140
        %v4255 = vadd.f32 %v3773, %v4143
        %v4256 = vadd.f32 %v3774, %v4148
        %v4257 = vadd.f32 %v3775, %v4151
        %v4258 = vadd.f32 %v3776, %v4156
        %v4259 = vadd.f32 %v3777, %v4159
        %v4260 = vadd.f32 %v3778, %v4164
        %v4261 = vadd.f32 %v3779, %v4167
        %v4262 = vadd.f32 %v3780, %v4172
        %v4263 = vadd.f32 %v3781, %v4175
        %v4264 = vadd.f32 %v3782, %v4180
        %v4265 = vadd.f32 %v3783, %v4183
        %v4266 = vadd.f32 %v3784, %v4188
        %v4267 = vadd.f32 %v3785, %v4191
        %v4268 = vadd.f32 %v3786, %v4196
        %v4269 = vadd.f32 %v3787, %v4199
        %v4270 = vadd.f32 %v3788, %v4204
        %v4271 = vadd.f32 %v3789, %v4207
        %v4272 = vadd.f32 %v3790, %v4212
        %v4273 = vadd.f32 %v3791, %v4215
        %v4274 = vadd.f32 %v3792, %v4220
        %v4275 = vadd.f32 %v3793, %v4223
        %v4276 = vadd.f32 %v3794, %v4228
        %v4277 = vadd.f32 %v3795, %v4231
        %v4278 = vadd.f32 %v3796, %v4236
        %v4279 = vadd.f32 %v3797, %v4239
        %v4280 = vadd.f32 %v3798, %v4244
        %v4281 = vadd.f32 %v3799, %v4247
        %v4282 = vld [vmem:[%s2] sm:$0x1]
        %v4284 = vlaneseq
        %v4285 = vshrl.u32 %v4284, 7
        %v4286 = vsub.s32 0, %v4285
        %v4287 = vrot.slane %v4282, %v4286
        %v4289 = vadd.f32 %v4250, %v4287
        %v4290 = vadd.f32 %v4251, %v4287
        %v4291 = vadd.f32 %v4252, %v4287
        %v4292 = vadd.f32 %v4253, %v4287
        %v4293 = vadd.f32 %v4254, %v4287
        %v4294 = vadd.f32 %v4255, %v4287
        %v4295 = vadd.f32 %v4256, %v4287
        %v4296 = vadd.f32 %v4257, %v4287
        %v4297 = vadd.f32 %v4258, %v4287
        %v4298 = vadd.f32 %v4259, %v4287
        %v4299 = vadd.f32 %v4260, %v4287
        %v4300 = vadd.f32 %v4261, %v4287
        %v4301 = vadd.f32 %v4262, %v4287
        %v4302 = vadd.f32 %v4263, %v4287
        %v4303 = vadd.f32 %v4264, %v4287
        %v4304 = vadd.f32 %v4265, %v4287
        %v4305 = vadd.f32 %v4266, %v4287
        %v4306 = vadd.f32 %v4267, %v4287
        %v4307 = vadd.f32 %v4268, %v4287
        %v4308 = vadd.f32 %v4269, %v4287
        %v4309 = vadd.f32 %v4270, %v4287
        %v4310 = vadd.f32 %v4271, %v4287
        %v4311 = vadd.f32 %v4272, %v4287
        %v4312 = vadd.f32 %v4273, %v4287
        %v4313 = vadd.f32 %v4274, %v4287
        %v4314 = vadd.f32 %v4275, %v4287
        %v4315 = vadd.f32 %v4276, %v4287
        %v4316 = vadd.f32 %v4277, %v4287
        %v4317 = vadd.f32 %v4278, %v4287
        %v4318 = vadd.f32 %v4279, %v4287
        %v4319 = vadd.f32 %v4280, %v4287
        %v4320 = vadd.f32 %v4281, %v4287
        %v4321 = vmax.f32 %v4289, 0.0
        %v4322 = vmax.f32 %v4290, 0.0
        %v4323 = vmax.f32 %v4291, 0.0
        %v4324 = vmax.f32 %v4292, 0.0
        %v4325 = vmax.f32 %v4293, 0.0
        %v4326 = vmax.f32 %v4294, 0.0
        %v4327 = vmax.f32 %v4295, 0.0
        %v4328 = vmax.f32 %v4296, 0.0
        %v4329 = vmax.f32 %v4297, 0.0
        %v4330 = vmax.f32 %v4298, 0.0
        %v4331 = vmax.f32 %v4299, 0.0
        %v4332 = vmax.f32 %v4300, 0.0
        %v4333 = vmax.f32 %v4301, 0.0
        %v4334 = vmax.f32 %v4302, 0.0
        %v4335 = vmax.f32 %v4303, 0.0
        %v4336 = vmax.f32 %v4304, 0.0
        %v4337 = vmax.f32 %v4305, 0.0
        %v4338 = vmax.f32 %v4306, 0.0
        %v4339 = vmax.f32 %v4307, 0.0
        %v4340 = vmax.f32 %v4308, 0.0
        %v4341 = vmax.f32 %v4309, 0.0
        %v4342 = vmax.f32 %v4310, 0.0
        %v4343 = vmax.f32 %v4311, 0.0
        %v4344 = vmax.f32 %v4312, 0.0
        %v4345 = vmax.f32 %v4313, 0.0
        %v4346 = vmax.f32 %v4314, 0.0
        %v4347 = vmax.f32 %v4315, 0.0
        %v4348 = vmax.f32 %v4316, 0.0
        %v4349 = vmax.f32 %v4317, 0.0
        %v4350 = vmax.f32 %v4318, 0.0
        %v4351 = vmax.f32 %v4319, 0.0
        %v4352 = vmax.f32 %v4320, 0.0
        %v4353 = vpack.c.bf16 %v4322, %v4321
        %v4354 = vpack.c.bf16 %v4324, %v4323
        %v4355 = vpack.c.bf16 %v4326, %v4325
        %v4356 = vpack.c.bf16 %v4328, %v4327
        %v4357 = vpack.c.bf16 %v4330, %v4329
        %v4358 = vpack.c.bf16 %v4332, %v4331
        %v4359 = vpack.c.bf16 %v4334, %v4333
        %v4360 = vpack.c.bf16 %v4336, %v4335
        %v4361 = vpack.c.bf16 %v4338, %v4337
        %v4362 = vpack.c.bf16 %v4340, %v4339
        %v4363 = vpack.c.bf16 %v4342, %v4341
        %v4364 = vpack.c.bf16 %v4344, %v4343
        %v4365 = vpack.c.bf16 %v4346, %v4345
        %v4366 = vpack.c.bf16 %v4348, %v4347
        %v4367 = vpack.c.bf16 %v4350, %v4349
        %v4368 = vpack.c.bf16 %v4352, %v4351
        %v4385 = vunpack.c.l.b16 %v4353
        %v4386 = vunpack.c.h.b16 %v4353
        %v4387 = vunpack.c.l.b16 %v4354
        %v4388 = vunpack.c.h.b16 %v4354
        %v4389 = vunpack.c.l.b16 %v4355
        %v4390 = vunpack.c.h.b16 %v4355
        %v4391 = vunpack.c.l.b16 %v4356
        %v4392 = vunpack.c.h.b16 %v4356
        %v4393 = vunpack.c.l.b16 %v4357
        %v4394 = vunpack.c.h.b16 %v4357
        %v4395 = vunpack.c.l.b16 %v4358
        %v4396 = vunpack.c.h.b16 %v4358
        %v4397 = vunpack.c.l.b16 %v4359
        %v4398 = vunpack.c.h.b16 %v4359
        %v4399 = vunpack.c.l.b16 %v4360
        %v4400 = vunpack.c.h.b16 %v4360
        %v4401 = vunpack.c.l.b16 %v4361
        %v4402 = vunpack.c.h.b16 %v4361
        %v4403 = vunpack.c.l.b16 %v4362
        %v4404 = vunpack.c.h.b16 %v4362
        %v4405 = vunpack.c.l.b16 %v4363
        %v4406 = vunpack.c.h.b16 %v4363
        %v4407 = vunpack.c.l.b16 %v4364
        %v4408 = vunpack.c.h.b16 %v4364
        %v4409 = vunpack.c.l.b16 %v4365
        %v4410 = vunpack.c.h.b16 %v4365
        %v4411 = vunpack.c.l.b16 %v4366
        %v4412 = vunpack.c.h.b16 %v4366
        %v4413 = vunpack.c.l.b16 %v4367
        %v4414 = vunpack.c.h.b16 %v4367
        %v4415 = vunpack.c.l.b16 %v4368
        %v4416 = vunpack.c.h.b16 %v4368
        %v4417 = vpack.c.b16 %v4385, %v4385
        %v4418 = vpack.c.b16 %v4386, %v4386
        %v4419 = vpack.c.b16 %v4387, %v4387
        %v4420 = vpack.c.b16 %v4388, %v4388
        %v4421 = vpack.c.b16 %v4389, %v4389
        %v4422 = vpack.c.b16 %v4390, %v4390
        %v4423 = vpack.c.b16 %v4391, %v4391
        %v4424 = vpack.c.b16 %v4392, %v4392
        %v4425 = vpack.c.b16 %v4393, %v4393
        %v4426 = vpack.c.b16 %v4394, %v4394
        %v4427 = vpack.c.b16 %v4395, %v4395
        %v4428 = vpack.c.b16 %v4396, %v4396
        %v4429 = vpack.c.b16 %v4397, %v4397
        %v4430 = vpack.c.b16 %v4398, %v4398
        %v4431 = vpack.c.b16 %v4399, %v4399
        %v4432 = vpack.c.b16 %v4400, %v4400
        %v4433 = vpack.c.b16 %v4401, %v4401
        %v4434 = vpack.c.b16 %v4402, %v4402
        %v4435 = vpack.c.b16 %v4403, %v4403
        %v4436 = vpack.c.b16 %v4404, %v4404
        %v4437 = vpack.c.b16 %v4405, %v4405
        %v4438 = vpack.c.b16 %v4406, %v4406
        %v4439 = vpack.c.b16 %v4407, %v4407
        %v4440 = vpack.c.b16 %v4408, %v4408
        %v4441 = vpack.c.b16 %v4409, %v4409
        %v4442 = vpack.c.b16 %v4410, %v4410
        %v4443 = vpack.c.b16 %v4411, %v4411
        %v4444 = vpack.c.b16 %v4412, %v4412
        %v4445 = vpack.c.b16 %v4413, %v4413
        %v4446 = vpack.c.b16 %v4414, %v4414
        %v4447 = vpack.c.b16 %v4415, %v4415
        %v4448 = vpack.c.b16 %v4416, %v4416
        %vm4449 = vsmask.f32 256
        %vm4450 = vsmask.f32 4368
        %vm4451 = vmor %vm4449, %vm4450
        %v4453 = vshrl.u32 %v4417, 16
        %v4455 = vrot.slane %v4453, 7
        %v4456 = vshll.u32 %v4417, 16
        %v4458 = vor.u32 %v4455, %v4456
        %v4459 = vrot.slane %v4455, 4
        %v4461 = vshrl.u32 %v4418, 16
        %v4463 = vrot.slane %v4461, 7
        %v4464 = vshll.u32 %v4418, 16
        %v4466 = vor.u32 %v4463, %v4464
        %v4467 = vsel %vm4451, %v4459, %v4466
        %v4468 = vrot.slane %v4463, 4
        %v4470 = vshrl.u32 %v4419, 16
        %v4472 = vrot.slane %v4470, 7
        %v4473 = vshll.u32 %v4419, 16
        %v4475 = vor.u32 %v4472, %v4473
        %v4476 = vrot.slane %v4472, 4
        %v4478 = vshrl.u32 %v4420, 16
        %v4480 = vrot.slane %v4478, 7
        %v4481 = vshll.u32 %v4420, 16
        %v4483 = vor.u32 %v4480, %v4481
        %v4484 = vsel %vm4451, %v4476, %v4483
        %v4485 = vrot.slane %v4480, 4
        %v4487 = vshrl.u32 %v4421, 16
        %v4489 = vrot.slane %v4487, 7
        %v4490 = vshll.u32 %v4421, 16
        %v4492 = vor.u32 %v4489, %v4490
        %v4493 = vrot.slane %v4489, 4
        %v4495 = vshrl.u32 %v4422, 16
        %v4497 = vrot.slane %v4495, 7
        %v4498 = vshll.u32 %v4422, 16
        %v4500 = vor.u32 %v4497, %v4498
        %v4501 = vsel %vm4451, %v4493, %v4500
        %v4502 = vrot.slane %v4497, 4
        %v4504 = vshrl.u32 %v4423, 16
        %v4506 = vrot.slane %v4504, 7
        %v4507 = vshll.u32 %v4423, 16
        %v4509 = vor.u32 %v4506, %v4507
        %v4510 = vrot.slane %v4506, 4
        %v4512 = vshrl.u32 %v4424, 16
        %v4514 = vrot.slane %v4512, 7
        %v4515 = vshll.u32 %v4424, 16
        %v4517 = vor.u32 %v4514, %v4515
        %v4518 = vsel %vm4451, %v4510, %v4517
        %v4519 = vrot.slane %v4514, 4
        %v4521 = vshrl.u32 %v4425, 16
        %v4523 = vrot.slane %v4521, 7
        %v4524 = vshll.u32 %v4425, 16
        %v4526 = vor.u32 %v4523, %v4524
        %v4527 = vrot.slane %v4523, 4
        %v4529 = vshrl.u32 %v4426, 16
        %v4531 = vrot.slane %v4529, 7
        %v4532 = vshll.u32 %v4426, 16
        %v4534 = vor.u32 %v4531, %v4532
        %v4535 = vsel %vm4451, %v4527, %v4534
        %v4536 = vrot.slane %v4531, 4
        %v4538 = vshrl.u32 %v4427, 16
        %v4540 = vrot.slane %v4538, 7
        %v4541 = vshll.u32 %v4427, 16
        %v4543 = vor.u32 %v4540, %v4541
        %v4544 = vrot.slane %v4540, 4
        %v4546 = vshrl.u32 %v4428, 16
        %v4548 = vrot.slane %v4546, 7
        %v4549 = vshll.u32 %v4428, 16
        %v4551 = vor.u32 %v4548, %v4549
        %v4552 = vsel %vm4451, %v4544, %v4551
        %v4553 = vrot.slane %v4548, 4
        %v4555 = vshrl.u32 %v4429, 16
        %v4557 = vrot.slane %v4555, 7
        %v4558 = vshll.u32 %v4429, 16
        %v4560 = vor.u32 %v4557, %v4558
        %v4561 = vrot.slane %v4557, 4
        %v4563 = vshrl.u32 %v4430, 16
        %v4565 = vrot.slane %v4563, 7
        %v4566 = vshll.u32 %v4430, 16
        %v4568 = vor.u32 %v4565, %v4566
        %v4569 = vsel %vm4451, %v4561, %v4568
        %v4570 = vrot.slane %v4565, 4
        %v4572 = vshrl.u32 %v4431, 16
        %v4574 = vrot.slane %v4572, 7
        %v4575 = vshll.u32 %v4431, 16
        %v4577 = vor.u32 %v4574, %v4575
        %v4578 = vrot.slane %v4574, 4
        %v4580 = vshrl.u32 %v4432, 16
        %v4582 = vrot.slane %v4580, 7
        %v4583 = vshll.u32 %v4432, 16
        %v4585 = vor.u32 %v4582, %v4583
        %v4586 = vsel %vm4451, %v4578, %v4585
        %v4587 = vrot.slane %v4582, 4
        %v4589 = vshrl.u32 %v4433, 16
        %v4591 = vrot.slane %v4589, 7
        %v4592 = vshll.u32 %v4433, 16
        %v4594 = vor.u32 %v4591, %v4592
        %v4595 = vrot.slane %v4591, 4
        %v4597 = vshrl.u32 %v4434, 16
        %v4599 = vrot.slane %v4597, 7
        %v4600 = vshll.u32 %v4434, 16
        %v4602 = vor.u32 %v4599, %v4600
        %v4603 = vsel %vm4451, %v4595, %v4602
        %v4604 = vrot.slane %v4599, 4
        %v4606 = vshrl.u32 %v4435, 16
        %v4608 = vrot.slane %v4606, 7
        %v4609 = vshll.u32 %v4435, 16
        %v4611 = vor.u32 %v4608, %v4609
        %v4612 = vrot.slane %v4608, 4
        %v4614 = vshrl.u32 %v4436, 16
        %v4616 = vrot.slane %v4614, 7
        %v4617 = vshll.u32 %v4436, 16
        %v4619 = vor.u32 %v4616, %v4617
        %v4620 = vsel %vm4451, %v4612, %v4619
        %v4621 = vrot.slane %v4616, 4
        %v4623 = vshrl.u32 %v4437, 16
        %v4625 = vrot.slane %v4623, 7
        %v4626 = vshll.u32 %v4437, 16
        %v4628 = vor.u32 %v4625, %v4626
        %v4629 = vrot.slane %v4625, 4
        %v4631 = vshrl.u32 %v4438, 16
        %v4633 = vrot.slane %v4631, 7
        %v4634 = vshll.u32 %v4438, 16
        %v4636 = vor.u32 %v4633, %v4634
        %v4637 = vsel %vm4451, %v4629, %v4636
        %v4638 = vrot.slane %v4633, 4
        %v4640 = vshrl.u32 %v4439, 16
        %v4642 = vrot.slane %v4640, 7
        %v4643 = vshll.u32 %v4439, 16
        %v4645 = vor.u32 %v4642, %v4643
        %v4646 = vrot.slane %v4642, 4
        %v4648 = vshrl.u32 %v4440, 16
        %v4650 = vrot.slane %v4648, 7
        %v4651 = vshll.u32 %v4440, 16
        %v4653 = vor.u32 %v4650, %v4651
        %v4654 = vsel %vm4451, %v4646, %v4653
        %v4655 = vrot.slane %v4650, 4
        %v4657 = vshrl.u32 %v4441, 16
        %v4659 = vrot.slane %v4657, 7
        %v4660 = vshll.u32 %v4441, 16
        %v4662 = vor.u32 %v4659, %v4660
        %v4663 = vrot.slane %v4659, 4
        %v4665 = vshrl.u32 %v4442, 16
        %v4667 = vrot.slane %v4665, 7
        %v4668 = vshll.u32 %v4442, 16
        %v4670 = vor.u32 %v4667, %v4668
        %v4671 = vsel %vm4451, %v4663, %v4670
        %v4672 = vrot.slane %v4667, 4
        %v4674 = vshrl.u32 %v4443, 16
        %v4676 = vrot.slane %v4674, 7
        %v4677 = vshll.u32 %v4443, 16
        %v4679 = vor.u32 %v4676, %v4677
        %v4680 = vrot.slane %v4676, 4
        %v4682 = vshrl.u32 %v4444, 16
        %v4684 = vrot.slane %v4682, 7
        %v4685 = vshll.u32 %v4444, 16
        %v4687 = vor.u32 %v4684, %v4685
        %v4688 = vsel %vm4451, %v4680, %v4687
        %v4689 = vrot.slane %v4684, 4
        %v4691 = vshrl.u32 %v4445, 16
        %v4693 = vrot.slane %v4691, 7
        %v4694 = vshll.u32 %v4445, 16
        %v4696 = vor.u32 %v4693, %v4694
        %v4697 = vrot.slane %v4693, 4
        %v4699 = vshrl.u32 %v4446, 16
        %v4701 = vrot.slane %v4699, 7
        %v4702 = vshll.u32 %v4446, 16
        %v4704 = vor.u32 %v4701, %v4702
        %v4705 = vsel %vm4451, %v4697, %v4704
        %v4706 = vrot.slane %v4701, 4
        %v4708 = vshrl.u32 %v4447, 16
        %v4710 = vrot.slane %v4708, 7
        %v4711 = vshll.u32 %v4447, 16
        %v4713 = vor.u32 %v4710, %v4711
        %v4714 = vrot.slane %v4710, 4
        %v4716 = vshrl.u32 %v4448, 16
        %v4718 = vrot.slane %v4716, 7
        %v4719 = vshll.u32 %v4448, 16
        %v4721 = vor.u32 %v4718, %v4719
        %v4722 = vsel %vm4451, %v4714, %v4721
        %v4723 = vrot.slane %v4718, 4
        %s4772 = scalar_lea.vmem [#allocation2], 12
        %vm4773 = vcmask 1043456
        %vm4774 = vsmask.f32 7938
        %vm4775 = vmand %vm4773, %vm4774
        %v4776 = vld [vmem:[%s4772] sm:$0xf]
        %v4777 = vsel %vm4775, %v4458, %v4776
        %4778 = vst [vmem:[%s4772] sm:$0xf] %v4777
        %4779 = vst [vmem:[%s4772 + $0x4] sm:$0xf] %v4467
        %vm4780 = vcmask 1040384
        %vm4781 = vmand %vm4780, %vm4449
        %v4782 = vld [vmem:[%s4772 + $0x8] sm:$0x1]
        %v4783 = vsel %vm4781, %v4468, %v4782
        %4784 = vst [vmem:[%s4772 + $0x8] sm:$0x1] %v4783
        %v4785 = vld [vmem:[%s4772 + $0xc] sm:$0xf]
        %v4786 = vsel %vm4775, %v4475, %v4785
        %4787 = vst [vmem:[%s4772 + $0xc] sm:$0xf] %v4786
        %4788 = vst [vmem:[%s4772 + $0x10] sm:$0xf] %v4484
        %v4789 = vld [vmem:[%s4772 + $0x14] sm:$0x1]
        %v4790 = vsel %vm4781, %v4485, %v4789
        %4791 = vst [vmem:[%s4772 + $0x14] sm:$0x1] %v4790
        %v4792 = vld [vmem:[%s4772 + $0x18] sm:$0xf]
        %v4793 = vsel %vm4775, %v4492, %v4792
        %4794 = vst [vmem:[%s4772 + $0x18] sm:$0xf] %v4793
        %4795 = vst [vmem:[%s4772 + $0x1c] sm:$0xf] %v4501
        %v4796 = vld [vmem:[%s4772 + $0x20] sm:$0x1]
        %v4797 = vsel %vm4781, %v4502, %v4796
        %4798 = vst [vmem:[%s4772 + $0x20] sm:$0x1] %v4797
        %v4799 = vld [vmem:[%s4772 + $0x24] sm:$0xf]
        %v4800 = vsel %vm4775, %v4509, %v4799
        %4801 = vst [vmem:[%s4772 + $0x24] sm:$0xf] %v4800
        %4802 = vst [vmem:[%s4772 + $0x28] sm:$0xf] %v4518
        %v4803 = vld [vmem:[%s4772 + $0x2c] sm:$0x1]
        %v4804 = vsel %vm4781, %v4519, %v4803
        %4805 = vst [vmem:[%s4772 + $0x2c] sm:$0x1] %v4804
        %v4806 = vld [vmem:[%s4772 + $0x30] sm:$0xf]
        %v4807 = vsel %vm4775, %v4526, %v4806
        %4808 = vst [vmem:[%s4772 + $0x30] sm:$0xf] %v4807
        %4809 = vst [vmem:[%s4772 + $0x34] sm:$0xf] %v4535
        %v4810 = vld [vmem:[%s4772 + $0x38] sm:$0x1]
        %v4811 = vsel %vm4781, %v4536, %v4810
        %4812 = vst [vmem:[%s4772 + $0x38] sm:$0x1] %v4811
        %v4813 = vld [vmem:[%s4772 + $0x3c] sm:$0xf]
        %v4814 = vsel %vm4775, %v4543, %v4813
        %4815 = vst [vmem:[%s4772 + $0x3c] sm:$0xf] %v4814
        %4816 = vst [vmem:[%s4772 + $0x40] sm:$0xf] %v4552
        %v4817 = vld [vmem:[%s4772 + $0x44] sm:$0x1]
        %v4818 = vsel %vm4781, %v4553, %v4817
        %4819 = vst [vmem:[%s4772 + $0x44] sm:$0x1] %v4818
        %v4820 = vld [vmem:[%s4772 + $0x48] sm:$0xf]
        %v4821 = vsel %vm4775, %v4560, %v4820
        %4822 = vst [vmem:[%s4772 + $0x48] sm:$0xf] %v4821
        %4823 = vst [vmem:[%s4772 + $0x4c] sm:$0xf] %v4569
        %v4824 = vld [vmem:[%s4772 + $0x50] sm:$0x1]
        %v4825 = vsel %vm4781, %v4570, %v4824
        %4826 = vst [vmem:[%s4772 + $0x50] sm:$0x1] %v4825
        %v4827 = vld [vmem:[%s4772 + $0x54] sm:$0xf]
        %v4828 = vsel %vm4775, %v4577, %v4827
        %4829 = vst [vmem:[%s4772 + $0x54] sm:$0xf] %v4828
        %4830 = vst [vmem:[%s4772 + $0x58] sm:$0xf] %v4586
        %v4831 = vld [vmem:[%s4772 + $0x5c] sm:$0x1]
        %v4832 = vsel %vm4781, %v4587, %v4831
        %4833 = vst [vmem:[%s4772 + $0x5c] sm:$0x1] %v4832
        %v4834 = vld [vmem:[%s4772 + $0x60] sm:$0xf]
        %v4835 = vsel %vm4775, %v4594, %v4834
        %4836 = vst [vmem:[%s4772 + $0x60] sm:$0xf] %v4835
        %4837 = vst [vmem:[%s4772 + $0x64] sm:$0xf] %v4603
        %v4838 = vld [vmem:[%s4772 + $0x68] sm:$0x1]
        %v4839 = vsel %vm4781, %v4604, %v4838
        %4840 = vst [vmem:[%s4772 + $0x68] sm:$0x1] %v4839
        %v4841 = vld [vmem:[%s4772 + $0x6c] sm:$0xf]
        %v4842 = vsel %vm4775, %v4611, %v4841
        %4843 = vst [vmem:[%s4772 + $0x6c] sm:$0xf] %v4842
        %4844 = vst [vmem:[%s4772 + $0x70] sm:$0xf] %v4620
        %v4845 = vld [vmem:[%s4772 + $0x74] sm:$0x1]
        %v4846 = vsel %vm4781, %v4621, %v4845
        %4847 = vst [vmem:[%s4772 + $0x74] sm:$0x1] %v4846
        %v4848 = vld [vmem:[%s4772 + $0x78] sm:$0xf]
        %v4849 = vsel %vm4775, %v4628, %v4848
        %4850 = vst [vmem:[%s4772 + $0x78] sm:$0xf] %v4849
        %4851 = vst [vmem:[%s4772 + $0x7c] sm:$0xf] %v4637
        %v4852 = vld [vmem:[%s4772 + $0x80] sm:$0x1]
        %v4853 = vsel %vm4781, %v4638, %v4852
        %4854 = vst [vmem:[%s4772 + $0x80] sm:$0x1] %v4853
        %v4855 = vld [vmem:[%s4772 + $0x84] sm:$0xf]
        %v4856 = vsel %vm4775, %v4645, %v4855
        %4857 = vst [vmem:[%s4772 + $0x84] sm:$0xf] %v4856
        %4858 = vst [vmem:[%s4772 + $0x88] sm:$0xf] %v4654
        %v4859 = vld [vmem:[%s4772 + $0x8c] sm:$0x1]
        %v4860 = vsel %vm4781, %v4655, %v4859
        %4861 = vst [vmem:[%s4772 + $0x8c] sm:$0x1] %v4860
        %v4862 = vld [vmem:[%s4772 + $0x90] sm:$0xf]
        %v4863 = vsel %vm4775, %v4662, %v4862
        %4864 = vst [vmem:[%s4772 + $0x90] sm:$0xf] %v4863
        %4865 = vst [vmem:[%s4772 + $0x94] sm:$0xf] %v4671
        %v4866 = vld [vmem:[%s4772 + $0x98] sm:$0x1]
        %v4867 = vsel %vm4781, %v4672, %v4866
        %4868 = vst [vmem:[%s4772 + $0x98] sm:$0x1] %v4867
        %v4869 = vld [vmem:[%s4772 + $0x9c] sm:$0xf]
        %v4870 = vsel %vm4775, %v4679, %v4869
        %4871 = vst [vmem:[%s4772 + $0x9c] sm:$0xf] %v4870
        %4872 = vst [vmem:[%s4772 + $0xa0] sm:$0xf] %v4688
        %v4873 = vld [vmem:[%s4772 + $0xa4] sm:$0x1]
        %v4874 = vsel %vm4781, %v4689, %v4873
        %4875 = vst [vmem:[%s4772 + $0xa4] sm:$0x1] %v4874
        %v4876 = vld [vmem:[%s4772 + $0xa8] sm:$0xf]
        %v4877 = vsel %vm4775, %v4696, %v4876
        %4878 = vst [vmem:[%s4772 + $0xa8] sm:$0xf] %v4877
        %4879 = vst [vmem:[%s4772 + $0xac] sm:$0xf] %v4705
        %v4880 = vld [vmem:[%s4772 + $0xb0] sm:$0x1]
        %v4881 = vsel %vm4781, %v4706, %v4880
        %4882 = vst [vmem:[%s4772 + $0xb0] sm:$0x1] %v4881
        %v4883 = vld [vmem:[%s4772 + $0xb4] sm:$0xf]
        %v4884 = vsel %vm4775, %v4713, %v4883
        %4885 = vst [vmem:[%s4772 + $0xb4] sm:$0xf] %v4884
        %4886 = vst [vmem:[%s4772 + $0xb8] sm:$0xf] %v4722
        %v4887 = vld [vmem:[%s4772 + $0xbc] sm:$0x1]
        %v4888 = vsel %vm4781, %v4723, %v4887
        %4889 = vst [vmem:[%s4772 + $0xbc] sm:$0x1] %v4888
        %v4890 = vld [vmem:[#allocation2] sm:$0xf]
        %v4891 = vld [vmem:[#allocation2 + $0x4] sm:$0xf]
        %v4892 = vld [vmem:[#allocation2 + $0xc] sm:$0xf]
        %v4893 = vld [vmem:[#allocation2 + $0x10] sm:$0xf]
        %v4894 = vld [vmem:[#allocation2 + $0x18] sm:$0xf]
        %v4895 = vld [vmem:[#allocation2 + $0x1c] sm:$0xf]
        %v4896 = vld [vmem:[#allocation2 + $0x24] sm:$0xf]
        %v4897 = vld [vmem:[#allocation2 + $0x28] sm:$0xf]
        %v4898 = vld [vmem:[#allocation2 + $0x30] sm:$0xf]
        %v4899 = vld [vmem:[#allocation2 + $0x34] sm:$0xf]
        %v4900 = vld [vmem:[#allocation2 + $0x3c] sm:$0xf]
        %v4901 = vld [vmem:[#allocation2 + $0x40] sm:$0xf]
        %v4902 = vld [vmem:[#allocation2 + $0x48] sm:$0xf]
        %v4903 = vld [vmem:[#allocation2 + $0x4c] sm:$0xf]
        %v4904 = vld [vmem:[#allocation2 + $0x54] sm:$0xf]
        %v4905 = vld [vmem:[#allocation2 + $0x58] sm:$0xf]
        %v4906 = vld [vmem:[#allocation2 + $0x60] sm:$0xf]
        %v4907 = vld [vmem:[#allocation2 + $0x64] sm:$0xf]
        %v4908 = vld [vmem:[#allocation2 + $0x6c] sm:$0xf]
        %v4909 = vld [vmem:[#allocation2 + $0x70] sm:$0xf]
        %v4910 = vld [vmem:[#allocation2 + $0x78] sm:$0xf]
        %v4911 = vld [vmem:[#allocation2 + $0x7c] sm:$0xf]
        %v4912 = vld [vmem:[#allocation2 + $0x84] sm:$0xf]
        %v4913 = vld [vmem:[#allocation2 + $0x88] sm:$0xf]
        %v4914 = vld [vmem:[#allocation2 + $0x90] sm:$0xf]
        %v4915 = vld [vmem:[#allocation2 + $0x94] sm:$0xf]
        %v4916 = vld [vmem:[#allocation2 + $0x9c] sm:$0xf]
        %v4917 = vld [vmem:[#allocation2 + $0xa0] sm:$0xf]
        %v4918 = vld [vmem:[#allocation2 + $0xa8] sm:$0xf]
        %v4919 = vld [vmem:[#allocation2 + $0xac] sm:$0xf]
        %v4920 = vld [vmem:[#allocation2 + $0xb4] sm:$0xf]
        %v4921 = vld [vmem:[#allocation2 + $0xb8] sm:$0xf]
        %v4922 = vld [vmem:[#allocation2 + $0x8] sm:$0x1]
        %v4923 = vld [vmem:[#allocation2 + $0x14] sm:$0x1]
        %v4924 = vld [vmem:[#allocation2 + $0x20] sm:$0x1]
        %v4925 = vld [vmem:[#allocation2 + $0x2c] sm:$0x1]
        %v4926 = vld [vmem:[#allocation2 + $0x38] sm:$0x1]
        %v4927 = vld [vmem:[#allocation2 + $0x44] sm:$0x1]
        %v4928 = vld [vmem:[#allocation2 + $0x50] sm:$0x1]
        %v4929 = vld [vmem:[#allocation2 + $0x5c] sm:$0x1]
        %v4930 = vld [vmem:[#allocation2 + $0x68] sm:$0x1]
        %v4931 = vld [vmem:[#allocation2 + $0x74] sm:$0x1]
        %v4932 = vld [vmem:[#allocation2 + $0x80] sm:$0x1]
        %v4933 = vld [vmem:[#allocation2 + $0x8c] sm:$0x1]
        %v4934 = vld [vmem:[#allocation2 + $0x98] sm:$0x1]
        %v4935 = vld [vmem:[#allocation2 + $0xa4] sm:$0x1]
        %v4936 = vld [vmem:[#allocation2 + $0xb0] sm:$0x1]
        %v4937 = vld [vmem:[#allocation2 + $0xbc] sm:$0x1]
        %v4939 = vshrl.u32 %v4890, 16
        %v4941 = vrot.slane %v4939, 4
        %v4942 = vshll.u32 %v4890, 16
        %v4944 = vrot.slane %v4942, 5
        %v4945 = vor.u32 %v4941, %v4944
        %v4946 = vrot.slane %v4945, 4
        %v4948 = vshll.u32 %v4891, 16
        %v4950 = vrot.slane %v4948, 5
        %v4951 = vsel %vm347, %v4946, %v4950
        %v4952 = vshrl.u32 %v4891, 16
        %v4954 = vrot.slane %v4952, 4
        %v4955 = vor.u32 %v4954, %v4950
        %v4956 = vrot.slane %v4955, 4
        %v4958 = vshll.u32 %v4922, 16
        %v4960 = vrot.slane %v4958, 5
        %v4961 = vsel %vm347, %v4956, %v4960
        %v4963 = vshrl.u32 %v4892, 16
        %v4965 = vrot.slane %v4963, 4
        %v4966 = vshll.u32 %v4892, 16
        %v4968 = vrot.slane %v4966, 5
        %v4969 = vor.u32 %v4965, %v4968
        %v4970 = vrot.slane %v4969, 4
        %v4972 = vshll.u32 %v4893, 16
        %v4974 = vrot.slane %v4972, 5
        %v4975 = vsel %vm347, %v4970, %v4974
        %v4976 = vshrl.u32 %v4893, 16
        %v4978 = vrot.slane %v4976, 4
        %v4979 = vor.u32 %v4978, %v4974
        %v4980 = vrot.slane %v4979, 4
        %v4982 = vshll.u32 %v4923, 16
        %v4984 = vrot.slane %v4982, 5
        %v4985 = vsel %vm347, %v4980, %v4984
        %v4987 = vshrl.u32 %v4894, 16
        %v4989 = vrot.slane %v4987, 4
        %v4990 = vshll.u32 %v4894, 16
        %v4992 = vrot.slane %v4990, 5
        %v4993 = vor.u32 %v4989, %v4992
        %v4994 = vrot.slane %v4993, 4
        %v4996 = vshll.u32 %v4895, 16
        %v4998 = vrot.slane %v4996, 5
        %v4999 = vsel %vm347, %v4994, %v4998
        %v5000 = vshrl.u32 %v4895, 16
        %v5002 = vrot.slane %v5000, 4
        %v5003 = vor.u32 %v5002, %v4998
        %v5004 = vrot.slane %v5003, 4
        %v5006 = vshll.u32 %v4924, 16
        %v5008 = vrot.slane %v5006, 5
        %v5009 = vsel %vm347, %v5004, %v5008
        %v5011 = vshrl.u32 %v4896, 16
        %v5013 = vrot.slane %v5011, 4
        %v5014 = vshll.u32 %v4896, 16
        %v5016 = vrot.slane %v5014, 5
        %v5017 = vor.u32 %v5013, %v5016
        %v5018 = vrot.slane %v5017, 4
        %v5020 = vshll.u32 %v4897, 16
        %v5022 = vrot.slane %v5020, 5
        %v5023 = vsel %vm347, %v5018, %v5022
        %v5024 = vshrl.u32 %v4897, 16
        %v5026 = vrot.slane %v5024, 4
        %v5027 = vor.u32 %v5026, %v5022
        %v5028 = vrot.slane %v5027, 4
        %v5030 = vshll.u32 %v4925, 16
        %v5032 = vrot.slane %v5030, 5
        %v5033 = vsel %vm347, %v5028, %v5032
        %v5035 = vshrl.u32 %v4898, 16
        %v5037 = vrot.slane %v5035, 4
        %v5038 = vshll.u32 %v4898, 16
        %v5040 = vrot.slane %v5038, 5
        %v5041 = vor.u32 %v5037, %v5040
        %v5042 = vrot.slane %v5041, 4
        %v5044 = vshll.u32 %v4899, 16
        %v5046 = vrot.slane %v5044, 5
        %v5047 = vsel %vm347, %v5042, %v5046
        %v5048 = vshrl.u32 %v4899, 16
        %v5050 = vrot.slane %v5048, 4
        %v5051 = vor.u32 %v5050, %v5046
        %v5052 = vrot.slane %v5051, 4
        %v5054 = vshll.u32 %v4926, 16
        %v5056 = vrot.slane %v5054, 5
        %v5057 = vsel %vm347, %v5052, %v5056
        %v5059 = vshrl.u32 %v4900, 16
        %v5061 = vrot.slane %v5059, 4
        %v5062 = vshll.u32 %v4900, 16
        %v5064 = vrot.slane %v5062, 5
        %v5065 = vor.u32 %v5061, %v5064
        %v5066 = vrot.slane %v5065, 4
        %v5068 = vshll.u32 %v4901, 16
        %v5070 = vrot.slane %v5068, 5
        %v5071 = vsel %vm347, %v5066, %v5070
        %v5072 = vshrl.u32 %v4901, 16
        %v5074 = vrot.slane %v5072, 4
        %v5075 = vor.u32 %v5074, %v5070
        %v5076 = vrot.slane %v5075, 4
        %v5078 = vshll.u32 %v4927, 16
        %v5080 = vrot.slane %v5078, 5
        %v5081 = vsel %vm347, %v5076, %v5080
        %v5083 = vshrl.u32 %v4902, 16
        %v5085 = vrot.slane %v5083, 4
        %v5086 = vshll.u32 %v4902, 16
        %v5088 = vrot.slane %v5086, 5
        %v5089 = vor.u32 %v5085, %v5088
        %v5090 = vrot.slane %v5089, 4
        %v5092 = vshll.u32 %v4903, 16
        %v5094 = vrot.slane %v5092, 5
        %v5095 = vsel %vm347, %v5090, %v5094
        %v5096 = vshrl.u32 %v4903, 16
        %v5098 = vrot.slane %v5096, 4
        %v5099 = vor.u32 %v5098, %v5094
        %v5100 = vrot.slane %v5099, 4
        %v5102 = vshll.u32 %v4928, 16
        %v5104 = vrot.slane %v5102, 5
        %v5105 = vsel %vm347, %v5100, %v5104
        %v5107 = vshrl.u32 %v4904, 16
        %v5109 = vrot.slane %v5107, 4
        %v5110 = vshll.u32 %v4904, 16
        %v5112 = vrot.slane %v5110, 5
        %v5113 = vor.u32 %v5109, %v5112
        %v5114 = vrot.slane %v5113, 4
        %v5116 = vshll.u32 %v4905, 16
        %v5118 = vrot.slane %v5116, 5
        %v5119 = vsel %vm347, %v5114, %v5118
        %v5120 = vshrl.u32 %v4905, 16
        %v5122 = vrot.slane %v5120, 4
        %v5123 = vor.u32 %v5122, %v5118
        %v5124 = vrot.slane %v5123, 4
        %v5126 = vshll.u32 %v4929, 16
        %v5128 = vrot.slane %v5126, 5
        %v5129 = vsel %vm347, %v5124, %v5128
        %v5131 = vshrl.u32 %v4906, 16
        %v5133 = vrot.slane %v5131, 4
        %v5134 = vshll.u32 %v4906, 16
        %v5136 = vrot.slane %v5134, 5
        %v5137 = vor.u32 %v5133, %v5136
        %v5138 = vrot.slane %v5137, 4
        %v5140 = vshll.u32 %v4907, 16
        %v5142 = vrot.slane %v5140, 5
        %v5143 = vsel %vm347, %v5138, %v5142
        %v5144 = vshrl.u32 %v4907, 16
        %v5146 = vrot.slane %v5144, 4
        %v5147 = vor.u32 %v5146, %v5142
        %v5148 = vrot.slane %v5147, 4
        %v5150 = vshll.u32 %v4930, 16
        %v5152 = vrot.slane %v5150, 5
        %v5153 = vsel %vm347, %v5148, %v5152
        %v5155 = vshrl.u32 %v4908, 16
        %v5157 = vrot.slane %v5155, 4
        %v5158 = vshll.u32 %v4908, 16
        %v5160 = vrot.slane %v5158, 5
        %v5161 = vor.u32 %v5157, %v5160
        %v5162 = vrot.slane %v5161, 4
        %v5164 = vshll.u32 %v4909, 16
        %v5166 = vrot.slane %v5164, 5
        %v5167 = vsel %vm347, %v5162, %v5166
        %v5168 = vshrl.u32 %v4909, 16
        %v5170 = vrot.slane %v5168, 4
        %v5171 = vor.u32 %v5170, %v5166
        %v5172 = vrot.slane %v5171, 4
        %v5174 = vshll.u32 %v4931, 16
        %v5176 = vrot.slane %v5174, 5
        %v5177 = vsel %vm347, %v5172, %v5176
        %v5179 = vshrl.u32 %v4910, 16
        %v5181 = vrot.slane %v5179, 4
        %v5182 = vshll.u32 %v4910, 16
        %v5184 = vrot.slane %v5182, 5
        %v5185 = vor.u32 %v5181, %v5184
        %v5186 = vrot.slane %v5185, 4
        %v5188 = vshll.u32 %v4911, 16
        %v5190 = vrot.slane %v5188, 5
        %v5191 = vsel %vm347, %v5186, %v5190
        %v5192 = vshrl.u32 %v4911, 16
        %v5194 = vrot.slane %v5192, 4
        %v5195 = vor.u32 %v5194, %v5190
        %v5196 = vrot.slane %v5195, 4
        %v5198 = vshll.u32 %v4932, 16
        %v5200 = vrot.slane %v5198, 5
        %v5201 = vsel %vm347, %v5196, %v5200
        %v5203 = vshrl.u32 %v4912, 16
        %v5205 = vrot.slane %v5203, 4
        %v5206 = vshll.u32 %v4912, 16
        %v5208 = vrot.slane %v5206, 5
        %v5209 = vor.u32 %v5205, %v5208
        %v5210 = vrot.slane %v5209, 4
        %v5212 = vshll.u32 %v4913, 16
        %v5214 = vrot.slane %v5212, 5
        %v5215 = vsel %vm347, %v5210, %v5214
        %v5216 = vshrl.u32 %v4913, 16
        %v5218 = vrot.slane %v5216, 4
        %v5219 = vor.u32 %v5218, %v5214
        %v5220 = vrot.slane %v5219, 4
        %v5222 = vshll.u32 %v4933, 16
        %v5224 = vrot.slane %v5222, 5
        %v5225 = vsel %vm347, %v5220, %v5224
        %v5227 = vshrl.u32 %v4914, 16
        %v5229 = vrot.slane %v5227, 4
        %v5230 = vshll.u32 %v4914, 16
        %v5232 = vrot.slane %v5230, 5
        %v5233 = vor.u32 %v5229, %v5232
        %v5234 = vrot.slane %v5233, 4
        %v5236 = vshll.u32 %v4915, 16
        %v5238 = vrot.slane %v5236, 5
        %v5239 = vsel %vm347, %v5234, %v5238
        %v5240 = vshrl.u32 %v4915, 16
        %v5242 = vrot.slane %v5240, 4
        %v5243 = vor.u32 %v5242, %v5238
        %v5244 = vrot.slane %v5243, 4
        %v5246 = vshll.u32 %v4934, 16
        %v5248 = vrot.slane %v5246, 5
        %v5249 = vsel %vm347, %v5244, %v5248
        %v5251 = vshrl.u32 %v4916, 16
        %v5253 = vrot.slane %v5251, 4
        %v5254 = vshll.u32 %v4916, 16
        %v5256 = vrot.slane %v5254, 5
        %v5257 = vor.u32 %v5253, %v5256
        %v5258 = vrot.slane %v5257, 4
        %v5260 = vshll.u32 %v4917, 16
        %v5262 = vrot.slane %v5260, 5
        %v5263 = vsel %vm347, %v5258, %v5262
        %v5264 = vshrl.u32 %v4917, 16
        %v5266 = vrot.slane %v5264, 4
        %v5267 = vor.u32 %v5266, %v5262
        %v5268 = vrot.slane %v5267, 4
        %v5270 = vshll.u32 %v4935, 16
        %v5272 = vrot.slane %v5270, 5
        %v5273 = vsel %vm347, %v5268, %v5272
        %v5275 = vshrl.u32 %v4918, 16
        %v5277 = vrot.slane %v5275, 4
        %v5278 = vshll.u32 %v4918, 16
        %v5280 = vrot.slane %v5278, 5
        %v5281 = vor.u32 %v5277, %v5280
        %v5282 = vrot.slane %v5281, 4
        %v5284 = vshll.u32 %v4919, 16
        %v5286 = vrot.slane %v5284, 5
        %v5287 = vsel %vm347, %v5282, %v5286
        %v5288 = vshrl.u32 %v4919, 16
        %v5290 = vrot.slane %v5288, 4
        %v5291 = vor.u32 %v5290, %v5286
        %v5292 = vrot.slane %v5291, 4
        %v5294 = vshll.u32 %v4936, 16
        %v5296 = vrot.slane %v5294, 5
        %v5297 = vsel %vm347, %v5292, %v5296
        %v5299 = vshrl.u32 %v4920, 16
        %v5301 = vrot.slane %v5299, 4
        %v5302 = vshll.u32 %v4920, 16
        %v5304 = vrot.slane %v5302, 5
        %v5305 = vor.u32 %v5301, %v5304
        %v5306 = vrot.slane %v5305, 4
        %v5308 = vshll.u32 %v4921, 16
        %v5310 = vrot.slane %v5308, 5
        %v5311 = vsel %vm347, %v5306, %v5310
        %v5312 = vshrl.u32 %v4921, 16
        %v5314 = vrot.slane %v5312, 4
        %v5315 = vor.u32 %v5314, %v5310
        %v5316 = vrot.slane %v5315, 4
        %v5318 = vshll.u32 %v4937, 16
        %v5320 = vrot.slane %v5318, 5
        %v5321 = vsel %vm347, %v5316, %v5320
        %v5354 = vunpack.c.l.b16 %v4890
        %v5355 = vunpack.c.l.b16 %v4891
        %v5356 = vunpack.c.l.b16 %v4892
        %v5357 = vunpack.c.l.b16 %v4893
        %v5358 = vunpack.c.l.b16 %v4894
        %v5359 = vunpack.c.l.b16 %v4895
        %v5360 = vunpack.c.l.b16 %v4896
        %v5361 = vunpack.c.l.b16 %v4897
        %v5362 = vunpack.c.l.b16 %v4898
        %v5363 = vunpack.c.l.b16 %v4899
        %v5364 = vunpack.c.l.b16 %v4900
        %v5365 = vunpack.c.l.b16 %v4901
        %v5366 = vunpack.c.l.b16 %v4902
        %v5367 = vunpack.c.l.b16 %v4903
        %v5368 = vunpack.c.l.b16 %v4904
        %v5369 = vunpack.c.l.b16 %v4905
        %v5370 = vunpack.c.l.b16 %v4906
        %v5371 = vunpack.c.l.b16 %v4907
        %v5372 = vunpack.c.l.b16 %v4908
        %v5373 = vunpack.c.l.b16 %v4909
        %v5374 = vunpack.c.l.b16 %v4910
        %v5375 = vunpack.c.l.b16 %v4911
        %v5376 = vunpack.c.l.b16 %v4912
        %v5377 = vunpack.c.l.b16 %v4913
        %v5378 = vunpack.c.l.b16 %v4914
        %v5379 = vunpack.c.l.b16 %v4915
        %v5380 = vunpack.c.l.b16 %v4916
        %v5381 = vunpack.c.l.b16 %v4917
        %v5382 = vunpack.c.l.b16 %v4918
        %v5383 = vunpack.c.l.b16 %v4919
        %v5384 = vunpack.c.l.b16 %v4920
        %v5385 = vunpack.c.l.b16 %v4921
        %v5386 = vpack.c.b16 %v5355, %v5354
        %v5387 = vpack.c.b16 %v5357, %v5356
        %v5388 = vpack.c.b16 %v5359, %v5358
        %v5389 = vpack.c.b16 %v5361, %v5360
        %v5390 = vpack.c.b16 %v5363, %v5362
        %v5391 = vpack.c.b16 %v5365, %v5364
        %v5392 = vpack.c.b16 %v5367, %v5366
        %v5393 = vpack.c.b16 %v5369, %v5368
        %v5394 = vpack.c.b16 %v5371, %v5370
        %v5395 = vpack.c.b16 %v5373, %v5372
        %v5396 = vpack.c.b16 %v5375, %v5374
        %v5397 = vpack.c.b16 %v5377, %v5376
        %v5398 = vpack.c.b16 %v5379, %v5378
        %v5399 = vpack.c.b16 %v5381, %v5380
        %v5400 = vpack.c.b16 %v5383, %v5382
        %v5401 = vpack.c.b16 %v5385, %v5384
        %v5418 = vunpack.c.l.b16 %v4951
        %v5419 = vunpack.c.l.b16 %v4961
        %v5420 = vunpack.c.l.b16 %v4975
        %v5421 = vunpack.c.l.b16 %v4985
        %v5422 = vunpack.c.l.b16 %v4999
        %v5423 = vunpack.c.l.b16 %v5009
        %v5424 = vunpack.c.l.b16 %v5023
        %v5425 = vunpack.c.l.b16 %v5033
        %v5426 = vunpack.c.l.b16 %v5047
        %v5427 = vunpack.c.l.b16 %v5057
        %v5428 = vunpack.c.l.b16 %v5071
        %v5429 = vunpack.c.l.b16 %v5081
        %v5430 = vunpack.c.l.b16 %v5095
        %v5431 = vunpack.c.l.b16 %v5105
        %v5432 = vunpack.c.l.b16 %v5119
        %v5433 = vunpack.c.l.b16 %v5129
        %v5434 = vunpack.c.l.b16 %v5143
        %v5435 = vunpack.c.l.b16 %v5153
        %v5436 = vunpack.c.l.b16 %v5167
        %v5437 = vunpack.c.l.b16 %v5177
        %v5438 = vunpack.c.l.b16 %v5191
        %v5439 = vunpack.c.l.b16 %v5201
        %v5440 = vunpack.c.l.b16 %v5215
        %v5441 = vunpack.c.l.b16 %v5225
        %v5442 = vunpack.c.l.b16 %v5239
        %v5443 = vunpack.c.l.b16 %v5249
        %v5444 = vunpack.c.l.b16 %v5263
        %v5445 = vunpack.c.l.b16 %v5273
        %v5446 = vunpack.c.l.b16 %v5287
        %v5447 = vunpack.c.l.b16 %v5297
        %v5448 = vunpack.c.l.b16 %v5311
        %v5449 = vunpack.c.l.b16 %v5321
        %v5450 = vpack.c.b16 %v5419, %v5418
        %v5451 = vpack.c.b16 %v5421, %v5420
        %v5452 = vpack.c.b16 %v5423, %v5422
        %v5453 = vpack.c.b16 %v5425, %v5424
        %v5454 = vpack.c.b16 %v5427, %v5426
        %v5455 = vpack.c.b16 %v5429, %v5428
        %v5456 = vpack.c.b16 %v5431, %v5430
        %v5457 = vpack.c.b16 %v5433, %v5432
        %v5458 = vpack.c.b16 %v5435, %v5434
        %v5459 = vpack.c.b16 %v5437, %v5436
        %v5460 = vpack.c.b16 %v5439, %v5438
        %v5461 = vpack.c.b16 %v5441, %v5440
        %v5462 = vpack.c.b16 %v5443, %v5442
        %v5463 = vpack.c.b16 %v5445, %v5444
        %v5464 = vpack.c.b16 %v5447, %v5446
        %v5465 = vpack.c.b16 %v5449, %v5448
        %v5482 = vld [vmem:[#allocation4] sm:$0xf]
        %v5483 = vld [vmem:[#allocation4 + $0x4] sm:$0xf]
        %v5484 = vld [vmem:[#allocation4 + $0x8] sm:$0xf]
        %v5485 = vld [vmem:[#allocation4 + $0xc] sm:$0xf]
        %v5486 = vld [vmem:[#allocation4 + $0x10] sm:$0xf]
        %v5487 = vld [vmem:[#allocation4 + $0x14] sm:$0xf]
        %v5488 = vld [vmem:[#allocation4 + $0x18] sm:$0xf]
        %v5489 = vld [vmem:[#allocation4 + $0x1c] sm:$0xf]
        %v5490 = vld [vmem:[#allocation4 + $0x20] sm:$0xf]
        %v5491 = vld [vmem:[#allocation4 + $0x24] sm:$0xf]
        %v5492 = vld [vmem:[#allocation4 + $0x28] sm:$0xf]
        %v5493 = vld [vmem:[#allocation4 + $0x2c] sm:$0xf]
        %v5494 = vld [vmem:[#allocation4 + $0x30] sm:$0xf]
        %v5495 = vld [vmem:[#allocation4 + $0x34] sm:$0xf]
        %v5496 = vld [vmem:[#allocation4 + $0x38] sm:$0xf]
        %v5497 = vld [vmem:[#allocation4 + $0x3c] sm:$0xf]
        %v5498 = vld [vmem:[#allocation4 + $0x40] sm:$0xf]
        %v5499 = vld [vmem:[#allocation4 + $0x44] sm:$0xf]
        %v5500 = vld [vmem:[#allocation4 + $0x48] sm:$0xf]
        %v5501 = vld [vmem:[#allocation4 + $0x4c] sm:$0xf]
        %v5502 = vld [vmem:[#allocation4 + $0x50] sm:$0xf]
        %v5503 = vld [vmem:[#allocation4 + $0x54] sm:$0xf]
        %v5504 = vld [vmem:[#allocation4 + $0x58] sm:$0xf]
        %v5505 = vld [vmem:[#allocation4 + $0x5c] sm:$0xf]
        %v5506 = vld [vmem:[#allocation4 + $0x60] sm:$0xf]
        %v5507 = vld [vmem:[#allocation4 + $0x64] sm:$0xf]
        %v5508 = vld [vmem:[#allocation4 + $0x68] sm:$0xf]
        %v5509 = vld [vmem:[#allocation4 + $0x6c] sm:$0xf]
        %v5510 = vld [vmem:[#allocation4 + $0x70] sm:$0xf]
        %v5511 = vld [vmem:[#allocation4 + $0x74] sm:$0xf]
        %v5512 = vld [vmem:[#allocation4 + $0x78] sm:$0xf]
        %v5513 = vld [vmem:[#allocation4 + $0x7c] sm:$0xf]
        %v5514 = vld [vmem:[#allocation2] sm:$0xe]
        %v5515 = vld [vmem:[#allocation2 + $0xc] sm:$0xe]
        %v5516 = vld [vmem:[#allocation2 + $0x18] sm:$0xe]
        %v5517 = vld [vmem:[#allocation2 + $0x24] sm:$0xe]
        %v5518 = vld [vmem:[#allocation2 + $0x30] sm:$0xe]
        %v5519 = vld [vmem:[#allocation2 + $0x3c] sm:$0xe]
        %v5520 = vld [vmem:[#allocation2 + $0x48] sm:$0xe]
        %v5521 = vld [vmem:[#allocation2 + $0x54] sm:$0xe]
        %v5522 = vld [vmem:[#allocation2 + $0x60] sm:$0xe]
        %v5523 = vld [vmem:[#allocation2 + $0x6c] sm:$0xe]
        %v5524 = vld [vmem:[#allocation2 + $0x78] sm:$0xe]
        %v5525 = vld [vmem:[#allocation2 + $0x84] sm:$0xe]
        %v5526 = vld [vmem:[#allocation2 + $0x90] sm:$0xe]
        %v5527 = vld [vmem:[#allocation2 + $0x9c] sm:$0xe]
        %v5528 = vld [vmem:[#allocation2 + $0xa8] sm:$0xe]
        %v5529 = vld [vmem:[#allocation2 + $0xb4] sm:$0xe]
        %v5562 = vrot.slane %v5514, 5
        %v5563 = vrot.slane %v5562, 4
        %v5564 = vrot.slane %v4891, 5
        %v5565 = vsel %vm974, %v5563, %v5564
        %v5566 = vrot.slane %v5564, 4
        %v5567 = vrot.slane %v4922, 5
        %v5568 = vsel %vm974, %v5566, %v5567
        %v5569 = vrot.slane %v5515, 5
        %v5570 = vrot.slane %v5569, 4
        %v5571 = vrot.slane %v4893, 5
        %v5572 = vsel %vm974, %v5570, %v5571
        %v5573 = vrot.slane %v5571, 4
        %v5574 = vrot.slane %v4923, 5
        %v5575 = vsel %vm974, %v5573, %v5574
        %v5576 = vrot.slane %v5516, 5
        %v5577 = vrot.slane %v5576, 4
        %v5578 = vrot.slane %v4895, 5
        %v5579 = vsel %vm974, %v5577, %v5578
        %v5580 = vrot.slane %v5578, 4
        %v5581 = vrot.slane %v4924, 5
        %v5582 = vsel %vm974, %v5580, %v5581
        %v5583 = vrot.slane %v5517, 5
        %v5584 = vrot.slane %v5583, 4
        %v5585 = vrot.slane %v4897, 5
        %v5586 = vsel %vm974, %v5584, %v5585
        %v5587 = vrot.slane %v5585, 4
        %v5588 = vrot.slane %v4925, 5
        %v5589 = vsel %vm974, %v5587, %v5588
        %v5590 = vrot.slane %v5518, 5
        %v5591 = vrot.slane %v5590, 4
        %v5592 = vrot.slane %v4899, 5
        %v5593 = vsel %vm974, %v5591, %v5592
        %v5594 = vrot.slane %v5592, 4
        %v5595 = vrot.slane %v4926, 5
        %v5596 = vsel %vm974, %v5594, %v5595
        %v5597 = vrot.slane %v5519, 5
        %v5598 = vrot.slane %v5597, 4
        %v5599 = vrot.slane %v4901, 5
        %v5600 = vsel %vm974, %v5598, %v5599
        %v5601 = vrot.slane %v5599, 4
        %v5602 = vrot.slane %v4927, 5
        %v5603 = vsel %vm974, %v5601, %v5602
        %v5604 = vrot.slane %v5520, 5
        %v5605 = vrot.slane %v5604, 4
        %v5606 = vrot.slane %v4903, 5
        %v5607 = vsel %vm974, %v5605, %v5606
        %v5608 = vrot.slane %v5606, 4
        %v5609 = vrot.slane %v4928, 5
        %v5610 = vsel %vm974, %v5608, %v5609
        %v5611 = vrot.slane %v5521, 5
        %v5612 = vrot.slane %v5611, 4
        %v5613 = vrot.slane %v4905, 5
        %v5614 = vsel %vm974, %v5612, %v5613
        %v5615 = vrot.slane %v5613, 4
        %v5616 = vrot.slane %v4929, 5
        %v5617 = vsel %vm974, %v5615, %v5616
        %v5618 = vrot.slane %v5522, 5
        %v5619 = vrot.slane %v5618, 4
        %v5620 = vrot.slane %v4907, 5
        %v5621 = vsel %vm974, %v5619, %v5620
        %v5622 = vrot.slane %v5620, 4
        %v5623 = vrot.slane %v4930, 5
        %v5624 = vsel %vm974, %v5622, %v5623
        %v5625 = vrot.slane %v5523, 5
        %v5626 = vrot.slane %v5625, 4
        %v5627 = vrot.slane %v4909, 5
        %v5628 = vsel %vm974, %v5626, %v5627
        %v5629 = vrot.slane %v5627, 4
        %v5630 = vrot.slane %v4931, 5
        %v5631 = vsel %vm974, %v5629, %v5630
        %v5632 = vrot.slane %v5524, 5
        %v5633 = vrot.slane %v5632, 4
        %v5634 = vrot.slane %v4911, 5
        %v5635 = vsel %vm974, %v5633, %v5634
        %v5636 = vrot.slane %v5634, 4
        %v5637 = vrot.slane %v4932, 5
        %v5638 = vsel %vm974, %v5636, %v5637
        %v5639 = vrot.slane %v5525, 5
        %v5640 = vrot.slane %v5639, 4
        %v5641 = vrot.slane %v4913, 5
        %v5642 = vsel %vm974, %v5640, %v5641
        %v5643 = vrot.slane %v5641, 4
        %v5644 = vrot.slane %v4933, 5
        %v5645 = vsel %vm974, %v5643, %v5644
        %v5646 = vrot.slane %v5526, 5
        %v5647 = vrot.slane %v5646, 4
        %v5648 = vrot.slane %v4915, 5
        %v5649 = vsel %vm974, %v5647, %v5648
        %v5650 = vrot.slane %v5648, 4
        %v5651 = vrot.slane %v4934, 5
        %v5652 = vsel %vm974, %v5650, %v5651
        %v5653 = vrot.slane %v5527, 5
        %v5654 = vrot.slane %v5653, 4
        %v5655 = vrot.slane %v4917, 5
        %v5656 = vsel %vm974, %v5654, %v5655
        %v5657 = vrot.slane %v5655, 4
        %v5658 = vrot.slane %v4935, 5
        %v5659 = vsel %vm974, %v5657, %v5658
        %v5660 = vrot.slane %v5528, 5
        %v5661 = vrot.slane %v5660, 4
        %v5662 = vrot.slane %v4919, 5
        %v5663 = vsel %vm974, %v5661, %v5662
        %v5664 = vrot.slane %v5662, 4
        %v5665 = vrot.slane %v4936, 5
        %v5666 = vsel %vm974, %v5664, %v5665
        %v5667 = vrot.slane %v5529, 5
        %v5668 = vrot.slane %v5667, 4
        %v5669 = vrot.slane %v4921, 5
        %v5670 = vsel %vm974, %v5668, %v5669
        %v5671 = vrot.slane %v5669, 4
        %v5672 = vrot.slane %v4937, 5
        %v5673 = vsel %vm974, %v5671, %v5672
        %v5674 = vld [vmem:[%s4772] sm:$0xf]
        %v5675 = vld [vmem:[%s4772 + $0x4] sm:$0xf]
        %v5676 = vld [vmem:[%s4772 + $0xc] sm:$0xf]
        %v5677 = vld [vmem:[%s4772 + $0x10] sm:$0xf]
        %v5678 = vld [vmem:[%s4772 + $0x18] sm:$0xf]
        %v5679 = vld [vmem:[%s4772 + $0x1c] sm:$0xf]
        %v5680 = vld [vmem:[%s4772 + $0x24] sm:$0xf]
        %v5681 = vld [vmem:[%s4772 + $0x28] sm:$0xf]
        %v5682 = vld [vmem:[%s4772 + $0x30] sm:$0xf]
        %v5683 = vld [vmem:[%s4772 + $0x34] sm:$0xf]
        %v5684 = vld [vmem:[%s4772 + $0x3c] sm:$0xf]
        %v5685 = vld [vmem:[%s4772 + $0x40] sm:$0xf]
        %v5686 = vld [vmem:[%s4772 + $0x48] sm:$0xf]
        %v5687 = vld [vmem:[%s4772 + $0x4c] sm:$0xf]
        %v5688 = vld [vmem:[%s4772 + $0x54] sm:$0xf]
        %v5689 = vld [vmem:[%s4772 + $0x58] sm:$0xf]
        %v5690 = vld [vmem:[%s4772 + $0x60] sm:$0xf]
        %v5691 = vld [vmem:[%s4772 + $0x64] sm:$0xf]
        %v5692 = vld [vmem:[%s4772 + $0x6c] sm:$0xf]
        %v5693 = vld [vmem:[%s4772 + $0x70] sm:$0xf]
        %v5694 = vld [vmem:[%s4772 + $0x78] sm:$0xf]
        %v5695 = vld [vmem:[%s4772 + $0x7c] sm:$0xf]
        %v5696 = vld [vmem:[%s4772 + $0x84] sm:$0xf]
        %v5697 = vld [vmem:[%s4772 + $0x88] sm:$0xf]
        %v5698 = vld [vmem:[%s4772 + $0x90] sm:$0xf]
        %v5699 = vld [vmem:[%s4772 + $0x94] sm:$0xf]
        %v5700 = vld [vmem:[%s4772 + $0x9c] sm:$0xf]
        %v5701 = vld [vmem:[%s4772 + $0xa0] sm:$0xf]
        %v5702 = vld [vmem:[%s4772 + $0xa8] sm:$0xf]
        %v5703 = vld [vmem:[%s4772 + $0xac] sm:$0xf]
        %v5704 = vld [vmem:[%s4772 + $0xb4] sm:$0xf]
        %v5705 = vld [vmem:[%s4772 + $0xb8] sm:$0xf]
        %v5706 = vunpack.c.l.b16 %v5565
        %v5707 = vunpack.c.l.b16 %v5568
        %v5708 = vunpack.c.l.b16 %v5572
        %v5709 = vunpack.c.l.b16 %v5575
        %v5710 = vunpack.c.l.b16 %v5579
        %v5711 = vunpack.c.l.b16 %v5582
        %v5712 = vunpack.c.l.b16 %v5586
        %v5713 = vunpack.c.l.b16 %v5589
        %v5714 = vunpack.c.l.b16 %v5593
        %v5715 = vunpack.c.l.b16 %v5596
        %v5716 = vunpack.c.l.b16 %v5600
        %v5717 = vunpack.c.l.b16 %v5603
        %v5718 = vunpack.c.l.b16 %v5607
        %v5719 = vunpack.c.l.b16 %v5610
        %v5720 = vunpack.c.l.b16 %v5614
        %v5721 = vunpack.c.l.b16 %v5617
        %v5722 = vunpack.c.l.b16 %v5621
        %v5723 = vunpack.c.l.b16 %v5624
        %v5724 = vunpack.c.l.b16 %v5628
        %v5725 = vunpack.c.l.b16 %v5631
        %v5726 = vunpack.c.l.b16 %v5635
        %v5727 = vunpack.c.l.b16 %v5638
        %v5728 = vunpack.c.l.b16 %v5642
        %v5729 = vunpack.c.l.b16 %v5645
        %v5730 = vunpack.c.l.b16 %v5649
        %v5731 = vunpack.c.l.b16 %v5652
        %v5732 = vunpack.c.l.b16 %v5656
        %v5733 = vunpack.c.l.b16 %v5659
        %v5734 = vunpack.c.l.b16 %v5663
        %v5735 = vunpack.c.l.b16 %v5666
        %v5736 = vunpack.c.l.b16 %v5670
        %v5737 = vunpack.c.l.b16 %v5673
        %v5738 = vpack.c.b16 %v5707, %v5706
        %v5739 = vpack.c.b16 %v5709, %v5708
        %v5740 = vpack.c.b16 %v5711, %v5710
        %v5741 = vpack.c.b16 %v5713, %v5712
        %v5742 = vpack.c.b16 %v5715, %v5714
        %v5743 = vpack.c.b16 %v5717, %v5716
        %v5744 = vpack.c.b16 %v5719, %v5718
        %v5745 = vpack.c.b16 %v5721, %v5720
        %v5746 = vpack.c.b16 %v5723, %v5722
        %v5747 = vpack.c.b16 %v5725, %v5724
        %v5748 = vpack.c.b16 %v5727, %v5726
        %v5749 = vpack.c.b16 %v5729, %v5728
        %v5750 = vpack.c.b16 %v5731, %v5730
        %v5751 = vpack.c.b16 %v5733, %v5732
        %v5752 = vpack.c.b16 %v5735, %v5734
        %v5753 = vpack.c.b16 %v5737, %v5736
        %v5802 = vunpack.c.l.b16 %v5674
        %v5803 = vunpack.c.l.b16 %v5675
        %v5804 = vunpack.c.l.b16 %v5676
        %v5805 = vunpack.c.l.b16 %v5677
        %v5806 = vunpack.c.l.b16 %v5678
        %v5807 = vunpack.c.l.b16 %v5679
        %v5808 = vunpack.c.l.b16 %v5680
        %v5809 = vunpack.c.l.b16 %v5681
        %v5810 = vunpack.c.l.b16 %v5682
        %v5811 = vunpack.c.l.b16 %v5683
        %v5812 = vunpack.c.l.b16 %v5684
        %v5813 = vunpack.c.l.b16 %v5685
        %v5814 = vunpack.c.l.b16 %v5686
        %v5815 = vunpack.c.l.b16 %v5687
        %v5816 = vunpack.c.l.b16 %v5688
        %v5817 = vunpack.c.l.b16 %v5689
        %v5818 = vunpack.c.l.b16 %v5690
        %v5819 = vunpack.c.l.b16 %v5691
        %v5820 = vunpack.c.l.b16 %v5692
        %v5821 = vunpack.c.l.b16 %v5693
        %v5822 = vunpack.c.l.b16 %v5694
        %v5823 = vunpack.c.l.b16 %v5695
        %v5824 = vunpack.c.l.b16 %v5696
        %v5825 = vunpack.c.l.b16 %v5697
        %v5826 = vunpack.c.l.b16 %v5698
        %v5827 = vunpack.c.l.b16 %v5699
        %v5828 = vunpack.c.l.b16 %v5700
        %v5829 = vunpack.c.l.b16 %v5701
        %v5830 = vunpack.c.l.b16 %v5702
        %v5831 = vunpack.c.l.b16 %v5703
        %v5832 = vunpack.c.l.b16 %v5704
        %v5833 = vunpack.c.l.b16 %v5705
        %v5834 = vpack.c.b16 %v5803, %v5802
        %v5835 = vpack.c.b16 %v5805, %v5804
        %v5836 = vpack.c.b16 %v5807, %v5806
        %v5837 = vpack.c.b16 %v5809, %v5808
        %v5838 = vpack.c.b16 %v5811, %v5810
        %v5839 = vpack.c.b16 %v5813, %v5812
        %v5840 = vpack.c.b16 %v5815, %v5814
        %v5841 = vpack.c.b16 %v5817, %v5816
        %v5842 = vpack.c.b16 %v5819, %v5818
        %v5843 = vpack.c.b16 %v5821, %v5820
        %v5844 = vpack.c.b16 %v5823, %v5822
        %v5845 = vpack.c.b16 %v5825, %v5824
        %v5846 = vpack.c.b16 %v5827, %v5826
        %v5847 = vpack.c.b16 %v5829, %v5828
        %v5848 = vpack.c.b16 %v5831, %v5830
        %v5849 = vpack.c.b16 %v5833, %v5832
        %s5866 = scalar_lea.vmem [#allocation4], 128
        %v5867 = vld [vmem:[%s5866] sm:$0xf]
        %v5868 = vld [vmem:[%s5866 + $0x4] sm:$0xf]
        %v5869 = vld [vmem:[%s5866 + $0x8] sm:$0xf]
        %v5870 = vld [vmem:[%s5866 + $0xc] sm:$0xf]
        %v5871 = vld [vmem:[%s5866 + $0x10] sm:$0xf]
        %v5872 = vld [vmem:[%s5866 + $0x14] sm:$0xf]
        %v5873 = vld [vmem:[%s5866 + $0x18] sm:$0xf]
        %v5874 = vld [vmem:[%s5866 + $0x1c] sm:$0xf]
        %v5875 = vld [vmem:[%s5866 + $0x20] sm:$0xf]
        %v5876 = vld [vmem:[%s5866 + $0x24] sm:$0xf]
        %v5877 = vld [vmem:[%s5866 + $0x28] sm:$0xf]
        %v5878 = vld [vmem:[%s5866 + $0x2c] sm:$0xf]
        %v5879 = vld [vmem:[%s5866 + $0x30] sm:$0xf]
        %v5880 = vld [vmem:[%s5866 + $0x34] sm:$0xf]
        %v5881 = vld [vmem:[%s5866 + $0x38] sm:$0xf]
        %v5882 = vld [vmem:[%s5866 + $0x3c] sm:$0xf]
        %v5883 = vld [vmem:[%s5866 + $0x40] sm:$0xf]
        %v5884 = vld [vmem:[%s5866 + $0x44] sm:$0xf]
        %v5885 = vld [vmem:[%s5866 + $0x48] sm:$0xf]
        %v5886 = vld [vmem:[%s5866 + $0x4c] sm:$0xf]
        %v5887 = vld [vmem:[%s5866 + $0x50] sm:$0xf]
        %v5888 = vld [vmem:[%s5866 + $0x54] sm:$0xf]
        %v5889 = vld [vmem:[%s5866 + $0x58] sm:$0xf]
        %v5890 = vld [vmem:[%s5866 + $0x5c] sm:$0xf]
        %v5891 = vld [vmem:[%s5866 + $0x60] sm:$0xf]
        %v5892 = vld [vmem:[%s5866 + $0x64] sm:$0xf]
        %v5893 = vld [vmem:[%s5866 + $0x68] sm:$0xf]
        %v5894 = vld [vmem:[%s5866 + $0x6c] sm:$0xf]
        %v5895 = vld [vmem:[%s5866 + $0x70] sm:$0xf]
        %v5896 = vld [vmem:[%s5866 + $0x74] sm:$0xf]
        %v5897 = vld [vmem:[%s5866 + $0x78] sm:$0xf]
        %v5898 = vld [vmem:[%s5866 + $0x7c] sm:$0xf]
        %v5931 = vunpack.c.l.b16 %v5867
        %v5932 = vunpack.c.l.b16 %v5868
        %v5933 = vunpack.c.l.b16 %v5869
        %v5934 = vunpack.c.l.b16 %v5870
        %v5935 = vunpack.c.l.b16 %v5871
        %v5936 = vunpack.c.l.b16 %v5872
        %v5937 = vunpack.c.l.b16 %v5873
        %v5938 = vunpack.c.l.b16 %v5874
        %v5939 = vunpack.c.l.b16 %v5875
        %v5940 = vunpack.c.l.b16 %v5876
        %v5941 = vunpack.c.l.b16 %v5877
        %v5942 = vunpack.c.l.b16 %v5878
        %v5943 = vunpack.c.l.b16 %v5879
        %v5944 = vunpack.c.l.b16 %v5880
        %v5945 = vunpack.c.l.b16 %v5881
        %v5946 = vunpack.c.l.b16 %v5882
        %v5947 = vunpack.c.l.b16 %v5883
        %v5948 = vunpack.c.l.b16 %v5884
        %v5949 = vunpack.c.l.b16 %v5885
        %v5950 = vunpack.c.l.b16 %v5886
        %v5951 = vunpack.c.l.b16 %v5887
        %v5952 = vunpack.c.l.b16 %v5888
        %v5953 = vunpack.c.l.b16 %v5889
        %v5954 = vunpack.c.l.b16 %v5890
        %v5955 = vunpack.c.l.b16 %v5891
        %v5956 = vunpack.c.l.b16 %v5892
        %v5957 = vunpack.c.l.b16 %v5893
        %v5958 = vunpack.c.l.b16 %v5894
        %v5959 = vunpack.c.l.b16 %v5895
        %v5960 = vunpack.c.l.b16 %v5896
        %v5961 = vunpack.c.l.b16 %v5897
        %v5962 = vunpack.c.l.b16 %v5898
        %v5963 = vpack.c.b16 %v5932, %v5931
        %v5964 = vpack.c.b16 %v5934, %v5933
        %v5965 = vpack.c.b16 %v5936, %v5935
        %v5966 = vpack.c.b16 %v5938, %v5937
        %v5967 = vpack.c.b16 %v5940, %v5939
        %v5968 = vpack.c.b16 %v5942, %v5941
        %v5969 = vpack.c.b16 %v5944, %v5943
        %v5970 = vpack.c.b16 %v5946, %v5945
        %v5971 = vpack.c.b16 %v5948, %v5947
        %v5972 = vpack.c.b16 %v5950, %v5949
        %v5973 = vpack.c.b16 %v5952, %v5951
        %v5974 = vpack.c.b16 %v5954, %v5953
        %v5975 = vpack.c.b16 %v5956, %v5955
        %v5976 = vpack.c.b16 %v5958, %v5957
        %v5977 = vpack.c.b16 %v5960, %v5959
        %v5978 = vpack.c.b16 %v5962, %v5961
        %5995 = vmatprep.subr.bf16.mxu0 0
        %5996 = vmatpush1.bf16.msra.mxu0 %v5970
        %5997 = vmatprep.subr.bf16.mxu0 0
        %5998 = vmatpush1.bf16.msra.mxu0 %v5969
        %5999 = vmatprep.subr.bf16.mxu0 0
        %6000 = vmatpush1.bf16.msra.mxu0 %v5968
        %6001 = vmatprep.subr.bf16.mxu0 0
        %6002 = vmatpush1.bf16.msra.mxu0 %v5967
        %6003 = vmatprep.subr.bf16.mxu0 0
        %6004 = vmatpush1.bf16.msra.mxu0 %v5966
        %6005 = vmatprep.subr.bf16.mxu0 0
        %6006 = vmatpush1.bf16.msra.mxu0 %v5965
        %6007 = vmatprep.subr.bf16.mxu0 0
        %6008 = vmatpush1.bf16.msra.mxu0 %v5964
        %6009 = vmatprep.subr.bf16.mxu0 0
        %6010 = vmatpush1.bf16.msra.mxu0 %v5963
        %6011 = vmatprep.subr.bf16.mxu0 0
        %6012 = vmatpush2.bf16.msra.mxu0 %v5978
        %6013 = vmatprep.subr.bf16.mxu0 0
        %6014 = vmatpush2.bf16.msra.mxu0 %v5977
        %6015 = vmatprep.subr.bf16.mxu0 0
        %6016 = vmatpush2.bf16.msra.mxu0 %v5976
        %6017 = vmatprep.subr.bf16.mxu0 0
        %6018 = vmatpush2.bf16.msra.mxu0 %v5975
        %6019 = vmatprep.subr.bf16.mxu0 0
        %6020 = vmatpush2.bf16.msra.mxu0 %v5974
        %6021 = vmatprep.subr.bf16.mxu0 0
        %6022 = vmatpush2.bf16.msra.mxu0 %v5973
        %6023 = vmatprep.subr.bf16.mxu0 0
        %6024 = vmatpush2.bf16.msra.mxu0 %v5972
        %6025 = vmatprep.subr.bf16.mxu0 0
        %6026 = vmatpush2.bf16.msra.mxu0 %v5971
        %6027 = vmatprep.mubr.bf16.mxu0 %v5834
        %6028 = vmatmul.mubr.bf16.gmra.mxu0 %v5738
        %v6029 = vpop.f32.mrf.mxu0
        %v6030 = vadd.f32 0.0, %v6029
        %v6031 = vpop.f32.mrf.mxu0
        %v6032 = vpop.f32.mrf.mxu0
        %v6033 = vadd.f32 0.0, %v6032
        %v6034 = vpop.f32.mrf.mxu0
        %6035 = vmatprep.mubr.bf16.mxu0 %v5835
        %6036 = vmatmul.mubr.bf16.gmra.mxu0 %v5739
        %v6037 = vpop.f32.mrf.mxu0
        %v6038 = vadd.f32 0.0, %v6037
        %v6039 = vpop.f32.mrf.mxu0
        %v6040 = vpop.f32.mrf.mxu0
        %v6041 = vadd.f32 0.0, %v6040
        %v6042 = vpop.f32.mrf.mxu0
        %6043 = vmatprep.mubr.bf16.mxu0 %v5836
        %6044 = vmatmul.mubr.bf16.gmra.mxu0 %v5740
        %v6045 = vpop.f32.mrf.mxu0
        %v6046 = vadd.f32 0.0, %v6045
        %v6047 = vpop.f32.mrf.mxu0
        %v6048 = vpop.f32.mrf.mxu0
        %v6049 = vadd.f32 0.0, %v6048
        %v6050 = vpop.f32.mrf.mxu0
        %6051 = vmatprep.mubr.bf16.mxu0 %v5837
        %6052 = vmatmul.mubr.bf16.gmra.mxu0 %v5741
        %v6053 = vpop.f32.mrf.mxu0
        %v6054 = vadd.f32 0.0, %v6053
        %v6055 = vpop.f32.mrf.mxu0
        %v6056 = vpop.f32.mrf.mxu0
        %v6057 = vadd.f32 0.0, %v6056
        %v6058 = vpop.f32.mrf.mxu0
        %6059 = vmatprep.mubr.bf16.mxu0 %v5838
        %6060 = vmatmul.mubr.bf16.gmra.mxu0 %v5742
        %v6061 = vpop.f32.mrf.mxu0
        %v6062 = vadd.f32 0.0, %v6061
        %v6063 = vpop.f32.mrf.mxu0
        %v6064 = vpop.f32.mrf.mxu0
        %v6065 = vadd.f32 0.0, %v6064
        %v6066 = vpop.f32.mrf.mxu0
        %6067 = vmatprep.mubr.bf16.mxu0 %v5839
        %6068 = vmatmul.mubr.bf16.gmra.mxu0 %v5743
        %v6069 = vpop.f32.mrf.mxu0
        %v6070 = vadd.f32 0.0, %v6069
        %v6071 = vpop.f32.mrf.mxu0
        %v6072 = vpop.f32.mrf.mxu0
        %v6073 = vadd.f32 0.0, %v6072
        %v6074 = vpop.f32.mrf.mxu0
        %6075 = vmatprep.mubr.bf16.mxu0 %v5840
        %6076 = vmatmul.mubr.bf16.gmra.mxu0 %v5744
        %v6077 = vpop.f32.mrf.mxu0
        %v6078 = vadd.f32 0.0, %v6077
        %v6079 = vpop.f32.mrf.mxu0
        %v6080 = vpop.f32.mrf.mxu0
        %v6081 = vadd.f32 0.0, %v6080
        %v6082 = vpop.f32.mrf.mxu0
        %6083 = vmatprep.mubr.bf16.mxu0 %v5841
        %6084 = vmatmul.mubr.bf16.gmra.mxu0 %v5745
        %v6085 = vpop.f32.mrf.mxu0
        %v6086 = vadd.f32 0.0, %v6085
        %v6087 = vpop.f32.mrf.mxu0
        %v6088 = vpop.f32.mrf.mxu0
        %v6089 = vadd.f32 0.0, %v6088
        %v6090 = vpop.f32.mrf.mxu0
        %6091 = vmatprep.mubr.bf16.mxu0 %v5842
        %6092 = vmatmul.mubr.bf16.gmra.mxu0 %v5746
        %v6093 = vpop.f32.mrf.mxu0
        %v6094 = vadd.f32 0.0, %v6093
        %v6095 = vpop.f32.mrf.mxu0
        %v6096 = vpop.f32.mrf.mxu0
        %v6097 = vadd.f32 0.0, %v6096
        %v6098 = vpop.f32.mrf.mxu0
        %6099 = vmatprep.mubr.bf16.mxu0 %v5843
        %6100 = vmatmul.mubr.bf16.gmra.mxu0 %v5747
        %v6101 = vpop.f32.mrf.mxu0
        %v6102 = vadd.f32 0.0, %v6101
        %v6103 = vpop.f32.mrf.mxu0
        %v6104 = vpop.f32.mrf.mxu0
        %v6105 = vadd.f32 0.0, %v6104
        %v6106 = vpop.f32.mrf.mxu0
        %6107 = vmatprep.mubr.bf16.mxu0 %v5844
        %6108 = vmatmul.mubr.bf16.gmra.mxu0 %v5748
        %v6109 = vpop.f32.mrf.mxu0
        %v6110 = vadd.f32 0.0, %v6109
        %v6111 = vpop.f32.mrf.mxu0
        %v6112 = vpop.f32.mrf.mxu0
        %v6113 = vadd.f32 0.0, %v6112
        %v6114 = vpop.f32.mrf.mxu0
        %6115 = vmatprep.mubr.bf16.mxu0 %v5845
        %6116 = vmatmul.mubr.bf16.gmra.mxu0 %v5749
        %v6117 = vpop.f32.mrf.mxu0
        %v6118 = vadd.f32 0.0, %v6117
        %v6119 = vpop.f32.mrf.mxu0
        %v6120 = vpop.f32.mrf.mxu0
        %v6121 = vadd.f32 0.0, %v6120
        %v6122 = vpop.f32.mrf.mxu0
        %6123 = vmatprep.mubr.bf16.mxu0 %v5846
        %6124 = vmatmul.mubr.bf16.gmra.mxu0 %v5750
        %v6125 = vpop.f32.mrf.mxu0
        %v6126 = vadd.f32 0.0, %v6125
        %v6127 = vpop.f32.mrf.mxu0
        %v6128 = vpop.f32.mrf.mxu0
        %v6129 = vadd.f32 0.0, %v6128
        %v6130 = vpop.f32.mrf.mxu0
        %6131 = vmatprep.mubr.bf16.mxu0 %v5847
        %6132 = vmatmul.mubr.bf16.gmra.mxu0 %v5751
        %v6133 = vpop.f32.mrf.mxu0
        %v6134 = vadd.f32 0.0, %v6133
        %v6135 = vpop.f32.mrf.mxu0
        %v6136 = vpop.f32.mrf.mxu0
        %v6137 = vadd.f32 0.0, %v6136
        %v6138 = vpop.f32.mrf.mxu0
        %6139 = vmatprep.mubr.bf16.mxu0 %v5848
        %6140 = vmatmul.mubr.bf16.gmra.mxu0 %v5752
        %v6141 = vpop.f32.mrf.mxu0
        %v6142 = vadd.f32 0.0, %v6141
        %v6143 = vpop.f32.mrf.mxu0
        %v6144 = vpop.f32.mrf.mxu0
        %v6145 = vadd.f32 0.0, %v6144
        %v6146 = vpop.f32.mrf.mxu0
        %6147 = vmatprep.mubr.bf16.mxu0 %v5849
        %6148 = vmatmul.mubr.bf16.gmra.mxu0 %v5753
        %v6149 = vpop.f32.mrf.mxu0
        %v6150 = vadd.f32 0.0, %v6149
        %v6151 = vpop.f32.mrf.mxu0
        %v6152 = vpop.f32.mrf.mxu0
        %v6153 = vadd.f32 0.0, %v6152
        %v6154 = vpop.f32.mrf.mxu0
        %6155 = vdwg.mxu0
        %v6188 = vunpack.c.l.b16 %v5482
        %v6189 = vunpack.c.l.b16 %v5483
        %v6190 = vunpack.c.l.b16 %v5484
        %v6191 = vunpack.c.l.b16 %v5485
        %v6192 = vunpack.c.l.b16 %v5486
        %v6193 = vunpack.c.l.b16 %v5487
        %v6194 = vunpack.c.l.b16 %v5488
        %v6195 = vunpack.c.l.b16 %v5489
        %v6196 = vunpack.c.l.b16 %v5490
        %v6197 = vunpack.c.l.b16 %v5491
        %v6198 = vunpack.c.l.b16 %v5492
        %v6199 = vunpack.c.l.b16 %v5493
        %v6200 = vunpack.c.l.b16 %v5494
        %v6201 = vunpack.c.l.b16 %v5495
        %v6202 = vunpack.c.l.b16 %v5496
        %v6203 = vunpack.c.l.b16 %v5497
        %v6204 = vunpack.c.l.b16 %v5498
        %v6205 = vunpack.c.l.b16 %v5499
        %v6206 = vunpack.c.l.b16 %v5500
        %v6207 = vunpack.c.l.b16 %v5501
        %v6208 = vunpack.c.l.b16 %v5502
        %v6209 = vunpack.c.l.b16 %v5503
        %v6210 = vunpack.c.l.b16 %v5504
        %v6211 = vunpack.c.l.b16 %v5505
        %v6212 = vunpack.c.l.b16 %v5506
        %v6213 = vunpack.c.l.b16 %v5507
        %v6214 = vunpack.c.l.b16 %v5508
        %v6215 = vunpack.c.l.b16 %v5509
        %v6216 = vunpack.c.l.b16 %v5510
        %v6217 = vunpack.c.l.b16 %v5511
        %v6218 = vunpack.c.l.b16 %v5512
        %v6219 = vunpack.c.l.b16 %v5513
        %v6220 = vpack.c.b16 %v6189, %v6188
        %v6221 = vpack.c.b16 %v6191, %v6190
        %v6222 = vpack.c.b16 %v6193, %v6192
        %v6223 = vpack.c.b16 %v6195, %v6194
        %v6224 = vpack.c.b16 %v6197, %v6196
        %v6225 = vpack.c.b16 %v6199, %v6198
        %v6226 = vpack.c.b16 %v6201, %v6200
        %v6227 = vpack.c.b16 %v6203, %v6202
        %v6228 = vpack.c.b16 %v6205, %v6204
        %v6229 = vpack.c.b16 %v6207, %v6206
        %v6230 = vpack.c.b16 %v6209, %v6208
        %v6231 = vpack.c.b16 %v6211, %v6210
        %v6232 = vpack.c.b16 %v6213, %v6212
        %v6233 = vpack.c.b16 %v6215, %v6214
        %v6234 = vpack.c.b16 %v6217, %v6216
        %v6235 = vpack.c.b16 %v6219, %v6218
        %6252 = vmatprep.subr.bf16.mxu0 0
        %6253 = vmatpush1.bf16.msra.mxu0 %v6227
        %6254 = vmatprep.subr.bf16.mxu0 0
        %6255 = vmatpush1.bf16.msra.mxu0 %v6226
        %6256 = vmatprep.subr.bf16.mxu0 0
        %6257 = vmatpush1.bf16.msra.mxu0 %v6225
        %6258 = vmatprep.subr.bf16.mxu0 0
        %6259 = vmatpush1.bf16.msra.mxu0 %v6224
        %6260 = vmatprep.subr.bf16.mxu0 0
        %6261 = vmatpush1.bf16.msra.mxu0 %v6223
        %6262 = vmatprep.subr.bf16.mxu0 0
        %6263 = vmatpush1.bf16.msra.mxu0 %v6222
        %6264 = vmatprep.subr.bf16.mxu0 0
        %6265 = vmatpush1.bf16.msra.mxu0 %v6221
        %6266 = vmatprep.subr.bf16.mxu0 0
        %6267 = vmatpush1.bf16.msra.mxu0 %v6220
        %6268 = vmatprep.subr.bf16.mxu0 0
        %6269 = vmatpush2.bf16.msra.mxu0 %v6235
        %6270 = vmatprep.subr.bf16.mxu0 0
        %6271 = vmatpush2.bf16.msra.mxu0 %v6234
        %6272 = vmatprep.subr.bf16.mxu0 0
        %6273 = vmatpush2.bf16.msra.mxu0 %v6233
        %6274 = vmatprep.subr.bf16.mxu0 0
        %6275 = vmatpush2.bf16.msra.mxu0 %v6232
        %6276 = vmatprep.subr.bf16.mxu0 0
        %6277 = vmatpush2.bf16.msra.mxu0 %v6231
        %6278 = vmatprep.subr.bf16.mxu0 0
        %6279 = vmatpush2.bf16.msra.mxu0 %v6230
        %6280 = vmatprep.subr.bf16.mxu0 0
        %6281 = vmatpush2.bf16.msra.mxu0 %v6229
        %6282 = vmatprep.subr.bf16.mxu0 0
        %6283 = vmatpush2.bf16.msra.mxu0 %v6228
        %6284 = vmatprep.mubr.bf16.mxu0 %v5450
        %6285 = vmatmul.mubr.bf16.gmra.mxu0 %v5386
        %v6286 = vpop.f32.mrf.mxu0
        %v6287 = vadd.f32 %v6030, %v6286
        %v6288 = vpop.f32.mrf.mxu0
        %v6289 = vpop.f32.mrf.mxu0
        %v6290 = vadd.f32 %v6033, %v6289
        %v6291 = vpop.f32.mrf.mxu0
        %6292 = vmatprep.mubr.bf16.mxu0 %v5451
        %6293 = vmatmul.mubr.bf16.gmra.mxu0 %v5387
        %v6294 = vpop.f32.mrf.mxu0
        %v6295 = vadd.f32 %v6038, %v6294
        %v6296 = vpop.f32.mrf.mxu0
        %v6297 = vpop.f32.mrf.mxu0
        %v6298 = vadd.f32 %v6041, %v6297
        %v6299 = vpop.f32.mrf.mxu0
        %6300 = vmatprep.mubr.bf16.mxu0 %v5452
        %6301 = vmatmul.mubr.bf16.gmra.mxu0 %v5388
        %v6302 = vpop.f32.mrf.mxu0
        %v6303 = vadd.f32 %v6046, %v6302
        %v6304 = vpop.f32.mrf.mxu0
        %v6305 = vpop.f32.mrf.mxu0
        %v6306 = vadd.f32 %v6049, %v6305
        %v6307 = vpop.f32.mrf.mxu0
        %6308 = vmatprep.mubr.bf16.mxu0 %v5453
        %6309 = vmatmul.mubr.bf16.gmra.mxu0 %v5389
        %v6310 = vpop.f32.mrf.mxu0
        %v6311 = vadd.f32 %v6054, %v6310
        %v6312 = vpop.f32.mrf.mxu0
        %v6313 = vpop.f32.mrf.mxu0
        %v6314 = vadd.f32 %v6057, %v6313
        %v6315 = vpop.f32.mrf.mxu0
        %6316 = vmatprep.mubr.bf16.mxu0 %v5454
        %6317 = vmatmul.mubr.bf16.gmra.mxu0 %v5390
        %v6318 = vpop.f32.mrf.mxu0
        %v6319 = vadd.f32 %v6062, %v6318
        %v6320 = vpop.f32.mrf.mxu0
        %v6321 = vpop.f32.mrf.mxu0
        %v6322 = vadd.f32 %v6065, %v6321
        %v6323 = vpop.f32.mrf.mxu0
        %6324 = vmatprep.mubr.bf16.mxu0 %v5455
        %6325 = vmatmul.mubr.bf16.gmra.mxu0 %v5391
        %v6326 = vpop.f32.mrf.mxu0
        %v6327 = vadd.f32 %v6070, %v6326
        %v6328 = vpop.f32.mrf.mxu0
        %v6329 = vpop.f32.mrf.mxu0
        %v6330 = vadd.f32 %v6073, %v6329
        %v6331 = vpop.f32.mrf.mxu0
        %6332 = vmatprep.mubr.bf16.mxu0 %v5456
        %6333 = vmatmul.mubr.bf16.gmra.mxu0 %v5392
        %v6334 = vpop.f32.mrf.mxu0
        %v6335 = vadd.f32 %v6078, %v6334
        %v6336 = vpop.f32.mrf.mxu0
        %v6337 = vpop.f32.mrf.mxu0
        %v6338 = vadd.f32 %v6081, %v6337
        %v6339 = vpop.f32.mrf.mxu0
        %6340 = vmatprep.mubr.bf16.mxu0 %v5457
        %6341 = vmatmul.mubr.bf16.gmra.mxu0 %v5393
        %v6342 = vpop.f32.mrf.mxu0
        %v6343 = vadd.f32 %v6086, %v6342
        %v6344 = vpop.f32.mrf.mxu0
        %v6345 = vpop.f32.mrf.mxu0
        %v6346 = vadd.f32 %v6089, %v6345
        %v6347 = vpop.f32.mrf.mxu0
        %6348 = vmatprep.mubr.bf16.mxu0 %v5458
        %6349 = vmatmul.mubr.bf16.gmra.mxu0 %v5394
        %v6350 = vpop.f32.mrf.mxu0
        %v6351 = vadd.f32 %v6094, %v6350
        %v6352 = vpop.f32.mrf.mxu0
        %v6353 = vpop.f32.mrf.mxu0
        %v6354 = vadd.f32 %v6097, %v6353
        %v6355 = vpop.f32.mrf.mxu0
        %6356 = vmatprep.mubr.bf16.mxu0 %v5459
        %6357 = vmatmul.mubr.bf16.gmra.mxu0 %v5395
        %v6358 = vpop.f32.mrf.mxu0
        %v6359 = vadd.f32 %v6102, %v6358
        %v6360 = vpop.f32.mrf.mxu0
        %v6361 = vpop.f32.mrf.mxu0
        %v6362 = vadd.f32 %v6105, %v6361
        %v6363 = vpop.f32.mrf.mxu0
        %6364 = vmatprep.mubr.bf16.mxu0 %v5460
        %6365 = vmatmul.mubr.bf16.gmra.mxu0 %v5396
        %v6366 = vpop.f32.mrf.mxu0
        %v6367 = vadd.f32 %v6110, %v6366
        %v6368 = vpop.f32.mrf.mxu0
        %v6369 = vpop.f32.mrf.mxu0
        %v6370 = vadd.f32 %v6113, %v6369
        %v6371 = vpop.f32.mrf.mxu0
        %6372 = vmatprep.mubr.bf16.mxu0 %v5461
        %6373 = vmatmul.mubr.bf16.gmra.mxu0 %v5397
        %v6374 = vpop.f32.mrf.mxu0
        %v6375 = vadd.f32 %v6118, %v6374
        %v6376 = vpop.f32.mrf.mxu0
        %v6377 = vpop.f32.mrf.mxu0
        %v6378 = vadd.f32 %v6121, %v6377
        %v6379 = vpop.f32.mrf.mxu0
        %6380 = vmatprep.mubr.bf16.mxu0 %v5462
        %6381 = vmatmul.mubr.bf16.gmra.mxu0 %v5398
        %v6382 = vpop.f32.mrf.mxu0
        %v6383 = vadd.f32 %v6126, %v6382
        %v6384 = vpop.f32.mrf.mxu0
        %v6385 = vpop.f32.mrf.mxu0
        %v6386 = vadd.f32 %v6129, %v6385
        %v6387 = vpop.f32.mrf.mxu0
        %6388 = vmatprep.mubr.bf16.mxu0 %v5463
        %6389 = vmatmul.mubr.bf16.gmra.mxu0 %v5399
        %v6390 = vpop.f32.mrf.mxu0
        %v6391 = vadd.f32 %v6134, %v6390
        %v6392 = vpop.f32.mrf.mxu0
        %v6393 = vpop.f32.mrf.mxu0
        %v6394 = vadd.f32 %v6137, %v6393
        %v6395 = vpop.f32.mrf.mxu0
        %6396 = vmatprep.mubr.bf16.mxu0 %v5464
        %6397 = vmatmul.mubr.bf16.gmra.mxu0 %v5400
        %v6398 = vpop.f32.mrf.mxu0
        %v6399 = vadd.f32 %v6142, %v6398
        %v6400 = vpop.f32.mrf.mxu0
        %v6401 = vpop.f32.mrf.mxu0
        %v6402 = vadd.f32 %v6145, %v6401
        %v6403 = vpop.f32.mrf.mxu0
        %6404 = vmatprep.mubr.bf16.mxu0 %v5465
        %6405 = vmatmul.mubr.bf16.gmra.mxu0 %v5401
        %v6406 = vpop.f32.mrf.mxu0
        %v6407 = vadd.f32 %v6150, %v6406
        %v6408 = vpop.f32.mrf.mxu0
        %v6409 = vpop.f32.mrf.mxu0
        %v6410 = vadd.f32 %v6153, %v6409
        %v6411 = vpop.f32.mrf.mxu0
        %6412 = vdwg.mxu0
        %v6413 = vld [vmem:[%s4772] sm:$0xf]
        %v6414 = vld [vmem:[%s4772 + $0x4] sm:$0xf]
        %v6415 = vld [vmem:[%s4772 + $0x8] sm:$0x1]
        %v6416 = vld [vmem:[%s4772 + $0xc] sm:$0xf]
        %v6417 = vld [vmem:[%s4772 + $0x10] sm:$0xf]
        %v6418 = vld [vmem:[%s4772 + $0x14] sm:$0x1]
        %v6419 = vld [vmem:[%s4772 + $0x18] sm:$0xf]
        %v6420 = vld [vmem:[%s4772 + $0x1c] sm:$0xf]
        %v6421 = vld [vmem:[%s4772 + $0x20] sm:$0x1]
        %v6422 = vld [vmem:[%s4772 + $0x24] sm:$0xf]
        %v6423 = vld [vmem:[%s4772 + $0x28] sm:$0xf]
        %v6424 = vld [vmem:[%s4772 + $0x2c] sm:$0x1]
        %v6425 = vld [vmem:[%s4772 + $0x30] sm:$0xf]
        %v6426 = vld [vmem:[%s4772 + $0x34] sm:$0xf]
        %v6427 = vld [vmem:[%s4772 + $0x38] sm:$0x1]
        %v6428 = vld [vmem:[%s4772 + $0x3c] sm:$0xf]
        %v6429 = vld [vmem:[%s4772 + $0x40] sm:$0xf]
        %v6430 = vld [vmem:[%s4772 + $0x44] sm:$0x1]
        %v6431 = vld [vmem:[%s4772 + $0x48] sm:$0xf]
        %v6432 = vld [vmem:[%s4772 + $0x4c] sm:$0xf]
        %v6433 = vld [vmem:[%s4772 + $0x50] sm:$0x1]
        %v6434 = vld [vmem:[%s4772 + $0x54] sm:$0xf]
        %v6435 = vld [vmem:[%s4772 + $0x58] sm:$0xf]
        %v6436 = vld [vmem:[%s4772 + $0x5c] sm:$0x1]
        %v6437 = vld [vmem:[%s4772 + $0x60] sm:$0xf]
        %v6438 = vld [vmem:[%s4772 + $0x64] sm:$0xf]
        %v6439 = vld [vmem:[%s4772 + $0x68] sm:$0x1]
        %v6440 = vld [vmem:[%s4772 + $0x6c] sm:$0xf]
        %v6441 = vld [vmem:[%s4772 + $0x70] sm:$0xf]
        %v6442 = vld [vmem:[%s4772 + $0x74] sm:$0x1]
        %v6443 = vld [vmem:[%s4772 + $0x78] sm:$0xf]
        %v6444 = vld [vmem:[%s4772 + $0x7c] sm:$0xf]
        %v6445 = vld [vmem:[%s4772 + $0x80] sm:$0x1]
        %v6446 = vld [vmem:[%s4772 + $0x84] sm:$0xf]
        %v6447 = vld [vmem:[%s4772 + $0x88] sm:$0xf]
        %v6448 = vld [vmem:[%s4772 + $0x8c] sm:$0x1]
        %v6449 = vld [vmem:[%s4772 + $0x90] sm:$0xf]
        %v6450 = vld [vmem:[%s4772 + $0x94] sm:$0xf]
        %v6451 = vld [vmem:[%s4772 + $0x98] sm:$0x1]
        %v6452 = vld [vmem:[%s4772 + $0x9c] sm:$0xf]
        %v6453 = vld [vmem:[%s4772 + $0xa0] sm:$0xf]
        %v6454 = vld [vmem:[%s4772 + $0xa4] sm:$0x1]
        %v6455 = vld [vmem:[%s4772 + $0xa8] sm:$0xf]
        %v6456 = vld [vmem:[%s4772 + $0xac] sm:$0xf]
        %v6457 = vld [vmem:[%s4772 + $0xb0] sm:$0x1]
        %v6458 = vld [vmem:[%s4772 + $0xb4] sm:$0xf]
        %v6459 = vld [vmem:[%s4772 + $0xb8] sm:$0xf]
        %v6460 = vld [vmem:[%s4772 + $0xbc] sm:$0x1]
        %v6462 = vshrl.u32 %v6413, 16
        %v6464 = vrot.slane %v6462, 4
        %v6465 = vshll.u32 %v6413, 16
        %v6467 = vrot.slane %v6465, 5
        %v6468 = vor.u32 %v6464, %v6467
        %v6469 = vrot.slane %v6468, 4
        %v6471 = vshll.u32 %v6414, 16
        %v6473 = vrot.slane %v6471, 5
        %v6474 = vsel %vm347, %v6469, %v6473
        %v6475 = vshrl.u32 %v6414, 16
        %v6477 = vrot.slane %v6475, 4
        %v6478 = vor.u32 %v6477, %v6473
        %v6479 = vrot.slane %v6478, 4
        %v6481 = vshll.u32 %v6415, 16
        %v6483 = vrot.slane %v6481, 5
        %v6484 = vsel %vm347, %v6479, %v6483
        %v6486 = vshrl.u32 %v6416, 16
        %v6488 = vrot.slane %v6486, 4
        %v6489 = vshll.u32 %v6416, 16
        %v6491 = vrot.slane %v6489, 5
        %v6492 = vor.u32 %v6488, %v6491
        %v6493 = vrot.slane %v6492, 4
        %v6495 = vshll.u32 %v6417, 16
        %v6497 = vrot.slane %v6495, 5
        %v6498 = vsel %vm347, %v6493, %v6497
        %v6499 = vshrl.u32 %v6417, 16
        %v6501 = vrot.slane %v6499, 4
        %v6502 = vor.u32 %v6501, %v6497
        %v6503 = vrot.slane %v6502, 4
        %v6505 = vshll.u32 %v6418, 16
        %v6507 = vrot.slane %v6505, 5
        %v6508 = vsel %vm347, %v6503, %v6507
        %v6510 = vshrl.u32 %v6419, 16
        %v6512 = vrot.slane %v6510, 4
        %v6513 = vshll.u32 %v6419, 16
        %v6515 = vrot.slane %v6513, 5
        %v6516 = vor.u32 %v6512, %v6515
        %v6517 = vrot.slane %v6516, 4
        %v6519 = vshll.u32 %v6420, 16
        %v6521 = vrot.slane %v6519, 5
        %v6522 = vsel %vm347, %v6517, %v6521
        %v6523 = vshrl.u32 %v6420, 16
        %v6525 = vrot.slane %v6523, 4
        %v6526 = vor.u32 %v6525, %v6521
        %v6527 = vrot.slane %v6526, 4
        %v6529 = vshll.u32 %v6421, 16
        %v6531 = vrot.slane %v6529, 5
        %v6532 = vsel %vm347, %v6527, %v6531
        %v6534 = vshrl.u32 %v6422, 16
        %v6536 = vrot.slane %v6534, 4
        %v6537 = vshll.u32 %v6422, 16
        %v6539 = vrot.slane %v6537, 5
        %v6540 = vor.u32 %v6536, %v6539
        %v6541 = vrot.slane %v6540, 4
        %v6543 = vshll.u32 %v6423, 16
        %v6545 = vrot.slane %v6543, 5
        %v6546 = vsel %vm347, %v6541, %v6545
        %v6547 = vshrl.u32 %v6423, 16
        %v6549 = vrot.slane %v6547, 4
        %v6550 = vor.u32 %v6549, %v6545
        %v6551 = vrot.slane %v6550, 4
        %v6553 = vshll.u32 %v6424, 16
        %v6555 = vrot.slane %v6553, 5
        %v6556 = vsel %vm347, %v6551, %v6555
        %v6558 = vshrl.u32 %v6425, 16
        %v6560 = vrot.slane %v6558, 4
        %v6561 = vshll.u32 %v6425, 16
        %v6563 = vrot.slane %v6561, 5
        %v6564 = vor.u32 %v6560, %v6563
        %v6565 = vrot.slane %v6564, 4
        %v6567 = vshll.u32 %v6426, 16
        %v6569 = vrot.slane %v6567, 5
        %v6570 = vsel %vm347, %v6565, %v6569
        %v6571 = vshrl.u32 %v6426, 16
        %v6573 = vrot.slane %v6571, 4
        %v6574 = vor.u32 %v6573, %v6569
        %v6575 = vrot.slane %v6574, 4
        %v6577 = vshll.u32 %v6427, 16
        %v6579 = vrot.slane %v6577, 5
        %v6580 = vsel %vm347, %v6575, %v6579
        %v6582 = vshrl.u32 %v6428, 16
        %v6584 = vrot.slane %v6582, 4
        %v6585 = vshll.u32 %v6428, 16
        %v6587 = vrot.slane %v6585, 5
        %v6588 = vor.u32 %v6584, %v6587
        %v6589 = vrot.slane %v6588, 4
        %v6591 = vshll.u32 %v6429, 16
        %v6593 = vrot.slane %v6591, 5
        %v6594 = vsel %vm347, %v6589, %v6593
        %v6595 = vshrl.u32 %v6429, 16
        %v6597 = vrot.slane %v6595, 4
        %v6598 = vor.u32 %v6597, %v6593
        %v6599 = vrot.slane %v6598, 4
        %v6601 = vshll.u32 %v6430, 16
        %v6603 = vrot.slane %v6601, 5
        %v6604 = vsel %vm347, %v6599, %v6603
        %v6606 = vshrl.u32 %v6431, 16
        %v6608 = vrot.slane %v6606, 4
        %v6609 = vshll.u32 %v6431, 16
        %v6611 = vrot.slane %v6609, 5
        %v6612 = vor.u32 %v6608, %v6611
        %v6613 = vrot.slane %v6612, 4
        %v6615 = vshll.u32 %v6432, 16
        %v6617 = vrot.slane %v6615, 5
        %v6618 = vsel %vm347, %v6613, %v6617
        %v6619 = vshrl.u32 %v6432, 16
        %v6621 = vrot.slane %v6619, 4
        %v6622 = vor.u32 %v6621, %v6617
        %v6623 = vrot.slane %v6622, 4
        %v6625 = vshll.u32 %v6433, 16
        %v6627 = vrot.slane %v6625, 5
        %v6628 = vsel %vm347, %v6623, %v6627
        %v6630 = vshrl.u32 %v6434, 16
        %v6632 = vrot.slane %v6630, 4
        %v6633 = vshll.u32 %v6434, 16
        %v6635 = vrot.slane %v6633, 5
        %v6636 = vor.u32 %v6632, %v6635
        %v6637 = vrot.slane %v6636, 4
        %v6639 = vshll.u32 %v6435, 16
        %v6641 = vrot.slane %v6639, 5
        %v6642 = vsel %vm347, %v6637, %v6641
        %v6643 = vshrl.u32 %v6435, 16
        %v6645 = vrot.slane %v6643, 4
        %v6646 = vor.u32 %v6645, %v6641
        %v6647 = vrot.slane %v6646, 4
        %v6649 = vshll.u32 %v6436, 16
        %v6651 = vrot.slane %v6649, 5
        %v6652 = vsel %vm347, %v6647, %v6651
        %v6654 = vshrl.u32 %v6437, 16
        %v6656 = vrot.slane %v6654, 4
        %v6657 = vshll.u32 %v6437, 16
        %v6659 = vrot.slane %v6657, 5
        %v6660 = vor.u32 %v6656, %v6659
        %v6661 = vrot.slane %v6660, 4
        %v6663 = vshll.u32 %v6438, 16
        %v6665 = vrot.slane %v6663, 5
        %v6666 = vsel %vm347, %v6661, %v6665
        %v6667 = vshrl.u32 %v6438, 16
        %v6669 = vrot.slane %v6667, 4
        %v6670 = vor.u32 %v6669, %v6665
        %v6671 = vrot.slane %v6670, 4
        %v6673 = vshll.u32 %v6439, 16
        %v6675 = vrot.slane %v6673, 5
        %v6676 = vsel %vm347, %v6671, %v6675
        %v6678 = vshrl.u32 %v6440, 16
        %v6680 = vrot.slane %v6678, 4
        %v6681 = vshll.u32 %v6440, 16
        %v6683 = vrot.slane %v6681, 5
        %v6684 = vor.u32 %v6680, %v6683
        %v6685 = vrot.slane %v6684, 4
        %v6687 = vshll.u32 %v6441, 16
        %v6689 = vrot.slane %v6687, 5
        %v6690 = vsel %vm347, %v6685, %v6689
        %v6691 = vshrl.u32 %v6441, 16
        %v6693 = vrot.slane %v6691, 4
        %v6694 = vor.u32 %v6693, %v6689
        %v6695 = vrot.slane %v6694, 4
        %v6697 = vshll.u32 %v6442, 16
        %v6699 = vrot.slane %v6697, 5
        %v6700 = vsel %vm347, %v6695, %v6699
        %v6702 = vshrl.u32 %v6443, 16
        %v6704 = vrot.slane %v6702, 4
        %v6705 = vshll.u32 %v6443, 16
        %v6707 = vrot.slane %v6705, 5
        %v6708 = vor.u32 %v6704, %v6707
        %v6709 = vrot.slane %v6708, 4
        %v6711 = vshll.u32 %v6444, 16
        %v6713 = vrot.slane %v6711, 5
        %v6714 = vsel %vm347, %v6709, %v6713
        %v6715 = vshrl.u32 %v6444, 16
        %v6717 = vrot.slane %v6715, 4
        %v6718 = vor.u32 %v6717, %v6713
        %v6719 = vrot.slane %v6718, 4
        %v6721 = vshll.u32 %v6445, 16
        %v6723 = vrot.slane %v6721, 5
        %v6724 = vsel %vm347, %v6719, %v6723
        %v6726 = vshrl.u32 %v6446, 16
        %v6728 = vrot.slane %v6726, 4
        %v6729 = vshll.u32 %v6446, 16
        %v6731 = vrot.slane %v6729, 5
        %v6732 = vor.u32 %v6728, %v6731
        %v6733 = vrot.slane %v6732, 4
        %v6735 = vshll.u32 %v6447, 16
        %v6737 = vrot.slane %v6735, 5
        %v6738 = vsel %vm347, %v6733, %v6737
        %v6739 = vshrl.u32 %v6447, 16
        %v6741 = vrot.slane %v6739, 4
        %v6742 = vor.u32 %v6741, %v6737
        %v6743 = vrot.slane %v6742, 4
        %v6745 = vshll.u32 %v6448, 16
        %v6747 = vrot.slane %v6745, 5
        %v6748 = vsel %vm347, %v6743, %v6747
        %v6750 = vshrl.u32 %v6449, 16
        %v6752 = vrot.slane %v6750, 4
        %v6753 = vshll.u32 %v6449, 16
        %v6755 = vrot.slane %v6753, 5
        %v6756 = vor.u32 %v6752, %v6755
        %v6757 = vrot.slane %v6756, 4
        %v6759 = vshll.u32 %v6450, 16
        %v6761 = vrot.slane %v6759, 5
        %v6762 = vsel %vm347, %v6757, %v6761
        %v6763 = vshrl.u32 %v6450, 16
        %v6765 = vrot.slane %v6763, 4
        %v6766 = vor.u32 %v6765, %v6761
        %v6767 = vrot.slane %v6766, 4
        %v6769 = vshll.u32 %v6451, 16
        %v6771 = vrot.slane %v6769, 5
        %v6772 = vsel %vm347, %v6767, %v6771
        %v6774 = vshrl.u32 %v6452, 16
        %v6776 = vrot.slane %v6774, 4
        %v6777 = vshll.u32 %v6452, 16
        %v6779 = vrot.slane %v6777, 5
        %v6780 = vor.u32 %v6776, %v6779
        %v6781 = vrot.slane %v6780, 4
        %v6783 = vshll.u32 %v6453, 16
        %v6785 = vrot.slane %v6783, 5
        %v6786 = vsel %vm347, %v6781, %v6785
        %v6787 = vshrl.u32 %v6453, 16
        %v6789 = vrot.slane %v6787, 4
        %v6790 = vor.u32 %v6789, %v6785
        %v6791 = vrot.slane %v6790, 4
        %v6793 = vshll.u32 %v6454, 16
        %v6795 = vrot.slane %v6793, 5
        %v6796 = vsel %vm347, %v6791, %v6795
        %v6798 = vshrl.u32 %v6455, 16
        %v6800 = vrot.slane %v6798, 4
        %v6801 = vshll.u32 %v6455, 16
        %v6803 = vrot.slane %v6801, 5
        %v6804 = vor.u32 %v6800, %v6803
        %v6805 = vrot.slane %v6804, 4
        %v6807 = vshll.u32 %v6456, 16
        %v6809 = vrot.slane %v6807, 5
        %v6810 = vsel %vm347, %v6805, %v6809
        %v6811 = vshrl.u32 %v6456, 16
        %v6813 = vrot.slane %v6811, 4
        %v6814 = vor.u32 %v6813, %v6809
        %v6815 = vrot.slane %v6814, 4
        %v6817 = vshll.u32 %v6457, 16
        %v6819 = vrot.slane %v6817, 5
        %v6820 = vsel %vm347, %v6815, %v6819
        %v6822 = vshrl.u32 %v6458, 16
        %v6824 = vrot.slane %v6822, 4
        %v6825 = vshll.u32 %v6458, 16
        %v6827 = vrot.slane %v6825, 5
        %v6828 = vor.u32 %v6824, %v6827
        %v6829 = vrot.slane %v6828, 4
        %v6831 = vshll.u32 %v6459, 16
        %v6833 = vrot.slane %v6831, 5
        %v6834 = vsel %vm347, %v6829, %v6833
        %v6835 = vshrl.u32 %v6459, 16
        %v6837 = vrot.slane %v6835, 4
        %v6838 = vor.u32 %v6837, %v6833
        %v6839 = vrot.slane %v6838, 4
        %v6841 = vshll.u32 %v6460, 16
        %v6843 = vrot.slane %v6841, 5
        %v6844 = vsel %vm347, %v6839, %v6843
        %v6845 = vld [vmem:[%s4772] sm:$0xe]
        %v6846 = vld [vmem:[%s4772 + $0xc] sm:$0xe]
        %v6847 = vld [vmem:[%s4772 + $0x18] sm:$0xe]
        %v6848 = vld [vmem:[%s4772 + $0x24] sm:$0xe]
        %v6849 = vld [vmem:[%s4772 + $0x30] sm:$0xe]
        %v6850 = vld [vmem:[%s4772 + $0x3c] sm:$0xe]
        %v6851 = vld [vmem:[%s4772 + $0x48] sm:$0xe]
        %v6852 = vld [vmem:[%s4772 + $0x54] sm:$0xe]
        %v6853 = vld [vmem:[%s4772 + $0x60] sm:$0xe]
        %v6854 = vld [vmem:[%s4772 + $0x6c] sm:$0xe]
        %v6855 = vld [vmem:[%s4772 + $0x78] sm:$0xe]
        %v6856 = vld [vmem:[%s4772 + $0x84] sm:$0xe]
        %v6857 = vld [vmem:[%s4772 + $0x90] sm:$0xe]
        %v6858 = vld [vmem:[%s4772 + $0x9c] sm:$0xe]
        %v6859 = vld [vmem:[%s4772 + $0xa8] sm:$0xe]
        %v6860 = vld [vmem:[%s4772 + $0xb4] sm:$0xe]
        %v6909 = vrot.slane %v6845, 5
        %v6910 = vrot.slane %v6909, 4
        %v6911 = vrot.slane %v6414, 5
        %v6912 = vsel %vm974, %v6910, %v6911
        %v6913 = vrot.slane %v6911, 4
        %v6914 = vrot.slane %v6415, 5
        %v6915 = vsel %vm974, %v6913, %v6914
        %v6916 = vrot.slane %v6846, 5
        %v6917 = vrot.slane %v6916, 4
        %v6918 = vrot.slane %v6417, 5
        %v6919 = vsel %vm974, %v6917, %v6918
        %v6920 = vrot.slane %v6918, 4
        %v6921 = vrot.slane %v6418, 5
        %v6922 = vsel %vm974, %v6920, %v6921
        %v6923 = vrot.slane %v6847, 5
        %v6924 = vrot.slane %v6923, 4
        %v6925 = vrot.slane %v6420, 5
        %v6926 = vsel %vm974, %v6924, %v6925
        %v6927 = vrot.slane %v6925, 4
        %v6928 = vrot.slane %v6421, 5
        %v6929 = vsel %vm974, %v6927, %v6928
        %v6930 = vrot.slane %v6848, 5
        %v6931 = vrot.slane %v6930, 4
        %v6932 = vrot.slane %v6423, 5
        %v6933 = vsel %vm974, %v6931, %v6932
        %v6934 = vrot.slane %v6932, 4
        %v6935 = vrot.slane %v6424, 5
        %v6936 = vsel %vm974, %v6934, %v6935
        %v6937 = vrot.slane %v6849, 5
        %v6938 = vrot.slane %v6937, 4
        %v6939 = vrot.slane %v6426, 5
        %v6940 = vsel %vm974, %v6938, %v6939
        %v6941 = vrot.slane %v6939, 4
        %v6942 = vrot.slane %v6427, 5
        %v6943 = vsel %vm974, %v6941, %v6942
        %v6944 = vrot.slane %v6850, 5
        %v6945 = vrot.slane %v6944, 4
        %v6946 = vrot.slane %v6429, 5
        %v6947 = vsel %vm974, %v6945, %v6946
        %v6948 = vrot.slane %v6946, 4
        %v6949 = vrot.slane %v6430, 5
        %v6950 = vsel %vm974, %v6948, %v6949
        %v6951 = vrot.slane %v6851, 5
        %v6952 = vrot.slane %v6951, 4
        %v6953 = vrot.slane %v6432, 5
        %v6954 = vsel %vm974, %v6952, %v6953
        %v6955 = vrot.slane %v6953, 4
        %v6956 = vrot.slane %v6433, 5
        %v6957 = vsel %vm974, %v6955, %v6956
        %v6958 = vrot.slane %v6852, 5
        %v6959 = vrot.slane %v6958, 4
        %v6960 = vrot.slane %v6435, 5
        %v6961 = vsel %vm974, %v6959, %v6960
        %v6962 = vrot.slane %v6960, 4
        %v6963 = vrot.slane %v6436, 5
        %v6964 = vsel %vm974, %v6962, %v6963
        %v6965 = vrot.slane %v6853, 5
        %v6966 = vrot.slane %v6965, 4
        %v6967 = vrot.slane %v6438, 5
        %v6968 = vsel %vm974, %v6966, %v6967
        %v6969 = vrot.slane %v6967, 4
        %v6970 = vrot.slane %v6439, 5
        %v6971 = vsel %vm974, %v6969, %v6970
        %v6972 = vrot.slane %v6854, 5
        %v6973 = vrot.slane %v6972, 4
        %v6974 = vrot.slane %v6441, 5
        %v6975 = vsel %vm974, %v6973, %v6974
        %v6976 = vrot.slane %v6974, 4
        %v6977 = vrot.slane %v6442, 5
        %v6978 = vsel %vm974, %v6976, %v6977
        %v6979 = vrot.slane %v6855, 5
        %v6980 = vrot.slane %v6979, 4
        %v6981 = vrot.slane %v6444, 5
        %v6982 = vsel %vm974, %v6980, %v6981
        %v6983 = vrot.slane %v6981, 4
        %v6984 = vrot.slane %v6445, 5
        %v6985 = vsel %vm974, %v6983, %v6984
        %v6986 = vrot.slane %v6856, 5
        %v6987 = vrot.slane %v6986, 4
        %v6988 = vrot.slane %v6447, 5
        %v6989 = vsel %vm974, %v6987, %v6988
        %v6990 = vrot.slane %v6988, 4
        %v6991 = vrot.slane %v6448, 5
        %v6992 = vsel %vm974, %v6990, %v6991
        %v6993 = vrot.slane %v6857, 5
        %v6994 = vrot.slane %v6993, 4
        %v6995 = vrot.slane %v6450, 5
        %v6996 = vsel %vm974, %v6994, %v6995
        %v6997 = vrot.slane %v6995, 4
        %v6998 = vrot.slane %v6451, 5
        %v6999 = vsel %vm974, %v6997, %v6998
        %v7000 = vrot.slane %v6858, 5
        %v7001 = vrot.slane %v7000, 4
        %v7002 = vrot.slane %v6453, 5
        %v7003 = vsel %vm974, %v7001, %v7002
        %v7004 = vrot.slane %v7002, 4
        %v7005 = vrot.slane %v6454, 5
        %v7006 = vsel %vm974, %v7004, %v7005
        %v7007 = vrot.slane %v6859, 5
        %v7008 = vrot.slane %v7007, 4
        %v7009 = vrot.slane %v6456, 5
        %v7010 = vsel %vm974, %v7008, %v7009
        %v7011 = vrot.slane %v7009, 4
        %v7012 = vrot.slane %v6457, 5
        %v7013 = vsel %vm974, %v7011, %v7012
        %v7014 = vrot.slane %v6860, 5
        %v7015 = vrot.slane %v7014, 4
        %v7016 = vrot.slane %v6459, 5
        %v7017 = vsel %vm974, %v7015, %v7016
        %v7018 = vrot.slane %v7016, 4
        %v7019 = vrot.slane %v6460, 5
        %v7020 = vsel %vm974, %v7018, %v7019
        %v7021 = vunpack.c.l.b16 %v6474
        %v7022 = vunpack.c.l.b16 %v6484
        %v7023 = vunpack.c.l.b16 %v6498
        %v7024 = vunpack.c.l.b16 %v6508
        %v7025 = vunpack.c.l.b16 %v6522
        %v7026 = vunpack.c.l.b16 %v6532
        %v7027 = vunpack.c.l.b16 %v6546
        %v7028 = vunpack.c.l.b16 %v6556
        %v7029 = vunpack.c.l.b16 %v6570
        %v7030 = vunpack.c.l.b16 %v6580
        %v7031 = vunpack.c.l.b16 %v6594
        %v7032 = vunpack.c.l.b16 %v6604
        %v7033 = vunpack.c.l.b16 %v6618
        %v7034 = vunpack.c.l.b16 %v6628
        %v7035 = vunpack.c.l.b16 %v6642
        %v7036 = vunpack.c.l.b16 %v6652
        %v7037 = vunpack.c.l.b16 %v6666
        %v7038 = vunpack.c.l.b16 %v6676
        %v7039 = vunpack.c.l.b16 %v6690
        %v7040 = vunpack.c.l.b16 %v6700
        %v7041 = vunpack.c.l.b16 %v6714
        %v7042 = vunpack.c.l.b16 %v6724
        %v7043 = vunpack.c.l.b16 %v6738
        %v7044 = vunpack.c.l.b16 %v6748
        %v7045 = vunpack.c.l.b16 %v6762
        %v7046 = vunpack.c.l.b16 %v6772
        %v7047 = vunpack.c.l.b16 %v6786
        %v7048 = vunpack.c.l.b16 %v6796
        %v7049 = vunpack.c.l.b16 %v6810
        %v7050 = vunpack.c.l.b16 %v6820
        %v7051 = vunpack.c.l.b16 %v6834
        %v7052 = vunpack.c.l.b16 %v6844
        %v7053 = vpack.c.b16 %v7022, %v7021
        %v7054 = vpack.c.b16 %v7024, %v7023
        %v7055 = vpack.c.b16 %v7026, %v7025
        %v7056 = vpack.c.b16 %v7028, %v7027
        %v7057 = vpack.c.b16 %v7030, %v7029
        %v7058 = vpack.c.b16 %v7032, %v7031
        %v7059 = vpack.c.b16 %v7034, %v7033
        %v7060 = vpack.c.b16 %v7036, %v7035
        %v7061 = vpack.c.b16 %v7038, %v7037
        %v7062 = vpack.c.b16 %v7040, %v7039
        %v7063 = vpack.c.b16 %v7042, %v7041
        %v7064 = vpack.c.b16 %v7044, %v7043
        %v7065 = vpack.c.b16 %v7046, %v7045
        %v7066 = vpack.c.b16 %v7048, %v7047
        %v7067 = vpack.c.b16 %v7050, %v7049
        %v7068 = vpack.c.b16 %v7052, %v7051
        %v7085 = vunpack.c.l.b16 %v6912
        %v7086 = vunpack.c.l.b16 %v6915
        %v7087 = vunpack.c.l.b16 %v6919
        %v7088 = vunpack.c.l.b16 %v6922
        %v7089 = vunpack.c.l.b16 %v6926
        %v7090 = vunpack.c.l.b16 %v6929
        %v7091 = vunpack.c.l.b16 %v6933
        %v7092 = vunpack.c.l.b16 %v6936
        %v7093 = vunpack.c.l.b16 %v6940
        %v7094 = vunpack.c.l.b16 %v6943
        %v7095 = vunpack.c.l.b16 %v6947
        %v7096 = vunpack.c.l.b16 %v6950
        %v7097 = vunpack.c.l.b16 %v6954
        %v7098 = vunpack.c.l.b16 %v6957
        %v7099 = vunpack.c.l.b16 %v6961
        %v7100 = vunpack.c.l.b16 %v6964
        %v7101 = vunpack.c.l.b16 %v6968
        %v7102 = vunpack.c.l.b16 %v6971
        %v7103 = vunpack.c.l.b16 %v6975
        %v7104 = vunpack.c.l.b16 %v6978
        %v7105 = vunpack.c.l.b16 %v6982
        %v7106 = vunpack.c.l.b16 %v6985
        %v7107 = vunpack.c.l.b16 %v6989
        %v7108 = vunpack.c.l.b16 %v6992
        %v7109 = vunpack.c.l.b16 %v6996
        %v7110 = vunpack.c.l.b16 %v6999
        %v7111 = vunpack.c.l.b16 %v7003
        %v7112 = vunpack.c.l.b16 %v7006
        %v7113 = vunpack.c.l.b16 %v7010
        %v7114 = vunpack.c.l.b16 %v7013
        %v7115 = vunpack.c.l.b16 %v7017
        %v7116 = vunpack.c.l.b16 %v7020
        %v7117 = vpack.c.b16 %v7086, %v7085
        %v7118 = vpack.c.b16 %v7088, %v7087
        %v7119 = vpack.c.b16 %v7090, %v7089
        %v7120 = vpack.c.b16 %v7092, %v7091
        %v7121 = vpack.c.b16 %v7094, %v7093
        %v7122 = vpack.c.b16 %v7096, %v7095
        %v7123 = vpack.c.b16 %v7098, %v7097
        %v7124 = vpack.c.b16 %v7100, %v7099
        %v7125 = vpack.c.b16 %v7102, %v7101
        %v7126 = vpack.c.b16 %v7104, %v7103
        %v7127 = vpack.c.b16 %v7106, %v7105
        %v7128 = vpack.c.b16 %v7108, %v7107
        %v7129 = vpack.c.b16 %v7110, %v7109
        %v7130 = vpack.c.b16 %v7112, %v7111
        %v7131 = vpack.c.b16 %v7114, %v7113
        %v7132 = vpack.c.b16 %v7116, %v7115
        %s7149 = scalar_lea.vmem [#allocation4], 256
        %v7150 = vld [vmem:[%s7149] sm:$0xf]
        %v7151 = vld [vmem:[%s7149 + $0x4] sm:$0xf]
        %v7152 = vld [vmem:[%s7149 + $0x8] sm:$0xf]
        %v7153 = vld [vmem:[%s7149 + $0xc] sm:$0xf]
        %v7154 = vld [vmem:[%s7149 + $0x10] sm:$0xf]
        %v7155 = vld [vmem:[%s7149 + $0x14] sm:$0xf]
        %v7156 = vld [vmem:[%s7149 + $0x18] sm:$0xf]
        %v7157 = vld [vmem:[%s7149 + $0x1c] sm:$0xf]
        %v7158 = vld [vmem:[%s7149 + $0x20] sm:$0xf]
        %v7159 = vld [vmem:[%s7149 + $0x24] sm:$0xf]
        %v7160 = vld [vmem:[%s7149 + $0x28] sm:$0xf]
        %v7161 = vld [vmem:[%s7149 + $0x2c] sm:$0xf]
        %v7162 = vld [vmem:[%s7149 + $0x30] sm:$0xf]
        %v7163 = vld [vmem:[%s7149 + $0x34] sm:$0xf]
        %v7164 = vld [vmem:[%s7149 + $0x38] sm:$0xf]
        %v7165 = vld [vmem:[%s7149 + $0x3c] sm:$0xf]
        %v7166 = vld [vmem:[%s7149 + $0x40] sm:$0xf]
        %v7167 = vld [vmem:[%s7149 + $0x44] sm:$0xf]
        %v7168 = vld [vmem:[%s7149 + $0x48] sm:$0xf]
        %v7169 = vld [vmem:[%s7149 + $0x4c] sm:$0xf]
        %v7170 = vld [vmem:[%s7149 + $0x50] sm:$0xf]
        %v7171 = vld [vmem:[%s7149 + $0x54] sm:$0xf]
        %v7172 = vld [vmem:[%s7149 + $0x58] sm:$0xf]
        %v7173 = vld [vmem:[%s7149 + $0x5c] sm:$0xf]
        %v7174 = vld [vmem:[%s7149 + $0x60] sm:$0xf]
        %v7175 = vld [vmem:[%s7149 + $0x64] sm:$0xf]
        %v7176 = vld [vmem:[%s7149 + $0x68] sm:$0xf]
        %v7177 = vld [vmem:[%s7149 + $0x6c] sm:$0xf]
        %v7178 = vld [vmem:[%s7149 + $0x70] sm:$0xf]
        %v7179 = vld [vmem:[%s7149 + $0x74] sm:$0xf]
        %v7180 = vld [vmem:[%s7149 + $0x78] sm:$0xf]
        %v7181 = vld [vmem:[%s7149 + $0x7c] sm:$0xf]
        %v7214 = vunpack.c.l.b16 %v7150
        %v7215 = vunpack.c.l.b16 %v7151
        %v7216 = vunpack.c.l.b16 %v7152
        %v7217 = vunpack.c.l.b16 %v7153
        %v7218 = vunpack.c.l.b16 %v7154
        %v7219 = vunpack.c.l.b16 %v7155
        %v7220 = vunpack.c.l.b16 %v7156
        %v7221 = vunpack.c.l.b16 %v7157
        %v7222 = vunpack.c.l.b16 %v7158
        %v7223 = vunpack.c.l.b16 %v7159
        %v7224 = vunpack.c.l.b16 %v7160
        %v7225 = vunpack.c.l.b16 %v7161
        %v7226 = vunpack.c.l.b16 %v7162
        %v7227 = vunpack.c.l.b16 %v7163
        %v7228 = vunpack.c.l.b16 %v7164
        %v7229 = vunpack.c.l.b16 %v7165
        %v7230 = vunpack.c.l.b16 %v7166
        %v7231 = vunpack.c.l.b16 %v7167
        %v7232 = vunpack.c.l.b16 %v7168
        %v7233 = vunpack.c.l.b16 %v7169
        %v7234 = vunpack.c.l.b16 %v7170
        %v7235 = vunpack.c.l.b16 %v7171
        %v7236 = vunpack.c.l.b16 %v7172
        %v7237 = vunpack.c.l.b16 %v7173
        %v7238 = vunpack.c.l.b16 %v7174
        %v7239 = vunpack.c.l.b16 %v7175
        %v7240 = vunpack.c.l.b16 %v7176
        %v7241 = vunpack.c.l.b16 %v7177
        %v7242 = vunpack.c.l.b16 %v7178
        %v7243 = vunpack.c.l.b16 %v7179
        %v7244 = vunpack.c.l.b16 %v7180
        %v7245 = vunpack.c.l.b16 %v7181
        %v7246 = vpack.c.b16 %v7215, %v7214
        %v7247 = vpack.c.b16 %v7217, %v7216
        %v7248 = vpack.c.b16 %v7219, %v7218
        %v7249 = vpack.c.b16 %v7221, %v7220
        %v7250 = vpack.c.b16 %v7223, %v7222
        %v7251 = vpack.c.b16 %v7225, %v7224
        %v7252 = vpack.c.b16 %v7227, %v7226
        %v7253 = vpack.c.b16 %v7229, %v7228
        %v7254 = vpack.c.b16 %v7231, %v7230
        %v7255 = vpack.c.b16 %v7233, %v7232
        %v7256 = vpack.c.b16 %v7235, %v7234
        %v7257 = vpack.c.b16 %v7237, %v7236
        %v7258 = vpack.c.b16 %v7239, %v7238
        %v7259 = vpack.c.b16 %v7241, %v7240
        %v7260 = vpack.c.b16 %v7243, %v7242
        %v7261 = vpack.c.b16 %v7245, %v7244
        %7278 = vmatprep.subr.bf16.mxu0 0
        %7279 = vmatpush1.bf16.msra.mxu0 %v7253
        %7280 = vmatprep.subr.bf16.mxu0 0
        %7281 = vmatpush1.bf16.msra.mxu0 %v7252
        %7282 = vmatprep.subr.bf16.mxu0 0
        %7283 = vmatpush1.bf16.msra.mxu0 %v7251
        %7284 = vmatprep.subr.bf16.mxu0 0
        %7285 = vmatpush1.bf16.msra.mxu0 %v7250
        %7286 = vmatprep.subr.bf16.mxu0 0
        %7287 = vmatpush1.bf16.msra.mxu0 %v7249
        %7288 = vmatprep.subr.bf16.mxu0 0
        %7289 = vmatpush1.bf16.msra.mxu0 %v7248
        %7290 = vmatprep.subr.bf16.mxu0 0
        %7291 = vmatpush1.bf16.msra.mxu0 %v7247
        %7292 = vmatprep.subr.bf16.mxu0 0
        %7293 = vmatpush1.bf16.msra.mxu0 %v7246
        %7294 = vmatprep.subr.bf16.mxu0 0
        %7295 = vmatpush2.bf16.msra.mxu0 %v7261
        %7296 = vmatprep.subr.bf16.mxu0 0
        %7297 = vmatpush2.bf16.msra.mxu0 %v7260
        %7298 = vmatprep.subr.bf16.mxu0 0
        %7299 = vmatpush2.bf16.msra.mxu0 %v7259
        %7300 = vmatprep.subr.bf16.mxu0 0
        %7301 = vmatpush2.bf16.msra.mxu0 %v7258
        %7302 = vmatprep.subr.bf16.mxu0 0
        %7303 = vmatpush2.bf16.msra.mxu0 %v7257
        %7304 = vmatprep.subr.bf16.mxu0 0
        %7305 = vmatpush2.bf16.msra.mxu0 %v7256
        %7306 = vmatprep.subr.bf16.mxu0 0
        %7307 = vmatpush2.bf16.msra.mxu0 %v7255
        %7308 = vmatprep.subr.bf16.mxu0 0
        %7309 = vmatpush2.bf16.msra.mxu0 %v7254
        %7310 = vmatprep.mubr.bf16.mxu0 %v7117
        %7311 = vmatmul.mubr.bf16.gmra.mxu0 %v7053
        %v7312 = vpop.f32.mrf.mxu0
        %v7313 = vadd.f32 0.0, %v7312
        %v7314 = vpop.f32.mrf.mxu0
        %v7315 = vpop.f32.mrf.mxu0
        %v7316 = vadd.f32 0.0, %v7315
        %v7317 = vpop.f32.mrf.mxu0
        %7318 = vmatprep.mubr.bf16.mxu0 %v7118
        %7319 = vmatmul.mubr.bf16.gmra.mxu0 %v7054
        %v7320 = vpop.f32.mrf.mxu0
        %v7321 = vadd.f32 0.0, %v7320
        %v7322 = vpop.f32.mrf.mxu0
        %v7323 = vpop.f32.mrf.mxu0
        %v7324 = vadd.f32 0.0, %v7323
        %v7325 = vpop.f32.mrf.mxu0
        %7326 = vmatprep.mubr.bf16.mxu0 %v7119
        %7327 = vmatmul.mubr.bf16.gmra.mxu0 %v7055
        %v7328 = vpop.f32.mrf.mxu0
        %v7329 = vadd.f32 0.0, %v7328
        %v7330 = vpop.f32.mrf.mxu0
        %v7331 = vpop.f32.mrf.mxu0
        %v7332 = vadd.f32 0.0, %v7331
        %v7333 = vpop.f32.mrf.mxu0
        %7334 = vmatprep.mubr.bf16.mxu0 %v7120
        %7335 = vmatmul.mubr.bf16.gmra.mxu0 %v7056
        %v7336 = vpop.f32.mrf.mxu0
        %v7337 = vadd.f32 0.0, %v7336
        %v7338 = vpop.f32.mrf.mxu0
        %v7339 = vpop.f32.mrf.mxu0
        %v7340 = vadd.f32 0.0, %v7339
        %v7341 = vpop.f32.mrf.mxu0
        %7342 = vmatprep.mubr.bf16.mxu0 %v7121
        %7343 = vmatmul.mubr.bf16.gmra.mxu0 %v7057
        %v7344 = vpop.f32.mrf.mxu0
        %v7345 = vadd.f32 0.0, %v7344
        %v7346 = vpop.f32.mrf.mxu0
        %v7347 = vpop.f32.mrf.mxu0
        %v7348 = vadd.f32 0.0, %v7347
        %v7349 = vpop.f32.mrf.mxu0
        %7350 = vmatprep.mubr.bf16.mxu0 %v7122
        %7351 = vmatmul.mubr.bf16.gmra.mxu0 %v7058
        %v7352 = vpop.f32.mrf.mxu0
        %v7353 = vadd.f32 0.0, %v7352
        %v7354 = vpop.f32.mrf.mxu0
        %v7355 = vpop.f32.mrf.mxu0
        %v7356 = vadd.f32 0.0, %v7355
        %v7357 = vpop.f32.mrf.mxu0
        %7358 = vmatprep.mubr.bf16.mxu0 %v7123
        %7359 = vmatmul.mubr.bf16.gmra.mxu0 %v7059
        %v7360 = vpop.f32.mrf.mxu0
        %v7361 = vadd.f32 0.0, %v7360
        %v7362 = vpop.f32.mrf.mxu0
        %v7363 = vpop.f32.mrf.mxu0
        %v7364 = vadd.f32 0.0, %v7363
        %v7365 = vpop.f32.mrf.mxu0
        %7366 = vmatprep.mubr.bf16.mxu0 %v7124
        %7367 = vmatmul.mubr.bf16.gmra.mxu0 %v7060
        %v7368 = vpop.f32.mrf.mxu0
        %v7369 = vadd.f32 0.0, %v7368
        %v7370 = vpop.f32.mrf.mxu0
        %v7371 = vpop.f32.mrf.mxu0
        %v7372 = vadd.f32 0.0, %v7371
        %v7373 = vpop.f32.mrf.mxu0
        %7374 = vmatprep.mubr.bf16.mxu0 %v7125
        %7375 = vmatmul.mubr.bf16.gmra.mxu0 %v7061
        %v7376 = vpop.f32.mrf.mxu0
        %v7377 = vadd.f32 0.0, %v7376
        %v7378 = vpop.f32.mrf.mxu0
        %v7379 = vpop.f32.mrf.mxu0
        %v7380 = vadd.f32 0.0, %v7379
        %v7381 = vpop.f32.mrf.mxu0
        %7382 = vmatprep.mubr.bf16.mxu0 %v7126
        %7383 = vmatmul.mubr.bf16.gmra.mxu0 %v7062
        %v7384 = vpop.f32.mrf.mxu0
        %v7385 = vadd.f32 0.0, %v7384
        %v7386 = vpop.f32.mrf.mxu0
        %v7387 = vpop.f32.mrf.mxu0
        %v7388 = vadd.f32 0.0, %v7387
        %v7389 = vpop.f32.mrf.mxu0
        %7390 = vmatprep.mubr.bf16.mxu0 %v7127
        %7391 = vmatmul.mubr.bf16.gmra.mxu0 %v7063
        %v7392 = vpop.f32.mrf.mxu0
        %v7393 = vadd.f32 0.0, %v7392
        %v7394 = vpop.f32.mrf.mxu0
        %v7395 = vpop.f32.mrf.mxu0
        %v7396 = vadd.f32 0.0, %v7395
        %v7397 = vpop.f32.mrf.mxu0
        %7398 = vmatprep.mubr.bf16.mxu0 %v7128
        %7399 = vmatmul.mubr.bf16.gmra.mxu0 %v7064
        %v7400 = vpop.f32.mrf.mxu0
        %v7401 = vadd.f32 0.0, %v7400
        %v7402 = vpop.f32.mrf.mxu0
        %v7403 = vpop.f32.mrf.mxu0
        %v7404 = vadd.f32 0.0, %v7403
        %v7405 = vpop.f32.mrf.mxu0
        %7406 = vmatprep.mubr.bf16.mxu0 %v7129
        %7407 = vmatmul.mubr.bf16.gmra.mxu0 %v7065
        %v7408 = vpop.f32.mrf.mxu0
        %v7409 = vadd.f32 0.0, %v7408
        %v7410 = vpop.f32.mrf.mxu0
        %v7411 = vpop.f32.mrf.mxu0
        %v7412 = vadd.f32 0.0, %v7411
        %v7413 = vpop.f32.mrf.mxu0
        %7414 = vmatprep.mubr.bf16.mxu0 %v7130
        %7415 = vmatmul.mubr.bf16.gmra.mxu0 %v7066
        %v7416 = vpop.f32.mrf.mxu0
        %v7417 = vadd.f32 0.0, %v7416
        %v7418 = vpop.f32.mrf.mxu0
        %v7419 = vpop.f32.mrf.mxu0
        %v7420 = vadd.f32 0.0, %v7419
        %v7421 = vpop.f32.mrf.mxu0
        %7422 = vmatprep.mubr.bf16.mxu0 %v7131
        %7423 = vmatmul.mubr.bf16.gmra.mxu0 %v7067
        %v7424 = vpop.f32.mrf.mxu0
        %v7425 = vadd.f32 0.0, %v7424
        %v7426 = vpop.f32.mrf.mxu0
        %v7427 = vpop.f32.mrf.mxu0
        %v7428 = vadd.f32 0.0, %v7427
        %v7429 = vpop.f32.mrf.mxu0
        %7430 = vmatprep.mubr.bf16.mxu0 %v7132
        %7431 = vmatmul.mubr.bf16.gmra.mxu0 %v7068
        %v7432 = vpop.f32.mrf.mxu0
        %v7433 = vadd.f32 0.0, %v7432
        %v7434 = vpop.f32.mrf.mxu0
        %v7435 = vpop.f32.mrf.mxu0
        %v7436 = vadd.f32 0.0, %v7435
        %v7437 = vpop.f32.mrf.mxu0
        %7438 = vdwg.mxu0
        %v7439 = vadd.f32 %v6287, %v7313
        %v7440 = vadd.f32 %v6290, %v7316
        %v7441 = vadd.f32 %v6295, %v7321
        %v7442 = vadd.f32 %v6298, %v7324
        %v7443 = vadd.f32 %v6303, %v7329
        %v7444 = vadd.f32 %v6306, %v7332
        %v7445 = vadd.f32 %v6311, %v7337
        %v7446 = vadd.f32 %v6314, %v7340
        %v7447 = vadd.f32 %v6319, %v7345
        %v7448 = vadd.f32 %v6322, %v7348
        %v7449 = vadd.f32 %v6327, %v7353
        %v7450 = vadd.f32 %v6330, %v7356
        %v7451 = vadd.f32 %v6335, %v7361
        %v7452 = vadd.f32 %v6338, %v7364
        %v7453 = vadd.f32 %v6343, %v7369
        %v7454 = vadd.f32 %v6346, %v7372
        %v7455 = vadd.f32 %v6351, %v7377
        %v7456 = vadd.f32 %v6354, %v7380
        %v7457 = vadd.f32 %v6359, %v7385
        %v7458 = vadd.f32 %v6362, %v7388
        %v7459 = vadd.f32 %v6367, %v7393
        %v7460 = vadd.f32 %v6370, %v7396
        %v7461 = vadd.f32 %v6375, %v7401
        %v7462 = vadd.f32 %v6378, %v7404
        %v7463 = vadd.f32 %v6383, %v7409
        %v7464 = vadd.f32 %v6386, %v7412
        %v7465 = vadd.f32 %v6391, %v7417
        %v7466 = vadd.f32 %v6394, %v7420
        %v7467 = vadd.f32 %v6399, %v7425
        %v7468 = vadd.f32 %v6402, %v7428
        %v7469 = vadd.f32 %v6407, %v7433
        %v7470 = vadd.f32 %v6410, %v7436
        %s7471 = scalar_lea.vmem [#allocation2], 24
        %v7472 = vld [vmem:[%s7471] sm:$0xf]
        %v7473 = vld [vmem:[%s7471 + $0x4] sm:$0xf]
        %v7474 = vld [vmem:[%s7471 + $0xc] sm:$0xf]
        %v7475 = vld [vmem:[%s7471 + $0x10] sm:$0xf]
        %v7476 = vld [vmem:[%s7471 + $0x18] sm:$0xf]
        %v7477 = vld [vmem:[%s7471 + $0x1c] sm:$0xf]
        %v7478 = vld [vmem:[%s7471 + $0x24] sm:$0xf]
        %v7479 = vld [vmem:[%s7471 + $0x28] sm:$0xf]
        %v7480 = vld [vmem:[%s7471 + $0x30] sm:$0xf]
        %v7481 = vld [vmem:[%s7471 + $0x34] sm:$0xf]
        %v7482 = vld [vmem:[%s7471 + $0x3c] sm:$0xf]
        %v7483 = vld [vmem:[%s7471 + $0x40] sm:$0xf]
        %v7484 = vld [vmem:[%s7471 + $0x48] sm:$0xf]
        %v7485 = vld [vmem:[%s7471 + $0x4c] sm:$0xf]
        %v7486 = vld [vmem:[%s7471 + $0x54] sm:$0xf]
        %v7487 = vld [vmem:[%s7471 + $0x58] sm:$0xf]
        %v7488 = vld [vmem:[%s7471 + $0x60] sm:$0xf]
        %v7489 = vld [vmem:[%s7471 + $0x64] sm:$0xf]
        %v7490 = vld [vmem:[%s7471 + $0x6c] sm:$0xf]
        %v7491 = vld [vmem:[%s7471 + $0x70] sm:$0xf]
        %v7492 = vld [vmem:[%s7471 + $0x78] sm:$0xf]
        %v7493 = vld [vmem:[%s7471 + $0x7c] sm:$0xf]
        %v7494 = vld [vmem:[%s7471 + $0x84] sm:$0xf]
        %v7495 = vld [vmem:[%s7471 + $0x88] sm:$0xf]
        %v7496 = vld [vmem:[%s7471 + $0x90] sm:$0xf]
        %v7497 = vld [vmem:[%s7471 + $0x94] sm:$0xf]
        %v7498 = vld [vmem:[%s7471 + $0x9c] sm:$0xf]
        %v7499 = vld [vmem:[%s7471 + $0xa0] sm:$0xf]
        %v7500 = vld [vmem:[%s7471 + $0xa8] sm:$0xf]
        %v7501 = vld [vmem:[%s7471 + $0xac] sm:$0xf]
        %v7502 = vld [vmem:[%s7471 + $0xb4] sm:$0xf]
        %v7503 = vld [vmem:[%s7471 + $0xb8] sm:$0xf]
        %v7504 = vld [vmem:[%s7471 + $0x8] sm:$0x1]
        %v7505 = vld [vmem:[%s7471 + $0x14] sm:$0x1]
        %v7506 = vld [vmem:[%s7471 + $0x20] sm:$0x1]
        %v7507 = vld [vmem:[%s7471 + $0x2c] sm:$0x1]
        %v7508 = vld [vmem:[%s7471 + $0x38] sm:$0x1]
        %v7509 = vld [vmem:[%s7471 + $0x44] sm:$0x1]
        %v7510 = vld [vmem:[%s7471 + $0x50] sm:$0x1]
        %v7511 = vld [vmem:[%s7471 + $0x5c] sm:$0x1]
        %v7512 = vld [vmem:[%s7471 + $0x68] sm:$0x1]
        %v7513 = vld [vmem:[%s7471 + $0x74] sm:$0x1]
        %v7514 = vld [vmem:[%s7471 + $0x80] sm:$0x1]
        %v7515 = vld [vmem:[%s7471 + $0x8c] sm:$0x1]
        %v7516 = vld [vmem:[%s7471 + $0x98] sm:$0x1]
        %v7517 = vld [vmem:[%s7471 + $0xa4] sm:$0x1]
        %v7518 = vld [vmem:[%s7471 + $0xb0] sm:$0x1]
        %v7519 = vld [vmem:[%s7471 + $0xbc] sm:$0x1]
        %v7521 = vshrl.u32 %v7472, 16
        %v7523 = vrot.slane %v7521, 4
        %v7524 = vshll.u32 %v7472, 16
        %v7526 = vrot.slane %v7524, 5
        %v7527 = vor.u32 %v7523, %v7526
        %v7528 = vrot.slane %v7527, 4
        %v7530 = vshll.u32 %v7473, 16
        %v7532 = vrot.slane %v7530, 5
        %v7533 = vsel %vm347, %v7528, %v7532
        %v7534 = vshrl.u32 %v7473, 16
        %v7536 = vrot.slane %v7534, 4
        %v7537 = vor.u32 %v7536, %v7532
        %v7538 = vrot.slane %v7537, 4
        %v7540 = vshll.u32 %v7504, 16
        %v7542 = vrot.slane %v7540, 5
        %v7543 = vsel %vm347, %v7538, %v7542
        %v7545 = vshrl.u32 %v7474, 16
        %v7547 = vrot.slane %v7545, 4
        %v7548 = vshll.u32 %v7474, 16
        %v7550 = vrot.slane %v7548, 5
        %v7551 = vor.u32 %v7547, %v7550
        %v7552 = vrot.slane %v7551, 4
        %v7554 = vshll.u32 %v7475, 16
        %v7556 = vrot.slane %v7554, 5
        %v7557 = vsel %vm347, %v7552, %v7556
        %v7558 = vshrl.u32 %v7475, 16
        %v7560 = vrot.slane %v7558, 4
        %v7561 = vor.u32 %v7560, %v7556
        %v7562 = vrot.slane %v7561, 4
        %v7564 = vshll.u32 %v7505, 16
        %v7566 = vrot.slane %v7564, 5
        %v7567 = vsel %vm347, %v7562, %v7566
        %v7569 = vshrl.u32 %v7476, 16
        %v7571 = vrot.slane %v7569, 4
        %v7572 = vshll.u32 %v7476, 16
        %v7574 = vrot.slane %v7572, 5
        %v7575 = vor.u32 %v7571, %v7574
        %v7576 = vrot.slane %v7575, 4
        %v7578 = vshll.u32 %v7477, 16
        %v7580 = vrot.slane %v7578, 5
        %v7581 = vsel %vm347, %v7576, %v7580
        %v7582 = vshrl.u32 %v7477, 16
        %v7584 = vrot.slane %v7582, 4
        %v7585 = vor.u32 %v7584, %v7580
        %v7586 = vrot.slane %v7585, 4
        %v7588 = vshll.u32 %v7506, 16
        %v7590 = vrot.slane %v7588, 5
        %v7591 = vsel %vm347, %v7586, %v7590
        %v7593 = vshrl.u32 %v7478, 16
        %v7595 = vrot.slane %v7593, 4
        %v7596 = vshll.u32 %v7478, 16
        %v7598 = vrot.slane %v7596, 5
        %v7599 = vor.u32 %v7595, %v7598
        %v7600 = vrot.slane %v7599, 4
        %v7602 = vshll.u32 %v7479, 16
        %v7604 = vrot.slane %v7602, 5
        %v7605 = vsel %vm347, %v7600, %v7604
        %v7606 = vshrl.u32 %v7479, 16
        %v7608 = vrot.slane %v7606, 4
        %v7609 = vor.u32 %v7608, %v7604
        %v7610 = vrot.slane %v7609, 4
        %v7612 = vshll.u32 %v7507, 16
        %v7614 = vrot.slane %v7612, 5
        %v7615 = vsel %vm347, %v7610, %v7614
        %v7617 = vshrl.u32 %v7480, 16
        %v7619 = vrot.slane %v7617, 4
        %v7620 = vshll.u32 %v7480, 16
        %v7622 = vrot.slane %v7620, 5
        %v7623 = vor.u32 %v7619, %v7622
        %v7624 = vrot.slane %v7623, 4
        %v7626 = vshll.u32 %v7481, 16
        %v7628 = vrot.slane %v7626, 5
        %v7629 = vsel %vm347, %v7624, %v7628
        %v7630 = vshrl.u32 %v7481, 16
        %v7632 = vrot.slane %v7630, 4
        %v7633 = vor.u32 %v7632, %v7628
        %v7634 = vrot.slane %v7633, 4
        %v7636 = vshll.u32 %v7508, 16
        %v7638 = vrot.slane %v7636, 5
        %v7639 = vsel %vm347, %v7634, %v7638
        %v7641 = vshrl.u32 %v7482, 16
        %v7643 = vrot.slane %v7641, 4
        %v7644 = vshll.u32 %v7482, 16
        %v7646 = vrot.slane %v7644, 5
        %v7647 = vor.u32 %v7643, %v7646
        %v7648 = vrot.slane %v7647, 4
        %v7650 = vshll.u32 %v7483, 16
        %v7652 = vrot.slane %v7650, 5
        %v7653 = vsel %vm347, %v7648, %v7652
        %v7654 = vshrl.u32 %v7483, 16
        %v7656 = vrot.slane %v7654, 4
        %v7657 = vor.u32 %v7656, %v7652
        %v7658 = vrot.slane %v7657, 4
        %v7660 = vshll.u32 %v7509, 16
        %v7662 = vrot.slane %v7660, 5
        %v7663 = vsel %vm347, %v7658, %v7662
        %v7665 = vshrl.u32 %v7484, 16
        %v7667 = vrot.slane %v7665, 4
        %v7668 = vshll.u32 %v7484, 16
        %v7670 = vrot.slane %v7668, 5
        %v7671 = vor.u32 %v7667, %v7670
        %v7672 = vrot.slane %v7671, 4
        %v7674 = vshll.u32 %v7485, 16
        %v7676 = vrot.slane %v7674, 5
        %v7677 = vsel %vm347, %v7672, %v7676
        %v7678 = vshrl.u32 %v7485, 16
        %v7680 = vrot.slane %v7678, 4
        %v7681 = vor.u32 %v7680, %v7676
        %v7682 = vrot.slane %v7681, 4
        %v7684 = vshll.u32 %v7510, 16
        %v7686 = vrot.slane %v7684, 5
        %v7687 = vsel %vm347, %v7682, %v7686
        %v7689 = vshrl.u32 %v7486, 16
        %v7691 = vrot.slane %v7689, 4
        %v7692 = vshll.u32 %v7486, 16
        %v7694 = vrot.slane %v7692, 5
        %v7695 = vor.u32 %v7691, %v7694
        %v7696 = vrot.slane %v7695, 4
        %v7698 = vshll.u32 %v7487, 16
        %v7700 = vrot.slane %v7698, 5
        %v7701 = vsel %vm347, %v7696, %v7700
        %v7702 = vshrl.u32 %v7487, 16
        %v7704 = vrot.slane %v7702, 4
        %v7705 = vor.u32 %v7704, %v7700
        %v7706 = vrot.slane %v7705, 4
        %v7708 = vshll.u32 %v7511, 16
        %v7710 = vrot.slane %v7708, 5
        %v7711 = vsel %vm347, %v7706, %v7710
        %v7713 = vshrl.u32 %v7488, 16
        %v7715 = vrot.slane %v7713, 4
        %v7716 = vshll.u32 %v7488, 16
        %v7718 = vrot.slane %v7716, 5
        %v7719 = vor.u32 %v7715, %v7718
        %v7720 = vrot.slane %v7719, 4
        %v7722 = vshll.u32 %v7489, 16
        %v7724 = vrot.slane %v7722, 5
        %v7725 = vsel %vm347, %v7720, %v7724
        %v7726 = vshrl.u32 %v7489, 16
        %v7728 = vrot.slane %v7726, 4
        %v7729 = vor.u32 %v7728, %v7724
        %v7730 = vrot.slane %v7729, 4
        %v7732 = vshll.u32 %v7512, 16
        %v7734 = vrot.slane %v7732, 5
        %v7735 = vsel %vm347, %v7730, %v7734
        %v7737 = vshrl.u32 %v7490, 16
        %v7739 = vrot.slane %v7737, 4
        %v7740 = vshll.u32 %v7490, 16
        %v7742 = vrot.slane %v7740, 5
        %v7743 = vor.u32 %v7739, %v7742
        %v7744 = vrot.slane %v7743, 4
        %v7746 = vshll.u32 %v7491, 16
        %v7748 = vrot.slane %v7746, 5
        %v7749 = vsel %vm347, %v7744, %v7748
        %v7750 = vshrl.u32 %v7491, 16
        %v7752 = vrot.slane %v7750, 4
        %v7753 = vor.u32 %v7752, %v7748
        %v7754 = vrot.slane %v7753, 4
        %v7756 = vshll.u32 %v7513, 16
        %v7758 = vrot.slane %v7756, 5
        %v7759 = vsel %vm347, %v7754, %v7758
        %v7761 = vshrl.u32 %v7492, 16
        %v7763 = vrot.slane %v7761, 4
        %v7764 = vshll.u32 %v7492, 16
        %v7766 = vrot.slane %v7764, 5
        %v7767 = vor.u32 %v7763, %v7766
        %v7768 = vrot.slane %v7767, 4
        %v7770 = vshll.u32 %v7493, 16
        %v7772 = vrot.slane %v7770, 5
        %v7773 = vsel %vm347, %v7768, %v7772
        %v7774 = vshrl.u32 %v7493, 16
        %v7776 = vrot.slane %v7774, 4
        %v7777 = vor.u32 %v7776, %v7772
        %v7778 = vrot.slane %v7777, 4
        %v7780 = vshll.u32 %v7514, 16
        %v7782 = vrot.slane %v7780, 5
        %v7783 = vsel %vm347, %v7778, %v7782
        %v7785 = vshrl.u32 %v7494, 16
        %v7787 = vrot.slane %v7785, 4
        %v7788 = vshll.u32 %v7494, 16
        %v7790 = vrot.slane %v7788, 5
        %v7791 = vor.u32 %v7787, %v7790
        %v7792 = vrot.slane %v7791, 4
        %v7794 = vshll.u32 %v7495, 16
        %v7796 = vrot.slane %v7794, 5
        %v7797 = vsel %vm347, %v7792, %v7796
        %v7798 = vshrl.u32 %v7495, 16
        %v7800 = vrot.slane %v7798, 4
        %v7801 = vor.u32 %v7800, %v7796
        %v7802 = vrot.slane %v7801, 4
        %v7804 = vshll.u32 %v7515, 16
        %v7806 = vrot.slane %v7804, 5
        %v7807 = vsel %vm347, %v7802, %v7806
        %v7809 = vshrl.u32 %v7496, 16
        %v7811 = vrot.slane %v7809, 4
        %v7812 = vshll.u32 %v7496, 16
        %v7814 = vrot.slane %v7812, 5
        %v7815 = vor.u32 %v7811, %v7814
        %v7816 = vrot.slane %v7815, 4
        %v7818 = vshll.u32 %v7497, 16
        %v7820 = vrot.slane %v7818, 5
        %v7821 = vsel %vm347, %v7816, %v7820
        %v7822 = vshrl.u32 %v7497, 16
        %v7824 = vrot.slane %v7822, 4
        %v7825 = vor.u32 %v7824, %v7820
        %v7826 = vrot.slane %v7825, 4
        %v7828 = vshll.u32 %v7516, 16
        %v7830 = vrot.slane %v7828, 5
        %v7831 = vsel %vm347, %v7826, %v7830
        %v7833 = vshrl.u32 %v7498, 16
        %v7835 = vrot.slane %v7833, 4
        %v7836 = vshll.u32 %v7498, 16
        %v7838 = vrot.slane %v7836, 5
        %v7839 = vor.u32 %v7835, %v7838
        %v7840 = vrot.slane %v7839, 4
        %v7842 = vshll.u32 %v7499, 16
        %v7844 = vrot.slane %v7842, 5
        %v7845 = vsel %vm347, %v7840, %v7844
        %v7846 = vshrl.u32 %v7499, 16
        %v7848 = vrot.slane %v7846, 4
        %v7849 = vor.u32 %v7848, %v7844
        %v7850 = vrot.slane %v7849, 4
        %v7852 = vshll.u32 %v7517, 16
        %v7854 = vrot.slane %v7852, 5
        %v7855 = vsel %vm347, %v7850, %v7854
        %v7857 = vshrl.u32 %v7500, 16
        %v7859 = vrot.slane %v7857, 4
        %v7860 = vshll.u32 %v7500, 16
        %v7862 = vrot.slane %v7860, 5
        %v7863 = vor.u32 %v7859, %v7862
        %v7864 = vrot.slane %v7863, 4
        %v7866 = vshll.u32 %v7501, 16
        %v7868 = vrot.slane %v7866, 5
        %v7869 = vsel %vm347, %v7864, %v7868
        %v7870 = vshrl.u32 %v7501, 16
        %v7872 = vrot.slane %v7870, 4
        %v7873 = vor.u32 %v7872, %v7868
        %v7874 = vrot.slane %v7873, 4
        %v7876 = vshll.u32 %v7518, 16
        %v7878 = vrot.slane %v7876, 5
        %v7879 = vsel %vm347, %v7874, %v7878
        %v7881 = vshrl.u32 %v7502, 16
        %v7883 = vrot.slane %v7881, 4
        %v7884 = vshll.u32 %v7502, 16
        %v7886 = vrot.slane %v7884, 5
        %v7887 = vor.u32 %v7883, %v7886
        %v7888 = vrot.slane %v7887, 4
        %v7890 = vshll.u32 %v7503, 16
        %v7892 = vrot.slane %v7890, 5
        %v7893 = vsel %vm347, %v7888, %v7892
        %v7894 = vshrl.u32 %v7503, 16
        %v7896 = vrot.slane %v7894, 4
        %v7897 = vor.u32 %v7896, %v7892
        %v7898 = vrot.slane %v7897, 4
        %v7900 = vshll.u32 %v7519, 16
        %v7902 = vrot.slane %v7900, 5
        %v7903 = vsel %vm347, %v7898, %v7902
        %v7936 = vunpack.c.l.b16 %v7472
        %v7937 = vunpack.c.l.b16 %v7473
        %v7938 = vunpack.c.l.b16 %v7474
        %v7939 = vunpack.c.l.b16 %v7475
        %v7940 = vunpack.c.l.b16 %v7476
        %v7941 = vunpack.c.l.b16 %v7477
        %v7942 = vunpack.c.l.b16 %v7478
        %v7943 = vunpack.c.l.b16 %v7479
        %v7944 = vunpack.c.l.b16 %v7480
        %v7945 = vunpack.c.l.b16 %v7481
        %v7946 = vunpack.c.l.b16 %v7482
        %v7947 = vunpack.c.l.b16 %v7483
        %v7948 = vunpack.c.l.b16 %v7484
        %v7949 = vunpack.c.l.b16 %v7485
        %v7950 = vunpack.c.l.b16 %v7486
        %v7951 = vunpack.c.l.b16 %v7487
        %v7952 = vunpack.c.l.b16 %v7488
        %v7953 = vunpack.c.l.b16 %v7489
        %v7954 = vunpack.c.l.b16 %v7490
        %v7955 = vunpack.c.l.b16 %v7491
        %v7956 = vunpack.c.l.b16 %v7492
        %v7957 = vunpack.c.l.b16 %v7493
        %v7958 = vunpack.c.l.b16 %v7494
        %v7959 = vunpack.c.l.b16 %v7495
        %v7960 = vunpack.c.l.b16 %v7496
        %v7961 = vunpack.c.l.b16 %v7497
        %v7962 = vunpack.c.l.b16 %v7498
        %v7963 = vunpack.c.l.b16 %v7499
        %v7964 = vunpack.c.l.b16 %v7500
        %v7965 = vunpack.c.l.b16 %v7501
        %v7966 = vunpack.c.l.b16 %v7502
        %v7967 = vunpack.c.l.b16 %v7503
        %v7968 = vpack.c.b16 %v7937, %v7936
        %v7969 = vpack.c.b16 %v7939, %v7938
        %v7970 = vpack.c.b16 %v7941, %v7940
        %v7971 = vpack.c.b16 %v7943, %v7942
        %v7972 = vpack.c.b16 %v7945, %v7944
        %v7973 = vpack.c.b16 %v7947, %v7946
        %v7974 = vpack.c.b16 %v7949, %v7948
        %v7975 = vpack.c.b16 %v7951, %v7950
        %v7976 = vpack.c.b16 %v7953, %v7952
        %v7977 = vpack.c.b16 %v7955, %v7954
        %v7978 = vpack.c.b16 %v7957, %v7956
        %v7979 = vpack.c.b16 %v7959, %v7958
        %v7980 = vpack.c.b16 %v7961, %v7960
        %v7981 = vpack.c.b16 %v7963, %v7962
        %v7982 = vpack.c.b16 %v7965, %v7964
        %v7983 = vpack.c.b16 %v7967, %v7966
        %v8000 = vunpack.c.l.b16 %v7533
        %v8001 = vunpack.c.l.b16 %v7543
        %v8002 = vunpack.c.l.b16 %v7557
        %v8003 = vunpack.c.l.b16 %v7567
        %v8004 = vunpack.c.l.b16 %v7581
        %v8005 = vunpack.c.l.b16 %v7591
        %v8006 = vunpack.c.l.b16 %v7605
        %v8007 = vunpack.c.l.b16 %v7615
        %v8008 = vunpack.c.l.b16 %v7629
        %v8009 = vunpack.c.l.b16 %v7639
        %v8010 = vunpack.c.l.b16 %v7653
        %v8011 = vunpack.c.l.b16 %v7663
        %v8012 = vunpack.c.l.b16 %v7677
        %v8013 = vunpack.c.l.b16 %v7687
        %v8014 = vunpack.c.l.b16 %v7701
        %v8015 = vunpack.c.l.b16 %v7711
        %v8016 = vunpack.c.l.b16 %v7725
        %v8017 = vunpack.c.l.b16 %v7735
        %v8018 = vunpack.c.l.b16 %v7749
        %v8019 = vunpack.c.l.b16 %v7759
        %v8020 = vunpack.c.l.b16 %v7773
        %v8021 = vunpack.c.l.b16 %v7783
        %v8022 = vunpack.c.l.b16 %v7797
        %v8023 = vunpack.c.l.b16 %v7807
        %v8024 = vunpack.c.l.b16 %v7821
        %v8025 = vunpack.c.l.b16 %v7831
        %v8026 = vunpack.c.l.b16 %v7845
        %v8027 = vunpack.c.l.b16 %v7855
        %v8028 = vunpack.c.l.b16 %v7869
        %v8029 = vunpack.c.l.b16 %v7879
        %v8030 = vunpack.c.l.b16 %v7893
        %v8031 = vunpack.c.l.b16 %v7903
        %v8032 = vpack.c.b16 %v8001, %v8000
        %v8033 = vpack.c.b16 %v8003, %v8002
        %v8034 = vpack.c.b16 %v8005, %v8004
        %v8035 = vpack.c.b16 %v8007, %v8006
        %v8036 = vpack.c.b16 %v8009, %v8008
        %v8037 = vpack.c.b16 %v8011, %v8010
        %v8038 = vpack.c.b16 %v8013, %v8012
        %v8039 = vpack.c.b16 %v8015, %v8014
        %v8040 = vpack.c.b16 %v8017, %v8016
        %v8041 = vpack.c.b16 %v8019, %v8018
        %v8042 = vpack.c.b16 %v8021, %v8020
        %v8043 = vpack.c.b16 %v8023, %v8022
        %v8044 = vpack.c.b16 %v8025, %v8024
        %v8045 = vpack.c.b16 %v8027, %v8026
        %v8046 = vpack.c.b16 %v8029, %v8028
        %v8047 = vpack.c.b16 %v8031, %v8030
        %s8064 = scalar_lea.vmem [#allocation4], 384
        %v8065 = vld [vmem:[%s8064] sm:$0xf]
        %v8066 = vld [vmem:[%s8064 + $0x4] sm:$0xf]
        %v8067 = vld [vmem:[%s8064 + $0x8] sm:$0xf]
        %v8068 = vld [vmem:[%s8064 + $0xc] sm:$0xf]
        %v8069 = vld [vmem:[%s8064 + $0x10] sm:$0xf]
        %v8070 = vld [vmem:[%s8064 + $0x14] sm:$0xf]
        %v8071 = vld [vmem:[%s8064 + $0x18] sm:$0xf]
        %v8072 = vld [vmem:[%s8064 + $0x1c] sm:$0xf]
        %v8073 = vld [vmem:[%s8064 + $0x20] sm:$0xf]
        %v8074 = vld [vmem:[%s8064 + $0x24] sm:$0xf]
        %v8075 = vld [vmem:[%s8064 + $0x28] sm:$0xf]
        %v8076 = vld [vmem:[%s8064 + $0x2c] sm:$0xf]
        %v8077 = vld [vmem:[%s8064 + $0x30] sm:$0xf]
        %v8078 = vld [vmem:[%s8064 + $0x34] sm:$0xf]
        %v8079 = vld [vmem:[%s8064 + $0x38] sm:$0xf]
        %v8080 = vld [vmem:[%s8064 + $0x3c] sm:$0xf]
        %v8081 = vld [vmem:[%s8064 + $0x40] sm:$0xf]
        %v8082 = vld [vmem:[%s8064 + $0x44] sm:$0xf]
        %v8083 = vld [vmem:[%s8064 + $0x48] sm:$0xf]
        %v8084 = vld [vmem:[%s8064 + $0x4c] sm:$0xf]
        %v8085 = vld [vmem:[%s8064 + $0x50] sm:$0xf]
        %v8086 = vld [vmem:[%s8064 + $0x54] sm:$0xf]
        %v8087 = vld [vmem:[%s8064 + $0x58] sm:$0xf]
        %v8088 = vld [vmem:[%s8064 + $0x5c] sm:$0xf]
        %v8089 = vld [vmem:[%s8064 + $0x60] sm:$0xf]
        %v8090 = vld [vmem:[%s8064 + $0x64] sm:$0xf]
        %v8091 = vld [vmem:[%s8064 + $0x68] sm:$0xf]
        %v8092 = vld [vmem:[%s8064 + $0x6c] sm:$0xf]
        %v8093 = vld [vmem:[%s8064 + $0x70] sm:$0xf]
        %v8094 = vld [vmem:[%s8064 + $0x74] sm:$0xf]
        %v8095 = vld [vmem:[%s8064 + $0x78] sm:$0xf]
        %v8096 = vld [vmem:[%s8064 + $0x7c] sm:$0xf]
        %v8129 = vunpack.c.l.b16 %v8065
        %v8130 = vunpack.c.l.b16 %v8066
        %v8131 = vunpack.c.l.b16 %v8067
        %v8132 = vunpack.c.l.b16 %v8068
        %v8133 = vunpack.c.l.b16 %v8069
        %v8134 = vunpack.c.l.b16 %v8070
        %v8135 = vunpack.c.l.b16 %v8071
        %v8136 = vunpack.c.l.b16 %v8072
        %v8137 = vunpack.c.l.b16 %v8073
        %v8138 = vunpack.c.l.b16 %v8074
        %v8139 = vunpack.c.l.b16 %v8075
        %v8140 = vunpack.c.l.b16 %v8076
        %v8141 = vunpack.c.l.b16 %v8077
        %v8142 = vunpack.c.l.b16 %v8078
        %v8143 = vunpack.c.l.b16 %v8079
        %v8144 = vunpack.c.l.b16 %v8080
        %v8145 = vunpack.c.l.b16 %v8081
        %v8146 = vunpack.c.l.b16 %v8082
        %v8147 = vunpack.c.l.b16 %v8083
        %v8148 = vunpack.c.l.b16 %v8084
        %v8149 = vunpack.c.l.b16 %v8085
        %v8150 = vunpack.c.l.b16 %v8086
        %v8151 = vunpack.c.l.b16 %v8087
        %v8152 = vunpack.c.l.b16 %v8088
        %v8153 = vunpack.c.l.b16 %v8089
        %v8154 = vunpack.c.l.b16 %v8090
        %v8155 = vunpack.c.l.b16 %v8091
        %v8156 = vunpack.c.l.b16 %v8092
        %v8157 = vunpack.c.l.b16 %v8093
        %v8158 = vunpack.c.l.b16 %v8094
        %v8159 = vunpack.c.l.b16 %v8095
        %v8160 = vunpack.c.l.b16 %v8096
        %v8161 = vpack.c.b16 %v8130, %v8129
        %v8162 = vpack.c.b16 %v8132, %v8131
        %v8163 = vpack.c.b16 %v8134, %v8133
        %v8164 = vpack.c.b16 %v8136, %v8135
        %v8165 = vpack.c.b16 %v8138, %v8137
        %v8166 = vpack.c.b16 %v8140, %v8139
        %v8167 = vpack.c.b16 %v8142, %v8141
        %v8168 = vpack.c.b16 %v8144, %v8143
        %v8169 = vpack.c.b16 %v8146, %v8145
        %v8170 = vpack.c.b16 %v8148, %v8147
        %v8171 = vpack.c.b16 %v8150, %v8149
        %v8172 = vpack.c.b16 %v8152, %v8151
        %v8173 = vpack.c.b16 %v8154, %v8153
        %v8174 = vpack.c.b16 %v8156, %v8155
        %v8175 = vpack.c.b16 %v8158, %v8157
        %v8176 = vpack.c.b16 %v8160, %v8159
        %8193 = vmatprep.subr.bf16.mxu0 0
        %8194 = vmatpush1.bf16.msra.mxu0 %v8168
        %8195 = vmatprep.subr.bf16.mxu0 0
        %8196 = vmatpush1.bf16.msra.mxu0 %v8167
        %8197 = vmatprep.subr.bf16.mxu0 0
        %8198 = vmatpush1.bf16.msra.mxu0 %v8166
        %8199 = vmatprep.subr.bf16.mxu0 0
        %8200 = vmatpush1.bf16.msra.mxu0 %v8165
        %8201 = vmatprep.subr.bf16.mxu0 0
        %8202 = vmatpush1.bf16.msra.mxu0 %v8164
        %8203 = vmatprep.subr.bf16.mxu0 0
        %8204 = vmatpush1.bf16.msra.mxu0 %v8163
        %8205 = vmatprep.subr.bf16.mxu0 0
        %8206 = vmatpush1.bf16.msra.mxu0 %v8162
        %8207 = vmatprep.subr.bf16.mxu0 0
        %8208 = vmatpush1.bf16.msra.mxu0 %v8161
        %8209 = vmatprep.subr.bf16.mxu0 0
        %8210 = vmatpush2.bf16.msra.mxu0 %v8176
        %8211 = vmatprep.subr.bf16.mxu0 0
        %8212 = vmatpush2.bf16.msra.mxu0 %v8175
        %8213 = vmatprep.subr.bf16.mxu0 0
        %8214 = vmatpush2.bf16.msra.mxu0 %v8174
        %8215 = vmatprep.subr.bf16.mxu0 0
        %8216 = vmatpush2.bf16.msra.mxu0 %v8173
        %8217 = vmatprep.subr.bf16.mxu0 0
        %8218 = vmatpush2.bf16.msra.mxu0 %v8172
        %8219 = vmatprep.subr.bf16.mxu0 0
        %8220 = vmatpush2.bf16.msra.mxu0 %v8171
        %8221 = vmatprep.subr.bf16.mxu0 0
        %8222 = vmatpush2.bf16.msra.mxu0 %v8170
        %8223 = vmatprep.subr.bf16.mxu0 0
        %8224 = vmatpush2.bf16.msra.mxu0 %v8169
        %8225 = vmatprep.mubr.bf16.mxu0 %v8032
        %8226 = vmatmul.mubr.bf16.gmra.mxu0 %v7968
        %v8227 = vpop.f32.mrf.mxu0
        %v8228 = vadd.f32 0.0, %v8227
        %v8229 = vpop.f32.mrf.mxu0
        %v8230 = vpop.f32.mrf.mxu0
        %v8231 = vadd.f32 0.0, %v8230
        %v8232 = vpop.f32.mrf.mxu0
        %8233 = vmatprep.mubr.bf16.mxu0 %v8033
        %8234 = vmatmul.mubr.bf16.gmra.mxu0 %v7969
        %v8235 = vpop.f32.mrf.mxu0
        %v8236 = vadd.f32 0.0, %v8235
        %v8237 = vpop.f32.mrf.mxu0
        %v8238 = vpop.f32.mrf.mxu0
        %v8239 = vadd.f32 0.0, %v8238
        %v8240 = vpop.f32.mrf.mxu0
        %8241 = vmatprep.mubr.bf16.mxu0 %v8034
        %8242 = vmatmul.mubr.bf16.gmra.mxu0 %v7970
        %v8243 = vpop.f32.mrf.mxu0
        %v8244 = vadd.f32 0.0, %v8243
        %v8245 = vpop.f32.mrf.mxu0
        %v8246 = vpop.f32.mrf.mxu0
        %v8247 = vadd.f32 0.0, %v8246
        %v8248 = vpop.f32.mrf.mxu0
        %8249 = vmatprep.mubr.bf16.mxu0 %v8035
        %8250 = vmatmul.mubr.bf16.gmra.mxu0 %v7971
        %v8251 = vpop.f32.mrf.mxu0
        %v8252 = vadd.f32 0.0, %v8251
        %v8253 = vpop.f32.mrf.mxu0
        %v8254 = vpop.f32.mrf.mxu0
        %v8255 = vadd.f32 0.0, %v8254
        %v8256 = vpop.f32.mrf.mxu0
        %8257 = vmatprep.mubr.bf16.mxu0 %v8036
        %8258 = vmatmul.mubr.bf16.gmra.mxu0 %v7972
        %v8259 = vpop.f32.mrf.mxu0
        %v8260 = vadd.f32 0.0, %v8259
        %v8261 = vpop.f32.mrf.mxu0
        %v8262 = vpop.f32.mrf.mxu0
        %v8263 = vadd.f32 0.0, %v8262
        %v8264 = vpop.f32.mrf.mxu0
        %8265 = vmatprep.mubr.bf16.mxu0 %v8037
        %8266 = vmatmul.mubr.bf16.gmra.mxu0 %v7973
        %v8267 = vpop.f32.mrf.mxu0
        %v8268 = vadd.f32 0.0, %v8267
        %v8269 = vpop.f32.mrf.mxu0
        %v8270 = vpop.f32.mrf.mxu0
        %v8271 = vadd.f32 0.0, %v8270
        %v8272 = vpop.f32.mrf.mxu0
        %8273 = vmatprep.mubr.bf16.mxu0 %v8038
        %8274 = vmatmul.mubr.bf16.gmra.mxu0 %v7974
        %v8275 = vpop.f32.mrf.mxu0
        %v8276 = vadd.f32 0.0, %v8275
        %v8277 = vpop.f32.mrf.mxu0
        %v8278 = vpop.f32.mrf.mxu0
        %v8279 = vadd.f32 0.0, %v8278
        %v8280 = vpop.f32.mrf.mxu0
        %8281 = vmatprep.mubr.bf16.mxu0 %v8039
        %8282 = vmatmul.mubr.bf16.gmra.mxu0 %v7975
        %v8283 = vpop.f32.mrf.mxu0
        %v8284 = vadd.f32 0.0, %v8283
        %v8285 = vpop.f32.mrf.mxu0
        %v8286 = vpop.f32.mrf.mxu0
        %v8287 = vadd.f32 0.0, %v8286
        %v8288 = vpop.f32.mrf.mxu0
        %8289 = vmatprep.mubr.bf16.mxu0 %v8040
        %8290 = vmatmul.mubr.bf16.gmra.mxu0 %v7976
        %v8291 = vpop.f32.mrf.mxu0
        %v8292 = vadd.f32 0.0, %v8291
        %v8293 = vpop.f32.mrf.mxu0
        %v8294 = vpop.f32.mrf.mxu0
        %v8295 = vadd.f32 0.0, %v8294
        %v8296 = vpop.f32.mrf.mxu0
        %8297 = vmatprep.mubr.bf16.mxu0 %v8041
        %8298 = vmatmul.mubr.bf16.gmra.mxu0 %v7977
        %v8299 = vpop.f32.mrf.mxu0
        %v8300 = vadd.f32 0.0, %v8299
        %v8301 = vpop.f32.mrf.mxu0
        %v8302 = vpop.f32.mrf.mxu0
        %v8303 = vadd.f32 0.0, %v8302
        %v8304 = vpop.f32.mrf.mxu0
        %8305 = vmatprep.mubr.bf16.mxu0 %v8042
        %8306 = vmatmul.mubr.bf16.gmra.mxu0 %v7978
        %v8307 = vpop.f32.mrf.mxu0
        %v8308 = vadd.f32 0.0, %v8307
        %v8309 = vpop.f32.mrf.mxu0
        %v8310 = vpop.f32.mrf.mxu0
        %v8311 = vadd.f32 0.0, %v8310
        %v8312 = vpop.f32.mrf.mxu0
        %8313 = vmatprep.mubr.bf16.mxu0 %v8043
        %8314 = vmatmul.mubr.bf16.gmra.mxu0 %v7979
        %v8315 = vpop.f32.mrf.mxu0
        %v8316 = vadd.f32 0.0, %v8315
        %v8317 = vpop.f32.mrf.mxu0
        %v8318 = vpop.f32.mrf.mxu0
        %v8319 = vadd.f32 0.0, %v8318
        %v8320 = vpop.f32.mrf.mxu0
        %8321 = vmatprep.mubr.bf16.mxu0 %v8044
        %8322 = vmatmul.mubr.bf16.gmra.mxu0 %v7980
        %v8323 = vpop.f32.mrf.mxu0
        %v8324 = vadd.f32 0.0, %v8323
        %v8325 = vpop.f32.mrf.mxu0
        %v8326 = vpop.f32.mrf.mxu0
        %v8327 = vadd.f32 0.0, %v8326
        %v8328 = vpop.f32.mrf.mxu0
        %8329 = vmatprep.mubr.bf16.mxu0 %v8045
        %8330 = vmatmul.mubr.bf16.gmra.mxu0 %v7981
        %v8331 = vpop.f32.mrf.mxu0
        %v8332 = vadd.f32 0.0, %v8331
        %v8333 = vpop.f32.mrf.mxu0
        %v8334 = vpop.f32.mrf.mxu0
        %v8335 = vadd.f32 0.0, %v8334
        %v8336 = vpop.f32.mrf.mxu0
        %8337 = vmatprep.mubr.bf16.mxu0 %v8046
        %8338 = vmatmul.mubr.bf16.gmra.mxu0 %v7982
        %v8339 = vpop.f32.mrf.mxu0
        %v8340 = vadd.f32 0.0, %v8339
        %v8341 = vpop.f32.mrf.mxu0
        %v8342 = vpop.f32.mrf.mxu0
        %v8343 = vadd.f32 0.0, %v8342
        %v8344 = vpop.f32.mrf.mxu0
        %8345 = vmatprep.mubr.bf16.mxu0 %v8047
        %8346 = vmatmul.mubr.bf16.gmra.mxu0 %v7983
        %v8347 = vpop.f32.mrf.mxu0
        %v8348 = vadd.f32 0.0, %v8347
        %v8349 = vpop.f32.mrf.mxu0
        %v8350 = vpop.f32.mrf.mxu0
        %v8351 = vadd.f32 0.0, %v8350
        %v8352 = vpop.f32.mrf.mxu0
        %8353 = vdwg.mxu0
        %v8354 = vadd.f32 %v7439, %v8228
        %v8355 = vadd.f32 %v7440, %v8231
        %v8356 = vadd.f32 %v7441, %v8236
        %v8357 = vadd.f32 %v7442, %v8239
        %v8358 = vadd.f32 %v7443, %v8244
        %v8359 = vadd.f32 %v7444, %v8247
        %v8360 = vadd.f32 %v7445, %v8252
        %v8361 = vadd.f32 %v7446, %v8255
        %v8362 = vadd.f32 %v7447, %v8260
        %v8363 = vadd.f32 %v7448, %v8263
        %v8364 = vadd.f32 %v7449, %v8268
        %v8365 = vadd.f32 %v7450, %v8271
        %v8366 = vadd.f32 %v7451, %v8276
        %v8367 = vadd.f32 %v7452, %v8279
        %v8368 = vadd.f32 %v7453, %v8284
        %v8369 = vadd.f32 %v7454, %v8287
        %v8370 = vadd.f32 %v7455, %v8292
        %v8371 = vadd.f32 %v7456, %v8295
        %v8372 = vadd.f32 %v7457, %v8300
        %v8373 = vadd.f32 %v7458, %v8303
        %v8374 = vadd.f32 %v7459, %v8308
        %v8375 = vadd.f32 %v7460, %v8311
        %v8376 = vadd.f32 %v7461, %v8316
        %v8377 = vadd.f32 %v7462, %v8319
        %v8378 = vadd.f32 %v7463, %v8324
        %v8379 = vadd.f32 %v7464, %v8327
        %v8380 = vadd.f32 %v7465, %v8332
        %v8381 = vadd.f32 %v7466, %v8335
        %v8382 = vadd.f32 %v7467, %v8340
        %v8383 = vadd.f32 %v7468, %v8343
        %v8384 = vadd.f32 %v7469, %v8348
        %v8385 = vadd.f32 %v7470, %v8351
        %v8386 = vld [vmem:[%s7471] sm:$0xe]
        %v8387 = vld [vmem:[%s7471 + $0xc] sm:$0xe]
        %v8388 = vld [vmem:[%s7471 + $0x18] sm:$0xe]
        %v8389 = vld [vmem:[%s7471 + $0x24] sm:$0xe]
        %v8390 = vld [vmem:[%s7471 + $0x30] sm:$0xe]
        %v8391 = vld [vmem:[%s7471 + $0x3c] sm:$0xe]
        %v8392 = vld [vmem:[%s7471 + $0x48] sm:$0xe]
        %v8393 = vld [vmem:[%s7471 + $0x54] sm:$0xe]
        %v8394 = vld [vmem:[%s7471 + $0x60] sm:$0xe]
        %v8395 = vld [vmem:[%s7471 + $0x6c] sm:$0xe]
        %v8396 = vld [vmem:[%s7471 + $0x78] sm:$0xe]
        %v8397 = vld [vmem:[%s7471 + $0x84] sm:$0xe]
        %v8398 = vld [vmem:[%s7471 + $0x90] sm:$0xe]
        %v8399 = vld [vmem:[%s7471 + $0x9c] sm:$0xe]
        %v8400 = vld [vmem:[%s7471 + $0xa8] sm:$0xe]
        %v8401 = vld [vmem:[%s7471 + $0xb4] sm:$0xe]
        %v8434 = vrot.slane %v8386, 5
        %v8435 = vrot.slane %v8434, 4
        %v8436 = vrot.slane %v7473, 5
        %v8437 = vsel %vm974, %v8435, %v8436
        %v8438 = vrot.slane %v8436, 4
        %v8439 = vrot.slane %v7504, 5
        %v8440 = vsel %vm974, %v8438, %v8439
        %v8441 = vrot.slane %v8387, 5
        %v8442 = vrot.slane %v8441, 4
        %v8443 = vrot.slane %v7475, 5
        %v8444 = vsel %vm974, %v8442, %v8443
        %v8445 = vrot.slane %v8443, 4
        %v8446 = vrot.slane %v7505, 5
        %v8447 = vsel %vm974, %v8445, %v8446
        %v8448 = vrot.slane %v8388, 5
        %v8449 = vrot.slane %v8448, 4
        %v8450 = vrot.slane %v7477, 5
        %v8451 = vsel %vm974, %v8449, %v8450
        %v8452 = vrot.slane %v8450, 4
        %v8453 = vrot.slane %v7506, 5
        %v8454 = vsel %vm974, %v8452, %v8453
        %v8455 = vrot.slane %v8389, 5
        %v8456 = vrot.slane %v8455, 4
        %v8457 = vrot.slane %v7479, 5
        %v8458 = vsel %vm974, %v8456, %v8457
        %v8459 = vrot.slane %v8457, 4
        %v8460 = vrot.slane %v7507, 5
        %v8461 = vsel %vm974, %v8459, %v8460
        %v8462 = vrot.slane %v8390, 5
        %v8463 = vrot.slane %v8462, 4
        %v8464 = vrot.slane %v7481, 5
        %v8465 = vsel %vm974, %v8463, %v8464
        %v8466 = vrot.slane %v8464, 4
        %v8467 = vrot.slane %v7508, 5
        %v8468 = vsel %vm974, %v8466, %v8467
        %v8469 = vrot.slane %v8391, 5
        %v8470 = vrot.slane %v8469, 4
        %v8471 = vrot.slane %v7483, 5
        %v8472 = vsel %vm974, %v8470, %v8471
        %v8473 = vrot.slane %v8471, 4
        %v8474 = vrot.slane %v7509, 5
        %v8475 = vsel %vm974, %v8473, %v8474
        %v8476 = vrot.slane %v8392, 5
        %v8477 = vrot.slane %v8476, 4
        %v8478 = vrot.slane %v7485, 5
        %v8479 = vsel %vm974, %v8477, %v8478
        %v8480 = vrot.slane %v8478, 4
        %v8481 = vrot.slane %v7510, 5
        %v8482 = vsel %vm974, %v8480, %v8481
        %v8483 = vrot.slane %v8393, 5
        %v8484 = vrot.slane %v8483, 4
        %v8485 = vrot.slane %v7487, 5
        %v8486 = vsel %vm974, %v8484, %v8485
        %v8487 = vrot.slane %v8485, 4
        %v8488 = vrot.slane %v7511, 5
        %v8489 = vsel %vm974, %v8487, %v8488
        %v8490 = vrot.slane %v8394, 5
        %v8491 = vrot.slane %v8490, 4
        %v8492 = vrot.slane %v7489, 5
        %v8493 = vsel %vm974, %v8491, %v8492
        %v8494 = vrot.slane %v8492, 4
        %v8495 = vrot.slane %v7512, 5
        %v8496 = vsel %vm974, %v8494, %v8495
        %v8497 = vrot.slane %v8395, 5
        %v8498 = vrot.slane %v8497, 4
        %v8499 = vrot.slane %v7491, 5
        %v8500 = vsel %vm974, %v8498, %v8499
        %v8501 = vrot.slane %v8499, 4
        %v8502 = vrot.slane %v7513, 5
        %v8503 = vsel %vm974, %v8501, %v8502
        %v8504 = vrot.slane %v8396, 5
        %v8505 = vrot.slane %v8504, 4
        %v8506 = vrot.slane %v7493, 5
        %v8507 = vsel %vm974, %v8505, %v8506
        %v8508 = vrot.slane %v8506, 4
        %v8509 = vrot.slane %v7514, 5
        %v8510 = vsel %vm974, %v8508, %v8509
        %v8511 = vrot.slane %v8397, 5
        %v8512 = vrot.slane %v8511, 4
        %v8513 = vrot.slane %v7495, 5
        %v8514 = vsel %vm974, %v8512, %v8513
        %v8515 = vrot.slane %v8513, 4
        %v8516 = vrot.slane %v7515, 5
        %v8517 = vsel %vm974, %v8515, %v8516
        %v8518 = vrot.slane %v8398, 5
        %v8519 = vrot.slane %v8518, 4
        %v8520 = vrot.slane %v7497, 5
        %v8521 = vsel %vm974, %v8519, %v8520
        %v8522 = vrot.slane %v8520, 4
        %v8523 = vrot.slane %v7516, 5
        %v8524 = vsel %vm974, %v8522, %v8523
        %v8525 = vrot.slane %v8399, 5
        %v8526 = vrot.slane %v8525, 4
        %v8527 = vrot.slane %v7499, 5
        %v8528 = vsel %vm974, %v8526, %v8527
        %v8529 = vrot.slane %v8527, 4
        %v8530 = vrot.slane %v7517, 5
        %v8531 = vsel %vm974, %v8529, %v8530
        %v8532 = vrot.slane %v8400, 5
        %v8533 = vrot.slane %v8532, 4
        %v8534 = vrot.slane %v7501, 5
        %v8535 = vsel %vm974, %v8533, %v8534
        %v8536 = vrot.slane %v8534, 4
        %v8537 = vrot.slane %v7518, 5
        %v8538 = vsel %vm974, %v8536, %v8537
        %v8539 = vrot.slane %v8401, 5
        %v8540 = vrot.slane %v8539, 4
        %v8541 = vrot.slane %v7503, 5
        %v8542 = vsel %vm974, %v8540, %v8541
        %v8543 = vrot.slane %v8541, 4
        %v8544 = vrot.slane %v7519, 5
        %v8545 = vsel %vm974, %v8543, %v8544
        %s8546 = scalar_lea.vmem [#allocation4], 512
        %v8547 = vld [vmem:[%s8546] sm:$0xf]
        %v8548 = vld [vmem:[%s8546 + $0x4] sm:$0xf]
        %v8549 = vld [vmem:[%s8546 + $0x8] sm:$0xf]
        %v8550 = vld [vmem:[%s8546 + $0xc] sm:$0xf]
        %v8551 = vld [vmem:[%s8546 + $0x10] sm:$0xf]
        %v8552 = vld [vmem:[%s8546 + $0x14] sm:$0xf]
        %v8553 = vld [vmem:[%s8546 + $0x18] sm:$0xf]
        %v8554 = vld [vmem:[%s8546 + $0x1c] sm:$0xf]
        %v8555 = vld [vmem:[%s8546 + $0x20] sm:$0xf]
        %v8556 = vld [vmem:[%s8546 + $0x24] sm:$0xf]
        %v8557 = vld [vmem:[%s8546 + $0x28] sm:$0xf]
        %v8558 = vld [vmem:[%s8546 + $0x2c] sm:$0xf]
        %v8559 = vld [vmem:[%s8546 + $0x30] sm:$0xf]
        %v8560 = vld [vmem:[%s8546 + $0x34] sm:$0xf]
        %v8561 = vld [vmem:[%s8546 + $0x38] sm:$0xf]
        %v8562 = vld [vmem:[%s8546 + $0x3c] sm:$0xf]
        %v8563 = vunpack.c.l.b16 %v8437
        %v8564 = vunpack.c.l.b16 %v8440
        %v8565 = vunpack.c.l.b16 %v8444
        %v8566 = vunpack.c.l.b16 %v8447
        %v8567 = vunpack.c.l.b16 %v8451
        %v8568 = vunpack.c.l.b16 %v8454
        %v8569 = vunpack.c.l.b16 %v8458
        %v8570 = vunpack.c.l.b16 %v8461
        %v8571 = vunpack.c.l.b16 %v8465
        %v8572 = vunpack.c.l.b16 %v8468
        %v8573 = vunpack.c.l.b16 %v8472
        %v8574 = vunpack.c.l.b16 %v8475
        %v8575 = vunpack.c.l.b16 %v8479
        %v8576 = vunpack.c.l.b16 %v8482
        %v8577 = vunpack.c.l.b16 %v8486
        %v8578 = vunpack.c.l.b16 %v8489
        %v8579 = vunpack.c.l.b16 %v8493
        %v8580 = vunpack.c.l.b16 %v8496
        %v8581 = vunpack.c.l.b16 %v8500
        %v8582 = vunpack.c.l.b16 %v8503
        %v8583 = vunpack.c.l.b16 %v8507
        %v8584 = vunpack.c.l.b16 %v8510
        %v8585 = vunpack.c.l.b16 %v8514
        %v8586 = vunpack.c.l.b16 %v8517
        %v8587 = vunpack.c.l.b16 %v8521
        %v8588 = vunpack.c.l.b16 %v8524
        %v8589 = vunpack.c.l.b16 %v8528
        %v8590 = vunpack.c.l.b16 %v8531
        %v8591 = vunpack.c.l.b16 %v8535
        %v8592 = vunpack.c.l.b16 %v8538
        %v8593 = vunpack.c.l.b16 %v8542
        %v8594 = vunpack.c.l.b16 %v8545
        %v8595 = vpack.c.b16 %v8564, %v8563
        %v8596 = vpack.c.b16 %v8566, %v8565
        %v8597 = vpack.c.b16 %v8568, %v8567
        %v8598 = vpack.c.b16 %v8570, %v8569
        %v8599 = vpack.c.b16 %v8572, %v8571
        %v8600 = vpack.c.b16 %v8574, %v8573
        %v8601 = vpack.c.b16 %v8576, %v8575
        %v8602 = vpack.c.b16 %v8578, %v8577
        %v8603 = vpack.c.b16 %v8580, %v8579
        %v8604 = vpack.c.b16 %v8582, %v8581
        %v8605 = vpack.c.b16 %v8584, %v8583
        %v8606 = vpack.c.b16 %v8586, %v8585
        %v8607 = vpack.c.b16 %v8588, %v8587
        %v8608 = vpack.c.b16 %v8590, %v8589
        %v8609 = vpack.c.b16 %v8592, %v8591
        %v8610 = vpack.c.b16 %v8594, %v8593
        %v8643 = vunpack.c.l.b16 %v8547
        %v8644 = vunpack.c.l.b16 %v8548
        %v8645 = vunpack.c.l.b16 %v8549
        %v8646 = vunpack.c.l.b16 %v8550
        %v8647 = vunpack.c.l.b16 %v8551
        %v8648 = vunpack.c.l.b16 %v8552
        %v8649 = vunpack.c.l.b16 %v8553
        %v8650 = vunpack.c.l.b16 %v8554
        %v8651 = vunpack.c.l.b16 %v8555
        %v8652 = vunpack.c.l.b16 %v8556
        %v8653 = vunpack.c.l.b16 %v8557
        %v8654 = vunpack.c.l.b16 %v8558
        %v8655 = vunpack.c.l.b16 %v8559
        %v8656 = vunpack.c.l.b16 %v8560
        %v8657 = vunpack.c.l.b16 %v8561
        %v8658 = vunpack.c.l.b16 %v8562
        %v8659 = vpack.c.b16 %v8644, %v8643
        %v8660 = vpack.c.b16 %v8646, %v8645
        %v8661 = vpack.c.b16 %v8648, %v8647
        %v8662 = vpack.c.b16 %v8650, %v8649
        %v8663 = vpack.c.b16 %v8652, %v8651
        %v8664 = vpack.c.b16 %v8654, %v8653
        %v8665 = vpack.c.b16 %v8656, %v8655
        %v8666 = vpack.c.b16 %v8658, %v8657
        %8675 = vmatprep.subr.bf16.mxu0 0
        %8676 = vmatpush1.bf16.msra.mxu0 %v8666
        %8677 = vmatprep.subr.bf16.mxu0 0
        %8678 = vmatpush1.bf16.msra.mxu0 %v8665
        %8679 = vmatprep.subr.bf16.mxu0 0
        %8680 = vmatpush1.bf16.msra.mxu0 %v8664
        %8681 = vmatprep.subr.bf16.mxu0 0
        %8682 = vmatpush1.bf16.msra.mxu0 %v8663
        %8683 = vmatprep.subr.bf16.mxu0 0
        %8684 = vmatpush1.bf16.msra.mxu0 %v8662
        %8685 = vmatprep.subr.bf16.mxu0 0
        %8686 = vmatpush1.bf16.msra.mxu0 %v8661
        %8687 = vmatprep.subr.bf16.mxu0 0
        %8688 = vmatpush1.bf16.msra.mxu0 %v8660
        %8689 = vmatprep.subr.bf16.mxu0 0
        %8690 = vmatpush1.bf16.msra.mxu0 %v8659
        %8691 = vmatprep.subr.bf16.mxu0 0
        %8692 = vmatpush2.bf16.msra.mxu0 0
        %8693 = vmatprep.subr.bf16.mxu0 0
        %8694 = vmatpush2.bf16.msra.mxu0 0
        %8695 = vmatprep.subr.bf16.mxu0 0
        %8696 = vmatpush2.bf16.msra.mxu0 0
        %8697 = vmatprep.subr.bf16.mxu0 0
        %8698 = vmatpush2.bf16.msra.mxu0 0
        %8699 = vmatprep.subr.bf16.mxu0 0
        %8700 = vmatpush2.bf16.msra.mxu0 0
        %8701 = vmatprep.subr.bf16.mxu0 0
        %8702 = vmatpush2.bf16.msra.mxu0 0
        %8703 = vmatprep.subr.bf16.mxu0 0
        %8704 = vmatpush2.bf16.msra.mxu0 0
        %8705 = vmatprep.subr.bf16.mxu0 0
        %8706 = vmatpush2.bf16.msra.mxu0 0
        %8707 = vmatprep.mubr.bf16.mxu0 0
        %8708 = vmatmul.mubr.bf16.gmra.mxu0 %v8595
        %v8709 = vpop.f32.mrf.mxu0
        %v8710 = vadd.f32 0.0, %v8709
        %v8711 = vpop.f32.mrf.mxu0
        %v8712 = vpop.f32.mrf.mxu0
        %v8713 = vadd.f32 0.0, %v8712
        %v8714 = vpop.f32.mrf.mxu0
        %8715 = vmatprep.mubr.bf16.mxu0 0
        %8716 = vmatmul.mubr.bf16.gmra.mxu0 %v8596
        %v8717 = vpop.f32.mrf.mxu0
        %v8718 = vadd.f32 0.0, %v8717
        %v8719 = vpop.f32.mrf.mxu0
        %v8720 = vpop.f32.mrf.mxu0
        %v8721 = vadd.f32 0.0, %v8720
        %v8722 = vpop.f32.mrf.mxu0
        %8723 = vmatprep.mubr.bf16.mxu0 0
        %8724 = vmatmul.mubr.bf16.gmra.mxu0 %v8597
        %v8725 = vpop.f32.mrf.mxu0
        %v8726 = vadd.f32 0.0, %v8725
        %v8727 = vpop.f32.mrf.mxu0
        %v8728 = vpop.f32.mrf.mxu0
        %v8729 = vadd.f32 0.0, %v8728
        %v8730 = vpop.f32.mrf.mxu0
        %8731 = vmatprep.mubr.bf16.mxu0 0
        %8732 = vmatmul.mubr.bf16.gmra.mxu0 %v8598
        %v8733 = vpop.f32.mrf.mxu0
        %v8734 = vadd.f32 0.0, %v8733
        %v8735 = vpop.f32.mrf.mxu0
        %v8736 = vpop.f32.mrf.mxu0
        %v8737 = vadd.f32 0.0, %v8736
        %v8738 = vpop.f32.mrf.mxu0
        %8739 = vmatprep.mubr.bf16.mxu0 0
        %8740 = vmatmul.mubr.bf16.gmra.mxu0 %v8599
        %v8741 = vpop.f32.mrf.mxu0
        %v8742 = vadd.f32 0.0, %v8741
        %v8743 = vpop.f32.mrf.mxu0
        %v8744 = vpop.f32.mrf.mxu0
        %v8745 = vadd.f32 0.0, %v8744
        %v8746 = vpop.f32.mrf.mxu0
        %8747 = vmatprep.mubr.bf16.mxu0 0
        %8748 = vmatmul.mubr.bf16.gmra.mxu0 %v8600
        %v8749 = vpop.f32.mrf.mxu0
        %v8750 = vadd.f32 0.0, %v8749
        %v8751 = vpop.f32.mrf.mxu0
        %v8752 = vpop.f32.mrf.mxu0
        %v8753 = vadd.f32 0.0, %v8752
        %v8754 = vpop.f32.mrf.mxu0
        %8755 = vmatprep.mubr.bf16.mxu0 0
        %8756 = vmatmul.mubr.bf16.gmra.mxu0 %v8601
        %v8757 = vpop.f32.mrf.mxu0
        %v8758 = vadd.f32 0.0, %v8757
        %v8759 = vpop.f32.mrf.mxu0
        %v8760 = vpop.f32.mrf.mxu0
        %v8761 = vadd.f32 0.0, %v8760
        %v8762 = vpop.f32.mrf.mxu0
        %8763 = vmatprep.mubr.bf16.mxu0 0
        %8764 = vmatmul.mubr.bf16.gmra.mxu0 %v8602
        %v8765 = vpop.f32.mrf.mxu0
        %v8766 = vadd.f32 0.0, %v8765
        %v8767 = vpop.f32.mrf.mxu0
        %v8768 = vpop.f32.mrf.mxu0
        %v8769 = vadd.f32 0.0, %v8768
        %v8770 = vpop.f32.mrf.mxu0
        %8771 = vmatprep.mubr.bf16.mxu0 0
        %8772 = vmatmul.mubr.bf16.gmra.mxu0 %v8603
        %v8773 = vpop.f32.mrf.mxu0
        %v8774 = vadd.f32 0.0, %v8773
        %v8775 = vpop.f32.mrf.mxu0
        %v8776 = vpop.f32.mrf.mxu0
        %v8777 = vadd.f32 0.0, %v8776
        %v8778 = vpop.f32.mrf.mxu0
        %8779 = vmatprep.mubr.bf16.mxu0 0
        %8780 = vmatmul.mubr.bf16.gmra.mxu0 %v8604
        %v8781 = vpop.f32.mrf.mxu0
        %v8782 = vadd.f32 0.0, %v8781
        %v8783 = vpop.f32.mrf.mxu0
        %v8784 = vpop.f32.mrf.mxu0
        %v8785 = vadd.f32 0.0, %v8784
        %v8786 = vpop.f32.mrf.mxu0
        %8787 = vmatprep.mubr.bf16.mxu0 0
        %8788 = vmatmul.mubr.bf16.gmra.mxu0 %v8605
        %v8789 = vpop.f32.mrf.mxu0
        %v8790 = vadd.f32 0.0, %v8789
        %v8791 = vpop.f32.mrf.mxu0
        %v8792 = vpop.f32.mrf.mxu0
        %v8793 = vadd.f32 0.0, %v8792
        %v8794 = vpop.f32.mrf.mxu0
        %8795 = vmatprep.mubr.bf16.mxu0 0
        %8796 = vmatmul.mubr.bf16.gmra.mxu0 %v8606
        %v8797 = vpop.f32.mrf.mxu0
        %v8798 = vadd.f32 0.0, %v8797
        %v8799 = vpop.f32.mrf.mxu0
        %v8800 = vpop.f32.mrf.mxu0
        %v8801 = vadd.f32 0.0, %v8800
        %v8802 = vpop.f32.mrf.mxu0
        %8803 = vmatprep.mubr.bf16.mxu0 0
        %8804 = vmatmul.mubr.bf16.gmra.mxu0 %v8607
        %v8805 = vpop.f32.mrf.mxu0
        %v8806 = vadd.f32 0.0, %v8805
        %v8807 = vpop.f32.mrf.mxu0
        %v8808 = vpop.f32.mrf.mxu0
        %v8809 = vadd.f32 0.0, %v8808
        %v8810 = vpop.f32.mrf.mxu0
        %8811 = vmatprep.mubr.bf16.mxu0 0
        %8812 = vmatmul.mubr.bf16.gmra.mxu0 %v8608
        %v8813 = vpop.f32.mrf.mxu0
        %v8814 = vadd.f32 0.0, %v8813
        %v8815 = vpop.f32.mrf.mxu0
        %v8816 = vpop.f32.mrf.mxu0
        %v8817 = vadd.f32 0.0, %v8816
        %v8818 = vpop.f32.mrf.mxu0
        %8819 = vmatprep.mubr.bf16.mxu0 0
        %8820 = vmatmul.mubr.bf16.gmra.mxu0 %v8609
        %v8821 = vpop.f32.mrf.mxu0
        %v8822 = vadd.f32 0.0, %v8821
        %v8823 = vpop.f32.mrf.mxu0
        %v8824 = vpop.f32.mrf.mxu0
        %v8825 = vadd.f32 0.0, %v8824
        %v8826 = vpop.f32.mrf.mxu0
        %8827 = vmatprep.mubr.bf16.mxu0 0
        %8828 = vmatmul.mubr.bf16.gmra.mxu0 %v8610
        %v8829 = vpop.f32.mrf.mxu0
        %v8830 = vadd.f32 0.0, %v8829
        %v8831 = vpop.f32.mrf.mxu0
        %v8832 = vpop.f32.mrf.mxu0
        %v8833 = vadd.f32 0.0, %v8832
        %v8834 = vpop.f32.mrf.mxu0
        %8835 = vdwg.mxu0
        %v8836 = vadd.f32 %v8354, %v8710
        %v8837 = vadd.f32 %v8355, %v8713
        %v8838 = vadd.f32 %v8356, %v8718
        %v8839 = vadd.f32 %v8357, %v8721
        %v8840 = vadd.f32 %v8358, %v8726
        %v8841 = vadd.f32 %v8359, %v8729
        %v8842 = vadd.f32 %v8360, %v8734
        %v8843 = vadd.f32 %v8361, %v8737
        %v8844 = vadd.f32 %v8362, %v8742
        %v8845 = vadd.f32 %v8363, %v8745
        %v8846 = vadd.f32 %v8364, %v8750
        %v8847 = vadd.f32 %v8365, %v8753
        %v8848 = vadd.f32 %v8366, %v8758
        %v8849 = vadd.f32 %v8367, %v8761
        %v8850 = vadd.f32 %v8368, %v8766
        %v8851 = vadd.f32 %v8369, %v8769
        %v8852 = vadd.f32 %v8370, %v8774
        %v8853 = vadd.f32 %v8371, %v8777
        %v8854 = vadd.f32 %v8372, %v8782
        %v8855 = vadd.f32 %v8373, %v8785
        %v8856 = vadd.f32 %v8374, %v8790
        %v8857 = vadd.f32 %v8375, %v8793
        %v8858 = vadd.f32 %v8376, %v8798
        %v8859 = vadd.f32 %v8377, %v8801
        %v8860 = vadd.f32 %v8378, %v8806
        %v8861 = vadd.f32 %v8379, %v8809
        %v8862 = vadd.f32 %v8380, %v8814
        %v8863 = vadd.f32 %v8381, %v8817
        %v8864 = vadd.f32 %v8382, %v8822
        %v8865 = vadd.f32 %v8383, %v8825
        %v8866 = vadd.f32 %v8384, %v8830
        %v8867 = vadd.f32 %v8385, %v8833
        %v8868 = vld [vmem:[%s4] sm:$0x1]
        %v8870 = vlaneseq
        %v8871 = vshrl.u32 %v8870, 7
        %v8872 = vsub.s32 0, %v8871
        %v8873 = vrot.slane %v8868, %v8872
        %v8875 = vadd.f32 %v8836, %v8873
        %v8876 = vadd.f32 %v8837, %v8873
        %v8877 = vadd.f32 %v8838, %v8873
        %v8878 = vadd.f32 %v8839, %v8873
        %v8879 = vadd.f32 %v8840, %v8873
        %v8880 = vadd.f32 %v8841, %v8873
        %v8881 = vadd.f32 %v8842, %v8873
        %v8882 = vadd.f32 %v8843, %v8873
        %v8883 = vadd.f32 %v8844, %v8873
        %v8884 = vadd.f32 %v8845, %v8873
        %v8885 = vadd.f32 %v8846, %v8873
        %v8886 = vadd.f32 %v8847, %v8873
        %v8887 = vadd.f32 %v8848, %v8873
        %v8888 = vadd.f32 %v8849, %v8873
        %v8889 = vadd.f32 %v8850, %v8873
        %v8890 = vadd.f32 %v8851, %v8873
        %v8891 = vadd.f32 %v8852, %v8873
        %v8892 = vadd.f32 %v8853, %v8873
        %v8893 = vadd.f32 %v8854, %v8873
        %v8894 = vadd.f32 %v8855, %v8873
        %v8895 = vadd.f32 %v8856, %v8873
        %v8896 = vadd.f32 %v8857, %v8873
        %v8897 = vadd.f32 %v8858, %v8873
        %v8898 = vadd.f32 %v8859, %v8873
        %v8899 = vadd.f32 %v8860, %v8873
        %v8900 = vadd.f32 %v8861, %v8873
        %v8901 = vadd.f32 %v8862, %v8873
        %v8902 = vadd.f32 %v8863, %v8873
        %v8903 = vadd.f32 %v8864, %v8873
        %v8904 = vadd.f32 %v8865, %v8873
        %v8905 = vadd.f32 %v8866, %v8873
        %v8906 = vadd.f32 %v8867, %v8873
        %v8907 = vmax.f32 %v8875, 0.0
        %v8908 = vmax.f32 %v8876, 0.0
        %v8909 = vmax.f32 %v8877, 0.0
        %v8910 = vmax.f32 %v8878, 0.0
        %v8911 = vmax.f32 %v8879, 0.0
        %v8912 = vmax.f32 %v8880, 0.0
        %v8913 = vmax.f32 %v8881, 0.0
        %v8914 = vmax.f32 %v8882, 0.0
        %v8915 = vmax.f32 %v8883, 0.0
        %v8916 = vmax.f32 %v8884, 0.0
        %v8917 = vmax.f32 %v8885, 0.0
        %v8918 = vmax.f32 %v8886, 0.0
        %v8919 = vmax.f32 %v8887, 0.0
        %v8920 = vmax.f32 %v8888, 0.0
        %v8921 = vmax.f32 %v8889, 0.0
        %v8922 = vmax.f32 %v8890, 0.0
        %v8923 = vmax.f32 %v8891, 0.0
        %v8924 = vmax.f32 %v8892, 0.0
        %v8925 = vmax.f32 %v8893, 0.0
        %v8926 = vmax.f32 %v8894, 0.0
        %v8927 = vmax.f32 %v8895, 0.0
        %v8928 = vmax.f32 %v8896, 0.0
        %v8929 = vmax.f32 %v8897, 0.0
        %v8930 = vmax.f32 %v8898, 0.0
        %v8931 = vmax.f32 %v8899, 0.0
        %v8932 = vmax.f32 %v8900, 0.0
        %v8933 = vmax.f32 %v8901, 0.0
        %v8934 = vmax.f32 %v8902, 0.0
        %v8935 = vmax.f32 %v8903, 0.0
        %v8936 = vmax.f32 %v8904, 0.0
        %v8937 = vmax.f32 %v8905, 0.0
        %v8938 = vmax.f32 %v8906, 0.0
        %v8939 = vmax.f32 %v8907, %v8909
        %v8940 = vmax.f32 %v8908, %v8910
        %v8941 = vmax.f32 %v8911, %v8913
        %v8942 = vmax.f32 %v8912, %v8914
        %v8943 = vmax.f32 %v8915, %v8917
        %v8944 = vmax.f32 %v8916, %v8918
        %v8945 = vmax.f32 %v8919, %v8921
        %v8946 = vmax.f32 %v8920, %v8922
        %v8947 = vmax.f32 %v8923, %v8925
        %v8948 = vmax.f32 %v8924, %v8926
        %v8949 = vmax.f32 %v8927, %v8929
        %v8950 = vmax.f32 %v8928, %v8930
        %v8951 = vmax.f32 %v8931, %v8933
        %v8952 = vmax.f32 %v8932, %v8934
        %v8953 = vmax.f32 %v8935, %v8937
        %v8954 = vmax.f32 %v8936, %v8938
        %8955 = vst [vmem:[#allocation3] sm:$0xff] %v8939
        %8956 = vst [vmem:[#allocation3 + $0x8] sm:$0xff] %v8940
        %8957 = vst [vmem:[#allocation3 + $0x10] sm:$0xff] %v8941
        %8958 = vst [vmem:[#allocation3 + $0x18] sm:$0xff] %v8942
        %8959 = vst [vmem:[#allocation3 + $0x20] sm:$0xff] %v8943
        %8960 = vst [vmem:[#allocation3 + $0x28] sm:$0xff] %v8944
        %8961 = vst [vmem:[#allocation3 + $0x30] sm:$0xff] %v8945
        %8962 = vst [vmem:[#allocation3 + $0x38] sm:$0xff] %v8946
        %8963 = vst [vmem:[#allocation3 + $0x40] sm:$0xff] %v8947
        %8964 = vst [vmem:[#allocation3 + $0x48] sm:$0xff] %v8948
        %8965 = vst [vmem:[#allocation3 + $0x50] sm:$0xff] %v8949
        %8966 = vst [vmem:[#allocation3 + $0x58] sm:$0xff] %v8950
        %8967 = vst [vmem:[#allocation3 + $0x60] sm:$0xff] %v8951
        %8968 = vst [vmem:[#allocation3 + $0x68] sm:$0xff] %v8952
        %8969 = vst [vmem:[#allocation3 + $0x70] sm:$0xff] %v8953
        %8970 = vst [vmem:[#allocation3 + $0x78] sm:$0xff] %v8954
        %v8971 = vld [vmem:[#allocation3] ss:$2 sm:$0xff]
        %s8972 = scalar_lea.vmem [#allocation3], 16
        %v8973 = vld [vmem:[%s8972] ss:$2 sm:$0xff]
        %s8974 = scalar_lea.vmem [#allocation3], 32
        %v8975 = vld [vmem:[%s8974] ss:$2 sm:$0xff]
        %s8976 = scalar_lea.vmem [#allocation3], 48
        %v8977 = vld [vmem:[%s8976] ss:$2 sm:$0xff]
        %s8978 = scalar_lea.vmem [#allocation3], 64
        %v8979 = vld [vmem:[%s8978] ss:$2 sm:$0xff]
        %s8980 = scalar_lea.vmem [#allocation3], 80
        %v8981 = vld [vmem:[%s8980] ss:$2 sm:$0xff]
        %s8982 = scalar_lea.vmem [#allocation3], 96
        %v8983 = vld [vmem:[%s8982] ss:$2 sm:$0xff]
        %s8984 = scalar_lea.vmem [#allocation3], 112
        %v8985 = vld [vmem:[%s8984] ss:$2 sm:$0xff]
        %s8986 = scalar_lea.vmem [#allocation3], 1
        %v8987 = vld [vmem:[%s8986] ss:$2 sm:$0xff]
        %s8988 = scalar_lea.vmem [#allocation3], 17
        %v8989 = vld [vmem:[%s8988] ss:$2 sm:$0xff]
        %s8990 = scalar_lea.vmem [#allocation3], 33
        %v8991 = vld [vmem:[%s8990] ss:$2 sm:$0xff]
        %s8992 = scalar_lea.vmem [#allocation3], 49
        %v8993 = vld [vmem:[%s8992] ss:$2 sm:$0xff]
        %s8994 = scalar_lea.vmem [#allocation3], 65
        %v8995 = vld [vmem:[%s8994] ss:$2 sm:$0xff]
        %s8996 = scalar_lea.vmem [#allocation3], 81
        %v8997 = vld [vmem:[%s8996] ss:$2 sm:$0xff]
        %s8998 = scalar_lea.vmem [#allocation3], 97
        %v8999 = vld [vmem:[%s8998] ss:$2 sm:$0xff]
        %s9000 = scalar_lea.vmem [#allocation3], 113
        %v9001 = vld [vmem:[%s9000] ss:$2 sm:$0xff]
        %v9002 = vmax.f32 %v8971, %v8987
        %v9003 = vmax.f32 %v8973, %v8989
        %v9004 = vmax.f32 %v8975, %v8991
        %v9005 = vmax.f32 %v8977, %v8993
        %v9006 = vmax.f32 %v8979, %v8995
        %v9007 = vmax.f32 %v8981, %v8997
        %v9008 = vmax.f32 %v8983, %v8999
        %v9009 = vmax.f32 %v8985, %v9001
        %v9010 = vpack.c.bf16 %v9002, %v9002
        %v9011 = vpack.c.bf16 %v9003, %v9003
        %v9012 = vpack.c.bf16 %v9004, %v9004
        %v9013 = vpack.c.bf16 %v9005, %v9005
        %v9014 = vpack.c.bf16 %v9006, %v9006
        %v9015 = vpack.c.bf16 %v9007, %v9007
        %v9016 = vpack.c.bf16 %v9008, %v9008
        %v9017 = vpack.c.bf16 %v9009, %v9009
        %9018 = vst [vmem:[%s232] sm:$0xf] %v9010
        %9019 = vst [vmem:[%s232 + $0x4] sm:$0xf] %v9011
        %9020 = vst [vmem:[%s232 + $0x8] sm:$0xf] %v9012
        %9021 = vst [vmem:[%s232 + $0xc] sm:$0xf] %v9013
        %9022 = vst [vmem:[%s232 + $0x10] sm:$0xf] %v9014
        %9023 = vst [vmem:[%s232 + $0x14] sm:$0xf] %v9015
        %9024 = vst [vmem:[%s232 + $0x18] sm:$0xf] %v9016
        %9025 = vst [vmem:[%s232 + $0x1c] sm:$0xf] %v9017
        %s9026 = sand.u32 %s138, 1
        %s9027 = scalar_lea.sflag [#allocation6], %s9026
        %s9028 = sand.u32 %s138, 1
        %s9029 = smul.addr %s9028, 32
        %s9030 = scalar_lea.vmem [#allocation7], %s9029
        // Predicated region
        $region49: #{tpu_custom_call.1} parent=39 // pred_check
          %p9031 = pneg %p148
        $region50: #{tpu_custom_call.1} parent=39 // pred_check_branch
          %9033 = sbr.rel (%p9031) target = $region52
        $region51: #{tpu_custom_call.1} parent=39 // pred_region
          %s9035 = ssub.s32 512, 512
          %9036 = vsyncadd %s9027, %s9035
          %s9037 = smul.addr %s20, 8
          %s9038 = smul.addr %s9037, 64
          %s9039 = scalar_lea.hbm %s5, %s9038
          %s9040 = sshll.u32 %s9030, 4
          %s9041 = int_to_ptr.vmem [resolvable:$true] %s9040
          %9046 = dma.vmem_to_hbm [thread:$0]  %s9041, 512, %s9039, %s9027, 64, 64, 4
        $region52: #{tpu_custom_call.1} parent=39 // pred_fallthru
          _
      $region40: #{tpu_custom_call.1} parent=5 // pred_fallthru
        _
      %p9047 = scmp.le.s32.totalorder 2, %s15
      // Predicated region
      $region53: #{tpu_custom_call.1} parent=5 // pred_check
        %p9048 = pneg %p9047
      $region54: #{tpu_custom_call.1} parent=5 // pred_check_branch
        %9050 = sbr.rel (%p9048) target = $region56
      $region55: #{tpu_custom_call.1} parent=5 // pred_region
        %s9051 = ssub.s32 %s15, 2
        // Predicated region
        $region57: #{tpu_custom_call.1} parent=55 // pred_check
          %p9052 = pneg %p154
        $region58: #{tpu_custom_call.1} parent=55 // pred_check_branch
          %9054 = sbr.rel (%p9052) target = $region60
        $region59: #{tpu_custom_call.1} parent=55 // pred_region
          %s9055 = sand.u32 %s139, 1
          %s9056 = scalar_lea.sflag [#allocation6], %s9055
          %s9057 = sand.u32 %s139, 1
          %s9058 = smul.addr %s9057, 32
          %s9059 = scalar_lea.vmem [#allocation7], %s9058
          %9060 = dma.done %s9056, 512
        $region60: #{tpu_custom_call.1} parent=55 // pred_fallthru
          _
      $region56: #{tpu_custom_call.1} parent=5 // pred_fallthru
        _
    $region6: #{tpu_custom_call.1} parent=1 // loop_footer
      %s19 = sadd.s32 1, %s15
    $region7: #{tpu_custom_call.1} parent=1 // loop_footer_branch
      %14 = sbr.rel target = $region3
    $region8: #{tpu_custom_call.1} parent=1 // loop_exit
      _
    %9061 = vsyncpa [#allocation5], 1
    %s9062 = scalar_lea.sflag [#allocation5], 1
    %9063 = vsyncpa %s9062, 1
    %9064 = vsyncpa [#allocation6], 1
    %s9065 = scalar_lea.sflag [#allocation6], 1
    %9066 = vsyncpa %s9065, 1

</llo_original>
